<compile_context>
chip_gen: v5e
topology: v5e:2x2
jax: 0.10.0
libtpu: 0.0.40
codegen_flags: <defaults>
</compile_context>

<pallas_src>
import functools

import jax
import jax.numpy as jnp
from jax.experimental import pallas as pl
from jax.experimental.pallas import tpu as pltpu


def _round_up(n, m):
    return ((n + m - 1) // m) * m


def _vmem_capacity_bytes():
    try:
        info = pltpu.get_tpu_info()
        cap = getattr(info, "vmem_capacity_bytes", None)
        if cap:
            return int(cap)
    except Exception:
        pass
    return 64 * 1024 * 1024  # conservative default (v7x has the smallest VMEM)


def _device_kind():
    try:
        return jax.devices()[0].device_kind.lower()
    except Exception:
        return ""


def _lstm_chunk_kernel(x_ref, wih_ref, whh_ref, bias_ref, out_ref, h_sc, c_sc):
    """One grid step == one chunk of timesteps for one batch tile.

    x_ref   : (TC, B_tile, Ip)  bf16  time-major input chunk
    wih_ref : (Ip, 4*Hp)        bf16  resident W_ih^T (gate-blockwise padded)
    whh_ref : (Hp, 4*Hp)        bf16  resident W_hh^T
    bias_ref: (1, 4*Hp)         f32   b_ih + b_hh (gate-blockwise padded)
    out_ref : (TC, B_tile, Hp)        time-major hidden states for this chunk
    h_sc/c_sc: (B_tile, Hp)     f32   recurrent state, carried across chunks
    """
    @pl.when(pl.program_id(1) == 0)
    def _init():
        h_sc[...] = jnp.zeros_like(h_sc)
        c_sc[...] = jnp.zeros_like(c_sc)

    TC, B_tile, _ = x_ref.shape
    Hp = h_sc.shape[-1]

    w_ih = wih_ref[...]
    w_hh = whh_ref[...]
    # Hoist the bias broadcast out of the unrolled loop (broadcasts aren't CSE'd).
    bias = jnp.broadcast_to(bias_ref[...], (B_tile, 4 * Hp))

    h = h_sc[...]
    c = c_sc[...]

    # Fully unrolled static loop: h/c live in vregs, dense per-step loads/stores,
    # bf16 MXU operands with f32 accumulation, f32 gate elementwise math.
    for tt in range(TC):
        x_t = x_ref[tt]                                       # (B_tile, Ip) bf16
        gates = (
            jnp.dot(x_t, w_ih, preferred_element_type=jnp.float32)
            + jnp.dot(h.astype(jnp.bfloat16), w_hh,
                      preferred_element_type=jnp.float32)
            + bias
        )
        # PyTorch gate order: i, f, g, o — each gate occupies a lane-aligned slab.
        i = jax.nn.sigmoid(gates[:, 0 * Hp:1 * Hp])
        f = jax.nn.sigmoid(gates[:, 1 * Hp:2 * Hp])
        g = jnp.tanh(gates[:, 2 * Hp:3 * Hp])
        o = jax.nn.sigmoid(gates[:, 3 * Hp:4 * Hp])
        c = f * c + i * g
        h = o * jnp.tanh(c)
        out_ref[tt] = h.astype(out_ref.dtype)                 # dense (B_tile, Hp)

    h_sc[...] = h
    c_sc[...] = c


def lstm_encoder_forward(x, w_ih, w_hh, b_ih, b_hh, *, time_chunk=16,
                         b_tile=None, single_buffer_weights=True):
    """x: (B, T, I) float32. Returns (x_enc, out) like the PyTorch Encoder."""
    B, T, I = x.shape
    H = w_ih.shape[0] // 4
    f32, bf16 = jnp.float32, jnp.bfloat16
    out_dtype = x.dtype

    # ---- TPU-friendly padding -------------------------------------------
    Hp = _round_up(H, 128)          # lane-align each gate slab & the output
    Ip = _round_up(I, 8)            # sublane-align the W_ih^T contraction dim
    Bp = _round_up(B, 8)            # sublane-align batch

    kind = _device_kind()
    two_cores = "v7" in kind        # v7x: 2 TensorCores per chip
    if b_tile is None:
        if two_cores and Bp >= 16:
            # Split the (parallel) batch axis so both TensorCores get a shard.
            b_tile = _round_up((Bp + 1) // 2, 8)
        else:
            # Single TC: one big tile = better MXU row occupancy, fewer steps.
            b_tile = min(Bp, 256 if "v6" in kind else 128)
    B_tile = max(8, min(_round_up(b_tile, 8), Bp))
    Bp = _round_up(Bp, B_tile)

    # ---- pick the time chunk under the device VMEM budget -----------------
    usable_vmem = min(_vmem_capacity_bytes(), 128 << 20) - (16 << 20)
    out_bytes = jnp.dtype(out_dtype).itemsize

    def vmem_need(tc):
        return (2 * tc * B_tile * Ip * 2            # x block (bf16, double-buf)
                + 2 * tc * B_tile * Hp * out_bytes  # out block (double-buf)
                + Ip * 4 * Hp * 2                   # W_ih^T (single-buf)
                + Hp * 4 * Hp * 2                   # W_hh^T (single-buf)
                + 4 * Hp * 4                        # bias
                + 2 * B_tile * Hp * 4)              # h/c carry scratch

    TC = max(1, min(time_chunk, T))
    while vmem_need(TC) > usable_vmem and TC > 1:
        TC = max(1, TC // 2)
    Tp = _round_up(T, TC)

    # ---- gate-blockwise weight/bias padding --------------------------------
    # Gate k occupies lanes [k*Hp, k*Hp + H). Padded units/lanes have zero
    # weights and bias, so padded cells get gate pre-activation 0
    # -> i=f=o=0.5, g=0 -> their h,c stay exactly 0 forever.
    w_ih_p = jnp.pad(w_ih.astype(f32).reshape(4, H, I),
                     ((0, 0), (0, Hp - H), (0, Ip - I)))            # (4, Hp, Ip)
    w_ih_t = jnp.transpose(w_ih_p, (2, 0, 1)).reshape(Ip, 4 * Hp).astype(bf16)
    w_hh_p = jnp.pad(w_hh.astype(f32).reshape(4, H, H),
                     ((0, 0), (0, Hp - H), (0, Hp - H)))            # (4, Hp, Hp)
    w_hh_t = jnp.transpose(w_hh_p, (2, 0, 1)).reshape(Hp, 4 * Hp).astype(bf16)
    bias_p = jnp.pad((b_ih + b_hh).astype(f32).reshape(4, H),
                     ((0, 0), (0, Hp - H))).reshape(1, 4 * Hp)

    # Time-major bf16 input stream => dense per-step loads inside the kernel.
    x_p = jnp.pad(x.astype(f32), ((0, Bp - B), (0, Tp - T), (0, Ip - I)))
    x_tm = jnp.transpose(x_p, (1, 0, 2)).astype(bf16)               # (Tp, Bp, Ip)

    n_btiles = Bp // B_tile
    n_chunks = Tp // TC

    cparams = {"dimension_semantics": ("parallel", "arbitrary")}
    need = vmem_need(TC)
    if need > (16 << 20):
        # Never request more than the device can physically provide (v7x: 64 MiB).
        cparams["vmem_limit_bytes"] = int(min(need + (4 << 20), usable_vmem))

    # Constant-index_map blocks don't need double buffering.
    if single_buffer_weights and hasattr(pl, "Buffered"):
        resident = {"pipeline_mode": pl.Buffered(1)}
    else:
        resident = {}

    out_tm = pl.pallas_call(
        _lstm_chunk_kernel,
        out_shape=jax.ShapeDtypeStruct((Tp, Bp, Hp), out_dtype),
        grid_spec=pltpu.PrefetchScalarGridSpec(
            num_scalar_prefetch=0,
            grid=(n_btiles, n_chunks),
            in_specs=[
                pl.BlockSpec((TC, B_tile, Ip), lambda b, c: (c, b, 0)),
                pl.BlockSpec((Ip, 4 * Hp), lambda b, c: (0, 0), **resident),
                pl.BlockSpec((Hp, 4 * Hp), lambda b, c: (0, 0), **resident),
                pl.BlockSpec((1, 4 * Hp), lambda b, c: (0, 0), **resident),
            ],
            out_specs=pl.BlockSpec((TC, B_tile, Hp), lambda b, c: (c, b, 0)),
            scratch_shapes=[
                pltpu.VMEM((B_tile, Hp), jnp.float32),   # h carry
                pltpu.VMEM((B_tile, Hp), jnp.float32),   # c carry
            ],
        ),
        compiler_params=pltpu.CompilerParams(**cparams),
    )(x_tm, w_ih_t, w_hh_t, bias_p)

    out = jnp.transpose(out_tm, (1, 0, 2))[:B, :T, :H]   # back to batch-first
    # last_h_state of a single-layer LSTM == out[:, -1, :]; repeat over time.
    x_enc = jnp.broadcast_to(out[:, T - 1:T, :], (B, T, H))
    return x_enc, out


def _reference_lstm(x, w_ih, w_hh, b_ih, b_hh, *, matmul_dtype=jnp.float32):
    """Pure-JAX reference (lax.scan). matmul_dtype=bfloat16 mirrors the kernel's
    bf16 MXU operands (f32 accumulation, f32 elementwise)."""
    B, T, I = x.shape
    H = w_hh.shape[1]
    bias = (b_ih + b_hh).astype(jnp.float32)
    w_ih_t = w_ih.T.astype(matmul_dtype)
    w_hh_t = w_hh.T.astype(matmul_dtype)

    def step(carry, x_t):
        h, c = carry
        gates = (jnp.dot(x_t.astype(matmul_dtype), w_ih_t,
                         preferred_element_type=jnp.float32)
                 + jnp.dot(h.astype(matmul_dtype), w_hh_t,
                           preferred_element_type=jnp.float32)
                 + bias)
        i = jax.nn.sigmoid(gates[:, 0:H])
        f = jax.nn.sigmoid(gates[:, H:2 * H])
        g = jnp.tanh(gates[:, 2 * H:3 * H])
        o = jax.nn.sigmoid(gates[:, 3 * H:4 * H])
        c = f * c + i * g
        h = o * jnp.tanh(c)
        return (h, c), h

    init = (jnp.zeros((B, H), jnp.float32), jnp.zeros((B, H), jnp.float32))
    (h_last, _), hs = jax.lax.scan(step, init, jnp.transpose(x, (1, 0, 2)))
    out = jnp.transpose(hs, (1, 0, 2))
    x_enc = jnp.broadcast_to(h_last[:, None, :], (B, T, H))
    return x_enc, out


if __name__ == "__main__":
    # batch=2, seq=20 (exercises multi-chunk carry + time padding with the
    # default time_chunk=16), input_size=16, hidden_size=32.
    B, T, I, H = 2, 20, 16, 32

    key = jax.random.PRNGKey(0)
    kx, k1, k2, k3, k4 = jax.random.split(key, 5)

    # Deterministic parameter init, PyTorch-style U(-1/sqrt(H), 1/sqrt(H)).
    bound = 1.0 / jnp.sqrt(jnp.float32(H))
    w_ih = jax.random.uniform(k1, (4 * H, I), jnp.float32, -bound, bound)
    w_hh = jax.random.uniform(k2, (4 * H, H), jnp.float32, -bound, bound)
    b_ih = jax.random.uniform(k3, (4 * H,), jnp.float32, -bound, bound)
    b_hh = jax.random.uniform(k4, (4 * H,), jnp.float32, -bound, bound)

    x = jax.random.normal(kx, (B, T, I), jnp.float32)

    try:
        x_enc, out = jax.jit(lstm_encoder_forward)(x, w_ih, w_hh, b_ih, b_hh)
        jax.block_until_ready((x_enc, out))
    except Exception:
        # Fallback for JAX versions without BlockSpec(pipeline_mode=...).
        fwd = functools.partial(lstm_encoder_forward, single_buffer_weights=False)
        x_enc, out = jax.jit(fwd)(x, w_ih, w_hh, b_ih, b_hh)
        jax.block_until_ready((x_enc, out))

    assert x_enc.shape == (B, T, H) and out.shape == (B, T, H)

    # Structural check against a reference using the same bf16 MXU operands.
    x_enc_bf, out_bf = _reference_lstm(x, w_ih, w_hh, b_ih, b_hh,
                                       matmul_dtype=jnp.bfloat16)
    assert jnp.allclose(out, out_bf, atol=2e-3, rtol=2e-3)
    assert jnp.allclose(x_enc, x_enc_bf, atol=2e-3, rtol=2e-3)

    # Numerics sanity vs the full-f32 reference (bf16 MXU operands => looser tol).
    x_enc_r, out_r = _reference_lstm(x, w_ih, w_hh, b_ih, b_hh)
    assert jnp.allclose(out, out_r, atol=3e-2, rtol=3e-2)
    assert jnp.allclose(x_enc, x_enc_r, atol=3e-2, rtol=3e-2)

    print("KERNEL_OK")
</pallas_src>

<mosaic_0001>
module attributes {stable_mosaic.version = 11 : i64} {
  func.func @_lstm_chunk_kernel(%arg0: i32, %arg1: i32, %arg2: memref<16x8x16xbf16, #tpu.memory_space<vmem>>, %arg3: memref<16x512xbf16, #tpu.memory_space<vmem>>, %arg4: memref<128x512xbf16, #tpu.memory_space<vmem>>, %arg5: memref<1x512xf32, #tpu.memory_space<vmem>>, %arg6: memref<16x8x128xf32, #tpu.memory_space<vmem>>, %arg7: memref<8x128xf32, #tpu.memory_space<vmem>>, %arg8: memref<8x128xf32, #tpu.memory_space<vmem>>) attributes {dimension_semantics = [#tpu.dimension_semantics<parallel>, #tpu.dimension_semantics<arbitrary>], iteration_bounds = array<i64: 1, 2>, scalar_prefetch = 0 : i64, scratch_operands = 2 : i64, tpu.core_type = #tpu.core_type<tc>, window_params = [{transform_indices = @transform_0, window_bounds = array<i64: 16, 8, 16>}, {pipeline_mode = #tpu.pipeline_mode<synchronous>, transform_indices = @transform_1, window_bounds = array<i64: 16, 512>}, {pipeline_mode = #tpu.pipeline_mode<synchronous>, transform_indices = @transform_2, window_bounds = array<i64: 128, 512>}, {pipeline_mode = #tpu.pipeline_mode<synchronous>, transform_indices = @transform_3, window_bounds = array<i64: 1, 512>}, {transform_indices = @transform_4, window_bounds = array<i64: 16, 8, 128>}]} {
    %c0_i32 = arith.constant 0 : i32
    %0 = arith.cmpi eq, %arg1, %c0_i32 : i32
    %1 = arith.extui %0 : i1 to i32
    %c0_i32_0 = arith.constant 0 : i32
    %2 = arith.cmpi ne, %1, %c0_i32_0 : i32
    scf.if %2 {
      %cst_174 = arith.constant 0.000000e+00 : f32
      %572 = vector.broadcast %cst_174 : f32 to vector<8x128xf32>
      %c0_175 = arith.constant 0 : index
      %c0_176 = arith.constant 0 : index
      %573 = vector.load %arg7[%c0_175, %c0_176] : memref<8x128xf32, #tpu.memory_space<vmem>>, vector<8x128xf32>
      tpu.vector_store %arg7[%c0_175, %c0_176], %572 {strides = array<i32>} : memref<8x128xf32, #tpu.memory_space<vmem>>, vector<8x128xf32>,
      %cst_177 = arith.constant 0.000000e+00 : f32
      %574 = vector.broadcast %cst_177 : f32 to vector<8x128xf32>
      %c0_178 = arith.constant 0 : index
      %c0_179 = arith.constant 0 : index
      %575 = vector.load %arg8[%c0_178, %c0_179] : memref<8x128xf32, #tpu.memory_space<vmem>>, vector<8x128xf32>
      tpu.vector_store %arg8[%c0_178, %c0_179], %574 {strides = array<i32>} : memref<8x128xf32, #tpu.memory_space<vmem>>, vector<8x128xf32>,
    } else {
    }
    %c0 = arith.constant 0 : index
    %c0_1 = arith.constant 0 : index
    %3 = vector.load %arg3[%c0, %c0_1] : memref<16x512xbf16, #tpu.memory_space<vmem>>, vector<16x512xbf16>
    %c0_2 = arith.constant 0 : index
    %c0_3 = arith.constant 0 : index
    %4 = vector.load %arg4[%c0_2, %c0_3] : memref<128x512xbf16, #tpu.memory_space<vmem>>, vector<128x512xbf16>
    %c0_4 = arith.constant 0 : index
    %c0_5 = arith.constant 0 : index
    %5 = vector.load %arg5[%c0_4, %c0_5] : memref<1x512xf32, #tpu.memory_space<vmem>>, vector<1x512xf32>
    %6 = vector.shape_cast %5 : vector<1x512xf32> to vector<1x512xf32>
    %7 = vector.broadcast %6 : vector<1x512xf32> to vector<8x512xf32>
    %c0_6 = arith.constant 0 : index
    %c0_7 = arith.constant 0 : index
    %8 = vector.load %arg7[%c0_6, %c0_7] : memref<8x128xf32, #tpu.memory_space<vmem>>, vector<8x128xf32>
    %c0_8 = arith.constant 0 : index
    %c0_9 = arith.constant 0 : index
    %9 = vector.load %arg8[%c0_8, %c0_9] : memref<8x128xf32, #tpu.memory_space<vmem>>, vector<8x128xf32>
    %c0_10 = arith.constant 0 : index
    %c0_11 = arith.constant 0 : index
    %c0_12 = arith.constant 0 : index
    %10 = vector.load %arg2[%c0_10, %c0_11, %c0_12] : memref<16x8x16xbf16, #tpu.memory_space<vmem>>, vector<1x8x16xbf16>
    %11 = vector.shape_cast %10 : vector<1x8x16xbf16> to vector<8x16xbf16>
    %cst = arith.constant dense<0.000000e+00> : vector<8x512xf32>
    %12 = tpu.matmul %11, %3, %cst {dimension_numbers = #tpu.dot_dimension_numbers<[1], [0], [0], [1], [0, 0, 1, 1], [], []>} : vector<8x16xbf16>, vector<16x512xbf16>, vector<8x512xf32> -> vector<8x512xf32>
    %13 = arith.truncf %8 : vector<8x128xf32> to vector<8x128xbf16>
    %cst_13 = arith.constant dense<0.000000e+00> : vector<8x512xf32>
    %14 = tpu.matmul %13, %4, %cst_13 {dimension_numbers = #tpu.dot_dimension_numbers<[1], [0], [0], [1], [0, 0, 1, 1], [], []>} : vector<8x128xbf16>, vector<128x512xbf16>, vector<8x512xf32> -> vector<8x512xf32>
    %15 = arith.addf %12, %14 : vector<8x512xf32>
    %16 = arith.addf %15, %7 : vector<8x512xf32>
    %17 = vector.extract_strided_slice %16 {offsets = [0, 0], sizes = [8, 128], strides = [1, 1]} : vector<8x512xf32> to vector<8x128xf32>
    %18 = arith.negf %17 : vector<8x128xf32>
    %19 = math.exp %18 : vector<8x128xf32>
    %cst_14 = arith.constant 1.000000e+00 : f32
    %20 = vector.broadcast %cst_14 : f32 to vector<8x128xf32>
    %21 = arith.addf %20, %19 : vector<8x128xf32>
    %22 = arith.divf %20, %21 : vector<8x128xf32>
    %23 = vector.extract_strided_slice %16 {offsets = [0, 128], sizes = [8, 128], strides = [1, 1]} : vector<8x512xf32> to vector<8x128xf32>
    %24 = arith.negf %23 : vector<8x128xf32>
    %25 = math.exp %24 : vector<8x128xf32>
    %cst_15 = arith.constant 1.000000e+00 : f32
    %26 = vector.broadcast %cst_15 : f32 to vector<8x128xf32>
    %27 = arith.addf %26, %25 : vector<8x128xf32>
    %28 = arith.divf %26, %27 : vector<8x128xf32>
    %29 = vector.extract_strided_slice %16 {offsets = [0, 256], sizes = [8, 128], strides = [1, 1]} : vector<8x512xf32> to vector<8x128xf32>
    %30 = math.tanh %29 : vector<8x128xf32>
    %31 = vector.extract_strided_slice %16 {offsets = [0, 384], sizes = [8, 128], strides = [1, 1]} : vector<8x512xf32> to vector<8x128xf32>
    %32 = arith.negf %31 : vector<8x128xf32>
    %33 = math.exp %32 : vector<8x128xf32>
    %cst_16 = arith.constant 1.000000e+00 : f32
    %34 = vector.broadcast %cst_16 : f32 to vector<8x128xf32>
    %35 = arith.addf %34, %33 : vector<8x128xf32>
    %36 = arith.divf %34, %35 : vector<8x128xf32>
    %37 = arith.mulf %28, %9 : vector<8x128xf32>
    %38 = arith.mulf %22, %30 : vector<8x128xf32>
    %39 = arith.addf %37, %38 : vector<8x128xf32>
    %40 = math.tanh %39 : vector<8x128xf32>
    %41 = arith.mulf %36, %40 : vector<8x128xf32>
    %c0_17 = arith.constant 0 : index
    %c0_18 = arith.constant 0 : index
    %c0_19 = arith.constant 0 : index
    %42 = vector.load %arg6[%c0_17, %c0_18, %c0_19] : memref<16x8x128xf32, #tpu.memory_space<vmem>>, vector<1x8x128xf32>
    %43 = vector.shape_cast %42 : vector<1x8x128xf32> to vector<8x128xf32>
    %44 = vector.shape_cast %41 : vector<8x128xf32> to vector<1x8x128xf32>
    tpu.vector_store %arg6[%c0_17, %c0_18, %c0_19], %44 {strides = array<i32>} : memref<16x8x128xf32, #tpu.memory_space<vmem>>, vector<1x8x128xf32>,
    %c1 = arith.constant 1 : index
    %c0_20 = arith.constant 0 : index
    %c0_21 = arith.constant 0 : index
    %45 = vector.load %arg2[%c1, %c0_20, %c0_21] : memref<16x8x16xbf16, #tpu.memory_space<vmem>>, vector<1x8x16xbf16>
    %46 = vector.shape_cast %45 : vector<1x8x16xbf16> to vector<8x16xbf16>
    %cst_22 = arith.constant dense<0.000000e+00> : vector<8x512xf32>
    %47 = tpu.matmul %46, %3, %cst_22 {dimension_numbers = #tpu.dot_dimension_numbers<[1], [0], [0], [1], [0, 0, 1, 1], [], []>} : vector<8x16xbf16>, vector<16x512xbf16>, vector<8x512xf32> -> vector<8x512xf32>
    %48 = arith.truncf %41 : vector<8x128xf32> to vector<8x128xbf16>
    %cst_23 = arith.constant dense<0.000000e+00> : vector<8x512xf32>
    %49 = tpu.matmul %48, %4, %cst_23 {dimension_numbers = #tpu.dot_dimension_numbers<[1], [0], [0], [1], [0, 0, 1, 1], [], []>} : vector<8x128xbf16>, vector<128x512xbf16>, vector<8x512xf32> -> vector<8x512xf32>
    %50 = arith.addf %47, %49 : vector<8x512xf32>
    %51 = arith.addf %50, %7 : vector<8x512xf32>
    %52 = vector.extract_strided_slice %51 {offsets = [0, 0], sizes = [8, 128], strides = [1, 1]} : vector<8x512xf32> to vector<8x128xf32>
    %53 = arith.negf %52 : vector<8x128xf32>
    %54 = math.exp %53 : vector<8x128xf32>
    %cst_24 = arith.constant 1.000000e+00 : f32
    %55 = vector.broadcast %cst_24 : f32 to vector<8x128xf32>
    %56 = arith.addf %55, %54 : vector<8x128xf32>
    %57 = arith.divf %55, %56 : vector<8x128xf32>
    %58 = vector.extract_strided_slice %51 {offsets = [0, 128], sizes = [8, 128], strides = [1, 1]} : vector<8x512xf32> to vector<8x128xf32>
    %59 = arith.negf %58 : vector<8x128xf32>
    %60 = math.exp %59 : vector<8x128xf32>
    %cst_25 = arith.constant 1.000000e+00 : f32
    %61 = vector.broadcast %cst_25 : f32 to vector<8x128xf32>
    %62 = arith.addf %61, %60 : vector<8x128xf32>
    %63 = arith.divf %61, %62 : vector<8x128xf32>
    %64 = vector.extract_strided_slice %51 {offsets = [0, 256], sizes = [8, 128], strides = [1, 1]} : vector<8x512xf32> to vector<8x128xf32>
    %65 = math.tanh %64 : vector<8x128xf32>
    %66 = vector.extract_strided_slice %51 {offsets = [0, 384], sizes = [8, 128], strides = [1, 1]} : vector<8x512xf32> to vector<8x128xf32>
    %67 = arith.negf %66 : vector<8x128xf32>
    %68 = math.exp %67 : vector<8x128xf32>
    %cst_26 = arith.constant 1.000000e+00 : f32
    %69 = vector.broadcast %cst_26 : f32 to vector<8x128xf32>
    %70 = arith.addf %69, %68 : vector<8x128xf32>
    %71 = arith.divf %69, %70 : vector<8x128xf32>
    %72 = arith.mulf %63, %39 : vector<8x128xf32>
    %73 = arith.mulf %57, %65 : vector<8x128xf32>
    %74 = arith.addf %72, %73 : vector<8x128xf32>
    %75 = math.tanh %74 : vector<8x128xf32>
    %76 = arith.mulf %71, %75 : vector<8x128xf32>
    %c1_27 = arith.constant 1 : index
    %c0_28 = arith.constant 0 : index
    %c0_29 = arith.constant 0 : index
    %77 = vector.load %arg6[%c1_27, %c0_28, %c0_29] : memref<16x8x128xf32, #tpu.memory_space<vmem>>, vector<1x8x128xf32>
    %78 = vector.shape_cast %77 : vector<1x8x128xf32> to vector<8x128xf32>
    %79 = vector.shape_cast %76 : vector<8x128xf32> to vector<1x8x128xf32>
    tpu.vector_store %arg6[%c1_27, %c0_28, %c0_29], %79 {strides = array<i32>} : memref<16x8x128xf32, #tpu.memory_space<vmem>>, vector<1x8x128xf32>,
    %c2 = arith.constant 2 : index
    %c0_30 = arith.constant 0 : index
    %c0_31 = arith.constant 0 : index
    %80 = vector.load %arg2[%c2, %c0_30, %c0_31] : memref<16x8x16xbf16, #tpu.memory_space<vmem>>, vector<1x8x16xbf16>
    %81 = vector.shape_cast %80 : vector<1x8x16xbf16> to vector<8x16xbf16>
    %cst_32 = arith.constant dense<0.000000e+00> : vector<8x512xf32>
    %82 = tpu.matmul %81, %3, %cst_32 {dimension_numbers = #tpu.dot_dimension_numbers<[1], [0], [0], [1], [0, 0, 1, 1], [], []>} : vector<8x16xbf16>, vector<16x512xbf16>, vector<8x512xf32> -> vector<8x512xf32>
    %83 = arith.truncf %76 : vector<8x128xf32> to vector<8x128xbf16>
    %cst_33 = arith.constant dense<0.000000e+00> : vector<8x512xf32>
    %84 = tpu.matmul %83, %4, %cst_33 {dimension_numbers = #tpu.dot_dimension_numbers<[1], [0], [0], [1], [0, 0, 1, 1], [], []>} : vector<8x128xbf16>, vector<128x512xbf16>, vector<8x512xf32> -> vector<8x512xf32>
    %85 = arith.addf %82, %84 : vector<8x512xf32>
    %86 = arith.addf %85, %7 : vector<8x512xf32>
    %87 = vector.extract_strided_slice %86 {offsets = [0, 0], sizes = [8, 128], strides = [1, 1]} : vector<8x512xf32> to vector<8x128xf32>
    %88 = arith.negf %87 : vector<8x128xf32>
    %89 = math.exp %88 : vector<8x128xf32>
    %cst_34 = arith.constant 1.000000e+00 : f32
    %90 = vector.broadcast %cst_34 : f32 to vector<8x128xf32>
    %91 = arith.addf %90, %89 : vector<8x128xf32>
    %92 = arith.divf %90, %91 : vector<8x128xf32>
    %93 = vector.extract_strided_slice %86 {offsets = [0, 128], sizes = [8, 128], strides = [1, 1]} : vector<8x512xf32> to vector<8x128xf32>
    %94 = arith.negf %93 : vector<8x128xf32>
    %95 = math.exp %94 : vector<8x128xf32>
    %cst_35 = arith.constant 1.000000e+00 : f32
    %96 = vector.broadcast %cst_35 : f32 to vector<8x128xf32>
    %97 = arith.addf %96, %95 : vector<8x128xf32>
    %98 = arith.divf %96, %97 : vector<8x128xf32>
    %99 = vector.extract_strided_slice %86 {offsets = [0, 256], sizes = [8, 128], strides = [1, 1]} : vector<8x512xf32> to vector<8x128xf32>
    %100 = math.tanh %99 : vector<8x128xf32>
    %101 = vector.extract_strided_slice %86 {offsets = [0, 384], sizes = [8, 128], strides = [1, 1]} : vector<8x512xf32> to vector<8x128xf32>
    %102 = arith.negf %101 : vector<8x128xf32>
    %103 = math.exp %102 : vector<8x128xf32>
    %cst_36 = arith.constant 1.000000e+00 : f32
    %104 = vector.broadcast %cst_36 : f32 to vector<8x128xf32>
    %105 = arith.addf %104, %103 : vector<8x128xf32>
    %106 = arith.divf %104, %105 : vector<8x128xf32>
    %107 = arith.mulf %98, %74 : vector<8x128xf32>
    %108 = arith.mulf %92, %100 : vector<8x128xf32>
    %109 = arith.addf %107, %108 : vector<8x128xf32>
    %110 = math.tanh %109 : vector<8x128xf32>
    %111 = arith.mulf %106, %110 : vector<8x128xf32>
    %c2_37 = arith.constant 2 : index
    %c0_38 = arith.constant 0 : index
    %c0_39 = arith.constant 0 : index
    %112 = vector.load %arg6[%c2_37, %c0_38, %c0_39] : memref<16x8x128xf32, #tpu.memory_space<vmem>>, vector<1x8x128xf32>
    %113 = vector.shape_cast %112 : vector<1x8x128xf32> to vector<8x128xf32>
    %114 = vector.shape_cast %111 : vector<8x128xf32> to vector<1x8x128xf32>
    tpu.vector_store %arg6[%c2_37, %c0_38, %c0_39], %114 {strides = array<i32>} : memref<16x8x128xf32, #tpu.memory_space<vmem>>, vector<1x8x128xf32>,
    %c3 = arith.constant 3 : index
    %c0_40 = arith.constant 0 : index
    %c0_41 = arith.constant 0 : index
    %115 = vector.load %arg2[%c3, %c0_40, %c0_41] : memref<16x8x16xbf16, #tpu.memory_space<vmem>>, vector<1x8x16xbf16>
    %116 = vector.shape_cast %115 : vector<1x8x16xbf16> to vector<8x16xbf16>
    %cst_42 = arith.constant dense<0.000000e+00> : vector<8x512xf32>
    %117 = tpu.matmul %116, %3, %cst_42 {dimension_numbers = #tpu.dot_dimension_numbers<[1], [0], [0], [1], [0, 0, 1, 1], [], []>} : vector<8x16xbf16>, vector<16x512xbf16>, vector<8x512xf32> -> vector<8x512xf32>
    %118 = arith.truncf %111 : vector<8x128xf32> to vector<8x128xbf16>
    %cst_43 = arith.constant dense<0.000000e+00> : vector<8x512xf32>
    %119 = tpu.matmul %118, %4, %cst_43 {dimension_numbers = #tpu.dot_dimension_numbers<[1], [0], [0], [1], [0, 0, 1, 1], [], []>} : vector<8x128xbf16>, vector<128x512xbf16>, vector<8x512xf32> -> vector<8x512xf32>
    %120 = arith.addf %117, %119 : vector<8x512xf32>
    %121 = arith.addf %120, %7 : vector<8x512xf32>
    %122 = vector.extract_strided_slice %121 {offsets = [0, 0], sizes = [8, 128], strides = [1, 1]} : vector<8x512xf32> to vector<8x128xf32>
    %123 = arith.negf %122 : vector<8x128xf32>
    %124 = math.exp %123 : vector<8x128xf32>
    %cst_44 = arith.constant 1.000000e+00 : f32
    %125 = vector.broadcast %cst_44 : f32 to vector<8x128xf32>
    %126 = arith.addf %125, %124 : vector<8x128xf32>
    %127 = arith.divf %125, %126 : vector<8x128xf32>
    %128 = vector.extract_strided_slice %121 {offsets = [0, 128], sizes = [8, 128], strides = [1, 1]} : vector<8x512xf32> to vector<8x128xf32>
    %129 = arith.negf %128 : vector<8x128xf32>
    %130 = math.exp %129 : vector<8x128xf32>
    %cst_45 = arith.constant 1.000000e+00 : f32
    %131 = vector.broadcast %cst_45 : f32 to vector<8x128xf32>
    %132 = arith.addf %131, %130 : vector<8x128xf32>
    %133 = arith.divf %131, %132 : vector<8x128xf32>
    %134 = vector.extract_strided_slice %121 {offsets = [0, 256], sizes = [8, 128], strides = [1, 1]} : vector<8x512xf32> to vector<8x128xf32>
    %135 = math.tanh %134 : vector<8x128xf32>
    %136 = vector.extract_strided_slice %121 {offsets = [0, 384], sizes = [8, 128], strides = [1, 1]} : vector<8x512xf32> to vector<8x128xf32>
    %137 = arith.negf %136 : vector<8x128xf32>
    %138 = math.exp %137 : vector<8x128xf32>
    %cst_46 = arith.constant 1.000000e+00 : f32
    %139 = vector.broadcast %cst_46 : f32 to vector<8x128xf32>
    %140 = arith.addf %139, %138 : vector<8x128xf32>
    %141 = arith.divf %139, %140 : vector<8x128xf32>
    %142 = arith.mulf %133, %109 : vector<8x128xf32>
    %143 = arith.mulf %127, %135 : vector<8x128xf32>
    %144 = arith.addf %142, %143 : vector<8x128xf32>
    %145 = math.tanh %144 : vector<8x128xf32>
    %146 = arith.mulf %141, %145 : vector<8x128xf32>
    %c3_47 = arith.constant 3 : index
    %c0_48 = arith.constant 0 : index
    %c0_49 = arith.constant 0 : index
    %147 = vector.load %arg6[%c3_47, %c0_48, %c0_49] : memref<16x8x128xf32, #tpu.memory_space<vmem>>, vector<1x8x128xf32>
    %148 = vector.shape_cast %147 : vector<1x8x128xf32> to vector<8x128xf32>
    %149 = vector.shape_cast %146 : vector<8x128xf32> to vector<1x8x128xf32>
    tpu.vector_store %arg6[%c3_47, %c0_48, %c0_49], %149 {strides = array<i32>} : memref<16x8x128xf32, #tpu.memory_space<vmem>>, vector<1x8x128xf32>,
    %c4 = arith.constant 4 : index
    %c0_50 = arith.constant 0 : index
    %c0_51 = arith.constant 0 : index
    %150 = vector.load %arg2[%c4, %c0_50, %c0_51] : memref<16x8x16xbf16, #tpu.memory_space<vmem>>, vector<1x8x16xbf16>
    %151 = vector.shape_cast %150 : vector<1x8x16xbf16> to vector<8x16xbf16>
    %cst_52 = arith.constant dense<0.000000e+00> : vector<8x512xf32>
    %152 = tpu.matmul %151, %3, %cst_52 {dimension_numbers = #tpu.dot_dimension_numbers<[1], [0], [0], [1], [0, 0, 1, 1], [], []>} : vector<8x16xbf16>, vector<16x512xbf16>, vector<8x512xf32> -> vector<8x512xf32>
    %153 = arith.truncf %146 : vector<8x128xf32> to vector<8x128xbf16>
    %cst_53 = arith.constant dense<0.000000e+00> : vector<8x512xf32>
    %154 = tpu.matmul %153, %4, %cst_53 {dimension_numbers = #tpu.dot_dimension_numbers<[1], [0], [0], [1], [0, 0, 1, 1], [], []>} : vector<8x128xbf16>, vector<128x512xbf16>, vector<8x512xf32> -> vector<8x512xf32>
    %155 = arith.addf %152, %154 : vector<8x512xf32>
    %156 = arith.addf %155, %7 : vector<8x512xf32>
    %157 = vector.extract_strided_slice %156 {offsets = [0, 0], sizes = [8, 128], strides = [1, 1]} : vector<8x512xf32> to vector<8x128xf32>
    %158 = arith.negf %157 : vector<8x128xf32>
    %159 = math.exp %158 : vector<8x128xf32>
    %cst_54 = arith.constant 1.000000e+00 : f32
    %160 = vector.broadcast %cst_54 : f32 to vector<8x128xf32>
    %161 = arith.addf %160, %159 : vector<8x128xf32>
    %162 = arith.divf %160, %161 : vector<8x128xf32>
    %163 = vector.extract_strided_slice %156 {offsets = [0, 128], sizes = [8, 128], strides = [1, 1]} : vector<8x512xf32> to vector<8x128xf32>
    %164 = arith.negf %163 : vector<8x128xf32>
    %165 = math.exp %164 : vector<8x128xf32>
    %cst_55 = arith.constant 1.000000e+00 : f32
    %166 = vector.broadcast %cst_55 : f32 to vector<8x128xf32>
    %167 = arith.addf %166, %165 : vector<8x128xf32>
    %168 = arith.divf %166, %167 : vector<8x128xf32>
    %169 = vector.extract_strided_slice %156 {offsets = [0, 256], sizes = [8, 128], strides = [1, 1]} : vector<8x512xf32> to vector<8x128xf32>
    %170 = math.tanh %169 : vector<8x128xf32>
    %171 = vector.extract_strided_slice %156 {offsets = [0, 384], sizes = [8, 128], strides = [1, 1]} : vector<8x512xf32> to vector<8x128xf32>
    %172 = arith.negf %171 : vector<8x128xf32>
    %173 = math.exp %172 : vector<8x128xf32>
    %cst_56 = arith.constant 1.000000e+00 : f32
    %174 = vector.broadcast %cst_56 : f32 to vector<8x128xf32>
    %175 = arith.addf %174, %173 : vector<8x128xf32>
    %176 = arith.divf %174, %175 : vector<8x128xf32>
    %177 = arith.mulf %168, %144 : vector<8x128xf32>
    %178 = arith.mulf %162, %170 : vector<8x128xf32>
    %179 = arith.addf %177, %178 : vector<8x128xf32>
    %180 = math.tanh %179 : vector<8x128xf32>
    %181 = arith.mulf %176, %180 : vector<8x128xf32>
    %c4_57 = arith.constant 4 : index
    %c0_58 = arith.constant 0 : index
    %c0_59 = arith.constant 0 : index
    %182 = vector.load %arg6[%c4_57, %c0_58, %c0_59] : memref<16x8x128xf32, #tpu.memory_space<vmem>>, vector<1x8x128xf32>
    %183 = vector.shape_cast %182 : vector<1x8x128xf32> to vector<8x128xf32>
    %184 = vector.shape_cast %181 : vector<8x128xf32> to vector<1x8x128xf32>
    tpu.vector_store %arg6[%c4_57, %c0_58, %c0_59], %184 {strides = array<i32>} : memref<16x8x128xf32, #tpu.memory_space<vmem>>, vector<1x8x128xf32>,
    %c5 = arith.constant 5 : index
    %c0_60 = arith.constant 0 : index
    %c0_61 = arith.constant 0 : index
    %185 = vector.load %arg2[%c5, %c0_60, %c0_61] : memref<16x8x16xbf16, #tpu.memory_space<vmem>>, vector<1x8x16xbf16>
    %186 = vector.shape_cast %185 : vector<1x8x16xbf16> to vector<8x16xbf16>
    %cst_62 = arith.constant dense<0.000000e+00> : vector<8x512xf32>
    %187 = tpu.matmul %186, %3, %cst_62 {dimension_numbers = #tpu.dot_dimension_numbers<[1], [0], [0], [1], [0, 0, 1, 1], [], []>} : vector<8x16xbf16>, vector<16x512xbf16>, vector<8x512xf32> -> vector<8x512xf32>
    %188 = arith.truncf %181 : vector<8x128xf32> to vector<8x128xbf16>
    %cst_63 = arith.constant dense<0.000000e+00> : vector<8x512xf32>
    %189 = tpu.matmul %188, %4, %cst_63 {dimension_numbers = #tpu.dot_dimension_numbers<[1], [0], [0], [1], [0, 0, 1, 1], [], []>} : vector<8x128xbf16>, vector<128x512xbf16>, vector<8x512xf32> -> vector<8x512xf32>
    %190 = arith.addf %187, %189 : vector<8x512xf32>
    %191 = arith.addf %190, %7 : vector<8x512xf32>
    %192 = vector.extract_strided_slice %191 {offsets = [0, 0], sizes = [8, 128], strides = [1, 1]} : vector<8x512xf32> to vector<8x128xf32>
    %193 = arith.negf %192 : vector<8x128xf32>
    %194 = math.exp %193 : vector<8x128xf32>
    %cst_64 = arith.constant 1.000000e+00 : f32
    %195 = vector.broadcast %cst_64 : f32 to vector<8x128xf32>
    %196 = arith.addf %195, %194 : vector<8x128xf32>
    %197 = arith.divf %195, %196 : vector<8x128xf32>
    %198 = vector.extract_strided_slice %191 {offsets = [0, 128], sizes = [8, 128], strides = [1, 1]} : vector<8x512xf32> to vector<8x128xf32>
    %199 = arith.negf %198 : vector<8x128xf32>
    %200 = math.exp %199 : vector<8x128xf32>
    %cst_65 = arith.constant 1.000000e+00 : f32
    %201 = vector.broadcast %cst_65 : f32 to vector<8x128xf32>
    %202 = arith.addf %201, %200 : vector<8x128xf32>
    %203 = arith.divf %201, %202 : vector<8x128xf32>
    %204 = vector.extract_strided_slice %191 {offsets = [0, 256], sizes = [8, 128], strides = [1, 1]} : vector<8x512xf32> to vector<8x128xf32>
    %205 = math.tanh %204 : vector<8x128xf32>
    %206 = vector.extract_strided_slice %191 {offsets = [0, 384], sizes = [8, 128], strides = [1, 1]} : vector<8x512xf32> to vector<8x128xf32>
    %207 = arith.negf %206 : vector<8x128xf32>
    %208 = math.exp %207 : vector<8x128xf32>
    %cst_66 = arith.constant 1.000000e+00 : f32
    %209 = vector.broadcast %cst_66 : f32 to vector<8x128xf32>
    %210 = arith.addf %209, %208 : vector<8x128xf32>
    %211 = arith.divf %209, %210 : vector<8x128xf32>
    %212 = arith.mulf %203, %179 : vector<8x128xf32>
    %213 = arith.mulf %197, %205 : vector<8x128xf32>
    %214 = arith.addf %212, %213 : vector<8x128xf32>
    %215 = math.tanh %214 : vector<8x128xf32>
    %216 = arith.mulf %211, %215 : vector<8x128xf32>
    %c5_67 = arith.constant 5 : index
    %c0_68 = arith.constant 0 : index
    %c0_69 = arith.constant 0 : index
    %217 = vector.load %arg6[%c5_67, %c0_68, %c0_69] : memref<16x8x128xf32, #tpu.memory_space<vmem>>, vector<1x8x128xf32>
    %218 = vector.shape_cast %217 : vector<1x8x128xf32> to vector<8x128xf32>
    %219 = vector.shape_cast %216 : vector<8x128xf32> to vector<1x8x128xf32>
    tpu.vector_store %arg6[%c5_67, %c0_68, %c0_69], %219 {strides = array<i32>} : memref<16x8x128xf32, #tpu.memory_space<vmem>>, vector<1x8x128xf32>,
    %c6 = arith.constant 6 : index
    %c0_70 = arith.constant 0 : index
    %c0_71 = arith.constant 0 : index
    %220 = vector.load %arg2[%c6, %c0_70, %c0_71] : memref<16x8x16xbf16, #tpu.memory_space<vmem>>, vector<1x8x16xbf16>
    %221 = vector.shape_cast %220 : vector<1x8x16xbf16> to vector<8x16xbf16>
    %cst_72 = arith.constant dense<0.000000e+00> : vector<8x512xf32>
    %222 = tpu.matmul %221, %3, %cst_72 {dimension_numbers = #tpu.dot_dimension_numbers<[1], [0], [0], [1], [0, 0, 1, 1], [], []>} : vector<8x16xbf16>, vector<16x512xbf16>, vector<8x512xf32> -> vector<8x512xf32>
    %223 = arith.truncf %216 : vector<8x128xf32> to vector<8x128xbf16>
    %cst_73 = arith.constant dense<0.000000e+00> : vector<8x512xf32>
    %224 = tpu.matmul %223, %4, %cst_73 {dimension_numbers = #tpu.dot_dimension_numbers<[1], [0], [0], [1], [0, 0, 1, 1], [], []>} : vector<8x128xbf16>, vector<128x512xbf16>, vector<8x512xf32> -> vector<8x512xf32>
    %225 = arith.addf %222, %224 : vector<8x512xf32>
    %226 = arith.addf %225, %7 : vector<8x512xf32>
    %227 = vector.extract_strided_slice %226 {offsets = [0, 0], sizes = [8, 128], strides = [1, 1]} : vector<8x512xf32> to vector<8x128xf32>
    %228 = arith.negf %227 : vector<8x128xf32>
    %229 = math.exp %228 : vector<8x128xf32>
    %cst_74 = arith.constant 1.000000e+00 : f32
    %230 = vector.broadcast %cst_74 : f32 to vector<8x128xf32>
    %231 = arith.addf %230, %229 : vector<8x128xf32>
    %232 = arith.divf %230, %231 : vector<8x128xf32>
    %233 = vector.extract_strided_slice %226 {offsets = [0, 128], sizes = [8, 128], strides = [1, 1]} : vector<8x512xf32> to vector<8x128xf32>
    %234 = arith.negf %233 : vector<8x128xf32>
    %235 = math.exp %234 : vector<8x128xf32>
    %cst_75 = arith.constant 1.000000e+00 : f32
    %236 = vector.broadcast %cst_75 : f32 to vector<8x128xf32>
    %237 = arith.addf %236, %235 : vector<8x128xf32>
    %238 = arith.divf %236, %237 : vector<8x128xf32>
    %239 = vector.extract_strided_slice %226 {offsets = [0, 256], sizes = [8, 128], strides = [1, 1]} : vector<8x512xf32> to vector<8x128xf32>
    %240 = math.tanh %239 : vector<8x128xf32>
    %241 = vector.extract_strided_slice %226 {offsets = [0, 384], sizes = [8, 128], strides = [1, 1]} : vector<8x512xf32> to vector<8x128xf32>
    %242 = arith.negf %241 : vector<8x128xf32>
    %243 = math.exp %242 : vector<8x128xf32>
    %cst_76 = arith.constant 1.000000e+00 : f32
    %244 = vector.broadcast %cst_76 : f32 to vector<8x128xf32>
    %245 = arith.addf %244, %243 : vector<8x128xf32>
    %246 = arith.divf %244, %245 : vector<8x128xf32>
    %247 = arith.mulf %238, %214 : vector<8x128xf32>
    %248 = arith.mulf %232, %240 : vector<8x128xf32>
    %249 = arith.addf %247, %248 : vector<8x128xf32>
    %250 = math.tanh %249 : vector<8x128xf32>
    %251 = arith.mulf %246, %250 : vector<8x128xf32>
    %c6_77 = arith.constant 6 : index
    %c0_78 = arith.constant 0 : index
    %c0_79 = arith.constant 0 : index
    %252 = vector.load %arg6[%c6_77, %c0_78, %c0_79] : memref<16x8x128xf32, #tpu.memory_space<vmem>>, vector<1x8x128xf32>
    %253 = vector.shape_cast %252 : vector<1x8x128xf32> to vector<8x128xf32>
    %254 = vector.shape_cast %251 : vector<8x128xf32> to vector<1x8x128xf32>
    tpu.vector_store %arg6[%c6_77, %c0_78, %c0_79], %254 {strides = array<i32>} : memref<16x8x128xf32, #tpu.memory_space<vmem>>, vector<1x8x128xf32>,
    %c7 = arith.constant 7 : index
    %c0_80 = arith.constant 0 : index
    %c0_81 = arith.constant 0 : index
    %255 = vector.load %arg2[%c7, %c0_80, %c0_81] : memref<16x8x16xbf16, #tpu.memory_space<vmem>>, vector<1x8x16xbf16>
    %256 = vector.shape_cast %255 : vector<1x8x16xbf16> to vector<8x16xbf16>
    %cst_82 = arith.constant dense<0.000000e+00> : vector<8x512xf32>
    %257 = tpu.matmul %256, %3, %cst_82 {dimension_numbers = #tpu.dot_dimension_numbers<[1], [0], [0], [1], [0, 0, 1, 1], [], []>} : vector<8x16xbf16>, vector<16x512xbf16>, vector<8x512xf32> -> vector<8x512xf32>
    %258 = arith.truncf %251 : vector<8x128xf32> to vector<8x128xbf16>
    %cst_83 = arith.constant dense<0.000000e+00> : vector<8x512xf32>
    %259 = tpu.matmul %258, %4, %cst_83 {dimension_numbers = #tpu.dot_dimension_numbers<[1], [0], [0], [1], [0, 0, 1, 1], [], []>} : vector<8x128xbf16>, vector<128x512xbf16>, vector<8x512xf32> -> vector<8x512xf32>
    %260 = arith.addf %257, %259 : vector<8x512xf32>
    %261 = arith.addf %260, %7 : vector<8x512xf32>
    %262 = vector.extract_strided_slice %261 {offsets = [0, 0], sizes = [8, 128], strides = [1, 1]} : vector<8x512xf32> to vector<8x128xf32>
    %263 = arith.negf %262 : vector<8x128xf32>
    %264 = math.exp %263 : vector<8x128xf32>
    %cst_84 = arith.constant 1.000000e+00 : f32
    %265 = vector.broadcast %cst_84 : f32 to vector<8x128xf32>
    %266 = arith.addf %265, %264 : vector<8x128xf32>
    %267 = arith.divf %265, %266 : vector<8x128xf32>
    %268 = vector.extract_strided_slice %261 {offsets = [0, 128], sizes = [8, 128], strides = [1, 1]} : vector<8x512xf32> to vector<8x128xf32>
    %269 = arith.negf %268 : vector<8x128xf32>
    %270 = math.exp %269 : vector<8x128xf32>
    %cst_85 = arith.constant 1.000000e+00 : f32
    %271 = vector.broadcast %cst_85 : f32 to vector<8x128xf32>
    %272 = arith.addf %271, %270 : vector<8x128xf32>
    %273 = arith.divf %271, %272 : vector<8x128xf32>
    %274 = vector.extract_strided_slice %261 {offsets = [0, 256], sizes = [8, 128], strides = [1, 1]} : vector<8x512xf32> to vector<8x128xf32>
    %275 = math.tanh %274 : vector<8x128xf32>
    %276 = vector.extract_strided_slice %261 {offsets = [0, 384], sizes = [8, 128], strides = [1, 1]} : vector<8x512xf32> to vector<8x128xf32>
    %277 = arith.negf %276 : vector<8x128xf32>
    %278 = math.exp %277 : vector<8x128xf32>
    %cst_86 = arith.constant 1.000000e+00 : f32
    %279 = vector.broadcast %cst_86 : f32 to vector<8x128xf32>
    %280 = arith.addf %279, %278 : vector<8x128xf32>
    %281 = arith.divf %279, %280 : vector<8x128xf32>
    %282 = arith.mulf %273, %249 : vector<8x128xf32>
    %283 = arith.mulf %267, %275 : vector<8x128xf32>
    %284 = arith.addf %282, %283 : vector<8x128xf32>
    %285 = math.tanh %284 : vector<8x128xf32>
    %286 = arith.mulf %281, %285 : vector<8x128xf32>
    %c7_87 = arith.constant 7 : index
    %c0_88 = arith.constant 0 : index
    %c0_89 = arith.constant 0 : index
    %287 = vector.load %arg6[%c7_87, %c0_88, %c0_89] : memref<16x8x128xf32, #tpu.memory_space<vmem>>, vector<1x8x128xf32>
    %288 = vector.shape_cast %287 : vector<1x8x128xf32> to vector<8x128xf32>
    %289 = vector.shape_cast %286 : vector<8x128xf32> to vector<1x8x128xf32>
    tpu.vector_store %arg6[%c7_87, %c0_88, %c0_89], %289 {strides = array<i32>} : memref<16x8x128xf32, #tpu.memory_space<vmem>>, vector<1x8x128xf32>,
    %c8 = arith.constant 8 : index
    %c0_90 = arith.constant 0 : index
    %c0_91 = arith.constant 0 : index
    %290 = vector.load %arg2[%c8, %c0_90, %c0_91] : memref<16x8x16xbf16, #tpu.memory_space<vmem>>, vector<1x8x16xbf16>
    %291 = vector.shape_cast %290 : vector<1x8x16xbf16> to vector<8x16xbf16>
    %cst_92 = arith.constant dense<0.000000e+00> : vector<8x512xf32>
    %292 = tpu.matmul %291, %3, %cst_92 {dimension_numbers = #tpu.dot_dimension_numbers<[1], [0], [0], [1], [0, 0, 1, 1], [], []>} : vector<8x16xbf16>, vector<16x512xbf16>, vector<8x512xf32> -> vector<8x512xf32>
    %293 = arith.truncf %286 : vector<8x128xf32> to vector<8x128xbf16>
    %cst_93 = arith.constant dense<0.000000e+00> : vector<8x512xf32>
    %294 = tpu.matmul %293, %4, %cst_93 {dimension_numbers = #tpu.dot_dimension_numbers<[1], [0], [0], [1], [0, 0, 1, 1], [], []>} : vector<8x128xbf16>, vector<128x512xbf16>, vector<8x512xf32> -> vector<8x512xf32>
    %295 = arith.addf %292, %294 : vector<8x512xf32>
    %296 = arith.addf %295, %7 : vector<8x512xf32>
    %297 = vector.extract_strided_slice %296 {offsets = [0, 0], sizes = [8, 128], strides = [1, 1]} : vector<8x512xf32> to vector<8x128xf32>
    %298 = arith.negf %297 : vector<8x128xf32>
    %299 = math.exp %298 : vector<8x128xf32>
    %cst_94 = arith.constant 1.000000e+00 : f32
    %300 = vector.broadcast %cst_94 : f32 to vector<8x128xf32>
    %301 = arith.addf %300, %299 : vector<8x128xf32>
    %302 = arith.divf %300, %301 : vector<8x128xf32>
    %303 = vector.extract_strided_slice %296 {offsets = [0, 128], sizes = [8, 128], strides = [1, 1]} : vector<8x512xf32> to vector<8x128xf32>
    %304 = arith.negf %303 : vector<8x128xf32>
    %305 = math.exp %304 : vector<8x128xf32>
    %cst_95 = arith.constant 1.000000e+00 : f32
    %306 = vector.broadcast %cst_95 : f32 to vector<8x128xf32>
    %307 = arith.addf %306, %305 : vector<8x128xf32>
    %308 = arith.divf %306, %307 : vector<8x128xf32>
    %309 = vector.extract_strided_slice %296 {offsets = [0, 256], sizes = [8, 128], strides = [1, 1]} : vector<8x512xf32> to vector<8x128xf32>
    %310 = math.tanh %309 : vector<8x128xf32>
    %311 = vector.extract_strided_slice %296 {offsets = [0, 384], sizes = [8, 128], strides = [1, 1]} : vector<8x512xf32> to vector<8x128xf32>
    %312 = arith.negf %311 : vector<8x128xf32>
    %313 = math.exp %312 : vector<8x128xf32>
    %cst_96 = arith.constant 1.000000e+00 : f32
    %314 = vector.broadcast %cst_96 : f32 to vector<8x128xf32>
    %315 = arith.addf %314, %313 : vector<8x128xf32>
    %316 = arith.divf %314, %315 : vector<8x128xf32>
    %317 = arith.mulf %308, %284 : vector<8x128xf32>
    %318 = arith.mulf %302, %310 : vector<8x128xf32>
    %319 = arith.addf %317, %318 : vector<8x128xf32>
    %320 = math.tanh %319 : vector<8x128xf32>
    %321 = arith.mulf %316, %320 : vector<8x128xf32>
    %c8_97 = arith.constant 8 : index
    %c0_98 = arith.constant 0 : index
    %c0_99 = arith.constant 0 : index
    %322 = vector.load %arg6[%c8_97, %c0_98, %c0_99] : memref<16x8x128xf32, #tpu.memory_space<vmem>>, vector<1x8x128xf32>
    %323 = vector.shape_cast %322 : vector<1x8x128xf32> to vector<8x128xf32>
    %324 = vector.shape_cast %321 : vector<8x128xf32> to vector<1x8x128xf32>
    tpu.vector_store %arg6[%c8_97, %c0_98, %c0_99], %324 {strides = array<i32>} : memref<16x8x128xf32, #tpu.memory_space<vmem>>, vector<1x8x128xf32>,
    %c9 = arith.constant 9 : index
    %c0_100 = arith.constant 0 : index
    %c0_101 = arith.constant 0 : index
    %325 = vector.load %arg2[%c9, %c0_100, %c0_101] : memref<16x8x16xbf16, #tpu.memory_space<vmem>>, vector<1x8x16xbf16>
    %326 = vector.shape_cast %325 : vector<1x8x16xbf16> to vector<8x16xbf16>
    %cst_102 = arith.constant dense<0.000000e+00> : vector<8x512xf32>
    %327 = tpu.matmul %326, %3, %cst_102 {dimension_numbers = #tpu.dot_dimension_numbers<[1], [0], [0], [1], [0, 0, 1, 1], [], []>} : vector<8x16xbf16>, vector<16x512xbf16>, vector<8x512xf32> -> vector<8x512xf32>
    %328 = arith.truncf %321 : vector<8x128xf32> to vector<8x128xbf16>
    %cst_103 = arith.constant dense<0.000000e+00> : vector<8x512xf32>
    %329 = tpu.matmul %328, %4, %cst_103 {dimension_numbers = #tpu.dot_dimension_numbers<[1], [0], [0], [1], [0, 0, 1, 1], [], []>} : vector<8x128xbf16>, vector<128x512xbf16>, vector<8x512xf32> -> vector<8x512xf32>
    %330 = arith.addf %327, %329 : vector<8x512xf32>
    %331 = arith.addf %330, %7 : vector<8x512xf32>
    %332 = vector.extract_strided_slice %331 {offsets = [0, 0], sizes = [8, 128], strides = [1, 1]} : vector<8x512xf32> to vector<8x128xf32>
    %333 = arith.negf %332 : vector<8x128xf32>
    %334 = math.exp %333 : vector<8x128xf32>
    %cst_104 = arith.constant 1.000000e+00 : f32
    %335 = vector.broadcast %cst_104 : f32 to vector<8x128xf32>
    %336 = arith.addf %335, %334 : vector<8x128xf32>
    %337 = arith.divf %335, %336 : vector<8x128xf32>
    %338 = vector.extract_strided_slice %331 {offsets = [0, 128], sizes = [8, 128], strides = [1, 1]} : vector<8x512xf32> to vector<8x128xf32>
    %339 = arith.negf %338 : vector<8x128xf32>
    %340 = math.exp %339 : vector<8x128xf32>
    %cst_105 = arith.constant 1.000000e+00 : f32
    %341 = vector.broadcast %cst_105 : f32 to vector<8x128xf32>
    %342 = arith.addf %341, %340 : vector<8x128xf32>
    %343 = arith.divf %341, %342 : vector<8x128xf32>
    %344 = vector.extract_strided_slice %331 {offsets = [0, 256], sizes = [8, 128], strides = [1, 1]} : vector<8x512xf32> to vector<8x128xf32>
    %345 = math.tanh %344 : vector<8x128xf32>
    %346 = vector.extract_strided_slice %331 {offsets = [0, 384], sizes = [8, 128], strides = [1, 1]} : vector<8x512xf32> to vector<8x128xf32>
    %347 = arith.negf %346 : vector<8x128xf32>
    %348 = math.exp %347 : vector<8x128xf32>
    %cst_106 = arith.constant 1.000000e+00 : f32
    %349 = vector.broadcast %cst_106 : f32 to vector<8x128xf32>
    %350 = arith.addf %349, %348 : vector<8x128xf32>
    %351 = arith.divf %349, %350 : vector<8x128xf32>
    %352 = arith.mulf %343, %319 : vector<8x128xf32>
    %353 = arith.mulf %337, %345 : vector<8x128xf32>
    %354 = arith.addf %352, %353 : vector<8x128xf32>
    %355 = math.tanh %354 : vector<8x128xf32>
    %356 = arith.mulf %351, %355 : vector<8x128xf32>
    %c9_107 = arith.constant 9 : index
    %c0_108 = arith.constant 0 : index
    %c0_109 = arith.constant 0 : index
    %357 = vector.load %arg6[%c9_107, %c0_108, %c0_109] : memref<16x8x128xf32, #tpu.memory_space<vmem>>, vector<1x8x128xf32>
    %358 = vector.shape_cast %357 : vector<1x8x128xf32> to vector<8x128xf32>
    %359 = vector.shape_cast %356 : vector<8x128xf32> to vector<1x8x128xf32>
    tpu.vector_store %arg6[%c9_107, %c0_108, %c0_109], %359 {strides = array<i32>} : memref<16x8x128xf32, #tpu.memory_space<vmem>>, vector<1x8x128xf32>,
    %c10 = arith.constant 10 : index
    %c0_110 = arith.constant 0 : index
    %c0_111 = arith.constant 0 : index
    %360 = vector.load %arg2[%c10, %c0_110, %c0_111] : memref<16x8x16xbf16, #tpu.memory_space<vmem>>, vector<1x8x16xbf16>
    %361 = vector.shape_cast %360 : vector<1x8x16xbf16> to vector<8x16xbf16>
    %cst_112 = arith.constant dense<0.000000e+00> : vector<8x512xf32>
    %362 = tpu.matmul %361, %3, %cst_112 {dimension_numbers = #tpu.dot_dimension_numbers<[1], [0], [0], [1], [0, 0, 1, 1], [], []>} : vector<8x16xbf16>, vector<16x512xbf16>, vector<8x512xf32> -> vector<8x512xf32>
    %363 = arith.truncf %356 : vector<8x128xf32> to vector<8x128xbf16>
    %cst_113 = arith.constant dense<0.000000e+00> : vector<8x512xf32>
    %364 = tpu.matmul %363, %4, %cst_113 {dimension_numbers = #tpu.dot_dimension_numbers<[1], [0], [0], [1], [0, 0, 1, 1], [], []>} : vector<8x128xbf16>, vector<128x512xbf16>, vector<8x512xf32> -> vector<8x512xf32>
    %365 = arith.addf %362, %364 : vector<8x512xf32>
    %366 = arith.addf %365, %7 : vector<8x512xf32>
    %367 = vector.extract_strided_slice %366 {offsets = [0, 0], sizes = [8, 128], strides = [1, 1]} : vector<8x512xf32> to vector<8x128xf32>
    %368 = arith.negf %367 : vector<8x128xf32>
    %369 = math.exp %368 : vector<8x128xf32>
    %cst_114 = arith.constant 1.000000e+00 : f32
    %370 = vector.broadcast %cst_114 : f32 to vector<8x128xf32>
    %371 = arith.addf %370, %369 : vector<8x128xf32>
    %372 = arith.divf %370, %371 : vector<8x128xf32>
    %373 = vector.extract_strided_slice %366 {offsets = [0, 128], sizes = [8, 128], strides = [1, 1]} : vector<8x512xf32> to vector<8x128xf32>
    %374 = arith.negf %373 : vector<8x128xf32>
    %375 = math.exp %374 : vector<8x128xf32>
    %cst_115 = arith.constant 1.000000e+00 : f32
    %376 = vector.broadcast %cst_115 : f32 to vector<8x128xf32>
    %377 = arith.addf %376, %375 : vector<8x128xf32>
    %378 = arith.divf %376, %377 : vector<8x128xf32>
    %379 = vector.extract_strided_slice %366 {offsets = [0, 256], sizes = [8, 128], strides = [1, 1]} : vector<8x512xf32> to vector<8x128xf32>
    %380 = math.tanh %379 : vector<8x128xf32>
    %381 = vector.extract_strided_slice %366 {offsets = [0, 384], sizes = [8, 128], strides = [1, 1]} : vector<8x512xf32> to vector<8x128xf32>
    %382 = arith.negf %381 : vector<8x128xf32>
    %383 = math.exp %382 : vector<8x128xf32>
    %cst_116 = arith.constant 1.000000e+00 : f32
    %384 = vector.broadcast %cst_116 : f32 to vector<8x128xf32>
    %385 = arith.addf %384, %383 : vector<8x128xf32>
    %386 = arith.divf %384, %385 : vector<8x128xf32>
    %387 = arith.mulf %378, %354 : vector<8x128xf32>
    %388 = arith.mulf %372, %380 : vector<8x128xf32>
    %389 = arith.addf %387, %388 : vector<8x128xf32>
    %390 = math.tanh %389 : vector<8x128xf32>
    %391 = arith.mulf %386, %390 : vector<8x128xf32>
    %c10_117 = arith.constant 10 : index
    %c0_118 = arith.constant 0 : index
    %c0_119 = arith.constant 0 : index
    %392 = vector.load %arg6[%c10_117, %c0_118, %c0_119] : memref<16x8x128xf32, #tpu.memory_space<vmem>>, vector<1x8x128xf32>
    %393 = vector.shape_cast %392 : vector<1x8x128xf32> to vector<8x128xf32>
    %394 = vector.shape_cast %391 : vector<8x128xf32> to vector<1x8x128xf32>
    tpu.vector_store %arg6[%c10_117, %c0_118, %c0_119], %394 {strides = array<i32>} : memref<16x8x128xf32, #tpu.memory_space<vmem>>, vector<1x8x128xf32>,
    %c11 = arith.constant 11 : index
    %c0_120 = arith.constant 0 : index
    %c0_121 = arith.constant 0 : index
    %395 = vector.load %arg2[%c11, %c0_120, %c0_121] : memref<16x8x16xbf16, #tpu.memory_space<vmem>>, vector<1x8x16xbf16>
    %396 = vector.shape_cast %395 : vector<1x8x16xbf16> to vector<8x16xbf16>
    %cst_122 = arith.constant dense<0.000000e+00> : vector<8x512xf32>
    %397 = tpu.matmul %396, %3, %cst_122 {dimension_numbers = #tpu.dot_dimension_numbers<[1], [0], [0], [1], [0, 0, 1, 1], [], []>} : vector<8x16xbf16>, vector<16x512xbf16>, vector<8x512xf32> -> vector<8x512xf32>
    %398 = arith.truncf %391 : vector<8x128xf32> to vector<8x128xbf16>
    %cst_123 = arith.constant dense<0.000000e+00> : vector<8x512xf32>
    %399 = tpu.matmul %398, %4, %cst_123 {dimension_numbers = #tpu.dot_dimension_numbers<[1], [0], [0], [1], [0, 0, 1, 1], [], []>} : vector<8x128xbf16>, vector<128x512xbf16>, vector<8x512xf32> -> vector<8x512xf32>
    %400 = arith.addf %397, %399 : vector<8x512xf32>
    %401 = arith.addf %400, %7 : vector<8x512xf32>
    %402 = vector.extract_strided_slice %401 {offsets = [0, 0], sizes = [8, 128], strides = [1, 1]} : vector<8x512xf32> to vector<8x128xf32>
    %403 = arith.negf %402 : vector<8x128xf32>
    %404 = math.exp %403 : vector<8x128xf32>
    %cst_124 = arith.constant 1.000000e+00 : f32
    %405 = vector.broadcast %cst_124 : f32 to vector<8x128xf32>
    %406 = arith.addf %405, %404 : vector<8x128xf32>
    %407 = arith.divf %405, %406 : vector<8x128xf32>
    %408 = vector.extract_strided_slice %401 {offsets = [0, 128], sizes = [8, 128], strides = [1, 1]} : vector<8x512xf32> to vector<8x128xf32>
    %409 = arith.negf %408 : vector<8x128xf32>
    %410 = math.exp %409 : vector<8x128xf32>
    %cst_125 = arith.constant 1.000000e+00 : f32
    %411 = vector.broadcast %cst_125 : f32 to vector<8x128xf32>
    %412 = arith.addf %411, %410 : vector<8x128xf32>
    %413 = arith.divf %411, %412 : vector<8x128xf32>
    %414 = vector.extract_strided_slice %401 {offsets = [0, 256], sizes = [8, 128], strides = [1, 1]} : vector<8x512xf32> to vector<8x128xf32>
    %415 = math.tanh %414 : vector<8x128xf32>
    %416 = vector.extract_strided_slice %401 {offsets = [0, 384], sizes = [8, 128], strides = [1, 1]} : vector<8x512xf32> to vector<8x128xf32>
    %417 = arith.negf %416 : vector<8x128xf32>
    %418 = math.exp %417 : vector<8x128xf32>
    %cst_126 = arith.constant 1.000000e+00 : f32
    %419 = vector.broadcast %cst_126 : f32 to vector<8x128xf32>
    %420 = arith.addf %419, %418 : vector<8x128xf32>
    %421 = arith.divf %419, %420 : vector<8x128xf32>
    %422 = arith.mulf %413, %389 : vector<8x128xf32>
    %423 = arith.mulf %407, %415 : vector<8x128xf32>
    %424 = arith.addf %422, %423 : vector<8x128xf32>
    %425 = math.tanh %424 : vector<8x128xf32>
    %426 = arith.mulf %421, %425 : vector<8x128xf32>
    %c11_127 = arith.constant 11 : index
    %c0_128 = arith.constant 0 : index
    %c0_129 = arith.constant 0 : index
    %427 = vector.load %arg6[%c11_127, %c0_128, %c0_129] : memref<16x8x128xf32, #tpu.memory_space<vmem>>, vector<1x8x128xf32>
    %428 = vector.shape_cast %427 : vector<1x8x128xf32> to vector<8x128xf32>
    %429 = vector.shape_cast %426 : vector<8x128xf32> to vector<1x8x128xf32>
    tpu.vector_store %arg6[%c11_127, %c0_128, %c0_129], %429 {strides = array<i32>} : memref<16x8x128xf32, #tpu.memory_space<vmem>>, vector<1x8x128xf32>,
    %c12 = arith.constant 12 : index
    %c0_130 = arith.constant 0 : index
    %c0_131 = arith.constant 0 : index
    %430 = vector.load %arg2[%c12, %c0_130, %c0_131] : memref<16x8x16xbf16, #tpu.memory_space<vmem>>, vector<1x8x16xbf16>
    %431 = vector.shape_cast %430 : vector<1x8x16xbf16> to vector<8x16xbf16>
    %cst_132 = arith.constant dense<0.000000e+00> : vector<8x512xf32>
    %432 = tpu.matmul %431, %3, %cst_132 {dimension_numbers = #tpu.dot_dimension_numbers<[1], [0], [0], [1], [0, 0, 1, 1], [], []>} : vector<8x16xbf16>, vector<16x512xbf16>, vector<8x512xf32> -> vector<8x512xf32>
    %433 = arith.truncf %426 : vector<8x128xf32> to vector<8x128xbf16>
    %cst_133 = arith.constant dense<0.000000e+00> : vector<8x512xf32>
    %434 = tpu.matmul %433, %4, %cst_133 {dimension_numbers = #tpu.dot_dimension_numbers<[1], [0], [0], [1], [0, 0, 1, 1], [], []>} : vector<8x128xbf16>, vector<128x512xbf16>, vector<8x512xf32> -> vector<8x512xf32>
    %435 = arith.addf %432, %434 : vector<8x512xf32>
    %436 = arith.addf %435, %7 : vector<8x512xf32>
    %437 = vector.extract_strided_slice %436 {offsets = [0, 0], sizes = [8, 128], strides = [1, 1]} : vector<8x512xf32> to vector<8x128xf32>
    %438 = arith.negf %437 : vector<8x128xf32>
    %439 = math.exp %438 : vector<8x128xf32>
    %cst_134 = arith.constant 1.000000e+00 : f32
    %440 = vector.broadcast %cst_134 : f32 to vector<8x128xf32>
    %441 = arith.addf %440, %439 : vector<8x128xf32>
    %442 = arith.divf %440, %441 : vector<8x128xf32>
    %443 = vector.extract_strided_slice %436 {offsets = [0, 128], sizes = [8, 128], strides = [1, 1]} : vector<8x512xf32> to vector<8x128xf32>
    %444 = arith.negf %443 : vector<8x128xf32>
    %445 = math.exp %444 : vector<8x128xf32>
    %cst_135 = arith.constant 1.000000e+00 : f32
    %446 = vector.broadcast %cst_135 : f32 to vector<8x128xf32>
    %447 = arith.addf %446, %445 : vector<8x128xf32>
    %448 = arith.divf %446, %447 : vector<8x128xf32>
    %449 = vector.extract_strided_slice %436 {offsets = [0, 256], sizes = [8, 128], strides = [1, 1]} : vector<8x512xf32> to vector<8x128xf32>
    %450 = math.tanh %449 : vector<8x128xf32>
    %451 = vector.extract_strided_slice %436 {offsets = [0, 384], sizes = [8, 128], strides = [1, 1]} : vector<8x512xf32> to vector<8x128xf32>
    %452 = arith.negf %451 : vector<8x128xf32>
    %453 = math.exp %452 : vector<8x128xf32>
    %cst_136 = arith.constant 1.000000e+00 : f32
    %454 = vector.broadcast %cst_136 : f32 to vector<8x128xf32>
    %455 = arith.addf %454, %453 : vector<8x128xf32>
    %456 = arith.divf %454, %455 : vector<8x128xf32>
    %457 = arith.mulf %448, %424 : vector<8x128xf32>
    %458 = arith.mulf %442, %450 : vector<8x128xf32>
    %459 = arith.addf %457, %458 : vector<8x128xf32>
    %460 = math.tanh %459 : vector<8x128xf32>
    %461 = arith.mulf %456, %460 : vector<8x128xf32>
    %c12_137 = arith.constant 12 : index
    %c0_138 = arith.constant 0 : index
    %c0_139 = arith.constant 0 : index
    %462 = vector.load %arg6[%c12_137, %c0_138, %c0_139] : memref<16x8x128xf32, #tpu.memory_space<vmem>>, vector<1x8x128xf32>
    %463 = vector.shape_cast %462 : vector<1x8x128xf32> to vector<8x128xf32>
    %464 = vector.shape_cast %461 : vector<8x128xf32> to vector<1x8x128xf32>
    tpu.vector_store %arg6[%c12_137, %c0_138, %c0_139], %464 {strides = array<i32>} : memref<16x8x128xf32, #tpu.memory_space<vmem>>, vector<1x8x128xf32>,
    %c13 = arith.constant 13 : index
    %c0_140 = arith.constant 0 : index
    %c0_141 = arith.constant 0 : index
    %465 = vector.load %arg2[%c13, %c0_140, %c0_141] : memref<16x8x16xbf16, #tpu.memory_space<vmem>>, vector<1x8x16xbf16>
    %466 = vector.shape_cast %465 : vector<1x8x16xbf16> to vector<8x16xbf16>
    %cst_142 = arith.constant dense<0.000000e+00> : vector<8x512xf32>
    %467 = tpu.matmul %466, %3, %cst_142 {dimension_numbers = #tpu.dot_dimension_numbers<[1], [0], [0], [1], [0, 0, 1, 1], [], []>} : vector<8x16xbf16>, vector<16x512xbf16>, vector<8x512xf32> -> vector<8x512xf32>
    %468 = arith.truncf %461 : vector<8x128xf32> to vector<8x128xbf16>
    %cst_143 = arith.constant dense<0.000000e+00> : vector<8x512xf32>
    %469 = tpu.matmul %468, %4, %cst_143 {dimension_numbers = #tpu.dot_dimension_numbers<[1], [0], [0], [1], [0, 0, 1, 1], [], []>} : vector<8x128xbf16>, vector<128x512xbf16>, vector<8x512xf32> -> vector<8x512xf32>
    %470 = arith.addf %467, %469 : vector<8x512xf32>
    %471 = arith.addf %470, %7 : vector<8x512xf32>
    %472 = vector.extract_strided_slice %471 {offsets = [0, 0], sizes = [8, 128], strides = [1, 1]} : vector<8x512xf32> to vector<8x128xf32>
    %473 = arith.negf %472 : vector<8x128xf32>
    %474 = math.exp %473 : vector<8x128xf32>
    %cst_144 = arith.constant 1.000000e+00 : f32
    %475 = vector.broadcast %cst_144 : f32 to vector<8x128xf32>
    %476 = arith.addf %475, %474 : vector<8x128xf32>
    %477 = arith.divf %475, %476 : vector<8x128xf32>
    %478 = vector.extract_strided_slice %471 {offsets = [0, 128], sizes = [8, 128], strides = [1, 1]} : vector<8x512xf32> to vector<8x128xf32>
    %479 = arith.negf %478 : vector<8x128xf32>
    %480 = math.exp %479 : vector<8x128xf32>
    %cst_145 = arith.constant 1.000000e+00 : f32
    %481 = vector.broadcast %cst_145 : f32 to vector<8x128xf32>
    %482 = arith.addf %481, %480 : vector<8x128xf32>
    %483 = arith.divf %481, %482 : vector<8x128xf32>
    %484 = vector.extract_strided_slice %471 {offsets = [0, 256], sizes = [8, 128], strides = [1, 1]} : vector<8x512xf32> to vector<8x128xf32>
    %485 = math.tanh %484 : vector<8x128xf32>
    %486 = vector.extract_strided_slice %471 {offsets = [0, 384], sizes = [8, 128], strides = [1, 1]} : vector<8x512xf32> to vector<8x128xf32>
    %487 = arith.negf %486 : vector<8x128xf32>
    %488 = math.exp %487 : vector<8x128xf32>
    %cst_146 = arith.constant 1.000000e+00 : f32
    %489 = vector.broadcast %cst_146 : f32 to vector<8x128xf32>
    %490 = arith.addf %489, %488 : vector<8x128xf32>
    %491 = arith.divf %489, %490 : vector<8x128xf32>
    %492 = arith.mulf %483, %459 : vector<8x128xf32>
    %493 = arith.mulf %477, %485 : vector<8x128xf32>
    %494 = arith.addf %492, %493 : vector<8x128xf32>
    %495 = math.tanh %494 : vector<8x128xf32>
    %496 = arith.mulf %491, %495 : vector<8x128xf32>
    %c13_147 = arith.constant 13 : index
    %c0_148 = arith.constant 0 : index
    %c0_149 = arith.constant 0 : index
    %497 = vector.load %arg6[%c13_147, %c0_148, %c0_149] : memref<16x8x128xf32, #tpu.memory_space<vmem>>, vector<1x8x128xf32>
    %498 = vector.shape_cast %497 : vector<1x8x128xf32> to vector<8x128xf32>
    %499 = vector.shape_cast %496 : vector<8x128xf32> to vector<1x8x128xf32>
    tpu.vector_store %arg6[%c13_147, %c0_148, %c0_149], %499 {strides = array<i32>} : memref<16x8x128xf32, #tpu.memory_space<vmem>>, vector<1x8x128xf32>,
    %c14 = arith.constant 14 : index
    %c0_150 = arith.constant 0 : index
    %c0_151 = arith.constant 0 : index
    %500 = vector.load %arg2[%c14, %c0_150, %c0_151] : memref<16x8x16xbf16, #tpu.memory_space<vmem>>, vector<1x8x16xbf16>
    %501 = vector.shape_cast %500 : vector<1x8x16xbf16> to vector<8x16xbf16>
    %cst_152 = arith.constant dense<0.000000e+00> : vector<8x512xf32>
    %502 = tpu.matmul %501, %3, %cst_152 {dimension_numbers = #tpu.dot_dimension_numbers<[1], [0], [0], [1], [0, 0, 1, 1], [], []>} : vector<8x16xbf16>, vector<16x512xbf16>, vector<8x512xf32> -> vector<8x512xf32>
    %503 = arith.truncf %496 : vector<8x128xf32> to vector<8x128xbf16>
    %cst_153 = arith.constant dense<0.000000e+00> : vector<8x512xf32>
    %504 = tpu.matmul %503, %4, %cst_153 {dimension_numbers = #tpu.dot_dimension_numbers<[1], [0], [0], [1], [0, 0, 1, 1], [], []>} : vector<8x128xbf16>, vector<128x512xbf16>, vector<8x512xf32> -> vector<8x512xf32>
    %505 = arith.addf %502, %504 : vector<8x512xf32>
    %506 = arith.addf %505, %7 : vector<8x512xf32>
    %507 = vector.extract_strided_slice %506 {offsets = [0, 0], sizes = [8, 128], strides = [1, 1]} : vector<8x512xf32> to vector<8x128xf32>
    %508 = arith.negf %507 : vector<8x128xf32>
    %509 = math.exp %508 : vector<8x128xf32>
    %cst_154 = arith.constant 1.000000e+00 : f32
    %510 = vector.broadcast %cst_154 : f32 to vector<8x128xf32>
    %511 = arith.addf %510, %509 : vector<8x128xf32>
    %512 = arith.divf %510, %511 : vector<8x128xf32>
    %513 = vector.extract_strided_slice %506 {offsets = [0, 128], sizes = [8, 128], strides = [1, 1]} : vector<8x512xf32> to vector<8x128xf32>
    %514 = arith.negf %513 : vector<8x128xf32>
    %515 = math.exp %514 : vector<8x128xf32>
    %cst_155 = arith.constant 1.000000e+00 : f32
    %516 = vector.broadcast %cst_155 : f32 to vector<8x128xf32>
    %517 = arith.addf %516, %515 : vector<8x128xf32>
    %518 = arith.divf %516, %517 : vector<8x128xf32>
    %519 = vector.extract_strided_slice %506 {offsets = [0, 256], sizes = [8, 128], strides = [1, 1]} : vector<8x512xf32> to vector<8x128xf32>
    %520 = math.tanh %519 : vector<8x128xf32>
    %521 = vector.extract_strided_slice %506 {offsets = [0, 384], sizes = [8, 128], strides = [1, 1]} : vector<8x512xf32> to vector<8x128xf32>
    %522 = arith.negf %521 : vector<8x128xf32>
    %523 = math.exp %522 : vector<8x128xf32>
    %cst_156 = arith.constant 1.000000e+00 : f32
    %524 = vector.broadcast %cst_156 : f32 to vector<8x128xf32>
    %525 = arith.addf %524, %523 : vector<8x128xf32>
    %526 = arith.divf %524, %525 : vector<8x128xf32>
    %527 = arith.mulf %518, %494 : vector<8x128xf32>
    %528 = arith.mulf %512, %520 : vector<8x128xf32>
    %529 = arith.addf %527, %528 : vector<8x128xf32>
    %530 = math.tanh %529 : vector<8x128xf32>
    %531 = arith.mulf %526, %530 : vector<8x128xf32>
    %c14_157 = arith.constant 14 : index
    %c0_158 = arith.constant 0 : index
    %c0_159 = arith.constant 0 : index
    %532 = vector.load %arg6[%c14_157, %c0_158, %c0_159] : memref<16x8x128xf32, #tpu.memory_space<vmem>>, vector<1x8x128xf32>
    %533 = vector.shape_cast %532 : vector<1x8x128xf32> to vector<8x128xf32>
    %534 = vector.shape_cast %531 : vector<8x128xf32> to vector<1x8x128xf32>
    tpu.vector_store %arg6[%c14_157, %c0_158, %c0_159], %534 {strides = array<i32>} : memref<16x8x128xf32, #tpu.memory_space<vmem>>, vector<1x8x128xf32>,
    %c15 = arith.constant 15 : index
    %c0_160 = arith.constant 0 : index
    %c0_161 = arith.constant 0 : index
    %535 = vector.load %arg2[%c15, %c0_160, %c0_161] : memref<16x8x16xbf16, #tpu.memory_space<vmem>>, vector<1x8x16xbf16>
    %536 = vector.shape_cast %535 : vector<1x8x16xbf16> to vector<8x16xbf16>
    %cst_162 = arith.constant dense<0.000000e+00> : vector<8x512xf32>
    %537 = tpu.matmul %536, %3, %cst_162 {dimension_numbers = #tpu.dot_dimension_numbers<[1], [0], [0], [1], [0, 0, 1, 1], [], []>} : vector<8x16xbf16>, vector<16x512xbf16>, vector<8x512xf32> -> vector<8x512xf32>
    %538 = arith.truncf %531 : vector<8x128xf32> to vector<8x128xbf16>
    %cst_163 = arith.constant dense<0.000000e+00> : vector<8x512xf32>
    %539 = tpu.matmul %538, %4, %cst_163 {dimension_numbers = #tpu.dot_dimension_numbers<[1], [0], [0], [1], [0, 0, 1, 1], [], []>} : vector<8x128xbf16>, vector<128x512xbf16>, vector<8x512xf32> -> vector<8x512xf32>
    %540 = arith.addf %537, %539 : vector<8x512xf32>
    %541 = arith.addf %540, %7 : vector<8x512xf32>
    %542 = vector.extract_strided_slice %541 {offsets = [0, 0], sizes = [8, 128], strides = [1, 1]} : vector<8x512xf32> to vector<8x128xf32>
    %543 = arith.negf %542 : vector<8x128xf32>
    %544 = math.exp %543 : vector<8x128xf32>
    %cst_164 = arith.constant 1.000000e+00 : f32
    %545 = vector.broadcast %cst_164 : f32 to vector<8x128xf32>
    %546 = arith.addf %545, %544 : vector<8x128xf32>
    %547 = arith.divf %545, %546 : vector<8x128xf32>
    %548 = vector.extract_strided_slice %541 {offsets = [0, 128], sizes = [8, 128], strides = [1, 1]} : vector<8x512xf32> to vector<8x128xf32>
    %549 = arith.negf %548 : vector<8x128xf32>
    %550 = math.exp %549 : vector<8x128xf32>
    %cst_165 = arith.constant 1.000000e+00 : f32
    %551 = vector.broadcast %cst_165 : f32 to vector<8x128xf32>
    %552 = arith.addf %551, %550 : vector<8x128xf32>
    %553 = arith.divf %551, %552 : vector<8x128xf32>
    %554 = vector.extract_strided_slice %541 {offsets = [0, 256], sizes = [8, 128], strides = [1, 1]} : vector<8x512xf32> to vector<8x128xf32>
    %555 = math.tanh %554 : vector<8x128xf32>
    %556 = vector.extract_strided_slice %541 {offsets = [0, 384], sizes = [8, 128], strides = [1, 1]} : vector<8x512xf32> to vector<8x128xf32>
    %557 = arith.negf %556 : vector<8x128xf32>
    %558 = math.exp %557 : vector<8x128xf32>
    %cst_166 = arith.constant 1.000000e+00 : f32
    %559 = vector.broadcast %cst_166 : f32 to vector<8x128xf32>
    %560 = arith.addf %559, %558 : vector<8x128xf32>
    %561 = arith.divf %559, %560 : vector<8x128xf32>
    %562 = arith.mulf %553, %529 : vector<8x128xf32>
    %563 = arith.mulf %547, %555 : vector<8x128xf32>
    %564 = arith.addf %562, %563 : vector<8x128xf32>
    %565 = math.tanh %564 : vector<8x128xf32>
    %566 = arith.mulf %561, %565 : vector<8x128xf32>
    %c15_167 = arith.constant 15 : index
    %c0_168 = arith.constant 0 : index
    %c0_169 = arith.constant 0 : index
    %567 = vector.load %arg6[%c15_167, %c0_168, %c0_169] : memref<16x8x128xf32, #tpu.memory_space<vmem>>, vector<1x8x128xf32>
    %568 = vector.shape_cast %567 : vector<1x8x128xf32> to vector<8x128xf32>
    %569 = vector.shape_cast %566 : vector<8x128xf32> to vector<1x8x128xf32>
    tpu.vector_store %arg6[%c15_167, %c0_168, %c0_169], %569 {strides = array<i32>} : memref<16x8x128xf32, #tpu.memory_space<vmem>>, vector<1x8x128xf32>,
    %c0_170 = arith.constant 0 : index
    %c0_171 = arith.constant 0 : index
    %570 = vector.load %arg7[%c0_170, %c0_171] : memref<8x128xf32, #tpu.memory_space<vmem>>, vector<8x128xf32>
    tpu.vector_store %arg7[%c0_170, %c0_171], %566 {strides = array<i32>} : memref<8x128xf32, #tpu.memory_space<vmem>>, vector<8x128xf32>,
    %c0_172 = arith.constant 0 : index
    %c0_173 = arith.constant 0 : index
    %571 = vector.load %arg8[%c0_172, %c0_173] : memref<8x128xf32, #tpu.memory_space<vmem>>, vector<8x128xf32>
    tpu.vector_store %arg8[%c0_172, %c0_173], %564 {strides = array<i32>} : memref<8x128xf32, #tpu.memory_space<vmem>>, vector<8x128xf32>,
    return
  }
  func.func @transform_0(%arg0: i32, %arg1: i32) -> (i32, i32, i32) {
    %c0_i32 = arith.constant 0 : i32
    %c0_i32_0 = arith.constant 0 : i32
    return %arg1, %arg0, %c0_i32 : i32, i32, i32
  }
  func.func @transform_1(%arg0: i32, %arg1: i32) -> (i32, i32) {
    %c0_i32 = arith.constant 0 : i32
    %c0_i32_0 = arith.constant 0 : i32
    %c0_i32_1 = arith.constant 0 : i32
    return %c0_i32, %c0_i32_0 : i32, i32
  }
  func.func @transform_2(%arg0: i32, %arg1: i32) -> (i32, i32) {
    %c0_i32 = arith.constant 0 : i32
    %c0_i32_0 = arith.constant 0 : i32
    %c0_i32_1 = arith.constant 0 : i32
    return %c0_i32, %c0_i32_0 : i32, i32
  }
  func.func @transform_3(%arg0: i32, %arg1: i32) -> (i32, i32) {
    %c0_i32 = arith.constant 0 : i32
    %c0_i32_0 = arith.constant 0 : i32
    %c0_i32_1 = arith.constant 0 : i32
    return %c0_i32, %c0_i32_0 : i32, i32
  }
  func.func @transform_4(%arg0: i32, %arg1: i32) -> (i32, i32, i32) {
    %c0_i32 = arith.constant 0 : i32
    %c0_i32_0 = arith.constant 0 : i32
    return %arg1, %arg0, %c0_i32 : i32, i32, i32
  }
}

module attributes {stable_mosaic.version = 11 : i64} {
  func.func @_lstm_chunk_kernel(%arg0: i32, %arg1: i32, %arg2: memref<16x8x16xbf16, #tpu.memory_space<vmem>>, %arg3: memref<16x512xbf16, #tpu.memory_space<vmem>>, %arg4: memref<128x512xbf16, #tpu.memory_space<vmem>>, %arg5: memref<1x512xf32, #tpu.memory_space<vmem>>, %arg6: memref<16x8x128xf32, #tpu.memory_space<vmem>>, %arg7: memref<8x128xf32, #tpu.memory_space<vmem>>, %arg8: memref<8x128xf32, #tpu.memory_space<vmem>>) attributes {dimension_semantics = [#tpu.dimension_semantics<parallel>, #tpu.dimension_semantics<arbitrary>], iteration_bounds = array<i64: 1, 2>, scalar_prefetch = 0 : i64, scratch_operands = 2 : i64, tpu.core_type = #tpu.core_type<tc>, window_params = [{transform_indices = @transform_0, window_bounds = array<i64: 16, 8, 16>}, {pipeline_mode = #tpu.pipeline_mode<synchronous>, transform_indices = @transform_1, window_bounds = array<i64: 16, 512>}, {pipeline_mode = #tpu.pipeline_mode<synchronous>, transform_indices = @transform_2, window_bounds = array<i64: 128, 512>}, {pipeline_mode = #tpu.pipeline_mode<synchronous>, transform_indices = @transform_3, window_bounds = array<i64: 1, 512>}, {transform_indices = @transform_4, window_bounds = array<i64: 16, 8, 128>}]} {
    %c0_i32 = arith.constant 0 : i32
    %0 = arith.cmpi eq, %arg1, %c0_i32 : i32
    %1 = arith.extui %0 : i1 to i32
    %c0_i32_0 = arith.constant 0 : i32
    %2 = arith.cmpi ne, %1, %c0_i32_0 : i32
    scf.if %2 {
      %cst_174 = arith.constant 0.000000e+00 : f32
      %572 = vector.broadcast %cst_174 : f32 to vector<8x128xf32>
      %c0_175 = arith.constant 0 : index
      %c0_176 = arith.constant 0 : index
      %573 = vector.load %arg7[%c0_175, %c0_176] : memref<8x128xf32, #tpu.memory_space<vmem>>, vector<8x128xf32>
      tpu.vector_store %arg7[%c0_175, %c0_176], %572 {strides = array<i32>} : memref<8x128xf32, #tpu.memory_space<vmem>>, vector<8x128xf32>,
      %cst_177 = arith.constant 0.000000e+00 : f32
      %574 = vector.broadcast %cst_177 : f32 to vector<8x128xf32>
      %c0_178 = arith.constant 0 : index
      %c0_179 = arith.constant 0 : index
      %575 = vector.load %arg8[%c0_178, %c0_179] : memref<8x128xf32, #tpu.memory_space<vmem>>, vector<8x128xf32>
      tpu.vector_store %arg8[%c0_178, %c0_179], %574 {strides = array<i32>} : memref<8x128xf32, #tpu.memory_space<vmem>>, vector<8x128xf32>,
    } else {
    }
    %c0 = arith.constant 0 : index
    %c0_1 = arith.constant 0 : index
    %3 = vector.load %arg3[%c0, %c0_1] : memref<16x512xbf16, #tpu.memory_space<vmem>>, vector<16x512xbf16>
    %c0_2 = arith.constant 0 : index
    %c0_3 = arith.constant 0 : index
    %4 = vector.load %arg4[%c0_2, %c0_3] : memref<128x512xbf16, #tpu.memory_space<vmem>>, vector<128x512xbf16>
    %c0_4 = arith.constant 0 : index
    %c0_5 = arith.constant 0 : index
    %5 = vector.load %arg5[%c0_4, %c0_5] : memref<1x512xf32, #tpu.memory_space<vmem>>, vector<1x512xf32>
    %6 = vector.shape_cast %5 : vector<1x512xf32> to vector<1x512xf32>
    %7 = vector.broadcast %6 : vector<1x512xf32> to vector<8x512xf32>
    %c0_6 = arith.constant 0 : index
    %c0_7 = arith.constant 0 : index
    %8 = vector.load %arg7[%c0_6, %c0_7] : memref<8x128xf32, #tpu.memory_space<vmem>>, vector<8x128xf32>
    %c0_8 = arith.constant 0 : index
    %c0_9 = arith.constant 0 : index
    %9 = vector.load %arg8[%c0_8, %c0_9] : memref<8x128xf32, #tpu.memory_space<vmem>>, vector<8x128xf32>
    %c0_10 = arith.constant 0 : index
    %c0_11 = arith.constant 0 : index
    %c0_12 = arith.constant 0 : index
    %10 = vector.load %arg2[%c0_10, %c0_11, %c0_12] : memref<16x8x16xbf16, #tpu.memory_space<vmem>>, vector<1x8x16xbf16>
    %11 = vector.shape_cast %10 : vector<1x8x16xbf16> to vector<8x16xbf16>
    %cst = arith.constant dense<0.000000e+00> : vector<8x512xf32>
    %12 = tpu.matmul %11, %3, %cst {dimension_numbers = #tpu.dot_dimension_numbers<[1], [0], [0], [1], [0, 0, 1, 1], [], []>} : vector<8x16xbf16>, vector<16x512xbf16>, vector<8x512xf32> -> vector<8x512xf32>
    %13 = arith.truncf %8 : vector<8x128xf32> to vector<8x128xbf16>
    %cst_13 = arith.constant dense<0.000000e+00> : vector<8x512xf32>
    %14 = tpu.matmul %13, %4, %cst_13 {dimension_numbers = #tpu.dot_dimension_numbers<[1], [0], [0], [1], [0, 0, 1, 1], [], []>} : vector<8x128xbf16>, vector<128x512xbf16>, vector<8x512xf32> -> vector<8x512xf32>
    %15 = arith.addf %12, %14 : vector<8x512xf32>
    %16 = arith.addf %15, %7 : vector<8x512xf32>
    %17 = vector.extract_strided_slice %16 {offsets = [0, 0], sizes = [8, 128], strides = [1, 1]} : vector<8x512xf32> to vector<8x128xf32>
    %18 = arith.negf %17 : vector<8x128xf32>
    %19 = math.exp %18 : vector<8x128xf32>
    %cst_14 = arith.constant 1.000000e+00 : f32
    %20 = vector.broadcast %cst_14 : f32 to vector<8x128xf32>
    %21 = arith.addf %20, %19 : vector<8x128xf32>
    %22 = arith.divf %20, %21 : vector<8x128xf32>
    %23 = vector.extract_strided_slice %16 {offsets = [0, 128], sizes = [8, 128], strides = [1, 1]} : vector<8x512xf32> to vector<8x128xf32>
    %24 = arith.negf %23 : vector<8x128xf32>
    %25 = math.exp %24 : vector<8x128xf32>
    %cst_15 = arith.constant 1.000000e+00 : f32
    %26 = vector.broadcast %cst_15 : f32 to vector<8x128xf32>
    %27 = arith.addf %26, %25 : vector<8x128xf32>
    %28 = arith.divf %26, %27 : vector<8x128xf32>
    %29 = vector.extract_strided_slice %16 {offsets = [0, 256], sizes = [8, 128], strides = [1, 1]} : vector<8x512xf32> to vector<8x128xf32>
    %30 = math.tanh %29 : vector<8x128xf32>
    %31 = vector.extract_strided_slice %16 {offsets = [0, 384], sizes = [8, 128], strides = [1, 1]} : vector<8x512xf32> to vector<8x128xf32>
    %32 = arith.negf %31 : vector<8x128xf32>
    %33 = math.exp %32 : vector<8x128xf32>
    %cst_16 = arith.constant 1.000000e+00 : f32
    %34 = vector.broadcast %cst_16 : f32 to vector<8x128xf32>
    %35 = arith.addf %34, %33 : vector<8x128xf32>
    %36 = arith.divf %34, %35 : vector<8x128xf32>
    %37 = arith.mulf %28, %9 : vector<8x128xf32>
    %38 = arith.mulf %22, %30 : vector<8x128xf32>
    %39 = arith.addf %37, %38 : vector<8x128xf32>
    %40 = math.tanh %39 : vector<8x128xf32>
    %41 = arith.mulf %36, %40 : vector<8x128xf32>
    %c0_17 = arith.constant 0 : index
    %c0_18 = arith.constant 0 : index
    %c0_19 = arith.constant 0 : index
    %42 = vector.load %arg6[%c0_17, %c0_18, %c0_19] : memref<16x8x128xf32, #tpu.memory_space<vmem>>, vector<1x8x128xf32>
    %43 = vector.shape_cast %42 : vector<1x8x128xf32> to vector<8x128xf32>
    %44 = vector.shape_cast %41 : vector<8x128xf32> to vector<1x8x128xf32>
    tpu.vector_store %arg6[%c0_17, %c0_18, %c0_19], %44 {strides = array<i32>} : memref<16x8x128xf32, #tpu.memory_space<vmem>>, vector<1x8x128xf32>,
    %c1 = arith.constant 1 : index
    %c0_20 = arith.constant 0 : index
    %c0_21 = arith.constant 0 : index
    %45 = vector.load %arg2[%c1, %c0_20, %c0_21] : memref<16x8x16xbf16, #tpu.memory_space<vmem>>, vector<1x8x16xbf16>
    %46 = vector.shape_cast %45 : vector<1x8x16xbf16> to vector<8x16xbf16>
    %cst_22 = arith.constant dense<0.000000e+00> : vector<8x512xf32>
    %47 = tpu.matmul %46, %3, %cst_22 {dimension_numbers = #tpu.dot_dimension_numbers<[1], [0], [0], [1], [0, 0, 1, 1], [], []>} : vector<8x16xbf16>, vector<16x512xbf16>, vector<8x512xf32> -> vector<8x512xf32>
    %48 = arith.truncf %41 : vector<8x128xf32> to vector<8x128xbf16>
    %cst_23 = arith.constant dense<0.000000e+00> : vector<8x512xf32>
    %49 = tpu.matmul %48, %4, %cst_23 {dimension_numbers = #tpu.dot_dimension_numbers<[1], [0], [0], [1], [0, 0, 1, 1], [], []>} : vector<8x128xbf16>, vector<128x512xbf16>, vector<8x512xf32> -> vector<8x512xf32>
    %50 = arith.addf %47, %49 : vector<8x512xf32>
    %51 = arith.addf %50, %7 : vector<8x512xf32>
    %52 = vector.extract_strided_slice %51 {offsets = [0, 0], sizes = [8, 128], strides = [1, 1]} : vector<8x512xf32> to vector<8x128xf32>
    %53 = arith.negf %52 : vector<8x128xf32>
    %54 = math.exp %53 : vector<8x128xf32>
    %cst_24 = arith.constant 1.000000e+00 : f32
    %55 = vector.broadcast %cst_24 : f32 to vector<8x128xf32>
    %56 = arith.addf %55, %54 : vector<8x128xf32>
    %57 = arith.divf %55, %56 : vector<8x128xf32>
    %58 = vector.extract_strided_slice %51 {offsets = [0, 128], sizes = [8, 128], strides = [1, 1]} : vector<8x512xf32> to vector<8x128xf32>
    %59 = arith.negf %58 : vector<8x128xf32>
    %60 = math.exp %59 : vector<8x128xf32>
    %cst_25 = arith.constant 1.000000e+00 : f32
    %61 = vector.broadcast %cst_25 : f32 to vector<8x128xf32>
    %62 = arith.addf %61, %60 : vector<8x128xf32>
    %63 = arith.divf %61, %62 : vector<8x128xf32>
    %64 = vector.extract_strided_slice %51 {offsets = [0, 256], sizes = [8, 128], strides = [1, 1]} : vector<8x512xf32> to vector<8x128xf32>
    %65 = math.tanh %64 : vector<8x128xf32>
    %66 = vector.extract_strided_slice %51 {offsets = [0, 384], sizes = [8, 128], strides = [1, 1]} : vector<8x512xf32> to vector<8x128xf32>
    %67 = arith.negf %66 : vector<8x128xf32>
    %68 = math.exp %67 : vector<8x128xf32>
    %cst_26 = arith.constant 1.000000e+00 : f32
    %69 = vector.broadcast %cst_26 : f32 to vector<8x128xf32>
    %70 = arith.addf %69, %68 : vector<8x128xf32>
    %71 = arith.divf %69, %70 : vector<8x128xf32>
    %72 = arith.mulf %63, %39 : vector<8x128xf32>
    %73 = arith.mulf %57, %65 : vector<8x128xf32>
    %74 = arith.addf %72, %73 : vector<8x128xf32>
    %75 = math.tanh %74 : vector<8x128xf32>
    %76 = arith.mulf %71, %75 : vector<8x128xf32>
    %c1_27 = arith.constant 1 : index
    %c0_28 = arith.constant 0 : index
    %c0_29 = arith.constant 0 : index
    %77 = vector.load %arg6[%c1_27, %c0_28, %c0_29] : memref<16x8x128xf32, #tpu.memory_space<vmem>>, vector<1x8x128xf32>
    %78 = vector.shape_cast %77 : vector<1x8x128xf32> to vector<8x128xf32>
    %79 = vector.shape_cast %76 : vector<8x128xf32> to vector<1x8x128xf32>
    tpu.vector_store %arg6[%c1_27, %c0_28, %c0_29], %79 {strides = array<i32>} : memref<16x8x128xf32, #tpu.memory_space<vmem>>, vector<1x8x128xf32>,
    %c2 = arith.constant 2 : index
    %c0_30 = arith.constant 0 : index
    %c0_31 = arith.constant 0 : index
    %80 = vector.load %arg2[%c2, %c0_30, %c0_31] : memref<16x8x16xbf16, #tpu.memory_space<vmem>>, vector<1x8x16xbf16>
    %81 = vector.shape_cast %80 : vector<1x8x16xbf16> to vector<8x16xbf16>
    %cst_32 = arith.constant dense<0.000000e+00> : vector<8x512xf32>
    %82 = tpu.matmul %81, %3, %cst_32 {dimension_numbers = #tpu.dot_dimension_numbers<[1], [0], [0], [1], [0, 0, 1, 1], [], []>} : vector<8x16xbf16>, vector<16x512xbf16>, vector<8x512xf32> -> vector<8x512xf32>
    %83 = arith.truncf %76 : vector<8x128xf32> to vector<8x128xbf16>
    %cst_33 = arith.constant dense<0.000000e+00> : vector<8x512xf32>
    %84 = tpu.matmul %83, %4, %cst_33 {dimension_numbers = #tpu.dot_dimension_numbers<[1], [0], [0], [1], [0, 0, 1, 1], [], []>} : vector<8x128xbf16>, vector<128x512xbf16>, vector<8x512xf32> -> vector<8x512xf32>
    %85 = arith.addf %82, %84 : vector<8x512xf32>
    %86 = arith.addf %85, %7 : vector<8x512xf32>
    %87 = vector.extract_strided_slice %86 {offsets = [0, 0], sizes = [8, 128], strides = [1, 1]} : vector<8x512xf32> to vector<8x128xf32>
    %88 = arith.negf %87 : vector<8x128xf32>
    %89 = math.exp %88 : vector<8x128xf32>
    %cst_34 = arith.constant 1.000000e+00 : f32
    %90 = vector.broadcast %cst_34 : f32 to vector<8x128xf32>
    %91 = arith.addf %90, %89 : vector<8x128xf32>
    %92 = arith.divf %90, %91 : vector<8x128xf32>
    %93 = vector.extract_strided_slice %86 {offsets = [0, 128], sizes = [8, 128], strides = [1, 1]} : vector<8x512xf32> to vector<8x128xf32>
    %94 = arith.negf %93 : vector<8x128xf32>
    %95 = math.exp %94 : vector<8x128xf32>
    %cst_35 = arith.constant 1.000000e+00 : f32
    %96 = vector.broadcast %cst_35 : f32 to vector<8x128xf32>
    %97 = arith.addf %96, %95 : vector<8x128xf32>
    %98 = arith.divf %96, %97 : vector<8x128xf32>
    %99 = vector.extract_strided_slice %86 {offsets = [0, 256], sizes = [8, 128], strides = [1, 1]} : vector<8x512xf32> to vector<8x128xf32>
    %100 = math.tanh %99 : vector<8x128xf32>
    %101 = vector.extract_strided_slice %86 {offsets = [0, 384], sizes = [8, 128], strides = [1, 1]} : vector<8x512xf32> to vector<8x128xf32>
    %102 = arith.negf %101 : vector<8x128xf32>
    %103 = math.exp %102 : vector<8x128xf32>
    %cst_36 = arith.constant 1.000000e+00 : f32
    %104 = vector.broadcast %cst_36 : f32 to vector<8x128xf32>
    %105 = arith.addf %104, %103 : vector<8x128xf32>
    %106 = arith.divf %104, %105 : vector<8x128xf32>
    %107 = arith.mulf %98, %74 : vector<8x128xf32>
    %108 = arith.mulf %92, %100 : vector<8x128xf32>
    %109 = arith.addf %107, %108 : vector<8x128xf32>
    %110 = math.tanh %109 : vector<8x128xf32>
    %111 = arith.mulf %106, %110 : vector<8x128xf32>
    %c2_37 = arith.constant 2 : index
    %c0_38 = arith.constant 0 : index
    %c0_39 = arith.constant 0 : index
    %112 = vector.load %arg6[%c2_37, %c0_38, %c0_39] : memref<16x8x128xf32, #tpu.memory_space<vmem>>, vector<1x8x128xf32>
    %113 = vector.shape_cast %112 : vector<1x8x128xf32> to vector<8x128xf32>
    %114 = vector.shape_cast %111 : vector<8x128xf32> to vector<1x8x128xf32>
    tpu.vector_store %arg6[%c2_37, %c0_38, %c0_39], %114 {strides = array<i32>} : memref<16x8x128xf32, #tpu.memory_space<vmem>>, vector<1x8x128xf32>,
    %c3 = arith.constant 3 : index
    %c0_40 = arith.constant 0 : index
    %c0_41 = arith.constant 0 : index
    %115 = vector.load %arg2[%c3, %c0_40, %c0_41] : memref<16x8x16xbf16, #tpu.memory_space<vmem>>, vector<1x8x16xbf16>
    %116 = vector.shape_cast %115 : vector<1x8x16xbf16> to vector<8x16xbf16>
    %cst_42 = arith.constant dense<0.000000e+00> : vector<8x512xf32>
    %117 = tpu.matmul %116, %3, %cst_42 {dimension_numbers = #tpu.dot_dimension_numbers<[1], [0], [0], [1], [0, 0, 1, 1], [], []>} : vector<8x16xbf16>, vector<16x512xbf16>, vector<8x512xf32> -> vector<8x512xf32>
    %118 = arith.truncf %111 : vector<8x128xf32> to vector<8x128xbf16>
    %cst_43 = arith.constant dense<0.000000e+00> : vector<8x512xf32>
    %119 = tpu.matmul %118, %4, %cst_43 {dimension_numbers = #tpu.dot_dimension_numbers<[1], [0], [0], [1], [0, 0, 1, 1], [], []>} : vector<8x128xbf16>, vector<128x512xbf16>, vector<8x512xf32> -> vector<8x512xf32>
    %120 = arith.addf %117, %119 : vector<8x512xf32>
    %121 = arith.addf %120, %7 : vector<8x512xf32>
    %122 = vector.extract_strided_slice %121 {offsets = [0, 0], sizes = [8, 128], strides = [1, 1]} : vector<8x512xf32> to vector<8x128xf32>
    %123 = arith.negf %122 : vector<8x128xf32>
    %124 = math.exp %123 : vector<8x128xf32>
    %cst_44 = arith.constant 1.000000e+00 : f32
    %125 = vector.broadcast %cst_44 : f32 to vector<8x128xf32>
    %126 = arith.addf %125, %124 : vector<8x128xf32>
    %127 = arith.divf %125, %126 : vector<8x128xf32>
    %128 = vector.extract_strided_slice %121 {offsets = [0, 128], sizes = [8, 128], strides = [1, 1]} : vector<8x512xf32> to vector<8x128xf32>
    %129 = arith.negf %128 : vector<8x128xf32>
    %130 = math.exp %129 : vector<8x128xf32>
    %cst_45 = arith.constant 1.000000e+00 : f32
    %131 = vector.broadcast %cst_45 : f32 to vector<8x128xf32>
    %132 = arith.addf %131, %130 : vector<8x128xf32>
    %133 = arith.divf %131, %132 : vector<8x128xf32>
    %134 = vector.extract_strided_slice %121 {offsets = [0, 256], sizes = [8, 128], strides = [1, 1]} : vector<8x512xf32> to vector<8x128xf32>
    %135 = math.tanh %134 : vector<8x128xf32>
    %136 = vector.extract_strided_slice %121 {offsets = [0, 384], sizes = [8, 128], strides = [1, 1]} : vector<8x512xf32> to vector<8x128xf32>
    %137 = arith.negf %136 : vector<8x128xf32>
    %138 = math.exp %137 : vector<8x128xf32>
    %cst_46 = arith.constant 1.000000e+00 : f32
    %139 = vector.broadcast %cst_46 : f32 to vector<8x128xf32>
    %140 = arith.addf %139, %138 : vector<8x128xf32>
    %141 = arith.divf %139, %140 : vector<8x128xf32>
    %142 = arith.mulf %133, %109 : vector<8x128xf32>
    %143 = arith.mulf %127, %135 : vector<8x128xf32>
    %144 = arith.addf %142, %143 : vector<8x128xf32>
    %145 = math.tanh %144 : vector<8x128xf32>
    %146 = arith.mulf %141, %145 : vector<8x128xf32>
    %c3_47 = arith.constant 3 : index
    %c0_48 = arith.constant 0 : index
    %c0_49 = arith.constant 0 : index
    %147 = vector.load %arg6[%c3_47, %c0_48, %c0_49] : memref<16x8x128xf32, #tpu.memory_space<vmem>>, vector<1x8x128xf32>
    %148 = vector.shape_cast %147 : vector<1x8x128xf32> to vector<8x128xf32>
    %149 = vector.shape_cast %146 : vector<8x128xf32> to vector<1x8x128xf32>
    tpu.vector_store %arg6[%c3_47, %c0_48, %c0_49], %149 {strides = array<i32>} : memref<16x8x128xf32, #tpu.memory_space<vmem>>, vector<1x8x128xf32>,
    %c4 = arith.constant 4 : index
    %c0_50 = arith.constant 0 : index
    %c0_51 = arith.constant 0 : index
    %150 = vector.load %arg2[%c4, %c0_50, %c0_51] : memref<16x8x16xbf16, #tpu.memory_space<vmem>>, vector<1x8x16xbf16>
    %151 = vector.shape_cast %150 : vector<1x8x16xbf16> to vector<8x16xbf16>
    %cst_52 = arith.constant dense<0.000000e+00> : vector<8x512xf32>
    %152 = tpu.matmul %151, %3, %cst_52 {dimension_numbers = #tpu.dot_dimension_numbers<[1], [0], [0], [1], [0, 0, 1, 1], [], []>} : vector<8x16xbf16>, vector<16x512xbf16>, vector<8x512xf32> -> vector<8x512xf32>
    %153 = arith.truncf %146 : vector<8x128xf32> to vector<8x128xbf16>
    %cst_53 = arith.constant dense<0.000000e+00> : vector<8x512xf32>
    %154 = tpu.matmul %153, %4, %cst_53 {dimension_numbers = #tpu.dot_dimension_numbers<[1], [0], [0], [1], [0, 0, 1, 1], [], []>} : vector<8x128xbf16>, vector<128x512xbf16>, vector<8x512xf32> -> vector<8x512xf32>
    %155 = arith.addf %152, %154 : vector<8x512xf32>
    %156 = arith.addf %155, %7 : vector<8x512xf32>
    %157 = vector.extract_strided_slice %156 {offsets = [0, 0], sizes = [8, 128], strides = [1, 1]} : vector<8x512xf32> to vector<8x128xf32>
    %158 = arith.negf %157 : vector<8x128xf32>
    %159 = math.exp %158 : vector<8x128xf32>
    %cst_54 = arith.constant 1.000000e+00 : f32
    %160 = vector.broadcast %cst_54 : f32 to vector<8x128xf32>
    %161 = arith.addf %160, %159 : vector<8x128xf32>
    %162 = arith.divf %160, %161 : vector<8x128xf32>
    %163 = vector.extract_strided_slice %156 {offsets = [0, 128], sizes = [8, 128], strides = [1, 1]} : vector<8x512xf32> to vector<8x128xf32>
    %164 = arith.negf %163 : vector<8x128xf32>
    %165 = math.exp %164 : vector<8x128xf32>
    %cst_55 = arith.constant 1.000000e+00 : f32
    %166 = vector.broadcast %cst_55 : f32 to vector<8x128xf32>
    %167 = arith.addf %166, %165 : vector<8x128xf32>
    %168 = arith.divf %166, %167 : vector<8x128xf32>
    %169 = vector.extract_strided_slice %156 {offsets = [0, 256], sizes = [8, 128], strides = [1, 1]} : vector<8x512xf32> to vector<8x128xf32>
    %170 = math.tanh %169 : vector<8x128xf32>
    %171 = vector.extract_strided_slice %156 {offsets = [0, 384], sizes = [8, 128], strides = [1, 1]} : vector<8x512xf32> to vector<8x128xf32>
    %172 = arith.negf %171 : vector<8x128xf32>
    %173 = math.exp %172 : vector<8x128xf32>
    %cst_56 = arith.constant 1.000000e+00 : f32
    %174 = vector.broadcast %cst_56 : f32 to vector<8x128xf32>
    %175 = arith.addf %174, %173 : vector<8x128xf32>
    %176 = arith.divf %174, %175 : vector<8x128xf32>
    %177 = arith.mulf %168, %144 : vector<8x128xf32>
    %178 = arith.mulf %162, %170 : vector<8x128xf32>
    %179 = arith.addf %177, %178 : vector<8x128xf32>
    %180 = math.tanh %179 : vector<8x128xf32>
    %181 = arith.mulf %176, %180 : vector<8x128xf32>
    %c4_57 = arith.constant 4 : index
    %c0_58 = arith.constant 0 : index
    %c0_59 = arith.constant 0 : index
    %182 = vector.load %arg6[%c4_57, %c0_58, %c0_59] : memref<16x8x128xf32, #tpu.memory_space<vmem>>, vector<1x8x128xf32>
    %183 = vector.shape_cast %182 : vector<1x8x128xf32> to vector<8x128xf32>
    %184 = vector.shape_cast %181 : vector<8x128xf32> to vector<1x8x128xf32>
    tpu.vector_store %arg6[%c4_57, %c0_58, %c0_59], %184 {strides = array<i32>} : memref<16x8x128xf32, #tpu.memory_space<vmem>>, vector<1x8x128xf32>,
    %c5 = arith.constant 5 : index
    %c0_60 = arith.constant 0 : index
    %c0_61 = arith.constant 0 : index
    %185 = vector.load %arg2[%c5, %c0_60, %c0_61] : memref<16x8x16xbf16, #tpu.memory_space<vmem>>, vector<1x8x16xbf16>
    %186 = vector.shape_cast %185 : vector<1x8x16xbf16> to vector<8x16xbf16>
    %cst_62 = arith.constant dense<0.000000e+00> : vector<8x512xf32>
    %187 = tpu.matmul %186, %3, %cst_62 {dimension_numbers = #tpu.dot_dimension_numbers<[1], [0], [0], [1], [0, 0, 1, 1], [], []>} : vector<8x16xbf16>, vector<16x512xbf16>, vector<8x512xf32> -> vector<8x512xf32>
    %188 = arith.truncf %181 : vector<8x128xf32> to vector<8x128xbf16>
    %cst_63 = arith.constant dense<0.000000e+00> : vector<8x512xf32>
    %189 = tpu.matmul %188, %4, %cst_63 {dimension_numbers = #tpu.dot_dimension_numbers<[1], [0], [0], [1], [0, 0, 1, 1], [], []>} : vector<8x128xbf16>, vector<128x512xbf16>, vector<8x512xf32> -> vector<8x512xf32>
    %190 = arith.addf %187, %189 : vector<8x512xf32>
    %191 = arith.addf %190, %7 : vector<8x512xf32>
    %192 = vector.extract_strided_slice %191 {offsets = [0, 0], sizes = [8, 128], strides = [1, 1]} : vector<8x512xf32> to vector<8x128xf32>
    %193 = arith.negf %192 : vector<8x128xf32>
    %194 = math.exp %193 : vector<8x128xf32>
    %cst_64 = arith.constant 1.000000e+00 : f32
    %195 = vector.broadcast %cst_64 : f32 to vector<8x128xf32>
    %196 = arith.addf %195, %194 : vector<8x128xf32>
    %197 = arith.divf %195, %196 : vector<8x128xf32>
    %198 = vector.extract_strided_slice %191 {offsets = [0, 128], sizes = [8, 128], strides = [1, 1]} : vector<8x512xf32> to vector<8x128xf32>
    %199 = arith.negf %198 : vector<8x128xf32>
    %200 = math.exp %199 : vector<8x128xf32>
    %cst_65 = arith.constant 1.000000e+00 : f32
    %201 = vector.broadcast %cst_65 : f32 to vector<8x128xf32>
    %202 = arith.addf %201, %200 : vector<8x128xf32>
    %203 = arith.divf %201, %202 : vector<8x128xf32>
    %204 = vector.extract_strided_slice %191 {offsets = [0, 256], sizes = [8, 128], strides = [1, 1]} : vector<8x512xf32> to vector<8x128xf32>
    %205 = math.tanh %204 : vector<8x128xf32>
    %206 = vector.extract_strided_slice %191 {offsets = [0, 384], sizes = [8, 128], strides = [1, 1]} : vector<8x512xf32> to vector<8x128xf32>
    %207 = arith.negf %206 : vector<8x128xf32>
    %208 = math.exp %207 : vector<8x128xf32>
    %cst_66 = arith.constant 1.000000e+00 : f32
    %209 = vector.broadcast %cst_66 : f32 to vector<8x128xf32>
    %210 = arith.addf %209, %208 : vector<8x128xf32>
    %211 = arith.divf %209, %210 : vector<8x128xf32>
    %212 = arith.mulf %203, %179 : vector<8x128xf32>
    %213 = arith.mulf %197, %205 : vector<8x128xf32>
    %214 = arith.addf %212, %213 : vector<8x128xf32>
    %215 = math.tanh %214 : vector<8x128xf32>
    %216 = arith.mulf %211, %215 : vector<8x128xf32>
    %c5_67 = arith.constant 5 : index
    %c0_68 = arith.constant 0 : index
    %c0_69 = arith.constant 0 : index
    %217 = vector.load %arg6[%c5_67, %c0_68, %c0_69] : memref<16x8x128xf32, #tpu.memory_space<vmem>>, vector<1x8x128xf32>
    %218 = vector.shape_cast %217 : vector<1x8x128xf32> to vector<8x128xf32>
    %219 = vector.shape_cast %216 : vector<8x128xf32> to vector<1x8x128xf32>
    tpu.vector_store %arg6[%c5_67, %c0_68, %c0_69], %219 {strides = array<i32>} : memref<16x8x128xf32, #tpu.memory_space<vmem>>, vector<1x8x128xf32>,
    %c6 = arith.constant 6 : index
    %c0_70 = arith.constant 0 : index
    %c0_71 = arith.constant 0 : index
    %220 = vector.load %arg2[%c6, %c0_70, %c0_71] : memref<16x8x16xbf16, #tpu.memory_space<vmem>>, vector<1x8x16xbf16>
    %221 = vector.shape_cast %220 : vector<1x8x16xbf16> to vector<8x16xbf16>
    %cst_72 = arith.constant dense<0.000000e+00> : vector<8x512xf32>
    %222 = tpu.matmul %221, %3, %cst_72 {dimension_numbers = #tpu.dot_dimension_numbers<[1], [0], [0], [1], [0, 0, 1, 1], [], []>} : vector<8x16xbf16>, vector<16x512xbf16>, vector<8x512xf32> -> vector<8x512xf32>
    %223 = arith.truncf %216 : vector<8x128xf32> to vector<8x128xbf16>
    %cst_73 = arith.constant dense<0.000000e+00> : vector<8x512xf32>
    %224 = tpu.matmul %223, %4, %cst_73 {dimension_numbers = #tpu.dot_dimension_numbers<[1], [0], [0], [1], [0, 0, 1, 1], [], []>} : vector<8x128xbf16>, vector<128x512xbf16>, vector<8x512xf32> -> vector<8x512xf32>
    %225 = arith.addf %222, %224 : vector<8x512xf32>
    %226 = arith.addf %225, %7 : vector<8x512xf32>
    %227 = vector.extract_strided_slice %226 {offsets = [0, 0], sizes = [8, 128], strides = [1, 1]} : vector<8x512xf32> to vector<8x128xf32>
    %228 = arith.negf %227 : vector<8x128xf32>
    %229 = math.exp %228 : vector<8x128xf32>
    %cst_74 = arith.constant 1.000000e+00 : f32
    %230 = vector.broadcast %cst_74 : f32 to vector<8x128xf32>
    %231 = arith.addf %230, %229 : vector<8x128xf32>
    %232 = arith.divf %230, %231 : vector<8x128xf32>
    %233 = vector.extract_strided_slice %226 {offsets = [0, 128], sizes = [8, 128], strides = [1, 1]} : vector<8x512xf32> to vector<8x128xf32>
    %234 = arith.negf %233 : vector<8x128xf32>
    %235 = math.exp %234 : vector<8x128xf32>
    %cst_75 = arith.constant 1.000000e+00 : f32
    %236 = vector.broadcast %cst_75 : f32 to vector<8x128xf32>
    %237 = arith.addf %236, %235 : vector<8x128xf32>
    %238 = arith.divf %236, %237 : vector<8x128xf32>
    %239 = vector.extract_strided_slice %226 {offsets = [0, 256], sizes = [8, 128], strides = [1, 1]} : vector<8x512xf32> to vector<8x128xf32>
    %240 = math.tanh %239 : vector<8x128xf32>
    %241 = vector.extract_strided_slice %226 {offsets = [0, 384], sizes = [8, 128], strides = [1, 1]} : vector<8x512xf32> to vector<8x128xf32>
    %242 = arith.negf %241 : vector<8x128xf32>
    %243 = math.exp %242 : vector<8x128xf32>
    %cst_76 = arith.constant 1.000000e+00 : f32
    %244 = vector.broadcast %cst_76 : f32 to vector<8x128xf32>
    %245 = arith.addf %244, %243 : vector<8x128xf32>
    %246 = arith.divf %244, %245 : vector<8x128xf32>
    %247 = arith.mulf %238, %214 : vector<8x128xf32>
    %248 = arith.mulf %232, %240 : vector<8x128xf32>
    %249 = arith.addf %247, %248 : vector<8x128xf32>
    %250 = math.tanh %249 : vector<8x128xf32>
    %251 = arith.mulf %246, %250 : vector<8x128xf32>
    %c6_77 = arith.constant 6 : index
    %c0_78 = arith.constant 0 : index
    %c0_79 = arith.constant 0 : index
    %252 = vector.load %arg6[%c6_77, %c0_78, %c0_79] : memref<16x8x128xf32, #tpu.memory_space<vmem>>, vector<1x8x128xf32>
    %253 = vector.shape_cast %252 : vector<1x8x128xf32> to vector<8x128xf32>
    %254 = vector.shape_cast %251 : vector<8x128xf32> to vector<1x8x128xf32>
    tpu.vector_store %arg6[%c6_77, %c0_78, %c0_79], %254 {strides = array<i32>} : memref<16x8x128xf32, #tpu.memory_space<vmem>>, vector<1x8x128xf32>,
    %c7 = arith.constant 7 : index
    %c0_80 = arith.constant 0 : index
    %c0_81 = arith.constant 0 : index
    %255 = vector.load %arg2[%c7, %c0_80, %c0_81] : memref<16x8x16xbf16, #tpu.memory_space<vmem>>, vector<1x8x16xbf16>
    %256 = vector.shape_cast %255 : vector<1x8x16xbf16> to vector<8x16xbf16>
    %cst_82 = arith.constant dense<0.000000e+00> : vector<8x512xf32>
    %257 = tpu.matmul %256, %3, %cst_82 {dimension_numbers = #tpu.dot_dimension_numbers<[1], [0], [0], [1], [0, 0, 1, 1], [], []>} : vector<8x16xbf16>, vector<16x512xbf16>, vector<8x512xf32> -> vector<8x512xf32>
    %258 = arith.truncf %251 : vector<8x128xf32> to vector<8x128xbf16>
    %cst_83 = arith.constant dense<0.000000e+00> : vector<8x512xf32>
    %259 = tpu.matmul %258, %4, %cst_83 {dimension_numbers = #tpu.dot_dimension_numbers<[1], [0], [0], [1], [0, 0, 1, 1], [], []>} : vector<8x128xbf16>, vector<128x512xbf16>, vector<8x512xf32> -> vector<8x512xf32>
    %260 = arith.addf %257, %259 : vector<8x512xf32>
    %261 = arith.addf %260, %7 : vector<8x512xf32>
    %262 = vector.extract_strided_slice %261 {offsets = [0, 0], sizes = [8, 128], strides = [1, 1]} : vector<8x512xf32> to vector<8x128xf32>
    %263 = arith.negf %262 : vector<8x128xf32>
    %264 = math.exp %263 : vector<8x128xf32>
    %cst_84 = arith.constant 1.000000e+00 : f32
    %265 = vector.broadcast %cst_84 : f32 to vector<8x128xf32>
    %266 = arith.addf %265, %264 : vector<8x128xf32>
    %267 = arith.divf %265, %266 : vector<8x128xf32>
    %268 = vector.extract_strided_slice %261 {offsets = [0, 128], sizes = [8, 128], strides = [1, 1]} : vector<8x512xf32> to vector<8x128xf32>
    %269 = arith.negf %268 : vector<8x128xf32>
    %270 = math.exp %269 : vector<8x128xf32>
    %cst_85 = arith.constant 1.000000e+00 : f32
    %271 = vector.broadcast %cst_85 : f32 to vector<8x128xf32>
    %272 = arith.addf %271, %270 : vector<8x128xf32>
    %273 = arith.divf %271, %272 : vector<8x128xf32>
    %274 = vector.extract_strided_slice %261 {offsets = [0, 256], sizes = [8, 128], strides = [1, 1]} : vector<8x512xf32> to vector<8x128xf32>
    %275 = math.tanh %274 : vector<8x128xf32>
    %276 = vector.extract_strided_slice %261 {offsets = [0, 384], sizes = [8, 128], strides = [1, 1]} : vector<8x512xf32> to vector<8x128xf32>
    %277 = arith.negf %276 : vector<8x128xf32>
    %278 = math.exp %277 : vector<8x128xf32>
    %cst_86 = arith.constant 1.000000e+00 : f32
    %279 = vector.broadcast %cst_86 : f32 to vector<8x128xf32>
    %280 = arith.addf %279, %278 : vector<8x128xf32>
    %281 = arith.divf %279, %280 : vector<8x128xf32>
    %282 = arith.mulf %273, %249 : vector<8x128xf32>
    %283 = arith.mulf %267, %275 : vector<8x128xf32>
    %284 = arith.addf %282, %283 : vector<8x128xf32>
    %285 = math.tanh %284 : vector<8x128xf32>
    %286 = arith.mulf %281, %285 : vector<8x128xf32>
    %c7_87 = arith.constant 7 : index
    %c0_88 = arith.constant 0 : index
    %c0_89 = arith.constant 0 : index
    %287 = vector.load %arg6[%c7_87, %c0_88, %c0_89] : memref<16x8x128xf32, #tpu.memory_space<vmem>>, vector<1x8x128xf32>
    %288 = vector.shape_cast %287 : vector<1x8x128xf32> to vector<8x128xf32>
    %289 = vector.shape_cast %286 : vector<8x128xf32> to vector<1x8x128xf32>
    tpu.vector_store %arg6[%c7_87, %c0_88, %c0_89], %289 {strides = array<i32>} : memref<16x8x128xf32, #tpu.memory_space<vmem>>, vector<1x8x128xf32>,
    %c8 = arith.constant 8 : index
    %c0_90 = arith.constant 0 : index
    %c0_91 = arith.constant 0 : index
    %290 = vector.load %arg2[%c8, %c0_90, %c0_91] : memref<16x8x16xbf16, #tpu.memory_space<vmem>>, vector<1x8x16xbf16>
    %291 = vector.shape_cast %290 : vector<1x8x16xbf16> to vector<8x16xbf16>
    %cst_92 = arith.constant dense<0.000000e+00> : vector<8x512xf32>
    %292 = tpu.matmul %291, %3, %cst_92 {dimension_numbers = #tpu.dot_dimension_numbers<[1], [0], [0], [1], [0, 0, 1, 1], [], []>} : vector<8x16xbf16>, vector<16x512xbf16>, vector<8x512xf32> -> vector<8x512xf32>
    %293 = arith.truncf %286 : vector<8x128xf32> to vector<8x128xbf16>
    %cst_93 = arith.constant dense<0.000000e+00> : vector<8x512xf32>
    %294 = tpu.matmul %293, %4, %cst_93 {dimension_numbers = #tpu.dot_dimension_numbers<[1], [0], [0], [1], [0, 0, 1, 1], [], []>} : vector<8x128xbf16>, vector<128x512xbf16>, vector<8x512xf32> -> vector<8x512xf32>
    %295 = arith.addf %292, %294 : vector<8x512xf32>
    %296 = arith.addf %295, %7 : vector<8x512xf32>
    %297 = vector.extract_strided_slice %296 {offsets = [0, 0], sizes = [8, 128], strides = [1, 1]} : vector<8x512xf32> to vector<8x128xf32>
    %298 = arith.negf %297 : vector<8x128xf32>
    %299 = math.exp %298 : vector<8x128xf32>
    %cst_94 = arith.constant 1.000000e+00 : f32
    %300 = vector.broadcast %cst_94 : f32 to vector<8x128xf32>
    %301 = arith.addf %300, %299 : vector<8x128xf32>
    %302 = arith.divf %300, %301 : vector<8x128xf32>
    %303 = vector.extract_strided_slice %296 {offsets = [0, 128], sizes = [8, 128], strides = [1, 1]} : vector<8x512xf32> to vector<8x128xf32>
    %304 = arith.negf %303 : vector<8x128xf32>
    %305 = math.exp %304 : vector<8x128xf32>
    %cst_95 = arith.constant 1.000000e+00 : f32
    %306 = vector.broadcast %cst_95 : f32 to vector<8x128xf32>
    %307 = arith.addf %306, %305 : vector<8x128xf32>
    %308 = arith.divf %306, %307 : vector<8x128xf32>
    %309 = vector.extract_strided_slice %296 {offsets = [0, 256], sizes = [8, 128], strides = [1, 1]} : vector<8x512xf32> to vector<8x128xf32>
    %310 = math.tanh %309 : vector<8x128xf32>
    %311 = vector.extract_strided_slice %296 {offsets = [0, 384], sizes = [8, 128], strides = [1, 1]} : vector<8x512xf32> to vector<8x128xf32>
    %312 = arith.negf %311 : vector<8x128xf32>
    %313 = math.exp %312 : vector<8x128xf32>
    %cst_96 = arith.constant 1.000000e+00 : f32
    %314 = vector.broadcast %cst_96 : f32 to vector<8x128xf32>
    %315 = arith.addf %314, %313 : vector<8x128xf32>
    %316 = arith.divf %314, %315 : vector<8x128xf32>
    %317 = arith.mulf %308, %284 : vector<8x128xf32>
    %318 = arith.mulf %302, %310 : vector<8x128xf32>
    %319 = arith.addf %317, %318 : vector<8x128xf32>
    %320 = math.tanh %319 : vector<8x128xf32>
    %321 = arith.mulf %316, %320 : vector<8x128xf32>
    %c8_97 = arith.constant 8 : index
    %c0_98 = arith.constant 0 : index
    %c0_99 = arith.constant 0 : index
    %322 = vector.load %arg6[%c8_97, %c0_98, %c0_99] : memref<16x8x128xf32, #tpu.memory_space<vmem>>, vector<1x8x128xf32>
    %323 = vector.shape_cast %322 : vector<1x8x128xf32> to vector<8x128xf32>
    %324 = vector.shape_cast %321 : vector<8x128xf32> to vector<1x8x128xf32>
    tpu.vector_store %arg6[%c8_97, %c0_98, %c0_99], %324 {strides = array<i32>} : memref<16x8x128xf32, #tpu.memory_space<vmem>>, vector<1x8x128xf32>,
    %c9 = arith.constant 9 : index
    %c0_100 = arith.constant 0 : index
    %c0_101 = arith.constant 0 : index
    %325 = vector.load %arg2[%c9, %c0_100, %c0_101] : memref<16x8x16xbf16, #tpu.memory_space<vmem>>, vector<1x8x16xbf16>
    %326 = vector.shape_cast %325 : vector<1x8x16xbf16> to vector<8x16xbf16>
    %cst_102 = arith.constant dense<0.000000e+00> : vector<8x512xf32>
    %327 = tpu.matmul %326, %3, %cst_102 {dimension_numbers = #tpu.dot_dimension_numbers<[1], [0], [0], [1], [0, 0, 1, 1], [], []>} : vector<8x16xbf16>, vector<16x512xbf16>, vector<8x512xf32> -> vector<8x512xf32>
    %328 = arith.truncf %321 : vector<8x128xf32> to vector<8x128xbf16>
    %cst_103 = arith.constant dense<0.000000e+00> : vector<8x512xf32>
    %329 = tpu.matmul %328, %4, %cst_103 {dimension_numbers = #tpu.dot_dimension_numbers<[1], [0], [0], [1], [0, 0, 1, 1], [], []>} : vector<8x128xbf16>, vector<128x512xbf16>, vector<8x512xf32> -> vector<8x512xf32>
    %330 = arith.addf %327, %329 : vector<8x512xf32>
    %331 = arith.addf %330, %7 : vector<8x512xf32>
    %332 = vector.extract_strided_slice %331 {offsets = [0, 0], sizes = [8, 128], strides = [1, 1]} : vector<8x512xf32> to vector<8x128xf32>
    %333 = arith.negf %332 : vector<8x128xf32>
    %334 = math.exp %333 : vector<8x128xf32>
    %cst_104 = arith.constant 1.000000e+00 : f32
    %335 = vector.broadcast %cst_104 : f32 to vector<8x128xf32>
    %336 = arith.addf %335, %334 : vector<8x128xf32>
    %337 = arith.divf %335, %336 : vector<8x128xf32>
    %338 = vector.extract_strided_slice %331 {offsets = [0, 128], sizes = [8, 128], strides = [1, 1]} : vector<8x512xf32> to vector<8x128xf32>
    %339 = arith.negf %338 : vector<8x128xf32>
    %340 = math.exp %339 : vector<8x128xf32>
    %cst_105 = arith.constant 1.000000e+00 : f32
    %341 = vector.broadcast %cst_105 : f32 to vector<8x128xf32>
    %342 = arith.addf %341, %340 : vector<8x128xf32>
    %343 = arith.divf %341, %342 : vector<8x128xf32>
    %344 = vector.extract_strided_slice %331 {offsets = [0, 256], sizes = [8, 128], strides = [1, 1]} : vector<8x512xf32> to vector<8x128xf32>
    %345 = math.tanh %344 : vector<8x128xf32>
    %346 = vector.extract_strided_slice %331 {offsets = [0, 384], sizes = [8, 128], strides = [1, 1]} : vector<8x512xf32> to vector<8x128xf32>
    %347 = arith.negf %346 : vector<8x128xf32>
    %348 = math.exp %347 : vector<8x128xf32>
    %cst_106 = arith.constant 1.000000e+00 : f32
    %349 = vector.broadcast %cst_106 : f32 to vector<8x128xf32>
    %350 = arith.addf %349, %348 : vector<8x128xf32>
    %351 = arith.divf %349, %350 : vector<8x128xf32>
    %352 = arith.mulf %343, %319 : vector<8x128xf32>
    %353 = arith.mulf %337, %345 : vector<8x128xf32>
    %354 = arith.addf %352, %353 : vector<8x128xf32>
    %355 = math.tanh %354 : vector<8x128xf32>
    %356 = arith.mulf %351, %355 : vector<8x128xf32>
    %c9_107 = arith.constant 9 : index
    %c0_108 = arith.constant 0 : index
    %c0_109 = arith.constant 0 : index
    %357 = vector.load %arg6[%c9_107, %c0_108, %c0_109] : memref<16x8x128xf32, #tpu.memory_space<vmem>>, vector<1x8x128xf32>
    %358 = vector.shape_cast %357 : vector<1x8x128xf32> to vector<8x128xf32>
    %359 = vector.shape_cast %356 : vector<8x128xf32> to vector<1x8x128xf32>
    tpu.vector_store %arg6[%c9_107, %c0_108, %c0_109], %359 {strides = array<i32>} : memref<16x8x128xf32, #tpu.memory_space<vmem>>, vector<1x8x128xf32>,
    %c10 = arith.constant 10 : index
    %c0_110 = arith.constant 0 : index
    %c0_111 = arith.constant 0 : index
    %360 = vector.load %arg2[%c10, %c0_110, %c0_111] : memref<16x8x16xbf16, #tpu.memory_space<vmem>>, vector<1x8x16xbf16>
    %361 = vector.shape_cast %360 : vector<1x8x16xbf16> to vector<8x16xbf16>
    %cst_112 = arith.constant dense<0.000000e+00> : vector<8x512xf32>
    %362 = tpu.matmul %361, %3, %cst_112 {dimension_numbers = #tpu.dot_dimension_numbers<[1], [0], [0], [1], [0, 0, 1, 1], [], []>} : vector<8x16xbf16>, vector<16x512xbf16>, vector<8x512xf32> -> vector<8x512xf32>
    %363 = arith.truncf %356 : vector<8x128xf32> to vector<8x128xbf16>
    %cst_113 = arith.constant dense<0.000000e+00> : vector<8x512xf32>
    %364 = tpu.matmul %363, %4, %cst_113 {dimension_numbers = #tpu.dot_dimension_numbers<[1], [0], [0], [1], [0, 0, 1, 1], [], []>} : vector<8x128xbf16>, vector<128x512xbf16>, vector<8x512xf32> -> vector<8x512xf32>
    %365 = arith.addf %362, %364 : vector<8x512xf32>
    %366 = arith.addf %365, %7 : vector<8x512xf32>
    %367 = vector.extract_strided_slice %366 {offsets = [0, 0], sizes = [8, 128], strides = [1, 1]} : vector<8x512xf32> to vector<8x128xf32>
    %368 = arith.negf %367 : vector<8x128xf32>
    %369 = math.exp %368 : vector<8x128xf32>
    %cst_114 = arith.constant 1.000000e+00 : f32
    %370 = vector.broadcast %cst_114 : f32 to vector<8x128xf32>
    %371 = arith.addf %370, %369 : vector<8x128xf32>
    %372 = arith.divf %370, %371 : vector<8x128xf32>
    %373 = vector.extract_strided_slice %366 {offsets = [0, 128], sizes = [8, 128], strides = [1, 1]} : vector<8x512xf32> to vector<8x128xf32>
    %374 = arith.negf %373 : vector<8x128xf32>
    %375 = math.exp %374 : vector<8x128xf32>
    %cst_115 = arith.constant 1.000000e+00 : f32
    %376 = vector.broadcast %cst_115 : f32 to vector<8x128xf32>
    %377 = arith.addf %376, %375 : vector<8x128xf32>
    %378 = arith.divf %376, %377 : vector<8x128xf32>
    %379 = vector.extract_strided_slice %366 {offsets = [0, 256], sizes = [8, 128], strides = [1, 1]} : vector<8x512xf32> to vector<8x128xf32>
    %380 = math.tanh %379 : vector<8x128xf32>
    %381 = vector.extract_strided_slice %366 {offsets = [0, 384], sizes = [8, 128], strides = [1, 1]} : vector<8x512xf32> to vector<8x128xf32>
    %382 = arith.negf %381 : vector<8x128xf32>
    %383 = math.exp %382 : vector<8x128xf32>
    %cst_116 = arith.constant 1.000000e+00 : f32
    %384 = vector.broadcast %cst_116 : f32 to vector<8x128xf32>
    %385 = arith.addf %384, %383 : vector<8x128xf32>
    %386 = arith.divf %384, %385 : vector<8x128xf32>
    %387 = arith.mulf %378, %354 : vector<8x128xf32>
    %388 = arith.mulf %372, %380 : vector<8x128xf32>
    %389 = arith.addf %387, %388 : vector<8x128xf32>
    %390 = math.tanh %389 : vector<8x128xf32>
    %391 = arith.mulf %386, %390 : vector<8x128xf32>
    %c10_117 = arith.constant 10 : index
    %c0_118 = arith.constant 0 : index
    %c0_119 = arith.constant 0 : index
    %392 = vector.load %arg6[%c10_117, %c0_118, %c0_119] : memref<16x8x128xf32, #tpu.memory_space<vmem>>, vector<1x8x128xf32>
    %393 = vector.shape_cast %392 : vector<1x8x128xf32> to vector<8x128xf32>
    %394 = vector.shape_cast %391 : vector<8x128xf32> to vector<1x8x128xf32>
    tpu.vector_store %arg6[%c10_117, %c0_118, %c0_119], %394 {strides = array<i32>} : memref<16x8x128xf32, #tpu.memory_space<vmem>>, vector<1x8x128xf32>,
    %c11 = arith.constant 11 : index
    %c0_120 = arith.constant 0 : index
    %c0_121 = arith.constant 0 : index
    %395 = vector.load %arg2[%c11, %c0_120, %c0_121] : memref<16x8x16xbf16, #tpu.memory_space<vmem>>, vector<1x8x16xbf16>
    %396 = vector.shape_cast %395 : vector<1x8x16xbf16> to vector<8x16xbf16>
    %cst_122 = arith.constant dense<0.000000e+00> : vector<8x512xf32>
    %397 = tpu.matmul %396, %3, %cst_122 {dimension_numbers = #tpu.dot_dimension_numbers<[1], [0], [0], [1], [0, 0, 1, 1], [], []>} : vector<8x16xbf16>, vector<16x512xbf16>, vector<8x512xf32> -> vector<8x512xf32>
    %398 = arith.truncf %391 : vector<8x128xf32> to vector<8x128xbf16>
    %cst_123 = arith.constant dense<0.000000e+00> : vector<8x512xf32>
    %399 = tpu.matmul %398, %4, %cst_123 {dimension_numbers = #tpu.dot_dimension_numbers<[1], [0], [0], [1], [0, 0, 1, 1], [], []>} : vector<8x128xbf16>, vector<128x512xbf16>, vector<8x512xf32> -> vector<8x512xf32>
    %400 = arith.addf %397, %399 : vector<8x512xf32>
    %401 = arith.addf %400, %7 : vector<8x512xf32>
    %402 = vector.extract_strided_slice %401 {offsets = [0, 0], sizes = [8, 128], strides = [1, 1]} : vector<8x512xf32> to vector<8x128xf32>
    %403 = arith.negf %402 : vector<8x128xf32>
    %404 = math.exp %403 : vector<8x128xf32>
    %cst_124 = arith.constant 1.000000e+00 : f32
    %405 = vector.broadcast %cst_124 : f32 to vector<8x128xf32>
    %406 = arith.addf %405, %404 : vector<8x128xf32>
    %407 = arith.divf %405, %406 : vector<8x128xf32>
    %408 = vector.extract_strided_slice %401 {offsets = [0, 128], sizes = [8, 128], strides = [1, 1]} : vector<8x512xf32> to vector<8x128xf32>
    %409 = arith.negf %408 : vector<8x128xf32>
    %410 = math.exp %409 : vector<8x128xf32>
    %cst_125 = arith.constant 1.000000e+00 : f32
    %411 = vector.broadcast %cst_125 : f32 to vector<8x128xf32>
    %412 = arith.addf %411, %410 : vector<8x128xf32>
    %413 = arith.divf %411, %412 : vector<8x128xf32>
    %414 = vector.extract_strided_slice %401 {offsets = [0, 256], sizes = [8, 128], strides = [1, 1]} : vector<8x512xf32> to vector<8x128xf32>
    %415 = math.tanh %414 : vector<8x128xf32>
    %416 = vector.extract_strided_slice %401 {offsets = [0, 384], sizes = [8, 128], strides = [1, 1]} : vector<8x512xf32> to vector<8x128xf32>
    %417 = arith.negf %416 : vector<8x128xf32>
    %418 = math.exp %417 : vector<8x128xf32>
    %cst_126 = arith.constant 1.000000e+00 : f32
    %419 = vector.broadcast %cst_126 : f32 to vector<8x128xf32>
    %420 = arith.addf %419, %418 : vector<8x128xf32>
    %421 = arith.divf %419, %420 : vector<8x128xf32>
    %422 = arith.mulf %413, %389 : vector<8x128xf32>
    %423 = arith.mulf %407, %415 : vector<8x128xf32>
    %424 = arith.addf %422, %423 : vector<8x128xf32>
    %425 = math.tanh %424 : vector<8x128xf32>
    %426 = arith.mulf %421, %425 : vector<8x128xf32>
    %c11_127 = arith.constant 11 : index
    %c0_128 = arith.constant 0 : index
    %c0_129 = arith.constant 0 : index
    %427 = vector.load %arg6[%c11_127, %c0_128, %c0_129] : memref<16x8x128xf32, #tpu.memory_space<vmem>>, vector<1x8x128xf32>
    %428 = vector.shape_cast %427 : vector<1x8x128xf32> to vector<8x128xf32>
    %429 = vector.shape_cast %426 : vector<8x128xf32> to vector<1x8x128xf32>
    tpu.vector_store %arg6[%c11_127, %c0_128, %c0_129], %429 {strides = array<i32>} : memref<16x8x128xf32, #tpu.memory_space<vmem>>, vector<1x8x128xf32>,
    %c12 = arith.constant 12 : index
    %c0_130 = arith.constant 0 : index
    %c0_131 = arith.constant 0 : index
    %430 = vector.load %arg2[%c12, %c0_130, %c0_131] : memref<16x8x16xbf16, #tpu.memory_space<vmem>>, vector<1x8x16xbf16>
    %431 = vector.shape_cast %430 : vector<1x8x16xbf16> to vector<8x16xbf16>
    %cst_132 = arith.constant dense<0.000000e+00> : vector<8x512xf32>
    %432 = tpu.matmul %431, %3, %cst_132 {dimension_numbers = #tpu.dot_dimension_numbers<[1], [0], [0], [1], [0, 0, 1, 1], [], []>} : vector<8x16xbf16>, vector<16x512xbf16>, vector<8x512xf32> -> vector<8x512xf32>
    %433 = arith.truncf %426 : vector<8x128xf32> to vector<8x128xbf16>
    %cst_133 = arith.constant dense<0.000000e+00> : vector<8x512xf32>
    %434 = tpu.matmul %433, %4, %cst_133 {dimension_numbers = #tpu.dot_dimension_numbers<[1], [0], [0], [1], [0, 0, 1, 1], [], []>} : vector<8x128xbf16>, vector<128x512xbf16>, vector<8x512xf32> -> vector<8x512xf32>
    %435 = arith.addf %432, %434 : vector<8x512xf32>
    %436 = arith.addf %435, %7 : vector<8x512xf32>
    %437 = vector.extract_strided_slice %436 {offsets = [0, 0], sizes = [8, 128], strides = [1, 1]} : vector<8x512xf32> to vector<8x128xf32>
    %438 = arith.negf %437 : vector<8x128xf32>
    %439 = math.exp %438 : vector<8x128xf32>
    %cst_134 = arith.constant 1.000000e+00 : f32
    %440 = vector.broadcast %cst_134 : f32 to vector<8x128xf32>
    %441 = arith.addf %440, %439 : vector<8x128xf32>
    %442 = arith.divf %440, %441 : vector<8x128xf32>
    %443 = vector.extract_strided_slice %436 {offsets = [0, 128], sizes = [8, 128], strides = [1, 1]} : vector<8x512xf32> to vector<8x128xf32>
    %444 = arith.negf %443 : vector<8x128xf32>
    %445 = math.exp %444 : vector<8x128xf32>
    %cst_135 = arith.constant 1.000000e+00 : f32
    %446 = vector.broadcast %cst_135 : f32 to vector<8x128xf32>
    %447 = arith.addf %446, %445 : vector<8x128xf32>
    %448 = arith.divf %446, %447 : vector<8x128xf32>
    %449 = vector.extract_strided_slice %436 {offsets = [0, 256], sizes = [8, 128], strides = [1, 1]} : vector<8x512xf32> to vector<8x128xf32>
    %450 = math.tanh %449 : vector<8x128xf32>
    %451 = vector.extract_strided_slice %436 {offsets = [0, 384], sizes = [8, 128], strides = [1, 1]} : vector<8x512xf32> to vector<8x128xf32>
    %452 = arith.negf %451 : vector<8x128xf32>
    %453 = math.exp %452 : vector<8x128xf32>
    %cst_136 = arith.constant 1.000000e+00 : f32
    %454 = vector.broadcast %cst_136 : f32 to vector<8x128xf32>
    %455 = arith.addf %454, %453 : vector<8x128xf32>
    %456 = arith.divf %454, %455 : vector<8x128xf32>
    %457 = arith.mulf %448, %424 : vector<8x128xf32>
    %458 = arith.mulf %442, %450 : vector<8x128xf32>
    %459 = arith.addf %457, %458 : vector<8x128xf32>
    %460 = math.tanh %459 : vector<8x128xf32>
    %461 = arith.mulf %456, %460 : vector<8x128xf32>
    %c12_137 = arith.constant 12 : index
    %c0_138 = arith.constant 0 : index
    %c0_139 = arith.constant 0 : index
    %462 = vector.load %arg6[%c12_137, %c0_138, %c0_139] : memref<16x8x128xf32, #tpu.memory_space<vmem>>, vector<1x8x128xf32>
    %463 = vector.shape_cast %462 : vector<1x8x128xf32> to vector<8x128xf32>
    %464 = vector.shape_cast %461 : vector<8x128xf32> to vector<1x8x128xf32>
    tpu.vector_store %arg6[%c12_137, %c0_138, %c0_139], %464 {strides = array<i32>} : memref<16x8x128xf32, #tpu.memory_space<vmem>>, vector<1x8x128xf32>,
    %c13 = arith.constant 13 : index
    %c0_140 = arith.constant 0 : index
    %c0_141 = arith.constant 0 : index
    %465 = vector.load %arg2[%c13, %c0_140, %c0_141] : memref<16x8x16xbf16, #tpu.memory_space<vmem>>, vector<1x8x16xbf16>
    %466 = vector.shape_cast %465 : vector<1x8x16xbf16> to vector<8x16xbf16>
    %cst_142 = arith.constant dense<0.000000e+00> : vector<8x512xf32>
    %467 = tpu.matmul %466, %3, %cst_142 {dimension_numbers = #tpu.dot_dimension_numbers<[1], [0], [0], [1], [0, 0, 1, 1], [], []>} : vector<8x16xbf16>, vector<16x512xbf16>, vector<8x512xf32> -> vector<8x512xf32>
    %468 = arith.truncf %461 : vector<8x128xf32> to vector<8x128xbf16>
    %cst_143 = arith.constant dense<0.000000e+00> : vector<8x512xf32>
    %469 = tpu.matmul %468, %4, %cst_143 {dimension_numbers = #tpu.dot_dimension_numbers<[1], [0], [0], [1], [0, 0, 1, 1], [], []>} : vector<8x128xbf16>, vector<128x512xbf16>, vector<8x512xf32> -> vector<8x512xf32>
    %470 = arith.addf %467, %469 : vector<8x512xf32>
    %471 = arith.addf %470, %7 : vector<8x512xf32>
    %472 = vector.extract_strided_slice %471 {offsets = [0, 0], sizes = [8, 128], strides = [1, 1]} : vector<8x512xf32> to vector<8x128xf32>
    %473 = arith.negf %472 : vector<8x128xf32>
    %474 = math.exp %473 : vector<8x128xf32>
    %cst_144 = arith.constant 1.000000e+00 : f32
    %475 = vector.broadcast %cst_144 : f32 to vector<8x128xf32>
    %476 = arith.addf %475, %474 : vector<8x128xf32>
    %477 = arith.divf %475, %476 : vector<8x128xf32>
    %478 = vector.extract_strided_slice %471 {offsets = [0, 128], sizes = [8, 128], strides = [1, 1]} : vector<8x512xf32> to vector<8x128xf32>
    %479 = arith.negf %478 : vector<8x128xf32>
    %480 = math.exp %479 : vector<8x128xf32>
    %cst_145 = arith.constant 1.000000e+00 : f32
    %481 = vector.broadcast %cst_145 : f32 to vector<8x128xf32>
    %482 = arith.addf %481, %480 : vector<8x128xf32>
    %483 = arith.divf %481, %482 : vector<8x128xf32>
    %484 = vector.extract_strided_slice %471 {offsets = [0, 256], sizes = [8, 128], strides = [1, 1]} : vector<8x512xf32> to vector<8x128xf32>
    %485 = math.tanh %484 : vector<8x128xf32>
    %486 = vector.extract_strided_slice %471 {offsets = [0, 384], sizes = [8, 128], strides = [1, 1]} : vector<8x512xf32> to vector<8x128xf32>
    %487 = arith.negf %486 : vector<8x128xf32>
    %488 = math.exp %487 : vector<8x128xf32>
    %cst_146 = arith.constant 1.000000e+00 : f32
    %489 = vector.broadcast %cst_146 : f32 to vector<8x128xf32>
    %490 = arith.addf %489, %488 : vector<8x128xf32>
    %491 = arith.divf %489, %490 : vector<8x128xf32>
    %492 = arith.mulf %483, %459 : vector<8x128xf32>
    %493 = arith.mulf %477, %485 : vector<8x128xf32>
    %494 = arith.addf %492, %493 : vector<8x128xf32>
    %495 = math.tanh %494 : vector<8x128xf32>
    %496 = arith.mulf %491, %495 : vector<8x128xf32>
    %c13_147 = arith.constant 13 : index
    %c0_148 = arith.constant 0 : index
    %c0_149 = arith.constant 0 : index
    %497 = vector.load %arg6[%c13_147, %c0_148, %c0_149] : memref<16x8x128xf32, #tpu.memory_space<vmem>>, vector<1x8x128xf32>
    %498 = vector.shape_cast %497 : vector<1x8x128xf32> to vector<8x128xf32>
    %499 = vector.shape_cast %496 : vector<8x128xf32> to vector<1x8x128xf32>
    tpu.vector_store %arg6[%c13_147, %c0_148, %c0_149], %499 {strides = array<i32>} : memref<16x8x128xf32, #tpu.memory_space<vmem>>, vector<1x8x128xf32>,
    %c14 = arith.constant 14 : index
    %c0_150 = arith.constant 0 : index
    %c0_151 = arith.constant 0 : index
    %500 = vector.load %arg2[%c14, %c0_150, %c0_151] : memref<16x8x16xbf16, #tpu.memory_space<vmem>>, vector<1x8x16xbf16>
    %501 = vector.shape_cast %500 : vector<1x8x16xbf16> to vector<8x16xbf16>
    %cst_152 = arith.constant dense<0.000000e+00> : vector<8x512xf32>
    %502 = tpu.matmul %501, %3, %cst_152 {dimension_numbers = #tpu.dot_dimension_numbers<[1], [0], [0], [1], [0, 0, 1, 1], [], []>} : vector<8x16xbf16>, vector<16x512xbf16>, vector<8x512xf32> -> vector<8x512xf32>
    %503 = arith.truncf %496 : vector<8x128xf32> to vector<8x128xbf16>
    %cst_153 = arith.constant dense<0.000000e+00> : vector<8x512xf32>
    %504 = tpu.matmul %503, %4, %cst_153 {dimension_numbers = #tpu.dot_dimension_numbers<[1], [0], [0], [1], [0, 0, 1, 1], [], []>} : vector<8x128xbf16>, vector<128x512xbf16>, vector<8x512xf32> -> vector<8x512xf32>
    %505 = arith.addf %502, %504 : vector<8x512xf32>
    %506 = arith.addf %505, %7 : vector<8x512xf32>
    %507 = vector.extract_strided_slice %506 {offsets = [0, 0], sizes = [8, 128], strides = [1, 1]} : vector<8x512xf32> to vector<8x128xf32>
    %508 = arith.negf %507 : vector<8x128xf32>
    %509 = math.exp %508 : vector<8x128xf32>
    %cst_154 = arith.constant 1.000000e+00 : f32
    %510 = vector.broadcast %cst_154 : f32 to vector<8x128xf32>
    %511 = arith.addf %510, %509 : vector<8x128xf32>
    %512 = arith.divf %510, %511 : vector<8x128xf32>
    %513 = vector.extract_strided_slice %506 {offsets = [0, 128], sizes = [8, 128], strides = [1, 1]} : vector<8x512xf32> to vector<8x128xf32>
    %514 = arith.negf %513 : vector<8x128xf32>
    %515 = math.exp %514 : vector<8x128xf32>
    %cst_155 = arith.constant 1.000000e+00 : f32
    %516 = vector.broadcast %cst_155 : f32 to vector<8x128xf32>
    %517 = arith.addf %516, %515 : vector<8x128xf32>
    %518 = arith.divf %516, %517 : vector<8x128xf32>
    %519 = vector.extract_strided_slice %506 {offsets = [0, 256], sizes = [8, 128], strides = [1, 1]} : vector<8x512xf32> to vector<8x128xf32>
    %520 = math.tanh %519 : vector<8x128xf32>
    %521 = vector.extract_strided_slice %506 {offsets = [0, 384], sizes = [8, 128], strides = [1, 1]} : vector<8x512xf32> to vector<8x128xf32>
    %522 = arith.negf %521 : vector<8x128xf32>
    %523 = math.exp %522 : vector<8x128xf32>
    %cst_156 = arith.constant 1.000000e+00 : f32
    %524 = vector.broadcast %cst_156 : f32 to vector<8x128xf32>
    %525 = arith.addf %524, %523 : vector<8x128xf32>
    %526 = arith.divf %524, %525 : vector<8x128xf32>
    %527 = arith.mulf %518, %494 : vector<8x128xf32>
    %528 = arith.mulf %512, %520 : vector<8x128xf32>
    %529 = arith.addf %527, %528 : vector<8x128xf32>
    %530 = math.tanh %529 : vector<8x128xf32>
    %531 = arith.mulf %526, %530 : vector<8x128xf32>
    %c14_157 = arith.constant 14 : index
    %c0_158 = arith.constant 0 : index
    %c0_159 = arith.constant 0 : index
    %532 = vector.load %arg6[%c14_157, %c0_158, %c0_159] : memref<16x8x128xf32, #tpu.memory_space<vmem>>, vector<1x8x128xf32>
    %533 = vector.shape_cast %532 : vector<1x8x128xf32> to vector<8x128xf32>
    %534 = vector.shape_cast %531 : vector<8x128xf32> to vector<1x8x128xf32>
    tpu.vector_store %arg6[%c14_157, %c0_158, %c0_159], %534 {strides = array<i32>} : memref<16x8x128xf32, #tpu.memory_space<vmem>>, vector<1x8x128xf32>,
    %c15 = arith.constant 15 : index
    %c0_160 = arith.constant 0 : index
    %c0_161 = arith.constant 0 : index
    %535 = vector.load %arg2[%c15, %c0_160, %c0_161] : memref<16x8x16xbf16, #tpu.memory_space<vmem>>, vector<1x8x16xbf16>
    %536 = vector.shape_cast %535 : vector<1x8x16xbf16> to vector<8x16xbf16>
    %cst_162 = arith.constant dense<0.000000e+00> : vector<8x512xf32>
    %537 = tpu.matmul %536, %3, %cst_162 {dimension_numbers = #tpu.dot_dimension_numbers<[1], [0], [0], [1], [0, 0, 1, 1], [], []>} : vector<8x16xbf16>, vector<16x512xbf16>, vector<8x512xf32> -> vector<8x512xf32>
    %538 = arith.truncf %531 : vector<8x128xf32> to vector<8x128xbf16>
    %cst_163 = arith.constant dense<0.000000e+00> : vector<8x512xf32>
    %539 = tpu.matmul %538, %4, %cst_163 {dimension_numbers = #tpu.dot_dimension_numbers<[1], [0], [0], [1], [0, 0, 1, 1], [], []>} : vector<8x128xbf16>, vector<128x512xbf16>, vector<8x512xf32> -> vector<8x512xf32>
    %540 = arith.addf %537, %539 : vector<8x512xf32>
    %541 = arith.addf %540, %7 : vector<8x512xf32>
    %542 = vector.extract_strided_slice %541 {offsets = [0, 0], sizes = [8, 128], strides = [1, 1]} : vector<8x512xf32> to vector<8x128xf32>
    %543 = arith.negf %542 : vector<8x128xf32>
    %544 = math.exp %543 : vector<8x128xf32>
    %cst_164 = arith.constant 1.000000e+00 : f32
    %545 = vector.broadcast %cst_164 : f32 to vector<8x128xf32>
    %546 = arith.addf %545, %544 : vector<8x128xf32>
    %547 = arith.divf %545, %546 : vector<8x128xf32>
    %548 = vector.extract_strided_slice %541 {offsets = [0, 128], sizes = [8, 128], strides = [1, 1]} : vector<8x512xf32> to vector<8x128xf32>
    %549 = arith.negf %548 : vector<8x128xf32>
    %550 = math.exp %549 : vector<8x128xf32>
    %cst_165 = arith.constant 1.000000e+00 : f32
    %551 = vector.broadcast %cst_165 : f32 to vector<8x128xf32>
    %552 = arith.addf %551, %550 : vector<8x128xf32>
    %553 = arith.divf %551, %552 : vector<8x128xf32>
    %554 = vector.extract_strided_slice %541 {offsets = [0, 256], sizes = [8, 128], strides = [1, 1]} : vector<8x512xf32> to vector<8x128xf32>
    %555 = math.tanh %554 : vector<8x128xf32>
    %556 = vector.extract_strided_slice %541 {offsets = [0, 384], sizes = [8, 128], strides = [1, 1]} : vector<8x512xf32> to vector<8x128xf32>
    %557 = arith.negf %556 : vector<8x128xf32>
    %558 = math.exp %557 : vector<8x128xf32>
    %cst_166 = arith.constant 1.000000e+00 : f32
    %559 = vector.broadcast %cst_166 : f32 to vector<8x128xf32>
    %560 = arith.addf %559, %558 : vector<8x128xf32>
    %561 = arith.divf %559, %560 : vector<8x128xf32>
    %562 = arith.mulf %553, %529 : vector<8x128xf32>
    %563 = arith.mulf %547, %555 : vector<8x128xf32>
    %564 = arith.addf %562, %563 : vector<8x128xf32>
    %565 = math.tanh %564 : vector<8x128xf32>
    %566 = arith.mulf %561, %565 : vector<8x128xf32>
    %c15_167 = arith.constant 15 : index
    %c0_168 = arith.constant 0 : index
    %c0_169 = arith.constant 0 : index
    %567 = vector.load %arg6[%c15_167, %c0_168, %c0_169] : memref<16x8x128xf32, #tpu.memory_space<vmem>>, vector<1x8x128xf32>
    %568 = vector.shape_cast %567 : vector<1x8x128xf32> to vector<8x128xf32>
    %569 = vector.shape_cast %566 : vector<8x128xf32> to vector<1x8x128xf32>
    tpu.vector_store %arg6[%c15_167, %c0_168, %c0_169], %569 {strides = array<i32>} : memref<16x8x128xf32, #tpu.memory_space<vmem>>, vector<1x8x128xf32>,
    %c0_170 = arith.constant 0 : index
    %c0_171 = arith.constant 0 : index
    %570 = vector.load %arg7[%c0_170, %c0_171] : memref<8x128xf32, #tpu.memory_space<vmem>>, vector<8x128xf32>
    tpu.vector_store %arg7[%c0_170, %c0_171], %566 {strides = array<i32>} : memref<8x128xf32, #tpu.memory_space<vmem>>, vector<8x128xf32>,
    %c0_172 = arith.constant 0 : index
    %c0_173 = arith.constant 0 : index
    %571 = vector.load %arg8[%c0_172, %c0_173] : memref<8x128xf32, #tpu.memory_space<vmem>>, vector<8x128xf32>
    tpu.vector_store %arg8[%c0_172, %c0_173], %564 {strides = array<i32>} : memref<8x128xf32, #tpu.memory_space<vmem>>, vector<8x128xf32>,
    return
  }
  func.func @transform_0(%arg0: i32, %arg1: i32) -> (i32, i32, i32) {
    %c0_i32 = arith.constant 0 : i32
    %c0_i32_0 = arith.constant 0 : i32
    return %arg1, %arg0, %c0_i32 : i32, i32, i32
  }
  func.func @transform_1(%arg0: i32, %arg1: i32) -> (i32, i32) {
    %c0_i32 = arith.constant 0 : i32
    %c0_i32_0 = arith.constant 0 : i32
    %c0_i32_1 = arith.constant 0 : i32
    return %c0_i32, %c0_i32_0 : i32, i32
  }
  func.func @transform_2(%arg0: i32, %arg1: i32) -> (i32, i32) {
    %c0_i32 = arith.constant 0 : i32
    %c0_i32_0 = arith.constant 0 : i32
    %c0_i32_1 = arith.constant 0 : i32
    return %c0_i32, %c0_i32_0 : i32, i32
  }
  func.func @transform_3(%arg0: i32, %arg1: i32) -> (i32, i32) {
    %c0_i32 = arith.constant 0 : i32
    %c0_i32_0 = arith.constant 0 : i32
    %c0_i32_1 = arith.constant 0 : i32
    return %c0_i32, %c0_i32_0 : i32, i32
  }
  func.func @transform_4(%arg0: i32, %arg1: i32) -> (i32, i32, i32) {
    %c0_i32 = arith.constant 0 : i32
    %c0_i32_0 = arith.constant 0 : i32
    return %arg1, %arg0, %c0_i32 : i32, i32, i32
  }
}

</mosaic_0001>

<llo_original>
// kernel: lstm_encoder_forward.1
$region0: #{lstm_encoder_forward.1}
  #allocation0 [shape = 'u32[]', space=smem, size = 0x4, offset = 0x4, fixed_abs, tag = 'smem constant byte address 0x4 - core index']
  #allocation1 [shape = 'u32[72,128]{1,0:T(1,128)}', space=vmem, size = 0x9000, scoped, tag = 'internal scratch']
  #allocation2 [shape = 'f32[8,128]{1,0:T(8,128)}', space=vmem, size = 0x1000, scoped, tag = 'scratch operand']
  #allocation3 [shape = 'f32[8,128]{1,0:T(8,128)}', space=vmem, size = 0x1000, scoped, tag = 'scratch operand']
  %s0 = inlined_call_operand.vmem [shape: bf16[32,8,16], index: 0, kind: input, shape index: {}]
  %s1 = inlined_call_operand.vmem [shape: bf16[16,512], index: 1, kind: input, shape index: {}]
  %s2 = inlined_call_operand.vmem [shape: bf16[128,512], index: 2, kind: input, shape index: {}]
  %s3 = inlined_call_operand.vmem [shape: f32[1,512], index: 3, kind: input, shape index: {}]
  %s4 = inlined_call_operand.vmem [shape: f32[32,8,128], index: 4, kind: output, shape index: {}]
  %s5 = sld [smem:[#allocation0]]
  $region53: #{lstm_encoder_forward.1} parent=0
    _
  %s7 = ssub.s32 1, %s5
  %s8 = scalar_select 0, %s7, %s5
  loop: start=0, step=1, limit=4
  $region2: #{lstm_encoder_forward.1} parent=0 // loop_pre_header
    _
  $region3: #{lstm_encoder_forward.1} parent=0 // loop_header
    %s10 = sphi 0, %s14
    %p11 = scmp.ge.s32.totalorder %s10, 4
    %s17 = sphi 0, %s29
    %s18 = sphi 0, %s25
    %s19 = sphi 0, %s17
    %s20 = sphi 0, %s18
    %s21 = sphi 0, %s19
    %s22 = sphi 0, %s20
    %s34 = sphi 0, %s36
    %s37 = sphi 0, %s34
    %s38 = sphi 0, %s37
    %s54 = sphi 0, %s38
    %s58 = sphi 0, %s58
    %s60 = sphi 0, %s58
    %s61 = sphi 0, %s60
    %s75 = sphi 0, %s61
    %s79 = sphi 0, %s79
    %s81 = sphi 0, %s79
    %s82 = sphi 0, %s81
    %s96 = sphi 0, %s82
    %s100 = sphi 0, %s100
    %s102 = sphi 0, %s100
    %s103 = sphi 0, %s102
    %s117 = sphi 0, %s103
    %s125 = sphi 0, %s127
    %s128 = sphi 0, %s125
    %s129 = sphi 0, %s128
    %s145 = sphi 0, %s129
  $region4: #{lstm_encoder_forward.1} parent=0 // loop_header_branch
    %13 = sbr.rel (%p11) target = $region8
  $region5: #{lstm_encoder_forward.1} parent=0 // loop_body
    %s15 = ssub.s32 %s10, 1
    %s16 = ssub.s32 %s10, 2
    %s23 = sadd.s32 1, %s18
    %p24 = scmp.ge.s32.totalorder %s23, 2
    %s25 = scalar_select %p24, 0, %s23
    %s26 = sadd.s32 1, %s17
    %s27 = scalar_select %p24, %s26, %s17
    %p28 = scmp.ge.s32.totalorder %s27, 1
    %s29 = scalar_select %p28, 0, %s27
    %s30 = ssub.s32 %s18, %s25
    %s31 = ssub.s32 %s17, %s29
    %s32 = sor.u32 %s30, %s31
    %p33 = scmp.eq.s32.totalorder %s32, 0
    %s35 = sadd.s32 %s34, 1
    %s36 = scalar_select %p33, %s34, %s35
    %p39 = pneg %p33
    %p40 = scmp.eq.s32.totalorder %s10, 1
    %p41 = por %p39, %p40
    %p42 = scmp.ne.s32.totalorder %s34, %s37
    %p43 = scmp.eq.s32.totalorder %s10, 0
    %p44 = por %p42, %p43
    %p45 = scmp.ne.s32.totalorder %s34, %s37
    %p46 = scmp.eq.s32.totalorder %s15, 1
    %p47 = por %p45, %p46
    %p48 = scmp.ne.s32.totalorder %s37, %s38
    %p49 = scmp.eq.s32.totalorder %s15, 0
    %p50 = por %p48, %p49
    %p51 = scmp.ne.s32.totalorder %s37, %s38
    %p52 = scmp.eq.s32.totalorder %s16, 1
    %p53 = por %p51, %p52
    %p55 = scmp.ne.s32.totalorder %s38, %s54
    %p56 = scmp.eq.s32.totalorder %s16, 0
    %p57 = por %p55, %p56
    %s59 = sadd.s32 %s58, 1
    %p62 = scmp.eq.s32.totalorder %s10, 1
    %p63 = scmp.ne.s32.totalorder %s58, %s60
    %p64 = scmp.eq.s32.totalorder %s10, 0
    %p65 = por %p63, %p64
    %p66 = scmp.ne.s32.totalorder %s58, %s60
    %p67 = scmp.eq.s32.totalorder %s15, 1
    %p68 = por %p66, %p67
    %p69 = scmp.ne.s32.totalorder %s60, %s61
    %p70 = scmp.eq.s32.totalorder %s15, 0
    %p71 = por %p69, %p70
    %p72 = scmp.ne.s32.totalorder %s60, %s61
    %p73 = scmp.eq.s32.totalorder %s16, 1
    %p74 = por %p72, %p73
    %p76 = scmp.ne.s32.totalorder %s61, %s75
    %p77 = scmp.eq.s32.totalorder %s16, 0
    %p78 = por %p76, %p77
    %s80 = sadd.s32 %s79, 1
    %p83 = scmp.eq.s32.totalorder %s10, 1
    %p84 = scmp.ne.s32.totalorder %s79, %s81
    %p85 = scmp.eq.s32.totalorder %s10, 0
    %p86 = por %p84, %p85
    %p87 = scmp.ne.s32.totalorder %s79, %s81
    %p88 = scmp.eq.s32.totalorder %s15, 1
    %p89 = por %p87, %p88
    %p90 = scmp.ne.s32.totalorder %s81, %s82
    %p91 = scmp.eq.s32.totalorder %s15, 0
    %p92 = por %p90, %p91
    %p93 = scmp.ne.s32.totalorder %s81, %s82
    %p94 = scmp.eq.s32.totalorder %s16, 1
    %p95 = por %p93, %p94
    %p97 = scmp.ne.s32.totalorder %s82, %s96
    %p98 = scmp.eq.s32.totalorder %s16, 0
    %p99 = por %p97, %p98
    %s101 = sadd.s32 %s100, 1
    %p104 = scmp.eq.s32.totalorder %s10, 1
    %p105 = scmp.ne.s32.totalorder %s100, %s102
    %p106 = scmp.eq.s32.totalorder %s10, 0
    %p107 = por %p105, %p106
    %p108 = scmp.ne.s32.totalorder %s100, %s102
    %p109 = scmp.eq.s32.totalorder %s15, 1
    %p110 = por %p108, %p109
    %p111 = scmp.ne.s32.totalorder %s102, %s103
    %p112 = scmp.eq.s32.totalorder %s15, 0
    %p113 = por %p111, %p112
    %p114 = scmp.ne.s32.totalorder %s102, %s103
    %p115 = scmp.eq.s32.totalorder %s16, 1
    %p116 = por %p114, %p115
    %p118 = scmp.ne.s32.totalorder %s103, %s117
    %p119 = scmp.eq.s32.totalorder %s16, 0
    %p120 = por %p118, %p119
    %s121 = ssub.s32 %s18, %s25
    %s122 = ssub.s32 %s17, %s29
    %s123 = sor.u32 %s121, %s122
    %p124 = scmp.eq.s32.totalorder %s123, 0
    %s126 = sadd.s32 %s125, 1
    %s127 = scalar_select %p124, %s125, %s126
    %p130 = pneg %p124
    %p131 = scmp.eq.s32.totalorder %s10, 1
    %p132 = por %p130, %p131
    %p133 = scmp.ne.s32.totalorder %s125, %s128
    %p134 = scmp.eq.s32.totalorder %s10, 0
    %p135 = por %p133, %p134
    %p136 = scmp.ne.s32.totalorder %s125, %s128
    %p137 = scmp.eq.s32.totalorder %s15, 1
    %p138 = por %p136, %p137
    %p139 = scmp.ne.s32.totalorder %s128, %s129
    %p140 = scmp.eq.s32.totalorder %s15, 0
    %p141 = por %p139, %p140
    %p142 = scmp.ne.s32.totalorder %s128, %s129
    %p143 = scmp.eq.s32.totalorder %s16, 1
    %p144 = por %p142, %p143
    %p146 = scmp.ne.s32.totalorder %s129, %s145
    %p147 = scmp.eq.s32.totalorder %s16, 0
    %p148 = por %p146, %p147
    %p149 = scmp.le.s32.totalorder 1, %s10
    %p150 = scmp.lt.s32.totalorder %s10, 3
    %p151 = pnand %p149, %p150
    %p152 = pneg %p151
    // Predicated region
    $region9: #{lstm_encoder_forward.1} parent=5 // pred_check
      _
    $region10: #{lstm_encoder_forward.1} parent=5 // pred_check_branch
      %154 = sbr.rel (%p151) target = $region12
    $region11: #{lstm_encoder_forward.1} parent=5 // pred_region
      %s155 = ssub.s32 %s10, 1
      // Predicated region
      $region13: #{lstm_encoder_forward.1} parent=11 // pred_check
        %p156 = pneg %p71
      $region14: #{lstm_encoder_forward.1} parent=11 // pred_check_branch
        %158 = sbr.rel (%p156) target = $region16
      $region15: #{lstm_encoder_forward.1} parent=11 // pred_region
        _
      $region16: #{lstm_encoder_forward.1} parent=11 // pred_fallthru
        _
      // Predicated region
      $region17: #{lstm_encoder_forward.1} parent=11 // pred_check
        %p159 = pneg %p92
      $region18: #{lstm_encoder_forward.1} parent=11 // pred_check_branch
        %161 = sbr.rel (%p159) target = $region20
      $region19: #{lstm_encoder_forward.1} parent=11 // pred_region
        _
      $region20: #{lstm_encoder_forward.1} parent=11 // pred_fallthru
        _
      // Predicated region
      $region21: #{lstm_encoder_forward.1} parent=11 // pred_check
        %p162 = pneg %p113
      $region22: #{lstm_encoder_forward.1} parent=11 // pred_check_branch
        %164 = sbr.rel (%p162) target = $region24
      $region23: #{lstm_encoder_forward.1} parent=11 // pred_region
        _
      $region24: #{lstm_encoder_forward.1} parent=11 // pred_fallthru
        _
    $region12: #{lstm_encoder_forward.1} parent=5 // pred_fallthru
      _
    %p165 = scmp.lt.s32.totalorder %s10, 2
    // Predicated region
    $region25: #{lstm_encoder_forward.1} parent=5 // pred_check
      %p166 = pneg %p165
    $region26: #{lstm_encoder_forward.1} parent=5 // pred_check_branch
      %168 = sbr.rel (%p166) target = $region28
    $region27: #{lstm_encoder_forward.1} parent=5 // pred_region
      // Predicated region
      $region29: #{lstm_encoder_forward.1} parent=27 // pred_check
        %p169 = pneg %p44
      $region30: #{lstm_encoder_forward.1} parent=27 // pred_check_branch
        %171 = sbr.rel (%p169) target = $region32
      $region31: #{lstm_encoder_forward.1} parent=27 // pred_region
        %s172 = smul.u32 16, %s18
        %p173 = scmp.lt.s32.totalorder %s172, 31
        %s174 = scalar_select %p173, %s172, 31
        %p175 = scmp.lt.s32.totalorder %s17, 0
        %s176 = scalar_select %p175, %s17, 0
        %s177 = sadd.s32 %s176, %s174
        %s178 = smul.addr %s177, 4
        %s179 = scalar_lea.vmem %s0, %s178
        %s180 = smul.u32 16, %s18
      $region32: #{lstm_encoder_forward.1} parent=27 // pred_fallthru
        _
    $region28: #{lstm_encoder_forward.1} parent=5 // pred_fallthru
      _
    %p181 = scmp.le.s32.totalorder 1, %s10
    %p182 = scmp.lt.s32.totalorder %s10, 3
    %p183 = pnand %p181, %p182
    %p184 = pneg %p183
    // Predicated region
    $region33: #{lstm_encoder_forward.1} parent=5 // pred_check
      _
    $region34: #{lstm_encoder_forward.1} parent=5 // pred_check_branch
      %186 = sbr.rel (%p183) target = $region36
    $region35: #{lstm_encoder_forward.1} parent=5 // pred_region
      %s187 = ssub.s32 %s10, 1
      %s188 = smul.u32 16, %s20
      %p189 = scmp.lt.s32.totalorder %s188, 31
      %s190 = scalar_select %p189, %s188, 31
      %p191 = scmp.lt.s32.totalorder %s19, 0
      %s192 = scalar_select %p191, %s19, 0
      %s193 = sadd.s32 %s192, %s190
      %s194 = smul.addr %s193, 4
      %s195 = scalar_lea.vmem %s0, %s194
      %p196 = pneg %p50
      %p197 = pneg %p47
      %p198 = pneg %p71
      %p199 = pneg %p68
      %p200 = pneg %p92
      %p201 = pneg %p89
      %p202 = pneg %p113
      %p203 = pneg %p110
      %p204 = pneg %p141
      %p205 = pneg %p138
      %s206 = smul.u32 16, %s20
      %p207 = scmp.lt.s32.totalorder %s206, 31
      %s208 = scalar_select %p207, %s206, 31
      %p209 = scmp.lt.s32.totalorder %s19, 0
      %s210 = scalar_select %p209, %s19, 0
      %s211 = sadd.s32 %s210, %s208
      %s212 = smul.addr %s211, 8
      %s213 = scalar_lea.vmem %s4, %s212
      %s214 = smul.u32 16, %s20
      %p215 = scmp.lt.s32.totalorder %s214, 31
      %s216 = scalar_select %p215, %s214, 31
      %p217 = scmp.lt.s32.totalorder %s19, 0
      %s218 = scalar_select %p217, %s19, 0
      %s219 = sadd.s32 %s218, %s216
      %s220 = smul.addr %s219, 4
      %s221 = scalar_lea.vmem %s0, %s220
      %s222 = smul.u32 16, %s20
      %s223 = smul.u32 16, %s20
      %p224 = scmp.lt.s32.totalorder %s223, 31
      %s225 = scalar_select %p224, %s223, 31
      %p226 = scmp.lt.s32.totalorder %s19, 0
      %s227 = scalar_select %p226, %s19, 0
      %s228 = sadd.s32 %s227, %s225
      %s229 = smul.addr %s228, 8
      %s230 = scalar_lea.vmem %s4, %s229
      %s231 = smul.u32 16, %s20
      %p233 = scmp.eq.s32.totalorder %s20, 0
      // Predicated region
      $region37: #{lstm_encoder_forward.1} parent=35 // pred_check
        %p234 = pneg %p233
      $region38: #{lstm_encoder_forward.1} parent=35 // pred_check_branch
        %236 = sbr.rel (%p234) target = $region40
      $region39: #{lstm_encoder_forward.1} parent=35 // pred_region
        %237 = vst [vmem:[#allocation2] sm:$0xff] 0.0
        %238 = vst [vmem:[#allocation3] sm:$0xff] 0.0
      $region40: #{lstm_encoder_forward.1} parent=35 // pred_fallthru
        _
      %v239 = vld [vmem:[%s1] sm:$0xff]
      %v240 = vld [vmem:[%s1 + $0x8] sm:$0xff]
      %v241 = vld [vmem:[%s1 + $0x10] sm:$0xff]
      %v242 = vld [vmem:[%s1 + $0x18] sm:$0xff]
      %v243 = vld [vmem:[%s2] sm:$0xff]
      %v244 = vld [vmem:[%s2 + $0x8] sm:$0xff]
      %v245 = vld [vmem:[%s2 + $0x10] sm:$0xff]
      %v246 = vld [vmem:[%s2 + $0x18] sm:$0xff]
      %v247 = vld [vmem:[%s2 + $0x20] sm:$0xff]
      %v248 = vld [vmem:[%s2 + $0x28] sm:$0xff]
      %v249 = vld [vmem:[%s2 + $0x30] sm:$0xff]
      %v250 = vld [vmem:[%s2 + $0x38] sm:$0xff]
      %v251 = vld [vmem:[%s2 + $0x40] sm:$0xff]
      %v252 = vld [vmem:[%s2 + $0x48] sm:$0xff]
      %v253 = vld [vmem:[%s2 + $0x50] sm:$0xff]
      %v254 = vld [vmem:[%s2 + $0x58] sm:$0xff]
      %v255 = vld [vmem:[%s2 + $0x60] sm:$0xff]
      %v256 = vld [vmem:[%s2 + $0x68] sm:$0xff]
      %v257 = vld [vmem:[%s2 + $0x70] sm:$0xff]
      %v258 = vld [vmem:[%s2 + $0x78] sm:$0xff]
      %v259 = vld [vmem:[%s2 + $0x80] sm:$0xff]
      %v260 = vld [vmem:[%s2 + $0x88] sm:$0xff]
      %v261 = vld [vmem:[%s2 + $0x90] sm:$0xff]
      %v262 = vld [vmem:[%s2 + $0x98] sm:$0xff]
      %v263 = vld [vmem:[%s2 + $0xa0] sm:$0xff]
      %v264 = vld [vmem:[%s2 + $0xa8] sm:$0xff]
      %v265 = vld [vmem:[%s2 + $0xb0] sm:$0xff]
      %v266 = vld [vmem:[%s2 + $0xb8] sm:$0xff]
      %v267 = vld [vmem:[%s2 + $0xc0] sm:$0xff]
      %v268 = vld [vmem:[%s2 + $0xc8] sm:$0xff]
      %v269 = vld [vmem:[%s2 + $0xd0] sm:$0xff]
      %v270 = vld [vmem:[%s2 + $0xd8] sm:$0xff]
      %v271 = vld [vmem:[%s2 + $0xe0] sm:$0xff]
      %v272 = vld [vmem:[%s2 + $0xe8] sm:$0xff]
      %v273 = vld [vmem:[%s2 + $0xf0] sm:$0xff]
      %v274 = vld [vmem:[%s2 + $0xf8] sm:$0xff]
      %v275 = vld [vmem:[%s3] sm:$0xf]
      %v277 = vperm.slane %v275, 0
      %v278 = vperm.slane %v275, 1
      %v279 = vperm.slane %v275, 2
      %v280 = vperm.slane %v275, 3
      %v285 = vld [vmem:[#allocation2] sm:$0xff]
      %v286 = vld [vmem:[#allocation3] sm:$0xff]
      %v287 = vld [vmem:[%s221] sm:$0xf]
      %v288 = vpack.c.bf16 %v285, %v285
      %v321 = vunpack.c.l.b16 %v243
      %v322 = vunpack.c.h.b16 %v243
      %v323 = vunpack.c.l.b16 %v244
      %v324 = vunpack.c.h.b16 %v244
      %v325 = vunpack.c.l.b16 %v245
      %v326 = vunpack.c.h.b16 %v245
      %v327 = vunpack.c.l.b16 %v246
      %v328 = vunpack.c.h.b16 %v246
      %v329 = vunpack.c.l.b16 %v247
      %v330 = vunpack.c.h.b16 %v247
      %v331 = vunpack.c.l.b16 %v248
      %v332 = vunpack.c.h.b16 %v248
      %v333 = vunpack.c.l.b16 %v249
      %v334 = vunpack.c.h.b16 %v249
      %v335 = vunpack.c.l.b16 %v250
      %v336 = vunpack.c.h.b16 %v250
      %v337 = vunpack.c.l.b16 %v251
      %v338 = vunpack.c.h.b16 %v251
      %v339 = vunpack.c.l.b16 %v252
      %v340 = vunpack.c.h.b16 %v252
      %v341 = vunpack.c.l.b16 %v253
      %v342 = vunpack.c.h.b16 %v253
      %v343 = vunpack.c.l.b16 %v254
      %v344 = vunpack.c.h.b16 %v254
      %v345 = vunpack.c.l.b16 %v255
      %v346 = vunpack.c.h.b16 %v255
      %v347 = vunpack.c.l.b16 %v256
      %v348 = vunpack.c.h.b16 %v256
      %v349 = vunpack.c.l.b16 %v257
      %v350 = vunpack.c.h.b16 %v257
      %v351 = vunpack.c.l.b16 %v258
      %v352 = vunpack.c.h.b16 %v258
      %v353 = vunpack.c.l.b16 %v259
      %v354 = vunpack.c.h.b16 %v259
      %v355 = vunpack.c.l.b16 %v260
      %v356 = vunpack.c.h.b16 %v260
      %v357 = vunpack.c.l.b16 %v261
      %v358 = vunpack.c.h.b16 %v261
      %v359 = vunpack.c.l.b16 %v262
      %v360 = vunpack.c.h.b16 %v262
      %v361 = vunpack.c.l.b16 %v263
      %v362 = vunpack.c.h.b16 %v263
      %v363 = vunpack.c.l.b16 %v264
      %v364 = vunpack.c.h.b16 %v264
      %v365 = vunpack.c.l.b16 %v265
      %v366 = vunpack.c.h.b16 %v265
      %v367 = vunpack.c.l.b16 %v266
      %v368 = vunpack.c.h.b16 %v266
      %v369 = vunpack.c.l.b16 %v267
      %v370 = vunpack.c.h.b16 %v267
      %v371 = vunpack.c.l.b16 %v268
      %v372 = vunpack.c.h.b16 %v268
      %v373 = vunpack.c.l.b16 %v269
      %v374 = vunpack.c.h.b16 %v269
      %v375 = vunpack.c.l.b16 %v270
      %v376 = vunpack.c.h.b16 %v270
      %v377 = vunpack.c.l.b16 %v271
      %v378 = vunpack.c.h.b16 %v271
      %v379 = vunpack.c.l.b16 %v272
      %v380 = vunpack.c.h.b16 %v272
      %v381 = vunpack.c.l.b16 %v273
      %v382 = vunpack.c.h.b16 %v273
      %v383 = vunpack.c.l.b16 %v274
      %v384 = vunpack.c.h.b16 %v274
      %v385 = vpack.c.b16 %v325, %v321
      %v386 = vpack.c.b16 %v326, %v322
      %v387 = vpack.c.b16 %v327, %v323
      %v388 = vpack.c.b16 %v328, %v324
      %v389 = vpack.c.b16 %v333, %v329
      %v390 = vpack.c.b16 %v334, %v330
      %v391 = vpack.c.b16 %v335, %v331
      %v392 = vpack.c.b16 %v336, %v332
      %v393 = vpack.c.b16 %v341, %v337
      %v394 = vpack.c.b16 %v342, %v338
      %v395 = vpack.c.b16 %v343, %v339
      %v396 = vpack.c.b16 %v344, %v340
      %v397 = vpack.c.b16 %v349, %v345
      %v398 = vpack.c.b16 %v350, %v346
      %v399 = vpack.c.b16 %v351, %v347
      %v400 = vpack.c.b16 %v352, %v348
      %v401 = vpack.c.b16 %v357, %v353
      %v402 = vpack.c.b16 %v358, %v354
      %v403 = vpack.c.b16 %v359, %v355
      %v404 = vpack.c.b16 %v360, %v356
      %v405 = vpack.c.b16 %v365, %v361
      %v406 = vpack.c.b16 %v366, %v362
      %v407 = vpack.c.b16 %v367, %v363
      %v408 = vpack.c.b16 %v368, %v364
      %v409 = vpack.c.b16 %v373, %v369
      %v410 = vpack.c.b16 %v374, %v370
      %v411 = vpack.c.b16 %v375, %v371
      %v412 = vpack.c.b16 %v376, %v372
      %v413 = vpack.c.b16 %v381, %v377
      %v414 = vpack.c.b16 %v382, %v378
      %v415 = vpack.c.b16 %v383, %v379
      %v416 = vpack.c.b16 %v384, %v380
      %449 = vmatpush.bf16.msra.mxu0 %v413
      %450 = vmatpush.bf16.msra.mxu0 %v409
      %451 = vmatpush.bf16.msra.mxu0 %v405
      %452 = vmatpush.bf16.msra.mxu0 %v401
      %453 = vmatpush.bf16.msra.mxu0 %v397
      %454 = vmatpush.bf16.msra.mxu0 %v393
      %455 = vmatpush.bf16.msra.mxu0 %v389
      %456 = vmatpush.bf16.msra.mxu0 %v385
      %457 = vmatmul.bf16.gmra.mxu0 %v288
      %v458 = vpop.f32.mrf.mxu0
      %v459 = vadd.f32 0.0, %v458
      %v460 = vpop.f32.mrf.mxu0
      %461 = vdwg.mxu0
      %462 = vmatpush.bf16.msra.mxu0 %v414
      %463 = vmatpush.bf16.msra.mxu0 %v410
      %464 = vmatpush.bf16.msra.mxu0 %v406
      %465 = vmatpush.bf16.msra.mxu0 %v402
      %466 = vmatpush.bf16.msra.mxu0 %v398
      %467 = vmatpush.bf16.msra.mxu0 %v394
      %468 = vmatpush.bf16.msra.mxu0 %v390
      %469 = vmatpush.bf16.msra.mxu0 %v386
      %470 = vmatmul.bf16.gmra.mxu0 %v288
      %v471 = vpop.f32.mrf.mxu0
      %v472 = vadd.f32 0.0, %v471
      %v473 = vpop.f32.mrf.mxu0
      %474 = vdwg.mxu0
      %475 = vmatpush.bf16.msra.mxu0 %v415
      %476 = vmatpush.bf16.msra.mxu0 %v411
      %477 = vmatpush.bf16.msra.mxu0 %v407
      %478 = vmatpush.bf16.msra.mxu0 %v403
      %479 = vmatpush.bf16.msra.mxu0 %v399
      %480 = vmatpush.bf16.msra.mxu0 %v395
      %481 = vmatpush.bf16.msra.mxu0 %v391
      %482 = vmatpush.bf16.msra.mxu0 %v387
      %483 = vmatmul.bf16.gmra.mxu0 %v288
      %v484 = vpop.f32.mrf.mxu0
      %v485 = vadd.f32 0.0, %v484
      %v486 = vpop.f32.mrf.mxu0
      %487 = vdwg.mxu0
      %488 = vmatpush.bf16.msra.mxu0 %v416
      %489 = vmatpush.bf16.msra.mxu0 %v412
      %490 = vmatpush.bf16.msra.mxu0 %v408
      %491 = vmatpush.bf16.msra.mxu0 %v404
      %492 = vmatpush.bf16.msra.mxu0 %v400
      %493 = vmatpush.bf16.msra.mxu0 %v396
      %494 = vmatpush.bf16.msra.mxu0 %v392
      %495 = vmatpush.bf16.msra.mxu0 %v388
      %496 = vmatmul.bf16.gmra.mxu0 %v288
      %v497 = vpop.f32.mrf.mxu0
      %v498 = vadd.f32 0.0, %v497
      %v499 = vpop.f32.mrf.mxu0
      %500 = vdwg.mxu0
      %v505 = vunpack.c.l.b16 %v239
      %v506 = vunpack.c.h.b16 %v239
      %v507 = vunpack.c.l.b16 %v240
      %v508 = vunpack.c.h.b16 %v240
      %v509 = vunpack.c.l.b16 %v241
      %v510 = vunpack.c.h.b16 %v241
      %v511 = vunpack.c.l.b16 %v242
      %v512 = vunpack.c.h.b16 %v242
      %v513 = vpack.c.b16 %v509, %v505
      %v514 = vpack.c.b16 %v510, %v506
      %v515 = vpack.c.b16 %v511, %v507
      %v516 = vpack.c.b16 %v512, %v508
      %vm521 = vcmask 130048
      %v523 = vsel %vm521, %v287, 0
      %525 = vmatpush.bf16.msra.mxu0 0
      %526 = vmatpush.bf16.msra.mxu0 0
      %527 = vmatpush.bf16.msra.mxu0 0
      %528 = vmatpush.bf16.msra.mxu0 0
      %529 = vmatpush.bf16.msra.mxu0 0
      %530 = vmatpush.bf16.msra.mxu0 0
      %531 = vmatpush.bf16.msra.mxu0 0
      %532 = vmatpush.bf16.msra.mxu0 %v513
      %533 = vmatmul.bf16.gmra.mxu0 %v523
      %v534 = vpop.f32.mrf.mxu0
      %v535 = vadd.f32 %v459, %v534
      %v536 = vpop.f32.mrf.mxu0
      %537 = vdwg.mxu0
      %538 = vmatpush.bf16.msra.mxu0 0
      %539 = vmatpush.bf16.msra.mxu0 0
      %540 = vmatpush.bf16.msra.mxu0 0
      %541 = vmatpush.bf16.msra.mxu0 0
      %542 = vmatpush.bf16.msra.mxu0 0
      %543 = vmatpush.bf16.msra.mxu0 0
      %544 = vmatpush.bf16.msra.mxu0 0
      %545 = vmatpush.bf16.msra.mxu0 %v514
      %546 = vmatmul.bf16.gmra.mxu0 %v523
      %v547 = vpop.f32.mrf.mxu0
      %v548 = vadd.f32 %v472, %v547
      %v549 = vpop.f32.mrf.mxu0
      %550 = vdwg.mxu0
      %551 = vmatpush.bf16.msra.mxu0 0
      %552 = vmatpush.bf16.msra.mxu0 0
      %553 = vmatpush.bf16.msra.mxu0 0
      %554 = vmatpush.bf16.msra.mxu0 0
      %555 = vmatpush.bf16.msra.mxu0 0
      %556 = vmatpush.bf16.msra.mxu0 0
      %557 = vmatpush.bf16.msra.mxu0 0
      %558 = vmatpush.bf16.msra.mxu0 %v515
      %559 = vmatmul.bf16.gmra.mxu0 %v523
      %v560 = vpop.f32.mrf.mxu0
      %v561 = vadd.f32 %v485, %v560
      %v562 = vpop.f32.mrf.mxu0
      %563 = vdwg.mxu0
      %564 = vmatpush.bf16.msra.mxu0 0
      %565 = vmatpush.bf16.msra.mxu0 0
      %566 = vmatpush.bf16.msra.mxu0 0
      %567 = vmatpush.bf16.msra.mxu0 0
      %568 = vmatpush.bf16.msra.mxu0 0
      %569 = vmatpush.bf16.msra.mxu0 0
      %570 = vmatpush.bf16.msra.mxu0 0
      %571 = vmatpush.bf16.msra.mxu0 %v516
      %572 = vmatmul.bf16.gmra.mxu0 %v523
      %v573 = vpop.f32.mrf.mxu0
      %v574 = vadd.f32 %v498, %v573
      %v575 = vpop.f32.mrf.mxu0
      %576 = vdwg.mxu0
      %v577 = vadd.f32 %v535, %v277
      %v578 = vadd.f32 %v548, %v278
      %v579 = vadd.f32 %v561, %v279
      %v580 = vadd.f32 %v574, %v280
      %v581 = vxor.u32 %v577, 2147483648
      %v582 = vmul.f32 %v581, 1.442695
      %v583 = vpow.pop %v582
      %v584 = vadd.f32 %v583, 1.0
      %v585 = vrcp.pop %v584
      %v586 = vmul.f32 %v584, %v585
      %v587 = vsub.f32 1.0, %v586
      %v588 = vmul.f32 %v585, %v587
      %v589 = vadd.f32 %v585, %v588
      %vm590 = vweird.f32 %v584
      %vm591 = vweird.f32 %v585
      %vm592 = vmor %vm590, %vm591
      %v593 = vsel %vm592, %v585, %v589
      %v594 = vand.u32 2147483647, %v584
      %vm595 = vcmp.eq.f32.partialorder %v594, 8.507059e+37
      %v596 = vand.u32 %v584, 2147483648
      %v597 = vor.u32 1.1754944e-38, %v596
      %v598 = vsel %vm595, %v597, %v593
      %v599 = vmul.f32 1.0, %v598
      %v600 = vxor.u32 %v578, 2147483648
      %v601 = vmul.f32 %v600, 1.442695
      %v602 = vpow.pop %v601
      %v603 = vadd.f32 %v602, 1.0
      %v604 = vrcp.pop %v603
      %v605 = vmul.f32 %v603, %v604
      %v606 = vsub.f32 1.0, %v605
      %v607 = vmul.f32 %v604, %v606
      %v608 = vadd.f32 %v604, %v607
      %vm609 = vweird.f32 %v603
      %vm610 = vweird.f32 %v604
      %vm611 = vmor %vm609, %vm610
      %v612 = vsel %vm611, %v604, %v608
      %v613 = vand.u32 2147483647, %v603
      %vm614 = vcmp.eq.f32.partialorder %v613, 8.507059e+37
      %v615 = vand.u32 %v603, 2147483648
      %v616 = vor.u32 1.1754944e-38, %v615
      %v617 = vsel %vm614, %v616, %v612
      %v618 = vmul.f32 1.0, %v617
      %v619 = vtanh.pop %v579
      %v620 = vxor.u32 %v580, 2147483648
      %v621 = vmul.f32 %v620, 1.442695
      %v622 = vpow.pop %v621
      %v623 = vadd.f32 %v622, 1.0
      %v624 = vrcp.pop %v623
      %v625 = vmul.f32 %v623, %v624
      %v626 = vsub.f32 1.0, %v625
      %v627 = vmul.f32 %v624, %v626
      %v628 = vadd.f32 %v624, %v627
      %vm629 = vweird.f32 %v623
      %vm630 = vweird.f32 %v624
      %vm631 = vmor %vm629, %vm630
      %v632 = vsel %vm631, %v624, %v628
      %v633 = vand.u32 2147483647, %v623
      %vm634 = vcmp.eq.f32.partialorder %v633, 8.507059e+37
      %v635 = vand.u32 %v623, 2147483648
      %v636 = vor.u32 1.1754944e-38, %v635
      %v637 = vsel %vm634, %v636, %v632
      %v638 = vmul.f32 1.0, %v637
      %v639 = vmul.f32 %v618, %v286
      %v640 = vmul.f32 %v599, %v619
      %v641 = vadd.f32 %v639, %v640
      %v642 = vtanh.pop %v641
      %v643 = vmul.f32 %v638, %v642
      %644 = vst [vmem:[%s230] sm:$0xff] %v643
      %s645 = scalar_lea.vmem %s221, 4
      %v646 = vld [vmem:[%s645] sm:$0xf]
      %v647 = vpack.c.bf16 %v643, %v643
      %648 = vmatpush.bf16.msra.mxu0 %v413
      %649 = vmatpush.bf16.msra.mxu0 %v409
      %650 = vmatpush.bf16.msra.mxu0 %v405
      %651 = vmatpush.bf16.msra.mxu0 %v401
      %652 = vmatpush.bf16.msra.mxu0 %v397
      %653 = vmatpush.bf16.msra.mxu0 %v393
      %654 = vmatpush.bf16.msra.mxu0 %v389
      %655 = vmatpush.bf16.msra.mxu0 %v385
      %656 = vmatmul.bf16.gmra.mxu0 %v647
      %v657 = vpop.f32.mrf.mxu0
      %v658 = vadd.f32 0.0, %v657
      %v659 = vpop.f32.mrf.mxu0
      %660 = vdwg.mxu0
      %661 = vmatpush.bf16.msra.mxu0 %v414
      %662 = vmatpush.bf16.msra.mxu0 %v410
      %663 = vmatpush.bf16.msra.mxu0 %v406
      %664 = vmatpush.bf16.msra.mxu0 %v402
      %665 = vmatpush.bf16.msra.mxu0 %v398
      %666 = vmatpush.bf16.msra.mxu0 %v394
      %667 = vmatpush.bf16.msra.mxu0 %v390
      %668 = vmatpush.bf16.msra.mxu0 %v386
      %669 = vmatmul.bf16.gmra.mxu0 %v647
      %v670 = vpop.f32.mrf.mxu0
      %v671 = vadd.f32 0.0, %v670
      %v672 = vpop.f32.mrf.mxu0
      %673 = vdwg.mxu0
      %674 = vmatpush.bf16.msra.mxu0 %v415
      %675 = vmatpush.bf16.msra.mxu0 %v411
      %676 = vmatpush.bf16.msra.mxu0 %v407
      %677 = vmatpush.bf16.msra.mxu0 %v403
      %678 = vmatpush.bf16.msra.mxu0 %v399
      %679 = vmatpush.bf16.msra.mxu0 %v395
      %680 = vmatpush.bf16.msra.mxu0 %v391
      %681 = vmatpush.bf16.msra.mxu0 %v387
      %682 = vmatmul.bf16.gmra.mxu0 %v647
      %v683 = vpop.f32.mrf.mxu0
      %v684 = vadd.f32 0.0, %v683
      %v685 = vpop.f32.mrf.mxu0
      %686 = vdwg.mxu0
      %687 = vmatpush.bf16.msra.mxu0 %v416
      %688 = vmatpush.bf16.msra.mxu0 %v412
      %689 = vmatpush.bf16.msra.mxu0 %v408
      %690 = vmatpush.bf16.msra.mxu0 %v404
      %691 = vmatpush.bf16.msra.mxu0 %v400
      %692 = vmatpush.bf16.msra.mxu0 %v396
      %693 = vmatpush.bf16.msra.mxu0 %v392
      %694 = vmatpush.bf16.msra.mxu0 %v388
      %695 = vmatmul.bf16.gmra.mxu0 %v647
      %v696 = vpop.f32.mrf.mxu0
      %v697 = vadd.f32 0.0, %v696
      %v698 = vpop.f32.mrf.mxu0
      %699 = vdwg.mxu0
      %v701 = vsel %vm521, %v646, 0
      %703 = vmatpush.bf16.msra.mxu0 0
      %704 = vmatpush.bf16.msra.mxu0 0
      %705 = vmatpush.bf16.msra.mxu0 0
      %706 = vmatpush.bf16.msra.mxu0 0
      %707 = vmatpush.bf16.msra.mxu0 0
      %708 = vmatpush.bf16.msra.mxu0 0
      %709 = vmatpush.bf16.msra.mxu0 0
      %710 = vmatpush.bf16.msra.mxu0 %v513
      %711 = vmatmul.bf16.gmra.mxu0 %v701
      %v712 = vpop.f32.mrf.mxu0
      %v713 = vadd.f32 %v658, %v712
      %v714 = vpop.f32.mrf.mxu0
      %715 = vdwg.mxu0
      %716 = vmatpush.bf16.msra.mxu0 0
      %717 = vmatpush.bf16.msra.mxu0 0
      %718 = vmatpush.bf16.msra.mxu0 0
      %719 = vmatpush.bf16.msra.mxu0 0
      %720 = vmatpush.bf16.msra.mxu0 0
      %721 = vmatpush.bf16.msra.mxu0 0
      %722 = vmatpush.bf16.msra.mxu0 0
      %723 = vmatpush.bf16.msra.mxu0 %v514
      %724 = vmatmul.bf16.gmra.mxu0 %v701
      %v725 = vpop.f32.mrf.mxu0
      %v726 = vadd.f32 %v671, %v725
      %v727 = vpop.f32.mrf.mxu0
      %728 = vdwg.mxu0
      %729 = vmatpush.bf16.msra.mxu0 0
      %730 = vmatpush.bf16.msra.mxu0 0
      %731 = vmatpush.bf16.msra.mxu0 0
      %732 = vmatpush.bf16.msra.mxu0 0
      %733 = vmatpush.bf16.msra.mxu0 0
      %734 = vmatpush.bf16.msra.mxu0 0
      %735 = vmatpush.bf16.msra.mxu0 0
      %736 = vmatpush.bf16.msra.mxu0 %v515
      %737 = vmatmul.bf16.gmra.mxu0 %v701
      %v738 = vpop.f32.mrf.mxu0
      %v739 = vadd.f32 %v684, %v738
      %v740 = vpop.f32.mrf.mxu0
      %741 = vdwg.mxu0
      %742 = vmatpush.bf16.msra.mxu0 0
      %743 = vmatpush.bf16.msra.mxu0 0
      %744 = vmatpush.bf16.msra.mxu0 0
      %745 = vmatpush.bf16.msra.mxu0 0
      %746 = vmatpush.bf16.msra.mxu0 0
      %747 = vmatpush.bf16.msra.mxu0 0
      %748 = vmatpush.bf16.msra.mxu0 0
      %749 = vmatpush.bf16.msra.mxu0 %v516
      %750 = vmatmul.bf16.gmra.mxu0 %v701
      %v751 = vpop.f32.mrf.mxu0
      %v752 = vadd.f32 %v697, %v751
      %v753 = vpop.f32.mrf.mxu0
      %754 = vdwg.mxu0
      %v755 = vadd.f32 %v713, %v277
      %v756 = vadd.f32 %v726, %v278
      %v757 = vadd.f32 %v739, %v279
      %v758 = vadd.f32 %v752, %v280
      %v759 = vxor.u32 %v755, 2147483648
      %v760 = vmul.f32 %v759, 1.442695
      %v761 = vpow.pop %v760
      %v762 = vadd.f32 %v761, 1.0
      %v763 = vrcp.pop %v762
      %v764 = vmul.f32 %v762, %v763
      %v765 = vsub.f32 1.0, %v764
      %v766 = vmul.f32 %v763, %v765
      %v767 = vadd.f32 %v763, %v766
      %vm768 = vweird.f32 %v762
      %vm769 = vweird.f32 %v763
      %vm770 = vmor %vm768, %vm769
      %v771 = vsel %vm770, %v763, %v767
      %v772 = vand.u32 2147483647, %v762
      %vm773 = vcmp.eq.f32.partialorder %v772, 8.507059e+37
      %v774 = vand.u32 %v762, 2147483648
      %v775 = vor.u32 1.1754944e-38, %v774
      %v776 = vsel %vm773, %v775, %v771
      %v777 = vmul.f32 1.0, %v776
      %v778 = vxor.u32 %v756, 2147483648
      %v779 = vmul.f32 %v778, 1.442695
      %v780 = vpow.pop %v779
      %v781 = vadd.f32 %v780, 1.0
      %v782 = vrcp.pop %v781
      %v783 = vmul.f32 %v781, %v782
      %v784 = vsub.f32 1.0, %v783
      %v785 = vmul.f32 %v782, %v784
      %v786 = vadd.f32 %v782, %v785
      %vm787 = vweird.f32 %v781
      %vm788 = vweird.f32 %v782
      %vm789 = vmor %vm787, %vm788
      %v790 = vsel %vm789, %v782, %v786
      %v791 = vand.u32 2147483647, %v781
      %vm792 = vcmp.eq.f32.partialorder %v791, 8.507059e+37
      %v793 = vand.u32 %v781, 2147483648
      %v794 = vor.u32 1.1754944e-38, %v793
      %v795 = vsel %vm792, %v794, %v790
      %v796 = vmul.f32 1.0, %v795
      %v797 = vtanh.pop %v757
      %v798 = vxor.u32 %v758, 2147483648
      %v799 = vmul.f32 %v798, 1.442695
      %v800 = vpow.pop %v799
      %v801 = vadd.f32 %v800, 1.0
      %v802 = vrcp.pop %v801
      %v803 = vmul.f32 %v801, %v802
      %v804 = vsub.f32 1.0, %v803
      %v805 = vmul.f32 %v802, %v804
      %v806 = vadd.f32 %v802, %v805
      %vm807 = vweird.f32 %v801
      %vm808 = vweird.f32 %v802
      %vm809 = vmor %vm807, %vm808
      %v810 = vsel %vm809, %v802, %v806
      %v811 = vand.u32 2147483647, %v801
      %vm812 = vcmp.eq.f32.partialorder %v811, 8.507059e+37
      %v813 = vand.u32 %v801, 2147483648
      %v814 = vor.u32 1.1754944e-38, %v813
      %v815 = vsel %vm812, %v814, %v810
      %v816 = vmul.f32 1.0, %v815
      %v817 = vmul.f32 %v796, %v641
      %v818 = vmul.f32 %v777, %v797
      %v819 = vadd.f32 %v817, %v818
      %v820 = vtanh.pop %v819
      %v821 = vmul.f32 %v816, %v820
      %s822 = scalar_lea.vmem %s230, 8
      %823 = vst [vmem:[%s822] sm:$0xff] %v821
      %s824 = scalar_lea.vmem %s221, 8
      %v825 = vld [vmem:[%s824] sm:$0xf]
      %v826 = vpack.c.bf16 %v821, %v821
      %827 = vmatpush.bf16.msra.mxu0 %v413
      %828 = vmatpush.bf16.msra.mxu0 %v409
      %829 = vmatpush.bf16.msra.mxu0 %v405
      %830 = vmatpush.bf16.msra.mxu0 %v401
      %831 = vmatpush.bf16.msra.mxu0 %v397
      %832 = vmatpush.bf16.msra.mxu0 %v393
      %833 = vmatpush.bf16.msra.mxu0 %v389
      %834 = vmatpush.bf16.msra.mxu0 %v385
      %835 = vmatmul.bf16.gmra.mxu0 %v826
      %v836 = vpop.f32.mrf.mxu0
      %v837 = vadd.f32 0.0, %v836
      %v838 = vpop.f32.mrf.mxu0
      %839 = vdwg.mxu0
      %840 = vmatpush.bf16.msra.mxu0 %v414
      %841 = vmatpush.bf16.msra.mxu0 %v410
      %842 = vmatpush.bf16.msra.mxu0 %v406
      %843 = vmatpush.bf16.msra.mxu0 %v402
      %844 = vmatpush.bf16.msra.mxu0 %v398
      %845 = vmatpush.bf16.msra.mxu0 %v394
      %846 = vmatpush.bf16.msra.mxu0 %v390
      %847 = vmatpush.bf16.msra.mxu0 %v386
      %848 = vmatmul.bf16.gmra.mxu0 %v826
      %v849 = vpop.f32.mrf.mxu0
      %v850 = vadd.f32 0.0, %v849
      %v851 = vpop.f32.mrf.mxu0
      %852 = vdwg.mxu0
      %853 = vmatpush.bf16.msra.mxu0 %v415
      %854 = vmatpush.bf16.msra.mxu0 %v411
      %855 = vmatpush.bf16.msra.mxu0 %v407
      %856 = vmatpush.bf16.msra.mxu0 %v403
      %857 = vmatpush.bf16.msra.mxu0 %v399
      %858 = vmatpush.bf16.msra.mxu0 %v395
      %859 = vmatpush.bf16.msra.mxu0 %v391
      %860 = vmatpush.bf16.msra.mxu0 %v387
      %861 = vmatmul.bf16.gmra.mxu0 %v826
      %v862 = vpop.f32.mrf.mxu0
      %v863 = vadd.f32 0.0, %v862
      %v864 = vpop.f32.mrf.mxu0
      %865 = vdwg.mxu0
      %866 = vmatpush.bf16.msra.mxu0 %v416
      %867 = vmatpush.bf16.msra.mxu0 %v412
      %868 = vmatpush.bf16.msra.mxu0 %v408
      %869 = vmatpush.bf16.msra.mxu0 %v404
      %870 = vmatpush.bf16.msra.mxu0 %v400
      %871 = vmatpush.bf16.msra.mxu0 %v396
      %872 = vmatpush.bf16.msra.mxu0 %v392
      %873 = vmatpush.bf16.msra.mxu0 %v388
      %874 = vmatmul.bf16.gmra.mxu0 %v826
      %v875 = vpop.f32.mrf.mxu0
      %v876 = vadd.f32 0.0, %v875
      %v877 = vpop.f32.mrf.mxu0
      %878 = vdwg.mxu0
      %v880 = vsel %vm521, %v825, 0
      %882 = vmatpush.bf16.msra.mxu0 0
      %883 = vmatpush.bf16.msra.mxu0 0
      %884 = vmatpush.bf16.msra.mxu0 0
      %885 = vmatpush.bf16.msra.mxu0 0
      %886 = vmatpush.bf16.msra.mxu0 0
      %887 = vmatpush.bf16.msra.mxu0 0
      %888 = vmatpush.bf16.msra.mxu0 0
      %889 = vmatpush.bf16.msra.mxu0 %v513
      %890 = vmatmul.bf16.gmra.mxu0 %v880
      %v891 = vpop.f32.mrf.mxu0
      %v892 = vadd.f32 %v837, %v891
      %v893 = vpop.f32.mrf.mxu0
      %894 = vdwg.mxu0
      %895 = vmatpush.bf16.msra.mxu0 0
      %896 = vmatpush.bf16.msra.mxu0 0
      %897 = vmatpush.bf16.msra.mxu0 0
      %898 = vmatpush.bf16.msra.mxu0 0
      %899 = vmatpush.bf16.msra.mxu0 0
      %900 = vmatpush.bf16.msra.mxu0 0
      %901 = vmatpush.bf16.msra.mxu0 0
      %902 = vmatpush.bf16.msra.mxu0 %v514
      %903 = vmatmul.bf16.gmra.mxu0 %v880
      %v904 = vpop.f32.mrf.mxu0
      %v905 = vadd.f32 %v850, %v904
      %v906 = vpop.f32.mrf.mxu0
      %907 = vdwg.mxu0
      %908 = vmatpush.bf16.msra.mxu0 0
      %909 = vmatpush.bf16.msra.mxu0 0
      %910 = vmatpush.bf16.msra.mxu0 0
      %911 = vmatpush.bf16.msra.mxu0 0
      %912 = vmatpush.bf16.msra.mxu0 0
      %913 = vmatpush.bf16.msra.mxu0 0
      %914 = vmatpush.bf16.msra.mxu0 0
      %915 = vmatpush.bf16.msra.mxu0 %v515
      %916 = vmatmul.bf16.gmra.mxu0 %v880
      %v917 = vpop.f32.mrf.mxu0
      %v918 = vadd.f32 %v863, %v917
      %v919 = vpop.f32.mrf.mxu0
      %920 = vdwg.mxu0
      %921 = vmatpush.bf16.msra.mxu0 0
      %922 = vmatpush.bf16.msra.mxu0 0
      %923 = vmatpush.bf16.msra.mxu0 0
      %924 = vmatpush.bf16.msra.mxu0 0
      %925 = vmatpush.bf16.msra.mxu0 0
      %926 = vmatpush.bf16.msra.mxu0 0
      %927 = vmatpush.bf16.msra.mxu0 0
      %928 = vmatpush.bf16.msra.mxu0 %v516
      %929 = vmatmul.bf16.gmra.mxu0 %v880
      %v930 = vpop.f32.mrf.mxu0
      %v931 = vadd.f32 %v876, %v930
      %v932 = vpop.f32.mrf.mxu0
      %933 = vdwg.mxu0
      %v934 = vadd.f32 %v892, %v277
      %v935 = vadd.f32 %v905, %v278
      %v936 = vadd.f32 %v918, %v279
      %v937 = vadd.f32 %v931, %v280
      %v938 = vxor.u32 %v934, 2147483648
      %v939 = vmul.f32 %v938, 1.442695
      %v940 = vpow.pop %v939
      %v941 = vadd.f32 %v940, 1.0
      %v942 = vrcp.pop %v941
      %v943 = vmul.f32 %v941, %v942
      %v944 = vsub.f32 1.0, %v943
      %v945 = vmul.f32 %v942, %v944
      %v946 = vadd.f32 %v942, %v945
      %vm947 = vweird.f32 %v941
      %vm948 = vweird.f32 %v942
      %vm949 = vmor %vm947, %vm948
      %v950 = vsel %vm949, %v942, %v946
      %v951 = vand.u32 2147483647, %v941
      %vm952 = vcmp.eq.f32.partialorder %v951, 8.507059e+37
      %v953 = vand.u32 %v941, 2147483648
      %v954 = vor.u32 1.1754944e-38, %v953
      %v955 = vsel %vm952, %v954, %v950
      %v956 = vmul.f32 1.0, %v955
      %v957 = vxor.u32 %v935, 2147483648
      %v958 = vmul.f32 %v957, 1.442695
      %v959 = vpow.pop %v958
      %v960 = vadd.f32 %v959, 1.0
      %v961 = vrcp.pop %v960
      %v962 = vmul.f32 %v960, %v961
      %v963 = vsub.f32 1.0, %v962
      %v964 = vmul.f32 %v961, %v963
      %v965 = vadd.f32 %v961, %v964
      %vm966 = vweird.f32 %v960
      %vm967 = vweird.f32 %v961
      %vm968 = vmor %vm966, %vm967
      %v969 = vsel %vm968, %v961, %v965
      %v970 = vand.u32 2147483647, %v960
      %vm971 = vcmp.eq.f32.partialorder %v970, 8.507059e+37
      %v972 = vand.u32 %v960, 2147483648
      %v973 = vor.u32 1.1754944e-38, %v972
      %v974 = vsel %vm971, %v973, %v969
      %v975 = vmul.f32 1.0, %v974
      %v976 = vtanh.pop %v936
      %v977 = vxor.u32 %v937, 2147483648
      %v978 = vmul.f32 %v977, 1.442695
      %v979 = vpow.pop %v978
      %v980 = vadd.f32 %v979, 1.0
      %v981 = vrcp.pop %v980
      %v982 = vmul.f32 %v980, %v981
      %v983 = vsub.f32 1.0, %v982
      %v984 = vmul.f32 %v981, %v983
      %v985 = vadd.f32 %v981, %v984
      %vm986 = vweird.f32 %v980
      %vm987 = vweird.f32 %v981
      %vm988 = vmor %vm986, %vm987
      %v989 = vsel %vm988, %v981, %v985
      %v990 = vand.u32 2147483647, %v980
      %vm991 = vcmp.eq.f32.partialorder %v990, 8.507059e+37
      %v992 = vand.u32 %v980, 2147483648
      %v993 = vor.u32 1.1754944e-38, %v992
      %v994 = vsel %vm991, %v993, %v989
      %v995 = vmul.f32 1.0, %v994
      %v996 = vmul.f32 %v975, %v819
      %v997 = vmul.f32 %v956, %v976
      %v998 = vadd.f32 %v996, %v997
      %v999 = vtanh.pop %v998
      %v1000 = vmul.f32 %v995, %v999
      %s1001 = scalar_lea.vmem %s230, 16
      %1002 = vst [vmem:[%s1001] sm:$0xff] %v1000
      %s1003 = scalar_lea.vmem %s221, 12
      %v1004 = vld [vmem:[%s1003] sm:$0xf]
      %v1005 = vpack.c.bf16 %v1000, %v1000
      %1006 = vmatpush.bf16.msra.mxu0 %v413
      %1007 = vmatpush.bf16.msra.mxu0 %v409
      %1008 = vmatpush.bf16.msra.mxu0 %v405
      %1009 = vmatpush.bf16.msra.mxu0 %v401
      %1010 = vmatpush.bf16.msra.mxu0 %v397
      %1011 = vmatpush.bf16.msra.mxu0 %v393
      %1012 = vmatpush.bf16.msra.mxu0 %v389
      %1013 = vmatpush.bf16.msra.mxu0 %v385
      %1014 = vmatmul.bf16.gmra.mxu0 %v1005
      %v1015 = vpop.f32.mrf.mxu0
      %v1016 = vadd.f32 0.0, %v1015
      %v1017 = vpop.f32.mrf.mxu0
      %1018 = vdwg.mxu0
      %1019 = vmatpush.bf16.msra.mxu0 %v414
      %1020 = vmatpush.bf16.msra.mxu0 %v410
      %1021 = vmatpush.bf16.msra.mxu0 %v406
      %1022 = vmatpush.bf16.msra.mxu0 %v402
      %1023 = vmatpush.bf16.msra.mxu0 %v398
      %1024 = vmatpush.bf16.msra.mxu0 %v394
      %1025 = vmatpush.bf16.msra.mxu0 %v390
      %1026 = vmatpush.bf16.msra.mxu0 %v386
      %1027 = vmatmul.bf16.gmra.mxu0 %v1005
      %v1028 = vpop.f32.mrf.mxu0
      %v1029 = vadd.f32 0.0, %v1028
      %v1030 = vpop.f32.mrf.mxu0
      %1031 = vdwg.mxu0
      %1032 = vmatpush.bf16.msra.mxu0 %v415
      %1033 = vmatpush.bf16.msra.mxu0 %v411
      %1034 = vmatpush.bf16.msra.mxu0 %v407
      %1035 = vmatpush.bf16.msra.mxu0 %v403
      %1036 = vmatpush.bf16.msra.mxu0 %v399
      %1037 = vmatpush.bf16.msra.mxu0 %v395
      %1038 = vmatpush.bf16.msra.mxu0 %v391
      %1039 = vmatpush.bf16.msra.mxu0 %v387
      %1040 = vmatmul.bf16.gmra.mxu0 %v1005
      %v1041 = vpop.f32.mrf.mxu0
      %v1042 = vadd.f32 0.0, %v1041
      %v1043 = vpop.f32.mrf.mxu0
      %1044 = vdwg.mxu0
      %1045 = vmatpush.bf16.msra.mxu0 %v416
      %1046 = vmatpush.bf16.msra.mxu0 %v412
      %1047 = vmatpush.bf16.msra.mxu0 %v408
      %1048 = vmatpush.bf16.msra.mxu0 %v404
      %1049 = vmatpush.bf16.msra.mxu0 %v400
      %1050 = vmatpush.bf16.msra.mxu0 %v396
      %1051 = vmatpush.bf16.msra.mxu0 %v392
      %1052 = vmatpush.bf16.msra.mxu0 %v388
      %1053 = vmatmul.bf16.gmra.mxu0 %v1005
      %v1054 = vpop.f32.mrf.mxu0
      %v1055 = vadd.f32 0.0, %v1054
      %v1056 = vpop.f32.mrf.mxu0
      %1057 = vdwg.mxu0
      %v1059 = vsel %vm521, %v1004, 0
      %1061 = vmatpush.bf16.msra.mxu0 0
      %1062 = vmatpush.bf16.msra.mxu0 0
      %1063 = vmatpush.bf16.msra.mxu0 0
      %1064 = vmatpush.bf16.msra.mxu0 0
      %1065 = vmatpush.bf16.msra.mxu0 0
      %1066 = vmatpush.bf16.msra.mxu0 0
      %1067 = vmatpush.bf16.msra.mxu0 0
      %1068 = vmatpush.bf16.msra.mxu0 %v513
      %1069 = vmatmul.bf16.gmra.mxu0 %v1059
      %v1070 = vpop.f32.mrf.mxu0
      %v1071 = vadd.f32 %v1016, %v1070
      %v1072 = vpop.f32.mrf.mxu0
      %1073 = vdwg.mxu0
      %1074 = vmatpush.bf16.msra.mxu0 0
      %1075 = vmatpush.bf16.msra.mxu0 0
      %1076 = vmatpush.bf16.msra.mxu0 0
      %1077 = vmatpush.bf16.msra.mxu0 0
      %1078 = vmatpush.bf16.msra.mxu0 0
      %1079 = vmatpush.bf16.msra.mxu0 0
      %1080 = vmatpush.bf16.msra.mxu0 0
      %1081 = vmatpush.bf16.msra.mxu0 %v514
      %1082 = vmatmul.bf16.gmra.mxu0 %v1059
      %v1083 = vpop.f32.mrf.mxu0
      %v1084 = vadd.f32 %v1029, %v1083
      %v1085 = vpop.f32.mrf.mxu0
      %1086 = vdwg.mxu0
      %1087 = vmatpush.bf16.msra.mxu0 0
      %1088 = vmatpush.bf16.msra.mxu0 0
      %1089 = vmatpush.bf16.msra.mxu0 0
      %1090 = vmatpush.bf16.msra.mxu0 0
      %1091 = vmatpush.bf16.msra.mxu0 0
      %1092 = vmatpush.bf16.msra.mxu0 0
      %1093 = vmatpush.bf16.msra.mxu0 0
      %1094 = vmatpush.bf16.msra.mxu0 %v515
      %1095 = vmatmul.bf16.gmra.mxu0 %v1059
      %v1096 = vpop.f32.mrf.mxu0
      %v1097 = vadd.f32 %v1042, %v1096
      %v1098 = vpop.f32.mrf.mxu0
      %1099 = vdwg.mxu0
      %1100 = vmatpush.bf16.msra.mxu0 0
      %1101 = vmatpush.bf16.msra.mxu0 0
      %1102 = vmatpush.bf16.msra.mxu0 0
      %1103 = vmatpush.bf16.msra.mxu0 0
      %1104 = vmatpush.bf16.msra.mxu0 0
      %1105 = vmatpush.bf16.msra.mxu0 0
      %1106 = vmatpush.bf16.msra.mxu0 0
      %1107 = vmatpush.bf16.msra.mxu0 %v516
      %1108 = vmatmul.bf16.gmra.mxu0 %v1059
      %v1109 = vpop.f32.mrf.mxu0
      %v1110 = vadd.f32 %v1055, %v1109
      %v1111 = vpop.f32.mrf.mxu0
      %1112 = vdwg.mxu0
      %v1113 = vadd.f32 %v1071, %v277
      %v1114 = vadd.f32 %v1084, %v278
      %v1115 = vadd.f32 %v1097, %v279
      %v1116 = vadd.f32 %v1110, %v280
      %v1117 = vxor.u32 %v1113, 2147483648
      %v1118 = vmul.f32 %v1117, 1.442695
      %v1119 = vpow.pop %v1118
      %v1120 = vadd.f32 %v1119, 1.0
      %v1121 = vrcp.pop %v1120
      %v1122 = vmul.f32 %v1120, %v1121
      %v1123 = vsub.f32 1.0, %v1122
      %v1124 = vmul.f32 %v1121, %v1123
      %v1125 = vadd.f32 %v1121, %v1124
      %vm1126 = vweird.f32 %v1120
      %vm1127 = vweird.f32 %v1121
      %vm1128 = vmor %vm1126, %vm1127
      %v1129 = vsel %vm1128, %v1121, %v1125
      %v1130 = vand.u32 2147483647, %v1120
      %vm1131 = vcmp.eq.f32.partialorder %v1130, 8.507059e+37
      %v1132 = vand.u32 %v1120, 2147483648
      %v1133 = vor.u32 1.1754944e-38, %v1132
      %v1134 = vsel %vm1131, %v1133, %v1129
      %v1135 = vmul.f32 1.0, %v1134
      %v1136 = vxor.u32 %v1114, 2147483648
      %v1137 = vmul.f32 %v1136, 1.442695
      %v1138 = vpow.pop %v1137
      %v1139 = vadd.f32 %v1138, 1.0
      %v1140 = vrcp.pop %v1139
      %v1141 = vmul.f32 %v1139, %v1140
      %v1142 = vsub.f32 1.0, %v1141
      %v1143 = vmul.f32 %v1140, %v1142
      %v1144 = vadd.f32 %v1140, %v1143
      %vm1145 = vweird.f32 %v1139
      %vm1146 = vweird.f32 %v1140
      %vm1147 = vmor %vm1145, %vm1146
      %v1148 = vsel %vm1147, %v1140, %v1144
      %v1149 = vand.u32 2147483647, %v1139
      %vm1150 = vcmp.eq.f32.partialorder %v1149, 8.507059e+37
      %v1151 = vand.u32 %v1139, 2147483648
      %v1152 = vor.u32 1.1754944e-38, %v1151
      %v1153 = vsel %vm1150, %v1152, %v1148
      %v1154 = vmul.f32 1.0, %v1153
      %v1155 = vtanh.pop %v1115
      %v1156 = vxor.u32 %v1116, 2147483648
      %v1157 = vmul.f32 %v1156, 1.442695
      %v1158 = vpow.pop %v1157
      %v1159 = vadd.f32 %v1158, 1.0
      %v1160 = vrcp.pop %v1159
      %v1161 = vmul.f32 %v1159, %v1160
      %v1162 = vsub.f32 1.0, %v1161
      %v1163 = vmul.f32 %v1160, %v1162
      %v1164 = vadd.f32 %v1160, %v1163
      %vm1165 = vweird.f32 %v1159
      %vm1166 = vweird.f32 %v1160
      %vm1167 = vmor %vm1165, %vm1166
      %v1168 = vsel %vm1167, %v1160, %v1164
      %v1169 = vand.u32 2147483647, %v1159
      %vm1170 = vcmp.eq.f32.partialorder %v1169, 8.507059e+37
      %v1171 = vand.u32 %v1159, 2147483648
      %v1172 = vor.u32 1.1754944e-38, %v1171
      %v1173 = vsel %vm1170, %v1172, %v1168
      %v1174 = vmul.f32 1.0, %v1173
      %v1175 = vmul.f32 %v1154, %v998
      %v1176 = vmul.f32 %v1135, %v1155
      %v1177 = vadd.f32 %v1175, %v1176
      %v1178 = vtanh.pop %v1177
      %v1179 = vmul.f32 %v1174, %v1178
      %s1180 = scalar_lea.vmem %s230, 24
      %1181 = vst [vmem:[%s1180] sm:$0xff] %v1179
      %s1182 = scalar_lea.vmem %s221, 16
      %v1183 = vld [vmem:[%s1182] sm:$0xf]
      %v1184 = vpack.c.bf16 %v1179, %v1179
      %1185 = vmatpush.bf16.msra.mxu0 %v413
      %1186 = vmatpush.bf16.msra.mxu0 %v409
      %1187 = vmatpush.bf16.msra.mxu0 %v405
      %1188 = vmatpush.bf16.msra.mxu0 %v401
      %1189 = vmatpush.bf16.msra.mxu0 %v397
      %1190 = vmatpush.bf16.msra.mxu0 %v393
      %1191 = vmatpush.bf16.msra.mxu0 %v389
      %1192 = vmatpush.bf16.msra.mxu0 %v385
      %1193 = vmatmul.bf16.gmra.mxu0 %v1184
      %v1194 = vpop.f32.mrf.mxu0
      %v1195 = vadd.f32 0.0, %v1194
      %v1196 = vpop.f32.mrf.mxu0
      %1197 = vdwg.mxu0
      %1198 = vmatpush.bf16.msra.mxu0 %v414
      %1199 = vmatpush.bf16.msra.mxu0 %v410
      %1200 = vmatpush.bf16.msra.mxu0 %v406
      %1201 = vmatpush.bf16.msra.mxu0 %v402
      %1202 = vmatpush.bf16.msra.mxu0 %v398
      %1203 = vmatpush.bf16.msra.mxu0 %v394
      %1204 = vmatpush.bf16.msra.mxu0 %v390
      %1205 = vmatpush.bf16.msra.mxu0 %v386
      %1206 = vmatmul.bf16.gmra.mxu0 %v1184
      %v1207 = vpop.f32.mrf.mxu0
      %v1208 = vadd.f32 0.0, %v1207
      %v1209 = vpop.f32.mrf.mxu0
      %1210 = vdwg.mxu0
      %1211 = vmatpush.bf16.msra.mxu0 %v415
      %1212 = vmatpush.bf16.msra.mxu0 %v411
      %1213 = vmatpush.bf16.msra.mxu0 %v407
      %1214 = vmatpush.bf16.msra.mxu0 %v403
      %1215 = vmatpush.bf16.msra.mxu0 %v399
      %1216 = vmatpush.bf16.msra.mxu0 %v395
      %1217 = vmatpush.bf16.msra.mxu0 %v391
      %1218 = vmatpush.bf16.msra.mxu0 %v387
      %1219 = vmatmul.bf16.gmra.mxu0 %v1184
      %v1220 = vpop.f32.mrf.mxu0
      %v1221 = vadd.f32 0.0, %v1220
      %v1222 = vpop.f32.mrf.mxu0
      %1223 = vdwg.mxu0
      %1224 = vmatpush.bf16.msra.mxu0 %v416
      %1225 = vmatpush.bf16.msra.mxu0 %v412
      %1226 = vmatpush.bf16.msra.mxu0 %v408
      %1227 = vmatpush.bf16.msra.mxu0 %v404
      %1228 = vmatpush.bf16.msra.mxu0 %v400
      %1229 = vmatpush.bf16.msra.mxu0 %v396
      %1230 = vmatpush.bf16.msra.mxu0 %v392
      %1231 = vmatpush.bf16.msra.mxu0 %v388
      %1232 = vmatmul.bf16.gmra.mxu0 %v1184
      %v1233 = vpop.f32.mrf.mxu0
      %v1234 = vadd.f32 0.0, %v1233
      %v1235 = vpop.f32.mrf.mxu0
      %1236 = vdwg.mxu0
      %v1238 = vsel %vm521, %v1183, 0
      %1240 = vmatpush.bf16.msra.mxu0 0
      %1241 = vmatpush.bf16.msra.mxu0 0
      %1242 = vmatpush.bf16.msra.mxu0 0
      %1243 = vmatpush.bf16.msra.mxu0 0
      %1244 = vmatpush.bf16.msra.mxu0 0
      %1245 = vmatpush.bf16.msra.mxu0 0
      %1246 = vmatpush.bf16.msra.mxu0 0
      %1247 = vmatpush.bf16.msra.mxu0 %v513
      %1248 = vmatmul.bf16.gmra.mxu0 %v1238
      %v1249 = vpop.f32.mrf.mxu0
      %v1250 = vadd.f32 %v1195, %v1249
      %v1251 = vpop.f32.mrf.mxu0
      %1252 = vdwg.mxu0
      %1253 = vmatpush.bf16.msra.mxu0 0
      %1254 = vmatpush.bf16.msra.mxu0 0
      %1255 = vmatpush.bf16.msra.mxu0 0
      %1256 = vmatpush.bf16.msra.mxu0 0
      %1257 = vmatpush.bf16.msra.mxu0 0
      %1258 = vmatpush.bf16.msra.mxu0 0
      %1259 = vmatpush.bf16.msra.mxu0 0
      %1260 = vmatpush.bf16.msra.mxu0 %v514
      %1261 = vmatmul.bf16.gmra.mxu0 %v1238
      %v1262 = vpop.f32.mrf.mxu0
      %v1263 = vadd.f32 %v1208, %v1262
      %v1264 = vpop.f32.mrf.mxu0
      %1265 = vdwg.mxu0
      %1266 = vmatpush.bf16.msra.mxu0 0
      %1267 = vmatpush.bf16.msra.mxu0 0
      %1268 = vmatpush.bf16.msra.mxu0 0
      %1269 = vmatpush.bf16.msra.mxu0 0
      %1270 = vmatpush.bf16.msra.mxu0 0
      %1271 = vmatpush.bf16.msra.mxu0 0
      %1272 = vmatpush.bf16.msra.mxu0 0
      %1273 = vmatpush.bf16.msra.mxu0 %v515
      %1274 = vmatmul.bf16.gmra.mxu0 %v1238
      %v1275 = vpop.f32.mrf.mxu0
      %v1276 = vadd.f32 %v1221, %v1275
      %v1277 = vpop.f32.mrf.mxu0
      %1278 = vdwg.mxu0
      %1279 = vmatpush.bf16.msra.mxu0 0
      %1280 = vmatpush.bf16.msra.mxu0 0
      %1281 = vmatpush.bf16.msra.mxu0 0
      %1282 = vmatpush.bf16.msra.mxu0 0
      %1283 = vmatpush.bf16.msra.mxu0 0
      %1284 = vmatpush.bf16.msra.mxu0 0
      %1285 = vmatpush.bf16.msra.mxu0 0
      %1286 = vmatpush.bf16.msra.mxu0 %v516
      %1287 = vmatmul.bf16.gmra.mxu0 %v1238
      %v1288 = vpop.f32.mrf.mxu0
      %v1289 = vadd.f32 %v1234, %v1288
      %v1290 = vpop.f32.mrf.mxu0
      %1291 = vdwg.mxu0
      %v1292 = vadd.f32 %v1250, %v277
      %v1293 = vadd.f32 %v1263, %v278
      %v1294 = vadd.f32 %v1276, %v279
      %v1295 = vadd.f32 %v1289, %v280
      %v1296 = vxor.u32 %v1292, 2147483648
      %v1297 = vmul.f32 %v1296, 1.442695
      %v1298 = vpow.pop %v1297
      %v1299 = vadd.f32 %v1298, 1.0
      %v1300 = vrcp.pop %v1299
      %v1301 = vmul.f32 %v1299, %v1300
      %v1302 = vsub.f32 1.0, %v1301
      %v1303 = vmul.f32 %v1300, %v1302
      %v1304 = vadd.f32 %v1300, %v1303
      %vm1305 = vweird.f32 %v1299
      %vm1306 = vweird.f32 %v1300
      %vm1307 = vmor %vm1305, %vm1306
      %v1308 = vsel %vm1307, %v1300, %v1304
      %v1309 = vand.u32 2147483647, %v1299
      %vm1310 = vcmp.eq.f32.partialorder %v1309, 8.507059e+37
      %v1311 = vand.u32 %v1299, 2147483648
      %v1312 = vor.u32 1.1754944e-38, %v1311
      %v1313 = vsel %vm1310, %v1312, %v1308
      %v1314 = vmul.f32 1.0, %v1313
      %v1315 = vxor.u32 %v1293, 2147483648
      %v1316 = vmul.f32 %v1315, 1.442695
      %v1317 = vpow.pop %v1316
      %v1318 = vadd.f32 %v1317, 1.0
      %v1319 = vrcp.pop %v1318
      %v1320 = vmul.f32 %v1318, %v1319
      %v1321 = vsub.f32 1.0, %v1320
      %v1322 = vmul.f32 %v1319, %v1321
      %v1323 = vadd.f32 %v1319, %v1322
      %vm1324 = vweird.f32 %v1318
      %vm1325 = vweird.f32 %v1319
      %vm1326 = vmor %vm1324, %vm1325
      %v1327 = vsel %vm1326, %v1319, %v1323
      %v1328 = vand.u32 2147483647, %v1318
      %vm1329 = vcmp.eq.f32.partialorder %v1328, 8.507059e+37
      %v1330 = vand.u32 %v1318, 2147483648
      %v1331 = vor.u32 1.1754944e-38, %v1330
      %v1332 = vsel %vm1329, %v1331, %v1327
      %v1333 = vmul.f32 1.0, %v1332
      %v1334 = vtanh.pop %v1294
      %v1335 = vxor.u32 %v1295, 2147483648
      %v1336 = vmul.f32 %v1335, 1.442695
      %v1337 = vpow.pop %v1336
      %v1338 = vadd.f32 %v1337, 1.0
      %v1339 = vrcp.pop %v1338
      %v1340 = vmul.f32 %v1338, %v1339
      %v1341 = vsub.f32 1.0, %v1340
      %v1342 = vmul.f32 %v1339, %v1341
      %v1343 = vadd.f32 %v1339, %v1342
      %vm1344 = vweird.f32 %v1338
      %vm1345 = vweird.f32 %v1339
      %vm1346 = vmor %vm1344, %vm1345
      %v1347 = vsel %vm1346, %v1339, %v1343
      %v1348 = vand.u32 2147483647, %v1338
      %vm1349 = vcmp.eq.f32.partialorder %v1348, 8.507059e+37
      %v1350 = vand.u32 %v1338, 2147483648
      %v1351 = vor.u32 1.1754944e-38, %v1350
      %v1352 = vsel %vm1349, %v1351, %v1347
      %v1353 = vmul.f32 1.0, %v1352
      %v1354 = vmul.f32 %v1333, %v1177
      %v1355 = vmul.f32 %v1314, %v1334
      %v1356 = vadd.f32 %v1354, %v1355
      %v1357 = vtanh.pop %v1356
      %v1358 = vmul.f32 %v1353, %v1357
      %s1359 = scalar_lea.vmem %s230, 32
      %1360 = vst [vmem:[%s1359] sm:$0xff] %v1358
      %s1361 = scalar_lea.vmem %s221, 20
      %v1362 = vld [vmem:[%s1361] sm:$0xf]
      %v1363 = vpack.c.bf16 %v1358, %v1358
      %1364 = vmatpush.bf16.msra.mxu0 %v413
      %1365 = vmatpush.bf16.msra.mxu0 %v409
      %1366 = vmatpush.bf16.msra.mxu0 %v405
      %1367 = vmatpush.bf16.msra.mxu0 %v401
      %1368 = vmatpush.bf16.msra.mxu0 %v397
      %1369 = vmatpush.bf16.msra.mxu0 %v393
      %1370 = vmatpush.bf16.msra.mxu0 %v389
      %1371 = vmatpush.bf16.msra.mxu0 %v385
      %1372 = vmatmul.bf16.gmra.mxu0 %v1363
      %v1373 = vpop.f32.mrf.mxu0
      %v1374 = vadd.f32 0.0, %v1373
      %v1375 = vpop.f32.mrf.mxu0
      %1376 = vdwg.mxu0
      %1377 = vmatpush.bf16.msra.mxu0 %v414
      %1378 = vmatpush.bf16.msra.mxu0 %v410
      %1379 = vmatpush.bf16.msra.mxu0 %v406
      %1380 = vmatpush.bf16.msra.mxu0 %v402
      %1381 = vmatpush.bf16.msra.mxu0 %v398
      %1382 = vmatpush.bf16.msra.mxu0 %v394
      %1383 = vmatpush.bf16.msra.mxu0 %v390
      %1384 = vmatpush.bf16.msra.mxu0 %v386
      %1385 = vmatmul.bf16.gmra.mxu0 %v1363
      %v1386 = vpop.f32.mrf.mxu0
      %v1387 = vadd.f32 0.0, %v1386
      %v1388 = vpop.f32.mrf.mxu0
      %1389 = vdwg.mxu0
      %1390 = vmatpush.bf16.msra.mxu0 %v415
      %1391 = vmatpush.bf16.msra.mxu0 %v411
      %1392 = vmatpush.bf16.msra.mxu0 %v407
      %1393 = vmatpush.bf16.msra.mxu0 %v403
      %1394 = vmatpush.bf16.msra.mxu0 %v399
      %1395 = vmatpush.bf16.msra.mxu0 %v395
      %1396 = vmatpush.bf16.msra.mxu0 %v391
      %1397 = vmatpush.bf16.msra.mxu0 %v387
      %1398 = vmatmul.bf16.gmra.mxu0 %v1363
      %v1399 = vpop.f32.mrf.mxu0
      %v1400 = vadd.f32 0.0, %v1399
      %v1401 = vpop.f32.mrf.mxu0
      %1402 = vdwg.mxu0
      %1403 = vmatpush.bf16.msra.mxu0 %v416
      %1404 = vmatpush.bf16.msra.mxu0 %v412
      %1405 = vmatpush.bf16.msra.mxu0 %v408
      %1406 = vmatpush.bf16.msra.mxu0 %v404
      %1407 = vmatpush.bf16.msra.mxu0 %v400
      %1408 = vmatpush.bf16.msra.mxu0 %v396
      %1409 = vmatpush.bf16.msra.mxu0 %v392
      %1410 = vmatpush.bf16.msra.mxu0 %v388
      %1411 = vmatmul.bf16.gmra.mxu0 %v1363
      %v1412 = vpop.f32.mrf.mxu0
      %v1413 = vadd.f32 0.0, %v1412
      %v1414 = vpop.f32.mrf.mxu0
      %1415 = vdwg.mxu0
      %v1417 = vsel %vm521, %v1362, 0
      %1419 = vmatpush.bf16.msra.mxu0 0
      %1420 = vmatpush.bf16.msra.mxu0 0
      %1421 = vmatpush.bf16.msra.mxu0 0
      %1422 = vmatpush.bf16.msra.mxu0 0
      %1423 = vmatpush.bf16.msra.mxu0 0
      %1424 = vmatpush.bf16.msra.mxu0 0
      %1425 = vmatpush.bf16.msra.mxu0 0
      %1426 = vmatpush.bf16.msra.mxu0 %v513
      %1427 = vmatmul.bf16.gmra.mxu0 %v1417
      %v1428 = vpop.f32.mrf.mxu0
      %v1429 = vadd.f32 %v1374, %v1428
      %v1430 = vpop.f32.mrf.mxu0
      %1431 = vdwg.mxu0
      %1432 = vmatpush.bf16.msra.mxu0 0
      %1433 = vmatpush.bf16.msra.mxu0 0
      %1434 = vmatpush.bf16.msra.mxu0 0
      %1435 = vmatpush.bf16.msra.mxu0 0
      %1436 = vmatpush.bf16.msra.mxu0 0
      %1437 = vmatpush.bf16.msra.mxu0 0
      %1438 = vmatpush.bf16.msra.mxu0 0
      %1439 = vmatpush.bf16.msra.mxu0 %v514
      %1440 = vmatmul.bf16.gmra.mxu0 %v1417
      %v1441 = vpop.f32.mrf.mxu0
      %v1442 = vadd.f32 %v1387, %v1441
      %v1443 = vpop.f32.mrf.mxu0
      %1444 = vdwg.mxu0
      %1445 = vmatpush.bf16.msra.mxu0 0
      %1446 = vmatpush.bf16.msra.mxu0 0
      %1447 = vmatpush.bf16.msra.mxu0 0
      %1448 = vmatpush.bf16.msra.mxu0 0
      %1449 = vmatpush.bf16.msra.mxu0 0
      %1450 = vmatpush.bf16.msra.mxu0 0
      %1451 = vmatpush.bf16.msra.mxu0 0
      %1452 = vmatpush.bf16.msra.mxu0 %v515
      %1453 = vmatmul.bf16.gmra.mxu0 %v1417
      %v1454 = vpop.f32.mrf.mxu0
      %v1455 = vadd.f32 %v1400, %v1454
      %v1456 = vpop.f32.mrf.mxu0
      %1457 = vdwg.mxu0
      %1458 = vmatpush.bf16.msra.mxu0 0
      %1459 = vmatpush.bf16.msra.mxu0 0
      %1460 = vmatpush.bf16.msra.mxu0 0
      %1461 = vmatpush.bf16.msra.mxu0 0
      %1462 = vmatpush.bf16.msra.mxu0 0
      %1463 = vmatpush.bf16.msra.mxu0 0
      %1464 = vmatpush.bf16.msra.mxu0 0
      %1465 = vmatpush.bf16.msra.mxu0 %v516
      %1466 = vmatmul.bf16.gmra.mxu0 %v1417
      %v1467 = vpop.f32.mrf.mxu0
      %v1468 = vadd.f32 %v1413, %v1467
      %v1469 = vpop.f32.mrf.mxu0
      %1470 = vdwg.mxu0
      %v1471 = vadd.f32 %v1429, %v277
      %v1472 = vadd.f32 %v1442, %v278
      %v1473 = vadd.f32 %v1455, %v279
      %v1474 = vadd.f32 %v1468, %v280
      %v1475 = vxor.u32 %v1471, 2147483648
      %v1476 = vmul.f32 %v1475, 1.442695
      %v1477 = vpow.pop %v1476
      %v1478 = vadd.f32 %v1477, 1.0
      %v1479 = vrcp.pop %v1478
      %v1480 = vmul.f32 %v1478, %v1479
      %v1481 = vsub.f32 1.0, %v1480
      %v1482 = vmul.f32 %v1479, %v1481
      %v1483 = vadd.f32 %v1479, %v1482
      %vm1484 = vweird.f32 %v1478
      %vm1485 = vweird.f32 %v1479
      %vm1486 = vmor %vm1484, %vm1485
      %v1487 = vsel %vm1486, %v1479, %v1483
      %v1488 = vand.u32 2147483647, %v1478
      %vm1489 = vcmp.eq.f32.partialorder %v1488, 8.507059e+37
      %v1490 = vand.u32 %v1478, 2147483648
      %v1491 = vor.u32 1.1754944e-38, %v1490
      %v1492 = vsel %vm1489, %v1491, %v1487
      %v1493 = vmul.f32 1.0, %v1492
      %v1494 = vxor.u32 %v1472, 2147483648
      %v1495 = vmul.f32 %v1494, 1.442695
      %v1496 = vpow.pop %v1495
      %v1497 = vadd.f32 %v1496, 1.0
      %v1498 = vrcp.pop %v1497
      %v1499 = vmul.f32 %v1497, %v1498
      %v1500 = vsub.f32 1.0, %v1499
      %v1501 = vmul.f32 %v1498, %v1500
      %v1502 = vadd.f32 %v1498, %v1501
      %vm1503 = vweird.f32 %v1497
      %vm1504 = vweird.f32 %v1498
      %vm1505 = vmor %vm1503, %vm1504
      %v1506 = vsel %vm1505, %v1498, %v1502
      %v1507 = vand.u32 2147483647, %v1497
      %vm1508 = vcmp.eq.f32.partialorder %v1507, 8.507059e+37
      %v1509 = vand.u32 %v1497, 2147483648
      %v1510 = vor.u32 1.1754944e-38, %v1509
      %v1511 = vsel %vm1508, %v1510, %v1506
      %v1512 = vmul.f32 1.0, %v1511
      %v1513 = vtanh.pop %v1473
      %v1514 = vxor.u32 %v1474, 2147483648
      %v1515 = vmul.f32 %v1514, 1.442695
      %v1516 = vpow.pop %v1515
      %v1517 = vadd.f32 %v1516, 1.0
      %v1518 = vrcp.pop %v1517
      %v1519 = vmul.f32 %v1517, %v1518
      %v1520 = vsub.f32 1.0, %v1519
      %v1521 = vmul.f32 %v1518, %v1520
      %v1522 = vadd.f32 %v1518, %v1521
      %vm1523 = vweird.f32 %v1517
      %vm1524 = vweird.f32 %v1518
      %vm1525 = vmor %vm1523, %vm1524
      %v1526 = vsel %vm1525, %v1518, %v1522
      %v1527 = vand.u32 2147483647, %v1517
      %vm1528 = vcmp.eq.f32.partialorder %v1527, 8.507059e+37
      %v1529 = vand.u32 %v1517, 2147483648
      %v1530 = vor.u32 1.1754944e-38, %v1529
      %v1531 = vsel %vm1528, %v1530, %v1526
      %v1532 = vmul.f32 1.0, %v1531
      %v1533 = vmul.f32 %v1512, %v1356
      %v1534 = vmul.f32 %v1493, %v1513
      %v1535 = vadd.f32 %v1533, %v1534
      %v1536 = vtanh.pop %v1535
      %v1537 = vmul.f32 %v1532, %v1536
      %s1538 = scalar_lea.vmem %s230, 40
      %1539 = vst [vmem:[%s1538] sm:$0xff] %v1537
      %s1540 = scalar_lea.vmem %s221, 24
      %v1541 = vld [vmem:[%s1540] sm:$0xf]
      %v1542 = vpack.c.bf16 %v1537, %v1537
      %1543 = vmatpush.bf16.msra.mxu0 %v413
      %1544 = vmatpush.bf16.msra.mxu0 %v409
      %1545 = vmatpush.bf16.msra.mxu0 %v405
      %1546 = vmatpush.bf16.msra.mxu0 %v401
      %1547 = vmatpush.bf16.msra.mxu0 %v397
      %1548 = vmatpush.bf16.msra.mxu0 %v393
      %1549 = vmatpush.bf16.msra.mxu0 %v389
      %1550 = vmatpush.bf16.msra.mxu0 %v385
      %1551 = vmatmul.bf16.gmra.mxu0 %v1542
      %v1552 = vpop.f32.mrf.mxu0
      %v1553 = vadd.f32 0.0, %v1552
      %v1554 = vpop.f32.mrf.mxu0
      %1555 = vdwg.mxu0
      %1556 = vmatpush.bf16.msra.mxu0 %v414
      %1557 = vmatpush.bf16.msra.mxu0 %v410
      %1558 = vmatpush.bf16.msra.mxu0 %v406
      %1559 = vmatpush.bf16.msra.mxu0 %v402
      %1560 = vmatpush.bf16.msra.mxu0 %v398
      %1561 = vmatpush.bf16.msra.mxu0 %v394
      %1562 = vmatpush.bf16.msra.mxu0 %v390
      %1563 = vmatpush.bf16.msra.mxu0 %v386
      %1564 = vmatmul.bf16.gmra.mxu0 %v1542
      %v1565 = vpop.f32.mrf.mxu0
      %v1566 = vadd.f32 0.0, %v1565
      %v1567 = vpop.f32.mrf.mxu0
      %1568 = vdwg.mxu0
      %1569 = vmatpush.bf16.msra.mxu0 %v415
      %1570 = vmatpush.bf16.msra.mxu0 %v411
      %1571 = vmatpush.bf16.msra.mxu0 %v407
      %1572 = vmatpush.bf16.msra.mxu0 %v403
      %1573 = vmatpush.bf16.msra.mxu0 %v399
      %1574 = vmatpush.bf16.msra.mxu0 %v395
      %1575 = vmatpush.bf16.msra.mxu0 %v391
      %1576 = vmatpush.bf16.msra.mxu0 %v387
      %1577 = vmatmul.bf16.gmra.mxu0 %v1542
      %v1578 = vpop.f32.mrf.mxu0
      %v1579 = vadd.f32 0.0, %v1578
      %v1580 = vpop.f32.mrf.mxu0
      %1581 = vdwg.mxu0
      %1582 = vmatpush.bf16.msra.mxu0 %v416
      %1583 = vmatpush.bf16.msra.mxu0 %v412
      %1584 = vmatpush.bf16.msra.mxu0 %v408
      %1585 = vmatpush.bf16.msra.mxu0 %v404
      %1586 = vmatpush.bf16.msra.mxu0 %v400
      %1587 = vmatpush.bf16.msra.mxu0 %v396
      %1588 = vmatpush.bf16.msra.mxu0 %v392
      %1589 = vmatpush.bf16.msra.mxu0 %v388
      %1590 = vmatmul.bf16.gmra.mxu0 %v1542
      %v1591 = vpop.f32.mrf.mxu0
      %v1592 = vadd.f32 0.0, %v1591
      %v1593 = vpop.f32.mrf.mxu0
      %1594 = vdwg.mxu0
      %v1596 = vsel %vm521, %v1541, 0
      %1598 = vmatpush.bf16.msra.mxu0 0
      %1599 = vmatpush.bf16.msra.mxu0 0
      %1600 = vmatpush.bf16.msra.mxu0 0
      %1601 = vmatpush.bf16.msra.mxu0 0
      %1602 = vmatpush.bf16.msra.mxu0 0
      %1603 = vmatpush.bf16.msra.mxu0 0
      %1604 = vmatpush.bf16.msra.mxu0 0
      %1605 = vmatpush.bf16.msra.mxu0 %v513
      %1606 = vmatmul.bf16.gmra.mxu0 %v1596
      %v1607 = vpop.f32.mrf.mxu0
      %v1608 = vadd.f32 %v1553, %v1607
      %v1609 = vpop.f32.mrf.mxu0
      %1610 = vdwg.mxu0
      %1611 = vmatpush.bf16.msra.mxu0 0
      %1612 = vmatpush.bf16.msra.mxu0 0
      %1613 = vmatpush.bf16.msra.mxu0 0
      %1614 = vmatpush.bf16.msra.mxu0 0
      %1615 = vmatpush.bf16.msra.mxu0 0
      %1616 = vmatpush.bf16.msra.mxu0 0
      %1617 = vmatpush.bf16.msra.mxu0 0
      %1618 = vmatpush.bf16.msra.mxu0 %v514
      %1619 = vmatmul.bf16.gmra.mxu0 %v1596
      %v1620 = vpop.f32.mrf.mxu0
      %v1621 = vadd.f32 %v1566, %v1620
      %v1622 = vpop.f32.mrf.mxu0
      %1623 = vdwg.mxu0
      %1624 = vmatpush.bf16.msra.mxu0 0
      %1625 = vmatpush.bf16.msra.mxu0 0
      %1626 = vmatpush.bf16.msra.mxu0 0
      %1627 = vmatpush.bf16.msra.mxu0 0
      %1628 = vmatpush.bf16.msra.mxu0 0
      %1629 = vmatpush.bf16.msra.mxu0 0
      %1630 = vmatpush.bf16.msra.mxu0 0
      %1631 = vmatpush.bf16.msra.mxu0 %v515
      %1632 = vmatmul.bf16.gmra.mxu0 %v1596
      %v1633 = vpop.f32.mrf.mxu0
      %v1634 = vadd.f32 %v1579, %v1633
      %v1635 = vpop.f32.mrf.mxu0
      %1636 = vdwg.mxu0
      %1637 = vmatpush.bf16.msra.mxu0 0
      %1638 = vmatpush.bf16.msra.mxu0 0
      %1639 = vmatpush.bf16.msra.mxu0 0
      %1640 = vmatpush.bf16.msra.mxu0 0
      %1641 = vmatpush.bf16.msra.mxu0 0
      %1642 = vmatpush.bf16.msra.mxu0 0
      %1643 = vmatpush.bf16.msra.mxu0 0
      %1644 = vmatpush.bf16.msra.mxu0 %v516
      %1645 = vmatmul.bf16.gmra.mxu0 %v1596
      %v1646 = vpop.f32.mrf.mxu0
      %v1647 = vadd.f32 %v1592, %v1646
      %v1648 = vpop.f32.mrf.mxu0
      %1649 = vdwg.mxu0
      %v1650 = vadd.f32 %v1608, %v277
      %v1651 = vadd.f32 %v1621, %v278
      %v1652 = vadd.f32 %v1634, %v279
      %v1653 = vadd.f32 %v1647, %v280
      %v1654 = vxor.u32 %v1650, 2147483648
      %v1655 = vmul.f32 %v1654, 1.442695
      %v1656 = vpow.pop %v1655
      %v1657 = vadd.f32 %v1656, 1.0
      %v1658 = vrcp.pop %v1657
      %v1659 = vmul.f32 %v1657, %v1658
      %v1660 = vsub.f32 1.0, %v1659
      %v1661 = vmul.f32 %v1658, %v1660
      %v1662 = vadd.f32 %v1658, %v1661
      %vm1663 = vweird.f32 %v1657
      %vm1664 = vweird.f32 %v1658
      %vm1665 = vmor %vm1663, %vm1664
      %v1666 = vsel %vm1665, %v1658, %v1662
      %v1667 = vand.u32 2147483647, %v1657
      %vm1668 = vcmp.eq.f32.partialorder %v1667, 8.507059e+37
      %v1669 = vand.u32 %v1657, 2147483648
      %v1670 = vor.u32 1.1754944e-38, %v1669
      %v1671 = vsel %vm1668, %v1670, %v1666
      %v1672 = vmul.f32 1.0, %v1671
      %v1673 = vxor.u32 %v1651, 2147483648
      %v1674 = vmul.f32 %v1673, 1.442695
      %v1675 = vpow.pop %v1674
      %v1676 = vadd.f32 %v1675, 1.0
      %v1677 = vrcp.pop %v1676
      %v1678 = vmul.f32 %v1676, %v1677
      %v1679 = vsub.f32 1.0, %v1678
      %v1680 = vmul.f32 %v1677, %v1679
      %v1681 = vadd.f32 %v1677, %v1680
      %vm1682 = vweird.f32 %v1676
      %vm1683 = vweird.f32 %v1677
      %vm1684 = vmor %vm1682, %vm1683
      %v1685 = vsel %vm1684, %v1677, %v1681
      %v1686 = vand.u32 2147483647, %v1676
      %vm1687 = vcmp.eq.f32.partialorder %v1686, 8.507059e+37
      %v1688 = vand.u32 %v1676, 2147483648
      %v1689 = vor.u32 1.1754944e-38, %v1688
      %v1690 = vsel %vm1687, %v1689, %v1685
      %v1691 = vmul.f32 1.0, %v1690
      %v1692 = vtanh.pop %v1652
      %v1693 = vxor.u32 %v1653, 2147483648
      %v1694 = vmul.f32 %v1693, 1.442695
      %v1695 = vpow.pop %v1694
      %v1696 = vadd.f32 %v1695, 1.0
      %v1697 = vrcp.pop %v1696
      %v1698 = vmul.f32 %v1696, %v1697
      %v1699 = vsub.f32 1.0, %v1698
      %v1700 = vmul.f32 %v1697, %v1699
      %v1701 = vadd.f32 %v1697, %v1700
      %vm1702 = vweird.f32 %v1696
      %vm1703 = vweird.f32 %v1697
      %vm1704 = vmor %vm1702, %vm1703
      %v1705 = vsel %vm1704, %v1697, %v1701
      %v1706 = vand.u32 2147483647, %v1696
      %vm1707 = vcmp.eq.f32.partialorder %v1706, 8.507059e+37
      %v1708 = vand.u32 %v1696, 2147483648
      %v1709 = vor.u32 1.1754944e-38, %v1708
      %v1710 = vsel %vm1707, %v1709, %v1705
      %v1711 = vmul.f32 1.0, %v1710
      %v1712 = vmul.f32 %v1691, %v1535
      %v1713 = vmul.f32 %v1672, %v1692
      %v1714 = vadd.f32 %v1712, %v1713
      %v1715 = vtanh.pop %v1714
      %v1716 = vmul.f32 %v1711, %v1715
      %s1717 = scalar_lea.vmem %s230, 48
      %1718 = vst [vmem:[%s1717] sm:$0xff] %v1716
      %s1719 = scalar_lea.vmem %s221, 28
      %v1720 = vld [vmem:[%s1719] sm:$0xf]
      %v1721 = vpack.c.bf16 %v1716, %v1716
      %1722 = vmatpush.bf16.msra.mxu0 %v413
      %1723 = vmatpush.bf16.msra.mxu0 %v409
      %1724 = vmatpush.bf16.msra.mxu0 %v405
      %1725 = vmatpush.bf16.msra.mxu0 %v401
      %1726 = vmatpush.bf16.msra.mxu0 %v397
      %1727 = vmatpush.bf16.msra.mxu0 %v393
      %1728 = vmatpush.bf16.msra.mxu0 %v389
      %1729 = vmatpush.bf16.msra.mxu0 %v385
      %1730 = vmatmul.bf16.gmra.mxu0 %v1721
      %v1731 = vpop.f32.mrf.mxu0
      %v1732 = vadd.f32 0.0, %v1731
      %v1733 = vpop.f32.mrf.mxu0
      %1734 = vdwg.mxu0
      %1735 = vmatpush.bf16.msra.mxu0 %v414
      %1736 = vmatpush.bf16.msra.mxu0 %v410
      %1737 = vmatpush.bf16.msra.mxu0 %v406
      %1738 = vmatpush.bf16.msra.mxu0 %v402
      %1739 = vmatpush.bf16.msra.mxu0 %v398
      %1740 = vmatpush.bf16.msra.mxu0 %v394
      %1741 = vmatpush.bf16.msra.mxu0 %v390
      %1742 = vmatpush.bf16.msra.mxu0 %v386
      %1743 = vmatmul.bf16.gmra.mxu0 %v1721
      %v1744 = vpop.f32.mrf.mxu0
      %v1745 = vadd.f32 0.0, %v1744
      %v1746 = vpop.f32.mrf.mxu0
      %1747 = vdwg.mxu0
      %1748 = vmatpush.bf16.msra.mxu0 %v415
      %1749 = vmatpush.bf16.msra.mxu0 %v411
      %1750 = vmatpush.bf16.msra.mxu0 %v407
      %1751 = vmatpush.bf16.msra.mxu0 %v403
      %1752 = vmatpush.bf16.msra.mxu0 %v399
      %1753 = vmatpush.bf16.msra.mxu0 %v395
      %1754 = vmatpush.bf16.msra.mxu0 %v391
      %1755 = vmatpush.bf16.msra.mxu0 %v387
      %1756 = vmatmul.bf16.gmra.mxu0 %v1721
      %v1757 = vpop.f32.mrf.mxu0
      %v1758 = vadd.f32 0.0, %v1757
      %v1759 = vpop.f32.mrf.mxu0
      %1760 = vdwg.mxu0
      %1761 = vmatpush.bf16.msra.mxu0 %v416
      %1762 = vmatpush.bf16.msra.mxu0 %v412
      %1763 = vmatpush.bf16.msra.mxu0 %v408
      %1764 = vmatpush.bf16.msra.mxu0 %v404
      %1765 = vmatpush.bf16.msra.mxu0 %v400
      %1766 = vmatpush.bf16.msra.mxu0 %v396
      %1767 = vmatpush.bf16.msra.mxu0 %v392
      %1768 = vmatpush.bf16.msra.mxu0 %v388
      %1769 = vmatmul.bf16.gmra.mxu0 %v1721
      %v1770 = vpop.f32.mrf.mxu0
      %v1771 = vadd.f32 0.0, %v1770
      %v1772 = vpop.f32.mrf.mxu0
      %1773 = vdwg.mxu0
      %v1775 = vsel %vm521, %v1720, 0
      %1777 = vmatpush.bf16.msra.mxu0 0
      %1778 = vmatpush.bf16.msra.mxu0 0
      %1779 = vmatpush.bf16.msra.mxu0 0
      %1780 = vmatpush.bf16.msra.mxu0 0
      %1781 = vmatpush.bf16.msra.mxu0 0
      %1782 = vmatpush.bf16.msra.mxu0 0
      %1783 = vmatpush.bf16.msra.mxu0 0
      %1784 = vmatpush.bf16.msra.mxu0 %v513
      %1785 = vmatmul.bf16.gmra.mxu0 %v1775
      %v1786 = vpop.f32.mrf.mxu0
      %v1787 = vadd.f32 %v1732, %v1786
      %v1788 = vpop.f32.mrf.mxu0
      %1789 = vdwg.mxu0
      %1790 = vmatpush.bf16.msra.mxu0 0
      %1791 = vmatpush.bf16.msra.mxu0 0
      %1792 = vmatpush.bf16.msra.mxu0 0
      %1793 = vmatpush.bf16.msra.mxu0 0
      %1794 = vmatpush.bf16.msra.mxu0 0
      %1795 = vmatpush.bf16.msra.mxu0 0
      %1796 = vmatpush.bf16.msra.mxu0 0
      %1797 = vmatpush.bf16.msra.mxu0 %v514
      %1798 = vmatmul.bf16.gmra.mxu0 %v1775
      %v1799 = vpop.f32.mrf.mxu0
      %v1800 = vadd.f32 %v1745, %v1799
      %v1801 = vpop.f32.mrf.mxu0
      %1802 = vdwg.mxu0
      %1803 = vmatpush.bf16.msra.mxu0 0
      %1804 = vmatpush.bf16.msra.mxu0 0
      %1805 = vmatpush.bf16.msra.mxu0 0
      %1806 = vmatpush.bf16.msra.mxu0 0
      %1807 = vmatpush.bf16.msra.mxu0 0
      %1808 = vmatpush.bf16.msra.mxu0 0
      %1809 = vmatpush.bf16.msra.mxu0 0
      %1810 = vmatpush.bf16.msra.mxu0 %v515
      %1811 = vmatmul.bf16.gmra.mxu0 %v1775
      %v1812 = vpop.f32.mrf.mxu0
      %v1813 = vadd.f32 %v1758, %v1812
      %v1814 = vpop.f32.mrf.mxu0
      %1815 = vdwg.mxu0
      %1816 = vmatpush.bf16.msra.mxu0 0
      %1817 = vmatpush.bf16.msra.mxu0 0
      %1818 = vmatpush.bf16.msra.mxu0 0
      %1819 = vmatpush.bf16.msra.mxu0 0
      %1820 = vmatpush.bf16.msra.mxu0 0
      %1821 = vmatpush.bf16.msra.mxu0 0
      %1822 = vmatpush.bf16.msra.mxu0 0
      %1823 = vmatpush.bf16.msra.mxu0 %v516
      %1824 = vmatmul.bf16.gmra.mxu0 %v1775
      %v1825 = vpop.f32.mrf.mxu0
      %v1826 = vadd.f32 %v1771, %v1825
      %v1827 = vpop.f32.mrf.mxu0
      %1828 = vdwg.mxu0
      %v1829 = vadd.f32 %v1787, %v277
      %v1830 = vadd.f32 %v1800, %v278
      %v1831 = vadd.f32 %v1813, %v279
      %v1832 = vadd.f32 %v1826, %v280
      %v1833 = vxor.u32 %v1829, 2147483648
      %v1834 = vmul.f32 %v1833, 1.442695
      %v1835 = vpow.pop %v1834
      %v1836 = vadd.f32 %v1835, 1.0
      %v1837 = vrcp.pop %v1836
      %v1838 = vmul.f32 %v1836, %v1837
      %v1839 = vsub.f32 1.0, %v1838
      %v1840 = vmul.f32 %v1837, %v1839
      %v1841 = vadd.f32 %v1837, %v1840
      %vm1842 = vweird.f32 %v1836
      %vm1843 = vweird.f32 %v1837
      %vm1844 = vmor %vm1842, %vm1843
      %v1845 = vsel %vm1844, %v1837, %v1841
      %v1846 = vand.u32 2147483647, %v1836
      %vm1847 = vcmp.eq.f32.partialorder %v1846, 8.507059e+37
      %v1848 = vand.u32 %v1836, 2147483648
      %v1849 = vor.u32 1.1754944e-38, %v1848
      %v1850 = vsel %vm1847, %v1849, %v1845
      %v1851 = vmul.f32 1.0, %v1850
      %v1852 = vxor.u32 %v1830, 2147483648
      %v1853 = vmul.f32 %v1852, 1.442695
      %v1854 = vpow.pop %v1853
      %v1855 = vadd.f32 %v1854, 1.0
      %v1856 = vrcp.pop %v1855
      %v1857 = vmul.f32 %v1855, %v1856
      %v1858 = vsub.f32 1.0, %v1857
      %v1859 = vmul.f32 %v1856, %v1858
      %v1860 = vadd.f32 %v1856, %v1859
      %vm1861 = vweird.f32 %v1855
      %vm1862 = vweird.f32 %v1856
      %vm1863 = vmor %vm1861, %vm1862
      %v1864 = vsel %vm1863, %v1856, %v1860
      %v1865 = vand.u32 2147483647, %v1855
      %vm1866 = vcmp.eq.f32.partialorder %v1865, 8.507059e+37
      %v1867 = vand.u32 %v1855, 2147483648
      %v1868 = vor.u32 1.1754944e-38, %v1867
      %v1869 = vsel %vm1866, %v1868, %v1864
      %v1870 = vmul.f32 1.0, %v1869
      %v1871 = vtanh.pop %v1831
      %v1872 = vxor.u32 %v1832, 2147483648
      %v1873 = vmul.f32 %v1872, 1.442695
      %v1874 = vpow.pop %v1873
      %v1875 = vadd.f32 %v1874, 1.0
      %v1876 = vrcp.pop %v1875
      %v1877 = vmul.f32 %v1875, %v1876
      %v1878 = vsub.f32 1.0, %v1877
      %v1879 = vmul.f32 %v1876, %v1878
      %v1880 = vadd.f32 %v1876, %v1879
      %vm1881 = vweird.f32 %v1875
      %vm1882 = vweird.f32 %v1876
      %vm1883 = vmor %vm1881, %vm1882
      %v1884 = vsel %vm1883, %v1876, %v1880
      %v1885 = vand.u32 2147483647, %v1875
      %vm1886 = vcmp.eq.f32.partialorder %v1885, 8.507059e+37
      %v1887 = vand.u32 %v1875, 2147483648
      %v1888 = vor.u32 1.1754944e-38, %v1887
      %v1889 = vsel %vm1886, %v1888, %v1884
      %v1890 = vmul.f32 1.0, %v1889
      %v1891 = vmul.f32 %v1870, %v1714
      %v1892 = vmul.f32 %v1851, %v1871
      %v1893 = vadd.f32 %v1891, %v1892
      %v1894 = vtanh.pop %v1893
      %v1895 = vmul.f32 %v1890, %v1894
      %s1896 = scalar_lea.vmem %s230, 56
      %1897 = vst [vmem:[%s1896] sm:$0xff] %v1895
      %s1898 = scalar_lea.vmem %s221, 32
      %v1899 = vld [vmem:[%s1898] sm:$0xf]
      %v1900 = vpack.c.bf16 %v1895, %v1895
      %1901 = vmatpush.bf16.msra.mxu0 %v413
      %1902 = vmatpush.bf16.msra.mxu0 %v409
      %1903 = vmatpush.bf16.msra.mxu0 %v405
      %1904 = vmatpush.bf16.msra.mxu0 %v401
      %1905 = vmatpush.bf16.msra.mxu0 %v397
      %1906 = vmatpush.bf16.msra.mxu0 %v393
      %1907 = vmatpush.bf16.msra.mxu0 %v389
      %1908 = vmatpush.bf16.msra.mxu0 %v385
      %1909 = vmatmul.bf16.gmra.mxu0 %v1900
      %v1910 = vpop.f32.mrf.mxu0
      %v1911 = vadd.f32 0.0, %v1910
      %v1912 = vpop.f32.mrf.mxu0
      %1913 = vdwg.mxu0
      %1914 = vmatpush.bf16.msra.mxu0 %v414
      %1915 = vmatpush.bf16.msra.mxu0 %v410
      %1916 = vmatpush.bf16.msra.mxu0 %v406
      %1917 = vmatpush.bf16.msra.mxu0 %v402
      %1918 = vmatpush.bf16.msra.mxu0 %v398
      %1919 = vmatpush.bf16.msra.mxu0 %v394
      %1920 = vmatpush.bf16.msra.mxu0 %v390
      %1921 = vmatpush.bf16.msra.mxu0 %v386
      %1922 = vmatmul.bf16.gmra.mxu0 %v1900
      %v1923 = vpop.f32.mrf.mxu0
      %v1924 = vadd.f32 0.0, %v1923
      %v1925 = vpop.f32.mrf.mxu0
      %1926 = vdwg.mxu0
      %1927 = vmatpush.bf16.msra.mxu0 %v415
      %1928 = vmatpush.bf16.msra.mxu0 %v411
      %1929 = vmatpush.bf16.msra.mxu0 %v407
      %1930 = vmatpush.bf16.msra.mxu0 %v403
      %1931 = vmatpush.bf16.msra.mxu0 %v399
      %1932 = vmatpush.bf16.msra.mxu0 %v395
      %1933 = vmatpush.bf16.msra.mxu0 %v391
      %1934 = vmatpush.bf16.msra.mxu0 %v387
      %1935 = vmatmul.bf16.gmra.mxu0 %v1900
      %v1936 = vpop.f32.mrf.mxu0
      %v1937 = vadd.f32 0.0, %v1936
      %v1938 = vpop.f32.mrf.mxu0
      %1939 = vdwg.mxu0
      %1940 = vmatpush.bf16.msra.mxu0 %v416
      %1941 = vmatpush.bf16.msra.mxu0 %v412
      %1942 = vmatpush.bf16.msra.mxu0 %v408
      %1943 = vmatpush.bf16.msra.mxu0 %v404
      %1944 = vmatpush.bf16.msra.mxu0 %v400
      %1945 = vmatpush.bf16.msra.mxu0 %v396
      %1946 = vmatpush.bf16.msra.mxu0 %v392
      %1947 = vmatpush.bf16.msra.mxu0 %v388
      %1948 = vmatmul.bf16.gmra.mxu0 %v1900
      %v1949 = vpop.f32.mrf.mxu0
      %v1950 = vadd.f32 0.0, %v1949
      %v1951 = vpop.f32.mrf.mxu0
      %1952 = vdwg.mxu0
      %v1954 = vsel %vm521, %v1899, 0
      %1956 = vmatpush.bf16.msra.mxu0 0
      %1957 = vmatpush.bf16.msra.mxu0 0
      %1958 = vmatpush.bf16.msra.mxu0 0
      %1959 = vmatpush.bf16.msra.mxu0 0
      %1960 = vmatpush.bf16.msra.mxu0 0
      %1961 = vmatpush.bf16.msra.mxu0 0
      %1962 = vmatpush.bf16.msra.mxu0 0
      %1963 = vmatpush.bf16.msra.mxu0 %v513
      %1964 = vmatmul.bf16.gmra.mxu0 %v1954
      %v1965 = vpop.f32.mrf.mxu0
      %v1966 = vadd.f32 %v1911, %v1965
      %v1967 = vpop.f32.mrf.mxu0
      %1968 = vdwg.mxu0
      %1969 = vmatpush.bf16.msra.mxu0 0
      %1970 = vmatpush.bf16.msra.mxu0 0
      %1971 = vmatpush.bf16.msra.mxu0 0
      %1972 = vmatpush.bf16.msra.mxu0 0
      %1973 = vmatpush.bf16.msra.mxu0 0
      %1974 = vmatpush.bf16.msra.mxu0 0
      %1975 = vmatpush.bf16.msra.mxu0 0
      %1976 = vmatpush.bf16.msra.mxu0 %v514
      %1977 = vmatmul.bf16.gmra.mxu0 %v1954
      %v1978 = vpop.f32.mrf.mxu0
      %v1979 = vadd.f32 %v1924, %v1978
      %v1980 = vpop.f32.mrf.mxu0
      %1981 = vdwg.mxu0
      %1982 = vmatpush.bf16.msra.mxu0 0
      %1983 = vmatpush.bf16.msra.mxu0 0
      %1984 = vmatpush.bf16.msra.mxu0 0
      %1985 = vmatpush.bf16.msra.mxu0 0
      %1986 = vmatpush.bf16.msra.mxu0 0
      %1987 = vmatpush.bf16.msra.mxu0 0
      %1988 = vmatpush.bf16.msra.mxu0 0
      %1989 = vmatpush.bf16.msra.mxu0 %v515
      %1990 = vmatmul.bf16.gmra.mxu0 %v1954
      %v1991 = vpop.f32.mrf.mxu0
      %v1992 = vadd.f32 %v1937, %v1991
      %v1993 = vpop.f32.mrf.mxu0
      %1994 = vdwg.mxu0
      %1995 = vmatpush.bf16.msra.mxu0 0
      %1996 = vmatpush.bf16.msra.mxu0 0
      %1997 = vmatpush.bf16.msra.mxu0 0
      %1998 = vmatpush.bf16.msra.mxu0 0
      %1999 = vmatpush.bf16.msra.mxu0 0
      %2000 = vmatpush.bf16.msra.mxu0 0
      %2001 = vmatpush.bf16.msra.mxu0 0
      %2002 = vmatpush.bf16.msra.mxu0 %v516
      %2003 = vmatmul.bf16.gmra.mxu0 %v1954
      %v2004 = vpop.f32.mrf.mxu0
      %v2005 = vadd.f32 %v1950, %v2004
      %v2006 = vpop.f32.mrf.mxu0
      %2007 = vdwg.mxu0
      %v2008 = vadd.f32 %v1966, %v277
      %v2009 = vadd.f32 %v1979, %v278
      %v2010 = vadd.f32 %v1992, %v279
      %v2011 = vadd.f32 %v2005, %v280
      %v2012 = vxor.u32 %v2008, 2147483648
      %v2013 = vmul.f32 %v2012, 1.442695
      %v2014 = vpow.pop %v2013
      %v2015 = vadd.f32 %v2014, 1.0
      %v2016 = vrcp.pop %v2015
      %v2017 = vmul.f32 %v2015, %v2016
      %v2018 = vsub.f32 1.0, %v2017
      %v2019 = vmul.f32 %v2016, %v2018
      %v2020 = vadd.f32 %v2016, %v2019
      %vm2021 = vweird.f32 %v2015
      %vm2022 = vweird.f32 %v2016
      %vm2023 = vmor %vm2021, %vm2022
      %v2024 = vsel %vm2023, %v2016, %v2020
      %v2025 = vand.u32 2147483647, %v2015
      %vm2026 = vcmp.eq.f32.partialorder %v2025, 8.507059e+37
      %v2027 = vand.u32 %v2015, 2147483648
      %v2028 = vor.u32 1.1754944e-38, %v2027
      %v2029 = vsel %vm2026, %v2028, %v2024
      %v2030 = vmul.f32 1.0, %v2029
      %v2031 = vxor.u32 %v2009, 2147483648
      %v2032 = vmul.f32 %v2031, 1.442695
      %v2033 = vpow.pop %v2032
      %v2034 = vadd.f32 %v2033, 1.0
      %v2035 = vrcp.pop %v2034
      %v2036 = vmul.f32 %v2034, %v2035
      %v2037 = vsub.f32 1.0, %v2036
      %v2038 = vmul.f32 %v2035, %v2037
      %v2039 = vadd.f32 %v2035, %v2038
      %vm2040 = vweird.f32 %v2034
      %vm2041 = vweird.f32 %v2035
      %vm2042 = vmor %vm2040, %vm2041
      %v2043 = vsel %vm2042, %v2035, %v2039
      %v2044 = vand.u32 2147483647, %v2034
      %vm2045 = vcmp.eq.f32.partialorder %v2044, 8.507059e+37
      %v2046 = vand.u32 %v2034, 2147483648
      %v2047 = vor.u32 1.1754944e-38, %v2046
      %v2048 = vsel %vm2045, %v2047, %v2043
      %v2049 = vmul.f32 1.0, %v2048
      %v2050 = vtanh.pop %v2010
      %v2051 = vxor.u32 %v2011, 2147483648
      %v2052 = vmul.f32 %v2051, 1.442695
      %v2053 = vpow.pop %v2052
      %v2054 = vadd.f32 %v2053, 1.0
      %v2055 = vrcp.pop %v2054
      %v2056 = vmul.f32 %v2054, %v2055
      %v2057 = vsub.f32 1.0, %v2056
      %v2058 = vmul.f32 %v2055, %v2057
      %v2059 = vadd.f32 %v2055, %v2058
      %vm2060 = vweird.f32 %v2054
      %vm2061 = vweird.f32 %v2055
      %vm2062 = vmor %vm2060, %vm2061
      %v2063 = vsel %vm2062, %v2055, %v2059
      %v2064 = vand.u32 2147483647, %v2054
      %vm2065 = vcmp.eq.f32.partialorder %v2064, 8.507059e+37
      %v2066 = vand.u32 %v2054, 2147483648
      %v2067 = vor.u32 1.1754944e-38, %v2066
      %v2068 = vsel %vm2065, %v2067, %v2063
      %v2069 = vmul.f32 1.0, %v2068
      %v2070 = vmul.f32 %v2049, %v1893
      %v2071 = vmul.f32 %v2030, %v2050
      %v2072 = vadd.f32 %v2070, %v2071
      %v2073 = vtanh.pop %v2072
      %v2074 = vmul.f32 %v2069, %v2073
      %s2075 = scalar_lea.vmem %s230, 64
      %2076 = vst [vmem:[%s2075] sm:$0xff] %v2074
      %s2077 = scalar_lea.vmem %s221, 36
      %v2078 = vld [vmem:[%s2077] sm:$0xf]
      %v2079 = vpack.c.bf16 %v2074, %v2074
      %2080 = vmatpush.bf16.msra.mxu0 %v413
      %2081 = vmatpush.bf16.msra.mxu0 %v409
      %2082 = vmatpush.bf16.msra.mxu0 %v405
      %2083 = vmatpush.bf16.msra.mxu0 %v401
      %2084 = vmatpush.bf16.msra.mxu0 %v397
      %2085 = vmatpush.bf16.msra.mxu0 %v393
      %2086 = vmatpush.bf16.msra.mxu0 %v389
      %2087 = vmatpush.bf16.msra.mxu0 %v385
      %2088 = vmatmul.bf16.gmra.mxu0 %v2079
      %v2089 = vpop.f32.mrf.mxu0
      %v2090 = vadd.f32 0.0, %v2089
      %v2091 = vpop.f32.mrf.mxu0
      %2092 = vdwg.mxu0
      %2093 = vmatpush.bf16.msra.mxu0 %v414
      %2094 = vmatpush.bf16.msra.mxu0 %v410
      %2095 = vmatpush.bf16.msra.mxu0 %v406
      %2096 = vmatpush.bf16.msra.mxu0 %v402
      %2097 = vmatpush.bf16.msra.mxu0 %v398
      %2098 = vmatpush.bf16.msra.mxu0 %v394
      %2099 = vmatpush.bf16.msra.mxu0 %v390
      %2100 = vmatpush.bf16.msra.mxu0 %v386
      %2101 = vmatmul.bf16.gmra.mxu0 %v2079
      %v2102 = vpop.f32.mrf.mxu0
      %v2103 = vadd.f32 0.0, %v2102
      %v2104 = vpop.f32.mrf.mxu0
      %2105 = vdwg.mxu0
      %2106 = vmatpush.bf16.msra.mxu0 %v415
      %2107 = vmatpush.bf16.msra.mxu0 %v411
      %2108 = vmatpush.bf16.msra.mxu0 %v407
      %2109 = vmatpush.bf16.msra.mxu0 %v403
      %2110 = vmatpush.bf16.msra.mxu0 %v399
      %2111 = vmatpush.bf16.msra.mxu0 %v395
      %2112 = vmatpush.bf16.msra.mxu0 %v391
      %2113 = vmatpush.bf16.msra.mxu0 %v387
      %2114 = vmatmul.bf16.gmra.mxu0 %v2079
      %v2115 = vpop.f32.mrf.mxu0
      %v2116 = vadd.f32 0.0, %v2115
      %v2117 = vpop.f32.mrf.mxu0
      %2118 = vdwg.mxu0
      %2119 = vmatpush.bf16.msra.mxu0 %v416
      %2120 = vmatpush.bf16.msra.mxu0 %v412
      %2121 = vmatpush.bf16.msra.mxu0 %v408
      %2122 = vmatpush.bf16.msra.mxu0 %v404
      %2123 = vmatpush.bf16.msra.mxu0 %v400
      %2124 = vmatpush.bf16.msra.mxu0 %v396
      %2125 = vmatpush.bf16.msra.mxu0 %v392
      %2126 = vmatpush.bf16.msra.mxu0 %v388
      %2127 = vmatmul.bf16.gmra.mxu0 %v2079
      %v2128 = vpop.f32.mrf.mxu0
      %v2129 = vadd.f32 0.0, %v2128
      %v2130 = vpop.f32.mrf.mxu0
      %2131 = vdwg.mxu0
      %v2133 = vsel %vm521, %v2078, 0
      %2135 = vmatpush.bf16.msra.mxu0 0
      %2136 = vmatpush.bf16.msra.mxu0 0
      %2137 = vmatpush.bf16.msra.mxu0 0
      %2138 = vmatpush.bf16.msra.mxu0 0
      %2139 = vmatpush.bf16.msra.mxu0 0
      %2140 = vmatpush.bf16.msra.mxu0 0
      %2141 = vmatpush.bf16.msra.mxu0 0
      %2142 = vmatpush.bf16.msra.mxu0 %v513
      %2143 = vmatmul.bf16.gmra.mxu0 %v2133
      %v2144 = vpop.f32.mrf.mxu0
      %v2145 = vadd.f32 %v2090, %v2144
      %v2146 = vpop.f32.mrf.mxu0
      %2147 = vdwg.mxu0
      %2148 = vmatpush.bf16.msra.mxu0 0
      %2149 = vmatpush.bf16.msra.mxu0 0
      %2150 = vmatpush.bf16.msra.mxu0 0
      %2151 = vmatpush.bf16.msra.mxu0 0
      %2152 = vmatpush.bf16.msra.mxu0 0
      %2153 = vmatpush.bf16.msra.mxu0 0
      %2154 = vmatpush.bf16.msra.mxu0 0
      %2155 = vmatpush.bf16.msra.mxu0 %v514
      %2156 = vmatmul.bf16.gmra.mxu0 %v2133
      %v2157 = vpop.f32.mrf.mxu0
      %v2158 = vadd.f32 %v2103, %v2157
      %v2159 = vpop.f32.mrf.mxu0
      %2160 = vdwg.mxu0
      %2161 = vmatpush.bf16.msra.mxu0 0
      %2162 = vmatpush.bf16.msra.mxu0 0
      %2163 = vmatpush.bf16.msra.mxu0 0
      %2164 = vmatpush.bf16.msra.mxu0 0
      %2165 = vmatpush.bf16.msra.mxu0 0
      %2166 = vmatpush.bf16.msra.mxu0 0
      %2167 = vmatpush.bf16.msra.mxu0 0
      %2168 = vmatpush.bf16.msra.mxu0 %v515
      %2169 = vmatmul.bf16.gmra.mxu0 %v2133
      %v2170 = vpop.f32.mrf.mxu0
      %v2171 = vadd.f32 %v2116, %v2170
      %v2172 = vpop.f32.mrf.mxu0
      %2173 = vdwg.mxu0
      %2174 = vmatpush.bf16.msra.mxu0 0
      %2175 = vmatpush.bf16.msra.mxu0 0
      %2176 = vmatpush.bf16.msra.mxu0 0
      %2177 = vmatpush.bf16.msra.mxu0 0
      %2178 = vmatpush.bf16.msra.mxu0 0
      %2179 = vmatpush.bf16.msra.mxu0 0
      %2180 = vmatpush.bf16.msra.mxu0 0
      %2181 = vmatpush.bf16.msra.mxu0 %v516
      %2182 = vmatmul.bf16.gmra.mxu0 %v2133
      %v2183 = vpop.f32.mrf.mxu0
      %v2184 = vadd.f32 %v2129, %v2183
      %v2185 = vpop.f32.mrf.mxu0
      %2186 = vdwg.mxu0
      %v2187 = vadd.f32 %v2145, %v277
      %v2188 = vadd.f32 %v2158, %v278
      %v2189 = vadd.f32 %v2171, %v279
      %v2190 = vadd.f32 %v2184, %v280
      %v2191 = vxor.u32 %v2187, 2147483648
      %v2192 = vmul.f32 %v2191, 1.442695
      %v2193 = vpow.pop %v2192
      %v2194 = vadd.f32 %v2193, 1.0
      %v2195 = vrcp.pop %v2194
      %v2196 = vmul.f32 %v2194, %v2195
      %v2197 = vsub.f32 1.0, %v2196
      %v2198 = vmul.f32 %v2195, %v2197
      %v2199 = vadd.f32 %v2195, %v2198
      %vm2200 = vweird.f32 %v2194
      %vm2201 = vweird.f32 %v2195
      %vm2202 = vmor %vm2200, %vm2201
      %v2203 = vsel %vm2202, %v2195, %v2199
      %v2204 = vand.u32 2147483647, %v2194
      %vm2205 = vcmp.eq.f32.partialorder %v2204, 8.507059e+37
      %v2206 = vand.u32 %v2194, 2147483648
      %v2207 = vor.u32 1.1754944e-38, %v2206
      %v2208 = vsel %vm2205, %v2207, %v2203
      %v2209 = vmul.f32 1.0, %v2208
      %v2210 = vxor.u32 %v2188, 2147483648
      %v2211 = vmul.f32 %v2210, 1.442695
      %v2212 = vpow.pop %v2211
      %v2213 = vadd.f32 %v2212, 1.0
      %v2214 = vrcp.pop %v2213
      %v2215 = vmul.f32 %v2213, %v2214
      %v2216 = vsub.f32 1.0, %v2215
      %v2217 = vmul.f32 %v2214, %v2216
      %v2218 = vadd.f32 %v2214, %v2217
      %vm2219 = vweird.f32 %v2213
      %vm2220 = vweird.f32 %v2214
      %vm2221 = vmor %vm2219, %vm2220
      %v2222 = vsel %vm2221, %v2214, %v2218
      %v2223 = vand.u32 2147483647, %v2213
      %vm2224 = vcmp.eq.f32.partialorder %v2223, 8.507059e+37
      %v2225 = vand.u32 %v2213, 2147483648
      %v2226 = vor.u32 1.1754944e-38, %v2225
      %v2227 = vsel %vm2224, %v2226, %v2222
      %v2228 = vmul.f32 1.0, %v2227
      %v2229 = vtanh.pop %v2189
      %v2230 = vxor.u32 %v2190, 2147483648
      %v2231 = vmul.f32 %v2230, 1.442695
      %v2232 = vpow.pop %v2231
      %v2233 = vadd.f32 %v2232, 1.0
      %v2234 = vrcp.pop %v2233
      %v2235 = vmul.f32 %v2233, %v2234
      %v2236 = vsub.f32 1.0, %v2235
      %v2237 = vmul.f32 %v2234, %v2236
      %v2238 = vadd.f32 %v2234, %v2237
      %vm2239 = vweird.f32 %v2233
      %vm2240 = vweird.f32 %v2234
      %vm2241 = vmor %vm2239, %vm2240
      %v2242 = vsel %vm2241, %v2234, %v2238
      %v2243 = vand.u32 2147483647, %v2233
      %vm2244 = vcmp.eq.f32.partialorder %v2243, 8.507059e+37
      %v2245 = vand.u32 %v2233, 2147483648
      %v2246 = vor.u32 1.1754944e-38, %v2245
      %v2247 = vsel %vm2244, %v2246, %v2242
      %v2248 = vmul.f32 1.0, %v2247
      %v2249 = vmul.f32 %v2228, %v2072
      %v2250 = vmul.f32 %v2209, %v2229
      %v2251 = vadd.f32 %v2249, %v2250
      %v2252 = vtanh.pop %v2251
      %v2253 = vmul.f32 %v2248, %v2252
      %s2254 = scalar_lea.vmem %s230, 72
      %2255 = vst [vmem:[%s2254] sm:$0xff] %v2253
      %s2256 = scalar_lea.vmem %s221, 40
      %v2257 = vld [vmem:[%s2256] sm:$0xf]
      %v2258 = vpack.c.bf16 %v2253, %v2253
      %2259 = vmatpush.bf16.msra.mxu0 %v413
      %2260 = vmatpush.bf16.msra.mxu0 %v409
      %2261 = vmatpush.bf16.msra.mxu0 %v405
      %2262 = vmatpush.bf16.msra.mxu0 %v401
      %2263 = vmatpush.bf16.msra.mxu0 %v397
      %2264 = vmatpush.bf16.msra.mxu0 %v393
      %2265 = vmatpush.bf16.msra.mxu0 %v389
      %2266 = vmatpush.bf16.msra.mxu0 %v385
      %2267 = vmatmul.bf16.gmra.mxu0 %v2258
      %v2268 = vpop.f32.mrf.mxu0
      %v2269 = vadd.f32 0.0, %v2268
      %v2270 = vpop.f32.mrf.mxu0
      %2271 = vdwg.mxu0
      %2272 = vmatpush.bf16.msra.mxu0 %v414
      %2273 = vmatpush.bf16.msra.mxu0 %v410
      %2274 = vmatpush.bf16.msra.mxu0 %v406
      %2275 = vmatpush.bf16.msra.mxu0 %v402
      %2276 = vmatpush.bf16.msra.mxu0 %v398
      %2277 = vmatpush.bf16.msra.mxu0 %v394
      %2278 = vmatpush.bf16.msra.mxu0 %v390
      %2279 = vmatpush.bf16.msra.mxu0 %v386
      %2280 = vmatmul.bf16.gmra.mxu0 %v2258
      %v2281 = vpop.f32.mrf.mxu0
      %v2282 = vadd.f32 0.0, %v2281
      %v2283 = vpop.f32.mrf.mxu0
      %2284 = vdwg.mxu0
      %2285 = vmatpush.bf16.msra.mxu0 %v415
      %2286 = vmatpush.bf16.msra.mxu0 %v411
      %2287 = vmatpush.bf16.msra.mxu0 %v407
      %2288 = vmatpush.bf16.msra.mxu0 %v403
      %2289 = vmatpush.bf16.msra.mxu0 %v399
      %2290 = vmatpush.bf16.msra.mxu0 %v395
      %2291 = vmatpush.bf16.msra.mxu0 %v391
      %2292 = vmatpush.bf16.msra.mxu0 %v387
      %2293 = vmatmul.bf16.gmra.mxu0 %v2258
      %v2294 = vpop.f32.mrf.mxu0
      %v2295 = vadd.f32 0.0, %v2294
      %v2296 = vpop.f32.mrf.mxu0
      %2297 = vdwg.mxu0
      %2298 = vmatpush.bf16.msra.mxu0 %v416
      %2299 = vmatpush.bf16.msra.mxu0 %v412
      %2300 = vmatpush.bf16.msra.mxu0 %v408
      %2301 = vmatpush.bf16.msra.mxu0 %v404
      %2302 = vmatpush.bf16.msra.mxu0 %v400
      %2303 = vmatpush.bf16.msra.mxu0 %v396
      %2304 = vmatpush.bf16.msra.mxu0 %v392
      %2305 = vmatpush.bf16.msra.mxu0 %v388
      %2306 = vmatmul.bf16.gmra.mxu0 %v2258
      %v2307 = vpop.f32.mrf.mxu0
      %v2308 = vadd.f32 0.0, %v2307
      %v2309 = vpop.f32.mrf.mxu0
      %2310 = vdwg.mxu0
      %v2312 = vsel %vm521, %v2257, 0
      %2314 = vmatpush.bf16.msra.mxu0 0
      %2315 = vmatpush.bf16.msra.mxu0 0
      %2316 = vmatpush.bf16.msra.mxu0 0
      %2317 = vmatpush.bf16.msra.mxu0 0
      %2318 = vmatpush.bf16.msra.mxu0 0
      %2319 = vmatpush.bf16.msra.mxu0 0
      %2320 = vmatpush.bf16.msra.mxu0 0
      %2321 = vmatpush.bf16.msra.mxu0 %v513
      %2322 = vmatmul.bf16.gmra.mxu0 %v2312
      %v2323 = vpop.f32.mrf.mxu0
      %v2324 = vadd.f32 %v2269, %v2323
      %v2325 = vpop.f32.mrf.mxu0
      %2326 = vdwg.mxu0
      %2327 = vmatpush.bf16.msra.mxu0 0
      %2328 = vmatpush.bf16.msra.mxu0 0
      %2329 = vmatpush.bf16.msra.mxu0 0
      %2330 = vmatpush.bf16.msra.mxu0 0
      %2331 = vmatpush.bf16.msra.mxu0 0
      %2332 = vmatpush.bf16.msra.mxu0 0
      %2333 = vmatpush.bf16.msra.mxu0 0
      %2334 = vmatpush.bf16.msra.mxu0 %v514
      %2335 = vmatmul.bf16.gmra.mxu0 %v2312
      %v2336 = vpop.f32.mrf.mxu0
      %v2337 = vadd.f32 %v2282, %v2336
      %v2338 = vpop.f32.mrf.mxu0
      %2339 = vdwg.mxu0
      %2340 = vmatpush.bf16.msra.mxu0 0
      %2341 = vmatpush.bf16.msra.mxu0 0
      %2342 = vmatpush.bf16.msra.mxu0 0
      %2343 = vmatpush.bf16.msra.mxu0 0
      %2344 = vmatpush.bf16.msra.mxu0 0
      %2345 = vmatpush.bf16.msra.mxu0 0
      %2346 = vmatpush.bf16.msra.mxu0 0
      %2347 = vmatpush.bf16.msra.mxu0 %v515
      %2348 = vmatmul.bf16.gmra.mxu0 %v2312
      %v2349 = vpop.f32.mrf.mxu0
      %v2350 = vadd.f32 %v2295, %v2349
      %v2351 = vpop.f32.mrf.mxu0
      %2352 = vdwg.mxu0
      %2353 = vmatpush.bf16.msra.mxu0 0
      %2354 = vmatpush.bf16.msra.mxu0 0
      %2355 = vmatpush.bf16.msra.mxu0 0
      %2356 = vmatpush.bf16.msra.mxu0 0
      %2357 = vmatpush.bf16.msra.mxu0 0
      %2358 = vmatpush.bf16.msra.mxu0 0
      %2359 = vmatpush.bf16.msra.mxu0 0
      %2360 = vmatpush.bf16.msra.mxu0 %v516
      %2361 = vmatmul.bf16.gmra.mxu0 %v2312
      %v2362 = vpop.f32.mrf.mxu0
      %v2363 = vadd.f32 %v2308, %v2362
      %v2364 = vpop.f32.mrf.mxu0
      %2365 = vdwg.mxu0
      %v2366 = vadd.f32 %v2324, %v277
      %v2367 = vadd.f32 %v2337, %v278
      %v2368 = vadd.f32 %v2350, %v279
      %v2369 = vadd.f32 %v2363, %v280
      %v2370 = vxor.u32 %v2366, 2147483648
      %v2371 = vmul.f32 %v2370, 1.442695
      %v2372 = vpow.pop %v2371
      %v2373 = vadd.f32 %v2372, 1.0
      %v2374 = vrcp.pop %v2373
      %v2375 = vmul.f32 %v2373, %v2374
      %v2376 = vsub.f32 1.0, %v2375
      %v2377 = vmul.f32 %v2374, %v2376
      %v2378 = vadd.f32 %v2374, %v2377
      %vm2379 = vweird.f32 %v2373
      %vm2380 = vweird.f32 %v2374
      %vm2381 = vmor %vm2379, %vm2380
      %v2382 = vsel %vm2381, %v2374, %v2378
      %v2383 = vand.u32 2147483647, %v2373
      %vm2384 = vcmp.eq.f32.partialorder %v2383, 8.507059e+37
      %v2385 = vand.u32 %v2373, 2147483648
      %v2386 = vor.u32 1.1754944e-38, %v2385
      %v2387 = vsel %vm2384, %v2386, %v2382
      %v2388 = vmul.f32 1.0, %v2387
      %v2389 = vxor.u32 %v2367, 2147483648
      %v2390 = vmul.f32 %v2389, 1.442695
      %v2391 = vpow.pop %v2390
      %v2392 = vadd.f32 %v2391, 1.0
      %v2393 = vrcp.pop %v2392
      %v2394 = vmul.f32 %v2392, %v2393
      %v2395 = vsub.f32 1.0, %v2394
      %v2396 = vmul.f32 %v2393, %v2395
      %v2397 = vadd.f32 %v2393, %v2396
      %vm2398 = vweird.f32 %v2392
      %vm2399 = vweird.f32 %v2393
      %vm2400 = vmor %vm2398, %vm2399
      %v2401 = vsel %vm2400, %v2393, %v2397
      %v2402 = vand.u32 2147483647, %v2392
      %vm2403 = vcmp.eq.f32.partialorder %v2402, 8.507059e+37
      %v2404 = vand.u32 %v2392, 2147483648
      %v2405 = vor.u32 1.1754944e-38, %v2404
      %v2406 = vsel %vm2403, %v2405, %v2401
      %v2407 = vmul.f32 1.0, %v2406
      %v2408 = vtanh.pop %v2368
      %v2409 = vxor.u32 %v2369, 2147483648
      %v2410 = vmul.f32 %v2409, 1.442695
      %v2411 = vpow.pop %v2410
      %v2412 = vadd.f32 %v2411, 1.0
      %v2413 = vrcp.pop %v2412
      %v2414 = vmul.f32 %v2412, %v2413
      %v2415 = vsub.f32 1.0, %v2414
      %v2416 = vmul.f32 %v2413, %v2415
      %v2417 = vadd.f32 %v2413, %v2416
      %vm2418 = vweird.f32 %v2412
      %vm2419 = vweird.f32 %v2413
      %vm2420 = vmor %vm2418, %vm2419
      %v2421 = vsel %vm2420, %v2413, %v2417
      %v2422 = vand.u32 2147483647, %v2412
      %vm2423 = vcmp.eq.f32.partialorder %v2422, 8.507059e+37
      %v2424 = vand.u32 %v2412, 2147483648
      %v2425 = vor.u32 1.1754944e-38, %v2424
      %v2426 = vsel %vm2423, %v2425, %v2421
      %v2427 = vmul.f32 1.0, %v2426
      %v2428 = vmul.f32 %v2407, %v2251
      %v2429 = vmul.f32 %v2388, %v2408
      %v2430 = vadd.f32 %v2428, %v2429
      %v2431 = vtanh.pop %v2430
      %v2432 = vmul.f32 %v2427, %v2431
      %s2433 = scalar_lea.vmem %s230, 80
      %2434 = vst [vmem:[%s2433] sm:$0xff] %v2432
      %s2435 = scalar_lea.vmem %s221, 44
      %v2436 = vld [vmem:[%s2435] sm:$0xf]
      %v2437 = vpack.c.bf16 %v2432, %v2432
      %2438 = vmatpush.bf16.msra.mxu0 %v413
      %2439 = vmatpush.bf16.msra.mxu0 %v409
      %2440 = vmatpush.bf16.msra.mxu0 %v405
      %2441 = vmatpush.bf16.msra.mxu0 %v401
      %2442 = vmatpush.bf16.msra.mxu0 %v397
      %2443 = vmatpush.bf16.msra.mxu0 %v393
      %2444 = vmatpush.bf16.msra.mxu0 %v389
      %2445 = vmatpush.bf16.msra.mxu0 %v385
      %2446 = vmatmul.bf16.gmra.mxu0 %v2437
      %v2447 = vpop.f32.mrf.mxu0
      %v2448 = vadd.f32 0.0, %v2447
      %v2449 = vpop.f32.mrf.mxu0
      %2450 = vdwg.mxu0
      %2451 = vmatpush.bf16.msra.mxu0 %v414
      %2452 = vmatpush.bf16.msra.mxu0 %v410
      %2453 = vmatpush.bf16.msra.mxu0 %v406
      %2454 = vmatpush.bf16.msra.mxu0 %v402
      %2455 = vmatpush.bf16.msra.mxu0 %v398
      %2456 = vmatpush.bf16.msra.mxu0 %v394
      %2457 = vmatpush.bf16.msra.mxu0 %v390
      %2458 = vmatpush.bf16.msra.mxu0 %v386
      %2459 = vmatmul.bf16.gmra.mxu0 %v2437
      %v2460 = vpop.f32.mrf.mxu0
      %v2461 = vadd.f32 0.0, %v2460
      %v2462 = vpop.f32.mrf.mxu0
      %2463 = vdwg.mxu0
      %2464 = vmatpush.bf16.msra.mxu0 %v415
      %2465 = vmatpush.bf16.msra.mxu0 %v411
      %2466 = vmatpush.bf16.msra.mxu0 %v407
      %2467 = vmatpush.bf16.msra.mxu0 %v403
      %2468 = vmatpush.bf16.msra.mxu0 %v399
      %2469 = vmatpush.bf16.msra.mxu0 %v395
      %2470 = vmatpush.bf16.msra.mxu0 %v391
      %2471 = vmatpush.bf16.msra.mxu0 %v387
      %2472 = vmatmul.bf16.gmra.mxu0 %v2437
      %v2473 = vpop.f32.mrf.mxu0
      %v2474 = vadd.f32 0.0, %v2473
      %v2475 = vpop.f32.mrf.mxu0
      %2476 = vdwg.mxu0
      %2477 = vmatpush.bf16.msra.mxu0 %v416
      %2478 = vmatpush.bf16.msra.mxu0 %v412
      %2479 = vmatpush.bf16.msra.mxu0 %v408
      %2480 = vmatpush.bf16.msra.mxu0 %v404
      %2481 = vmatpush.bf16.msra.mxu0 %v400
      %2482 = vmatpush.bf16.msra.mxu0 %v396
      %2483 = vmatpush.bf16.msra.mxu0 %v392
      %2484 = vmatpush.bf16.msra.mxu0 %v388
      %2485 = vmatmul.bf16.gmra.mxu0 %v2437
      %v2486 = vpop.f32.mrf.mxu0
      %v2487 = vadd.f32 0.0, %v2486
      %v2488 = vpop.f32.mrf.mxu0
      %2489 = vdwg.mxu0
      %v2491 = vsel %vm521, %v2436, 0
      %2493 = vmatpush.bf16.msra.mxu0 0
      %2494 = vmatpush.bf16.msra.mxu0 0
      %2495 = vmatpush.bf16.msra.mxu0 0
      %2496 = vmatpush.bf16.msra.mxu0 0
      %2497 = vmatpush.bf16.msra.mxu0 0
      %2498 = vmatpush.bf16.msra.mxu0 0
      %2499 = vmatpush.bf16.msra.mxu0 0
      %2500 = vmatpush.bf16.msra.mxu0 %v513
      %2501 = vmatmul.bf16.gmra.mxu0 %v2491
      %v2502 = vpop.f32.mrf.mxu0
      %v2503 = vadd.f32 %v2448, %v2502
      %v2504 = vpop.f32.mrf.mxu0
      %2505 = vdwg.mxu0
      %2506 = vmatpush.bf16.msra.mxu0 0
      %2507 = vmatpush.bf16.msra.mxu0 0
      %2508 = vmatpush.bf16.msra.mxu0 0
      %2509 = vmatpush.bf16.msra.mxu0 0
      %2510 = vmatpush.bf16.msra.mxu0 0
      %2511 = vmatpush.bf16.msra.mxu0 0
      %2512 = vmatpush.bf16.msra.mxu0 0
      %2513 = vmatpush.bf16.msra.mxu0 %v514
      %2514 = vmatmul.bf16.gmra.mxu0 %v2491
      %v2515 = vpop.f32.mrf.mxu0
      %v2516 = vadd.f32 %v2461, %v2515
      %v2517 = vpop.f32.mrf.mxu0
      %2518 = vdwg.mxu0
      %2519 = vmatpush.bf16.msra.mxu0 0
      %2520 = vmatpush.bf16.msra.mxu0 0
      %2521 = vmatpush.bf16.msra.mxu0 0
      %2522 = vmatpush.bf16.msra.mxu0 0
      %2523 = vmatpush.bf16.msra.mxu0 0
      %2524 = vmatpush.bf16.msra.mxu0 0
      %2525 = vmatpush.bf16.msra.mxu0 0
      %2526 = vmatpush.bf16.msra.mxu0 %v515
      %2527 = vmatmul.bf16.gmra.mxu0 %v2491
      %v2528 = vpop.f32.mrf.mxu0
      %v2529 = vadd.f32 %v2474, %v2528
      %v2530 = vpop.f32.mrf.mxu0
      %2531 = vdwg.mxu0
      %2532 = vmatpush.bf16.msra.mxu0 0
      %2533 = vmatpush.bf16.msra.mxu0 0
      %2534 = vmatpush.bf16.msra.mxu0 0
      %2535 = vmatpush.bf16.msra.mxu0 0
      %2536 = vmatpush.bf16.msra.mxu0 0
      %2537 = vmatpush.bf16.msra.mxu0 0
      %2538 = vmatpush.bf16.msra.mxu0 0
      %2539 = vmatpush.bf16.msra.mxu0 %v516
      %2540 = vmatmul.bf16.gmra.mxu0 %v2491
      %v2541 = vpop.f32.mrf.mxu0
      %v2542 = vadd.f32 %v2487, %v2541
      %v2543 = vpop.f32.mrf.mxu0
      %2544 = vdwg.mxu0
      %v2545 = vadd.f32 %v2503, %v277
      %v2546 = vadd.f32 %v2516, %v278
      %v2547 = vadd.f32 %v2529, %v279
      %v2548 = vadd.f32 %v2542, %v280
      %v2549 = vxor.u32 %v2545, 2147483648
      %v2550 = vmul.f32 %v2549, 1.442695
      %v2551 = vpow.pop %v2550
      %v2552 = vadd.f32 %v2551, 1.0
      %v2553 = vrcp.pop %v2552
      %v2554 = vmul.f32 %v2552, %v2553
      %v2555 = vsub.f32 1.0, %v2554
      %v2556 = vmul.f32 %v2553, %v2555
      %v2557 = vadd.f32 %v2553, %v2556
      %vm2558 = vweird.f32 %v2552
      %vm2559 = vweird.f32 %v2553
      %vm2560 = vmor %vm2558, %vm2559
      %v2561 = vsel %vm2560, %v2553, %v2557
      %v2562 = vand.u32 2147483647, %v2552
      %vm2563 = vcmp.eq.f32.partialorder %v2562, 8.507059e+37
      %v2564 = vand.u32 %v2552, 2147483648
      %v2565 = vor.u32 1.1754944e-38, %v2564
      %v2566 = vsel %vm2563, %v2565, %v2561
      %v2567 = vmul.f32 1.0, %v2566
      %v2568 = vxor.u32 %v2546, 2147483648
      %v2569 = vmul.f32 %v2568, 1.442695
      %v2570 = vpow.pop %v2569
      %v2571 = vadd.f32 %v2570, 1.0
      %v2572 = vrcp.pop %v2571
      %v2573 = vmul.f32 %v2571, %v2572
      %v2574 = vsub.f32 1.0, %v2573
      %v2575 = vmul.f32 %v2572, %v2574
      %v2576 = vadd.f32 %v2572, %v2575
      %vm2577 = vweird.f32 %v2571
      %vm2578 = vweird.f32 %v2572
      %vm2579 = vmor %vm2577, %vm2578
      %v2580 = vsel %vm2579, %v2572, %v2576
      %v2581 = vand.u32 2147483647, %v2571
      %vm2582 = vcmp.eq.f32.partialorder %v2581, 8.507059e+37
      %v2583 = vand.u32 %v2571, 2147483648
      %v2584 = vor.u32 1.1754944e-38, %v2583
      %v2585 = vsel %vm2582, %v2584, %v2580
      %v2586 = vmul.f32 1.0, %v2585
      %v2587 = vtanh.pop %v2547
      %v2588 = vxor.u32 %v2548, 2147483648
      %v2589 = vmul.f32 %v2588, 1.442695
      %v2590 = vpow.pop %v2589
      %v2591 = vadd.f32 %v2590, 1.0
      %v2592 = vrcp.pop %v2591
      %v2593 = vmul.f32 %v2591, %v2592
      %v2594 = vsub.f32 1.0, %v2593
      %v2595 = vmul.f32 %v2592, %v2594
      %v2596 = vadd.f32 %v2592, %v2595
      %vm2597 = vweird.f32 %v2591
      %vm2598 = vweird.f32 %v2592
      %vm2599 = vmor %vm2597, %vm2598
      %v2600 = vsel %vm2599, %v2592, %v2596
      %v2601 = vand.u32 2147483647, %v2591
      %vm2602 = vcmp.eq.f32.partialorder %v2601, 8.507059e+37
      %v2603 = vand.u32 %v2591, 2147483648
      %v2604 = vor.u32 1.1754944e-38, %v2603
      %v2605 = vsel %vm2602, %v2604, %v2600
      %v2606 = vmul.f32 1.0, %v2605
      %v2607 = vmul.f32 %v2586, %v2430
      %v2608 = vmul.f32 %v2567, %v2587
      %v2609 = vadd.f32 %v2607, %v2608
      %v2610 = vtanh.pop %v2609
      %v2611 = vmul.f32 %v2606, %v2610
      %s2612 = scalar_lea.vmem %s230, 88
      %2613 = vst [vmem:[%s2612] sm:$0xff] %v2611
      %s2614 = scalar_lea.vmem %s221, 48
      %v2615 = vld [vmem:[%s2614] sm:$0xf]
      %v2616 = vpack.c.bf16 %v2611, %v2611
      %2617 = vmatpush.bf16.msra.mxu0 %v413
      %2618 = vmatpush.bf16.msra.mxu0 %v409
      %2619 = vmatpush.bf16.msra.mxu0 %v405
      %2620 = vmatpush.bf16.msra.mxu0 %v401
      %2621 = vmatpush.bf16.msra.mxu0 %v397
      %2622 = vmatpush.bf16.msra.mxu0 %v393
      %2623 = vmatpush.bf16.msra.mxu0 %v389
      %2624 = vmatpush.bf16.msra.mxu0 %v385
      %2625 = vmatmul.bf16.gmra.mxu0 %v2616
      %v2626 = vpop.f32.mrf.mxu0
      %v2627 = vadd.f32 0.0, %v2626
      %v2628 = vpop.f32.mrf.mxu0
      %2629 = vdwg.mxu0
      %2630 = vmatpush.bf16.msra.mxu0 %v414
      %2631 = vmatpush.bf16.msra.mxu0 %v410
      %2632 = vmatpush.bf16.msra.mxu0 %v406
      %2633 = vmatpush.bf16.msra.mxu0 %v402
      %2634 = vmatpush.bf16.msra.mxu0 %v398
      %2635 = vmatpush.bf16.msra.mxu0 %v394
      %2636 = vmatpush.bf16.msra.mxu0 %v390
      %2637 = vmatpush.bf16.msra.mxu0 %v386
      %2638 = vmatmul.bf16.gmra.mxu0 %v2616
      %v2639 = vpop.f32.mrf.mxu0
      %v2640 = vadd.f32 0.0, %v2639
      %v2641 = vpop.f32.mrf.mxu0
      %2642 = vdwg.mxu0
      %2643 = vmatpush.bf16.msra.mxu0 %v415
      %2644 = vmatpush.bf16.msra.mxu0 %v411
      %2645 = vmatpush.bf16.msra.mxu0 %v407
      %2646 = vmatpush.bf16.msra.mxu0 %v403
      %2647 = vmatpush.bf16.msra.mxu0 %v399
      %2648 = vmatpush.bf16.msra.mxu0 %v395
      %2649 = vmatpush.bf16.msra.mxu0 %v391
      %2650 = vmatpush.bf16.msra.mxu0 %v387
      %2651 = vmatmul.bf16.gmra.mxu0 %v2616
      %v2652 = vpop.f32.mrf.mxu0
      %v2653 = vadd.f32 0.0, %v2652
      %v2654 = vpop.f32.mrf.mxu0
      %2655 = vdwg.mxu0
      %2656 = vmatpush.bf16.msra.mxu0 %v416
      %2657 = vmatpush.bf16.msra.mxu0 %v412
      %2658 = vmatpush.bf16.msra.mxu0 %v408
      %2659 = vmatpush.bf16.msra.mxu0 %v404
      %2660 = vmatpush.bf16.msra.mxu0 %v400
      %2661 = vmatpush.bf16.msra.mxu0 %v396
      %2662 = vmatpush.bf16.msra.mxu0 %v392
      %2663 = vmatpush.bf16.msra.mxu0 %v388
      %2664 = vmatmul.bf16.gmra.mxu0 %v2616
      %v2665 = vpop.f32.mrf.mxu0
      %v2666 = vadd.f32 0.0, %v2665
      %v2667 = vpop.f32.mrf.mxu0
      %2668 = vdwg.mxu0
      %v2670 = vsel %vm521, %v2615, 0
      %2672 = vmatpush.bf16.msra.mxu0 0
      %2673 = vmatpush.bf16.msra.mxu0 0
      %2674 = vmatpush.bf16.msra.mxu0 0
      %2675 = vmatpush.bf16.msra.mxu0 0
      %2676 = vmatpush.bf16.msra.mxu0 0
      %2677 = vmatpush.bf16.msra.mxu0 0
      %2678 = vmatpush.bf16.msra.mxu0 0
      %2679 = vmatpush.bf16.msra.mxu0 %v513
      %2680 = vmatmul.bf16.gmra.mxu0 %v2670
      %v2681 = vpop.f32.mrf.mxu0
      %v2682 = vadd.f32 %v2627, %v2681
      %v2683 = vpop.f32.mrf.mxu0
      %2684 = vdwg.mxu0
      %2685 = vmatpush.bf16.msra.mxu0 0
      %2686 = vmatpush.bf16.msra.mxu0 0
      %2687 = vmatpush.bf16.msra.mxu0 0
      %2688 = vmatpush.bf16.msra.mxu0 0
      %2689 = vmatpush.bf16.msra.mxu0 0
      %2690 = vmatpush.bf16.msra.mxu0 0
      %2691 = vmatpush.bf16.msra.mxu0 0
      %2692 = vmatpush.bf16.msra.mxu0 %v514
      %2693 = vmatmul.bf16.gmra.mxu0 %v2670
      %v2694 = vpop.f32.mrf.mxu0
      %v2695 = vadd.f32 %v2640, %v2694
      %v2696 = vpop.f32.mrf.mxu0
      %2697 = vdwg.mxu0
      %2698 = vmatpush.bf16.msra.mxu0 0
      %2699 = vmatpush.bf16.msra.mxu0 0
      %2700 = vmatpush.bf16.msra.mxu0 0
      %2701 = vmatpush.bf16.msra.mxu0 0
      %2702 = vmatpush.bf16.msra.mxu0 0
      %2703 = vmatpush.bf16.msra.mxu0 0
      %2704 = vmatpush.bf16.msra.mxu0 0
      %2705 = vmatpush.bf16.msra.mxu0 %v515
      %2706 = vmatmul.bf16.gmra.mxu0 %v2670
      %v2707 = vpop.f32.mrf.mxu0
      %v2708 = vadd.f32 %v2653, %v2707
      %v2709 = vpop.f32.mrf.mxu0
      %2710 = vdwg.mxu0
      %2711 = vmatpush.bf16.msra.mxu0 0
      %2712 = vmatpush.bf16.msra.mxu0 0
      %2713 = vmatpush.bf16.msra.mxu0 0
      %2714 = vmatpush.bf16.msra.mxu0 0
      %2715 = vmatpush.bf16.msra.mxu0 0
      %2716 = vmatpush.bf16.msra.mxu0 0
      %2717 = vmatpush.bf16.msra.mxu0 0
      %2718 = vmatpush.bf16.msra.mxu0 %v516
      %2719 = vmatmul.bf16.gmra.mxu0 %v2670
      %v2720 = vpop.f32.mrf.mxu0
      %v2721 = vadd.f32 %v2666, %v2720
      %v2722 = vpop.f32.mrf.mxu0
      %2723 = vdwg.mxu0
      %v2724 = vadd.f32 %v2682, %v277
      %v2725 = vadd.f32 %v2695, %v278
      %v2726 = vadd.f32 %v2708, %v279
      %v2727 = vadd.f32 %v2721, %v280
      %v2728 = vxor.u32 %v2724, 2147483648
      %v2729 = vmul.f32 %v2728, 1.442695
      %v2730 = vpow.pop %v2729
      %v2731 = vadd.f32 %v2730, 1.0
      %v2732 = vrcp.pop %v2731
      %v2733 = vmul.f32 %v2731, %v2732
      %v2734 = vsub.f32 1.0, %v2733
      %v2735 = vmul.f32 %v2732, %v2734
      %v2736 = vadd.f32 %v2732, %v2735
      %vm2737 = vweird.f32 %v2731
      %vm2738 = vweird.f32 %v2732
      %vm2739 = vmor %vm2737, %vm2738
      %v2740 = vsel %vm2739, %v2732, %v2736
      %v2741 = vand.u32 2147483647, %v2731
      %vm2742 = vcmp.eq.f32.partialorder %v2741, 8.507059e+37
      %v2743 = vand.u32 %v2731, 2147483648
      %v2744 = vor.u32 1.1754944e-38, %v2743
      %v2745 = vsel %vm2742, %v2744, %v2740
      %v2746 = vmul.f32 1.0, %v2745
      %v2747 = vxor.u32 %v2725, 2147483648
      %v2748 = vmul.f32 %v2747, 1.442695
      %v2749 = vpow.pop %v2748
      %v2750 = vadd.f32 %v2749, 1.0
      %v2751 = vrcp.pop %v2750
      %v2752 = vmul.f32 %v2750, %v2751
      %v2753 = vsub.f32 1.0, %v2752
      %v2754 = vmul.f32 %v2751, %v2753
      %v2755 = vadd.f32 %v2751, %v2754
      %vm2756 = vweird.f32 %v2750
      %vm2757 = vweird.f32 %v2751
      %vm2758 = vmor %vm2756, %vm2757
      %v2759 = vsel %vm2758, %v2751, %v2755
      %v2760 = vand.u32 2147483647, %v2750
      %vm2761 = vcmp.eq.f32.partialorder %v2760, 8.507059e+37
      %v2762 = vand.u32 %v2750, 2147483648
      %v2763 = vor.u32 1.1754944e-38, %v2762
      %v2764 = vsel %vm2761, %v2763, %v2759
      %v2765 = vmul.f32 1.0, %v2764
      %v2766 = vtanh.pop %v2726
      %v2767 = vxor.u32 %v2727, 2147483648
      %v2768 = vmul.f32 %v2767, 1.442695
      %v2769 = vpow.pop %v2768
      %v2770 = vadd.f32 %v2769, 1.0
      %v2771 = vrcp.pop %v2770
      %v2772 = vmul.f32 %v2770, %v2771
      %v2773 = vsub.f32 1.0, %v2772
      %v2774 = vmul.f32 %v2771, %v2773
      %v2775 = vadd.f32 %v2771, %v2774
      %vm2776 = vweird.f32 %v2770
      %vm2777 = vweird.f32 %v2771
      %vm2778 = vmor %vm2776, %vm2777
      %v2779 = vsel %vm2778, %v2771, %v2775
      %v2780 = vand.u32 2147483647, %v2770
      %vm2781 = vcmp.eq.f32.partialorder %v2780, 8.507059e+37
      %v2782 = vand.u32 %v2770, 2147483648
      %v2783 = vor.u32 1.1754944e-38, %v2782
      %v2784 = vsel %vm2781, %v2783, %v2779
      %v2785 = vmul.f32 1.0, %v2784
      %v2786 = vmul.f32 %v2765, %v2609
      %v2787 = vmul.f32 %v2746, %v2766
      %v2788 = vadd.f32 %v2786, %v2787
      %v2789 = vtanh.pop %v2788
      %v2790 = vmul.f32 %v2785, %v2789
      %s2791 = scalar_lea.vmem %s230, 96
      %2792 = vst [vmem:[%s2791] sm:$0xff] %v2790
      %s2793 = scalar_lea.vmem %s221, 52
      %v2794 = vld [vmem:[%s2793] sm:$0xf]
      %v2795 = vpack.c.bf16 %v2790, %v2790
      %2796 = vmatpush.bf16.msra.mxu0 %v413
      %2797 = vmatpush.bf16.msra.mxu0 %v409
      %2798 = vmatpush.bf16.msra.mxu0 %v405
      %2799 = vmatpush.bf16.msra.mxu0 %v401
      %2800 = vmatpush.bf16.msra.mxu0 %v397
      %2801 = vmatpush.bf16.msra.mxu0 %v393
      %2802 = vmatpush.bf16.msra.mxu0 %v389
      %2803 = vmatpush.bf16.msra.mxu0 %v385
      %2804 = vmatmul.bf16.gmra.mxu0 %v2795
      %v2805 = vpop.f32.mrf.mxu0
      %v2806 = vadd.f32 0.0, %v2805
      %v2807 = vpop.f32.mrf.mxu0
      %2808 = vdwg.mxu0
      %2809 = vmatpush.bf16.msra.mxu0 %v414
      %2810 = vmatpush.bf16.msra.mxu0 %v410
      %2811 = vmatpush.bf16.msra.mxu0 %v406
      %2812 = vmatpush.bf16.msra.mxu0 %v402
      %2813 = vmatpush.bf16.msra.mxu0 %v398
      %2814 = vmatpush.bf16.msra.mxu0 %v394
      %2815 = vmatpush.bf16.msra.mxu0 %v390
      %2816 = vmatpush.bf16.msra.mxu0 %v386
      %2817 = vmatmul.bf16.gmra.mxu0 %v2795
      %v2818 = vpop.f32.mrf.mxu0
      %v2819 = vadd.f32 0.0, %v2818
      %v2820 = vpop.f32.mrf.mxu0
      %2821 = vdwg.mxu0
      %2822 = vmatpush.bf16.msra.mxu0 %v415
      %2823 = vmatpush.bf16.msra.mxu0 %v411
      %2824 = vmatpush.bf16.msra.mxu0 %v407
      %2825 = vmatpush.bf16.msra.mxu0 %v403
      %2826 = vmatpush.bf16.msra.mxu0 %v399
      %2827 = vmatpush.bf16.msra.mxu0 %v395
      %2828 = vmatpush.bf16.msra.mxu0 %v391
      %2829 = vmatpush.bf16.msra.mxu0 %v387
      %2830 = vmatmul.bf16.gmra.mxu0 %v2795
      %v2831 = vpop.f32.mrf.mxu0
      %v2832 = vadd.f32 0.0, %v2831
      %v2833 = vpop.f32.mrf.mxu0
      %2834 = vdwg.mxu0
      %2835 = vmatpush.bf16.msra.mxu0 %v416
      %2836 = vmatpush.bf16.msra.mxu0 %v412
      %2837 = vmatpush.bf16.msra.mxu0 %v408
      %2838 = vmatpush.bf16.msra.mxu0 %v404
      %2839 = vmatpush.bf16.msra.mxu0 %v400
      %2840 = vmatpush.bf16.msra.mxu0 %v396
      %2841 = vmatpush.bf16.msra.mxu0 %v392
      %2842 = vmatpush.bf16.msra.mxu0 %v388
      %2843 = vmatmul.bf16.gmra.mxu0 %v2795
      %v2844 = vpop.f32.mrf.mxu0
      %v2845 = vadd.f32 0.0, %v2844
      %v2846 = vpop.f32.mrf.mxu0
      %2847 = vdwg.mxu0
      %v2849 = vsel %vm521, %v2794, 0
      %2851 = vmatpush.bf16.msra.mxu0 0
      %2852 = vmatpush.bf16.msra.mxu0 0
      %2853 = vmatpush.bf16.msra.mxu0 0
      %2854 = vmatpush.bf16.msra.mxu0 0
      %2855 = vmatpush.bf16.msra.mxu0 0
      %2856 = vmatpush.bf16.msra.mxu0 0
      %2857 = vmatpush.bf16.msra.mxu0 0
      %2858 = vmatpush.bf16.msra.mxu0 %v513
      %2859 = vmatmul.bf16.gmra.mxu0 %v2849
      %v2860 = vpop.f32.mrf.mxu0
      %v2861 = vadd.f32 %v2806, %v2860
      %v2862 = vpop.f32.mrf.mxu0
      %2863 = vdwg.mxu0
      %2864 = vmatpush.bf16.msra.mxu0 0
      %2865 = vmatpush.bf16.msra.mxu0 0
      %2866 = vmatpush.bf16.msra.mxu0 0
      %2867 = vmatpush.bf16.msra.mxu0 0
      %2868 = vmatpush.bf16.msra.mxu0 0
      %2869 = vmatpush.bf16.msra.mxu0 0
      %2870 = vmatpush.bf16.msra.mxu0 0
      %2871 = vmatpush.bf16.msra.mxu0 %v514
      %2872 = vmatmul.bf16.gmra.mxu0 %v2849
      %v2873 = vpop.f32.mrf.mxu0
      %v2874 = vadd.f32 %v2819, %v2873
      %v2875 = vpop.f32.mrf.mxu0
      %2876 = vdwg.mxu0
      %2877 = vmatpush.bf16.msra.mxu0 0
      %2878 = vmatpush.bf16.msra.mxu0 0
      %2879 = vmatpush.bf16.msra.mxu0 0
      %2880 = vmatpush.bf16.msra.mxu0 0
      %2881 = vmatpush.bf16.msra.mxu0 0
      %2882 = vmatpush.bf16.msra.mxu0 0
      %2883 = vmatpush.bf16.msra.mxu0 0
      %2884 = vmatpush.bf16.msra.mxu0 %v515
      %2885 = vmatmul.bf16.gmra.mxu0 %v2849
      %v2886 = vpop.f32.mrf.mxu0
      %v2887 = vadd.f32 %v2832, %v2886
      %v2888 = vpop.f32.mrf.mxu0
      %2889 = vdwg.mxu0
      %2890 = vmatpush.bf16.msra.mxu0 0
      %2891 = vmatpush.bf16.msra.mxu0 0
      %2892 = vmatpush.bf16.msra.mxu0 0
      %2893 = vmatpush.bf16.msra.mxu0 0
      %2894 = vmatpush.bf16.msra.mxu0 0
      %2895 = vmatpush.bf16.msra.mxu0 0
      %2896 = vmatpush.bf16.msra.mxu0 0
      %2897 = vmatpush.bf16.msra.mxu0 %v516
      %2898 = vmatmul.bf16.gmra.mxu0 %v2849
      %v2899 = vpop.f32.mrf.mxu0
      %v2900 = vadd.f32 %v2845, %v2899
      %v2901 = vpop.f32.mrf.mxu0
      %2902 = vdwg.mxu0
      %v2903 = vadd.f32 %v2861, %v277
      %v2904 = vadd.f32 %v2874, %v278
      %v2905 = vadd.f32 %v2887, %v279
      %v2906 = vadd.f32 %v2900, %v280
      %v2907 = vxor.u32 %v2903, 2147483648
      %v2908 = vmul.f32 %v2907, 1.442695
      %v2909 = vpow.pop %v2908
      %v2910 = vadd.f32 %v2909, 1.0
      %v2911 = vrcp.pop %v2910
      %v2912 = vmul.f32 %v2910, %v2911
      %v2913 = vsub.f32 1.0, %v2912
      %v2914 = vmul.f32 %v2911, %v2913
      %v2915 = vadd.f32 %v2911, %v2914
      %vm2916 = vweird.f32 %v2910
      %vm2917 = vweird.f32 %v2911
      %vm2918 = vmor %vm2916, %vm2917
      %v2919 = vsel %vm2918, %v2911, %v2915
      %v2920 = vand.u32 2147483647, %v2910
      %vm2921 = vcmp.eq.f32.partialorder %v2920, 8.507059e+37
      %v2922 = vand.u32 %v2910, 2147483648
      %v2923 = vor.u32 1.1754944e-38, %v2922
      %v2924 = vsel %vm2921, %v2923, %v2919
      %v2925 = vmul.f32 1.0, %v2924
      %v2926 = vxor.u32 %v2904, 2147483648
      %v2927 = vmul.f32 %v2926, 1.442695
      %v2928 = vpow.pop %v2927
      %v2929 = vadd.f32 %v2928, 1.0
      %v2930 = vrcp.pop %v2929
      %v2931 = vmul.f32 %v2929, %v2930
      %v2932 = vsub.f32 1.0, %v2931
      %v2933 = vmul.f32 %v2930, %v2932
      %v2934 = vadd.f32 %v2930, %v2933
      %vm2935 = vweird.f32 %v2929
      %vm2936 = vweird.f32 %v2930
      %vm2937 = vmor %vm2935, %vm2936
      %v2938 = vsel %vm2937, %v2930, %v2934
      %v2939 = vand.u32 2147483647, %v2929
      %vm2940 = vcmp.eq.f32.partialorder %v2939, 8.507059e+37
      %v2941 = vand.u32 %v2929, 2147483648
      %v2942 = vor.u32 1.1754944e-38, %v2941
      %v2943 = vsel %vm2940, %v2942, %v2938
      %v2944 = vmul.f32 1.0, %v2943
      %v2945 = vtanh.pop %v2905
      %v2946 = vxor.u32 %v2906, 2147483648
      %v2947 = vmul.f32 %v2946, 1.442695
      %v2948 = vpow.pop %v2947
      %v2949 = vadd.f32 %v2948, 1.0
      %v2950 = vrcp.pop %v2949
      %v2951 = vmul.f32 %v2949, %v2950
      %v2952 = vsub.f32 1.0, %v2951
      %v2953 = vmul.f32 %v2950, %v2952
      %v2954 = vadd.f32 %v2950, %v2953
      %vm2955 = vweird.f32 %v2949
      %vm2956 = vweird.f32 %v2950
      %vm2957 = vmor %vm2955, %vm2956
      %v2958 = vsel %vm2957, %v2950, %v2954
      %v2959 = vand.u32 2147483647, %v2949
      %vm2960 = vcmp.eq.f32.partialorder %v2959, 8.507059e+37
      %v2961 = vand.u32 %v2949, 2147483648
      %v2962 = vor.u32 1.1754944e-38, %v2961
      %v2963 = vsel %vm2960, %v2962, %v2958
      %v2964 = vmul.f32 1.0, %v2963
      %v2965 = vmul.f32 %v2944, %v2788
      %v2966 = vmul.f32 %v2925, %v2945
      %v2967 = vadd.f32 %v2965, %v2966
      %v2968 = vtanh.pop %v2967
      %v2969 = vmul.f32 %v2964, %v2968
      %s2970 = scalar_lea.vmem %s230, 104
      %2971 = vst [vmem:[%s2970] sm:$0xff] %v2969
      %s2972 = scalar_lea.vmem %s221, 56
      %v2973 = vld [vmem:[%s2972] sm:$0xf]
      %v2974 = vpack.c.bf16 %v2969, %v2969
      %2975 = vmatpush.bf16.msra.mxu0 %v413
      %2976 = vmatpush.bf16.msra.mxu0 %v409
      %2977 = vmatpush.bf16.msra.mxu0 %v405
      %2978 = vmatpush.bf16.msra.mxu0 %v401
      %2979 = vmatpush.bf16.msra.mxu0 %v397
      %2980 = vmatpush.bf16.msra.mxu0 %v393
      %2981 = vmatpush.bf16.msra.mxu0 %v389
      %2982 = vmatpush.bf16.msra.mxu0 %v385
      %2983 = vmatmul.bf16.gmra.mxu0 %v2974
      %v2984 = vpop.f32.mrf.mxu0
      %v2985 = vadd.f32 0.0, %v2984
      %v2986 = vpop.f32.mrf.mxu0
      %2987 = vdwg.mxu0
      %2988 = vmatpush.bf16.msra.mxu0 %v414
      %2989 = vmatpush.bf16.msra.mxu0 %v410
      %2990 = vmatpush.bf16.msra.mxu0 %v406
      %2991 = vmatpush.bf16.msra.mxu0 %v402
      %2992 = vmatpush.bf16.msra.mxu0 %v398
      %2993 = vmatpush.bf16.msra.mxu0 %v394
      %2994 = vmatpush.bf16.msra.mxu0 %v390
      %2995 = vmatpush.bf16.msra.mxu0 %v386
      %2996 = vmatmul.bf16.gmra.mxu0 %v2974
      %v2997 = vpop.f32.mrf.mxu0
      %v2998 = vadd.f32 0.0, %v2997
      %v2999 = vpop.f32.mrf.mxu0
      %3000 = vdwg.mxu0
      %3001 = vmatpush.bf16.msra.mxu0 %v415
      %3002 = vmatpush.bf16.msra.mxu0 %v411
      %3003 = vmatpush.bf16.msra.mxu0 %v407
      %3004 = vmatpush.bf16.msra.mxu0 %v403
      %3005 = vmatpush.bf16.msra.mxu0 %v399
      %3006 = vmatpush.bf16.msra.mxu0 %v395
      %3007 = vmatpush.bf16.msra.mxu0 %v391
      %3008 = vmatpush.bf16.msra.mxu0 %v387
      %3009 = vmatmul.bf16.gmra.mxu0 %v2974
      %v3010 = vpop.f32.mrf.mxu0
      %v3011 = vadd.f32 0.0, %v3010
      %v3012 = vpop.f32.mrf.mxu0
      %3013 = vdwg.mxu0
      %3014 = vmatpush.bf16.msra.mxu0 %v416
      %3015 = vmatpush.bf16.msra.mxu0 %v412
      %3016 = vmatpush.bf16.msra.mxu0 %v408
      %3017 = vmatpush.bf16.msra.mxu0 %v404
      %3018 = vmatpush.bf16.msra.mxu0 %v400
      %3019 = vmatpush.bf16.msra.mxu0 %v396
      %3020 = vmatpush.bf16.msra.mxu0 %v392
      %3021 = vmatpush.bf16.msra.mxu0 %v388
      %3022 = vmatmul.bf16.gmra.mxu0 %v2974
      %v3023 = vpop.f32.mrf.mxu0
      %v3024 = vadd.f32 0.0, %v3023
      %v3025 = vpop.f32.mrf.mxu0
      %3026 = vdwg.mxu0
      %v3028 = vsel %vm521, %v2973, 0
      %3030 = vmatpush.bf16.msra.mxu0 0
      %3031 = vmatpush.bf16.msra.mxu0 0
      %3032 = vmatpush.bf16.msra.mxu0 0
      %3033 = vmatpush.bf16.msra.mxu0 0
      %3034 = vmatpush.bf16.msra.mxu0 0
      %3035 = vmatpush.bf16.msra.mxu0 0
      %3036 = vmatpush.bf16.msra.mxu0 0
      %3037 = vmatpush.bf16.msra.mxu0 %v513
      %3038 = vmatmul.bf16.gmra.mxu0 %v3028
      %v3039 = vpop.f32.mrf.mxu0
      %v3040 = vadd.f32 %v2985, %v3039
      %v3041 = vpop.f32.mrf.mxu0
      %3042 = vdwg.mxu0
      %3043 = vmatpush.bf16.msra.mxu0 0
      %3044 = vmatpush.bf16.msra.mxu0 0
      %3045 = vmatpush.bf16.msra.mxu0 0
      %3046 = vmatpush.bf16.msra.mxu0 0
      %3047 = vmatpush.bf16.msra.mxu0 0
      %3048 = vmatpush.bf16.msra.mxu0 0
      %3049 = vmatpush.bf16.msra.mxu0 0
      %3050 = vmatpush.bf16.msra.mxu0 %v514
      %3051 = vmatmul.bf16.gmra.mxu0 %v3028
      %v3052 = vpop.f32.mrf.mxu0
      %v3053 = vadd.f32 %v2998, %v3052
      %v3054 = vpop.f32.mrf.mxu0
      %3055 = vdwg.mxu0
      %3056 = vmatpush.bf16.msra.mxu0 0
      %3057 = vmatpush.bf16.msra.mxu0 0
      %3058 = vmatpush.bf16.msra.mxu0 0
      %3059 = vmatpush.bf16.msra.mxu0 0
      %3060 = vmatpush.bf16.msra.mxu0 0
      %3061 = vmatpush.bf16.msra.mxu0 0
      %3062 = vmatpush.bf16.msra.mxu0 0
      %3063 = vmatpush.bf16.msra.mxu0 %v515
      %3064 = vmatmul.bf16.gmra.mxu0 %v3028
      %v3065 = vpop.f32.mrf.mxu0
      %v3066 = vadd.f32 %v3011, %v3065
      %v3067 = vpop.f32.mrf.mxu0
      %3068 = vdwg.mxu0
      %3069 = vmatpush.bf16.msra.mxu0 0
      %3070 = vmatpush.bf16.msra.mxu0 0
      %3071 = vmatpush.bf16.msra.mxu0 0
      %3072 = vmatpush.bf16.msra.mxu0 0
      %3073 = vmatpush.bf16.msra.mxu0 0
      %3074 = vmatpush.bf16.msra.mxu0 0
      %3075 = vmatpush.bf16.msra.mxu0 0
      %3076 = vmatpush.bf16.msra.mxu0 %v516
      %3077 = vmatmul.bf16.gmra.mxu0 %v3028
      %v3078 = vpop.f32.mrf.mxu0
      %v3079 = vadd.f32 %v3024, %v3078
      %v3080 = vpop.f32.mrf.mxu0
      %3081 = vdwg.mxu0
      %v3082 = vadd.f32 %v3040, %v277
      %v3083 = vadd.f32 %v3053, %v278
      %v3084 = vadd.f32 %v3066, %v279
      %v3085 = vadd.f32 %v3079, %v280
      %v3086 = vxor.u32 %v3082, 2147483648
      %v3087 = vmul.f32 %v3086, 1.442695
      %v3088 = vpow.pop %v3087
      %v3089 = vadd.f32 %v3088, 1.0
      %v3090 = vrcp.pop %v3089
      %v3091 = vmul.f32 %v3089, %v3090
      %v3092 = vsub.f32 1.0, %v3091
      %v3093 = vmul.f32 %v3090, %v3092
      %v3094 = vadd.f32 %v3090, %v3093
      %vm3095 = vweird.f32 %v3089
      %vm3096 = vweird.f32 %v3090
      %vm3097 = vmor %vm3095, %vm3096
      %v3098 = vsel %vm3097, %v3090, %v3094
      %v3099 = vand.u32 2147483647, %v3089
      %vm3100 = vcmp.eq.f32.partialorder %v3099, 8.507059e+37
      %v3101 = vand.u32 %v3089, 2147483648
      %v3102 = vor.u32 1.1754944e-38, %v3101
      %v3103 = vsel %vm3100, %v3102, %v3098
      %v3104 = vmul.f32 1.0, %v3103
      %v3105 = vxor.u32 %v3083, 2147483648
      %v3106 = vmul.f32 %v3105, 1.442695
      %v3107 = vpow.pop %v3106
      %v3108 = vadd.f32 %v3107, 1.0
      %v3109 = vrcp.pop %v3108
      %v3110 = vmul.f32 %v3108, %v3109
      %v3111 = vsub.f32 1.0, %v3110
      %v3112 = vmul.f32 %v3109, %v3111
      %v3113 = vadd.f32 %v3109, %v3112
      %vm3114 = vweird.f32 %v3108
      %vm3115 = vweird.f32 %v3109
      %vm3116 = vmor %vm3114, %vm3115
      %v3117 = vsel %vm3116, %v3109, %v3113
      %v3118 = vand.u32 2147483647, %v3108
      %vm3119 = vcmp.eq.f32.partialorder %v3118, 8.507059e+37
      %v3120 = vand.u32 %v3108, 2147483648
      %v3121 = vor.u32 1.1754944e-38, %v3120
      %v3122 = vsel %vm3119, %v3121, %v3117
      %v3123 = vmul.f32 1.0, %v3122
      %v3124 = vtanh.pop %v3084
      %v3125 = vxor.u32 %v3085, 2147483648
      %v3126 = vmul.f32 %v3125, 1.442695
      %v3127 = vpow.pop %v3126
      %v3128 = vadd.f32 %v3127, 1.0
      %v3129 = vrcp.pop %v3128
      %v3130 = vmul.f32 %v3128, %v3129
      %v3131 = vsub.f32 1.0, %v3130
      %v3132 = vmul.f32 %v3129, %v3131
      %v3133 = vadd.f32 %v3129, %v3132
      %vm3134 = vweird.f32 %v3128
      %vm3135 = vweird.f32 %v3129
      %vm3136 = vmor %vm3134, %vm3135
      %v3137 = vsel %vm3136, %v3129, %v3133
      %v3138 = vand.u32 2147483647, %v3128
      %vm3139 = vcmp.eq.f32.partialorder %v3138, 8.507059e+37
      %v3140 = vand.u32 %v3128, 2147483648
      %v3141 = vor.u32 1.1754944e-38, %v3140
      %v3142 = vsel %vm3139, %v3141, %v3137
      %v3143 = vmul.f32 1.0, %v3142
      %v3144 = vmul.f32 %v3123, %v2967
      %v3145 = vmul.f32 %v3104, %v3124
      %v3146 = vadd.f32 %v3144, %v3145
      %v3147 = vtanh.pop %v3146
      %v3148 = vmul.f32 %v3143, %v3147
      %s3149 = scalar_lea.vmem %s230, 112
      %3150 = vst [vmem:[%s3149] sm:$0xff] %v3148
      %s3151 = scalar_lea.vmem %s221, 60
      %v3152 = vld [vmem:[%s3151] sm:$0xf]
      %v3153 = vpack.c.bf16 %v3148, %v3148
      %3154 = vmatpush.bf16.msra.mxu0 %v413
      %3155 = vmatpush.bf16.msra.mxu0 %v409
      %3156 = vmatpush.bf16.msra.mxu0 %v405
      %3157 = vmatpush.bf16.msra.mxu0 %v401
      %3158 = vmatpush.bf16.msra.mxu0 %v397
      %3159 = vmatpush.bf16.msra.mxu0 %v393
      %3160 = vmatpush.bf16.msra.mxu0 %v389
      %3161 = vmatpush.bf16.msra.mxu0 %v385
      %3162 = vmatmul.bf16.gmra.mxu0 %v3153
      %v3163 = vpop.f32.mrf.mxu0
      %v3164 = vadd.f32 0.0, %v3163
      %v3165 = vpop.f32.mrf.mxu0
      %3166 = vdwg.mxu0
      %3167 = vmatpush.bf16.msra.mxu0 %v414
      %3168 = vmatpush.bf16.msra.mxu0 %v410
      %3169 = vmatpush.bf16.msra.mxu0 %v406
      %3170 = vmatpush.bf16.msra.mxu0 %v402
      %3171 = vmatpush.bf16.msra.mxu0 %v398
      %3172 = vmatpush.bf16.msra.mxu0 %v394
      %3173 = vmatpush.bf16.msra.mxu0 %v390
      %3174 = vmatpush.bf16.msra.mxu0 %v386
      %3175 = vmatmul.bf16.gmra.mxu0 %v3153
      %v3176 = vpop.f32.mrf.mxu0
      %v3177 = vadd.f32 0.0, %v3176
      %v3178 = vpop.f32.mrf.mxu0
      %3179 = vdwg.mxu0
      %3180 = vmatpush.bf16.msra.mxu0 %v415
      %3181 = vmatpush.bf16.msra.mxu0 %v411
      %3182 = vmatpush.bf16.msra.mxu0 %v407
      %3183 = vmatpush.bf16.msra.mxu0 %v403
      %3184 = vmatpush.bf16.msra.mxu0 %v399
      %3185 = vmatpush.bf16.msra.mxu0 %v395
      %3186 = vmatpush.bf16.msra.mxu0 %v391
      %3187 = vmatpush.bf16.msra.mxu0 %v387
      %3188 = vmatmul.bf16.gmra.mxu0 %v3153
      %v3189 = vpop.f32.mrf.mxu0
      %v3190 = vadd.f32 0.0, %v3189
      %v3191 = vpop.f32.mrf.mxu0
      %3192 = vdwg.mxu0
      %3193 = vmatpush.bf16.msra.mxu0 %v416
      %3194 = vmatpush.bf16.msra.mxu0 %v412
      %3195 = vmatpush.bf16.msra.mxu0 %v408
      %3196 = vmatpush.bf16.msra.mxu0 %v404
      %3197 = vmatpush.bf16.msra.mxu0 %v400
      %3198 = vmatpush.bf16.msra.mxu0 %v396
      %3199 = vmatpush.bf16.msra.mxu0 %v392
      %3200 = vmatpush.bf16.msra.mxu0 %v388
      %3201 = vmatmul.bf16.gmra.mxu0 %v3153
      %v3202 = vpop.f32.mrf.mxu0
      %v3203 = vadd.f32 0.0, %v3202
      %v3204 = vpop.f32.mrf.mxu0
      %3205 = vdwg.mxu0
      %v3207 = vsel %vm521, %v3152, 0
      %3209 = vmatpush.bf16.msra.mxu0 0
      %3210 = vmatpush.bf16.msra.mxu0 0
      %3211 = vmatpush.bf16.msra.mxu0 0
      %3212 = vmatpush.bf16.msra.mxu0 0
      %3213 = vmatpush.bf16.msra.mxu0 0
      %3214 = vmatpush.bf16.msra.mxu0 0
      %3215 = vmatpush.bf16.msra.mxu0 0
      %3216 = vmatpush.bf16.msra.mxu0 %v513
      %3217 = vmatmul.bf16.gmra.mxu0 %v3207
      %v3218 = vpop.f32.mrf.mxu0
      %v3219 = vadd.f32 %v3164, %v3218
      %v3220 = vpop.f32.mrf.mxu0
      %3221 = vdwg.mxu0
      %3222 = vmatpush.bf16.msra.mxu0 0
      %3223 = vmatpush.bf16.msra.mxu0 0
      %3224 = vmatpush.bf16.msra.mxu0 0
      %3225 = vmatpush.bf16.msra.mxu0 0
      %3226 = vmatpush.bf16.msra.mxu0 0
      %3227 = vmatpush.bf16.msra.mxu0 0
      %3228 = vmatpush.bf16.msra.mxu0 0
      %3229 = vmatpush.bf16.msra.mxu0 %v514
      %3230 = vmatmul.bf16.gmra.mxu0 %v3207
      %v3231 = vpop.f32.mrf.mxu0
      %v3232 = vadd.f32 %v3177, %v3231
      %v3233 = vpop.f32.mrf.mxu0
      %3234 = vdwg.mxu0
      %3235 = vmatpush.bf16.msra.mxu0 0
      %3236 = vmatpush.bf16.msra.mxu0 0
      %3237 = vmatpush.bf16.msra.mxu0 0
      %3238 = vmatpush.bf16.msra.mxu0 0
      %3239 = vmatpush.bf16.msra.mxu0 0
      %3240 = vmatpush.bf16.msra.mxu0 0
      %3241 = vmatpush.bf16.msra.mxu0 0
      %3242 = vmatpush.bf16.msra.mxu0 %v515
      %3243 = vmatmul.bf16.gmra.mxu0 %v3207
      %v3244 = vpop.f32.mrf.mxu0
      %v3245 = vadd.f32 %v3190, %v3244
      %v3246 = vpop.f32.mrf.mxu0
      %3247 = vdwg.mxu0
      %3248 = vmatpush.bf16.msra.mxu0 0
      %3249 = vmatpush.bf16.msra.mxu0 0
      %3250 = vmatpush.bf16.msra.mxu0 0
      %3251 = vmatpush.bf16.msra.mxu0 0
      %3252 = vmatpush.bf16.msra.mxu0 0
      %3253 = vmatpush.bf16.msra.mxu0 0
      %3254 = vmatpush.bf16.msra.mxu0 0
      %3255 = vmatpush.bf16.msra.mxu0 %v516
      %3256 = vmatmul.bf16.gmra.mxu0 %v3207
      %v3257 = vpop.f32.mrf.mxu0
      %v3258 = vadd.f32 %v3203, %v3257
      %v3259 = vpop.f32.mrf.mxu0
      %3260 = vdwg.mxu0
      %v3261 = vadd.f32 %v3219, %v277
      %v3262 = vadd.f32 %v3232, %v278
      %v3263 = vadd.f32 %v3245, %v279
      %v3264 = vadd.f32 %v3258, %v280
      %v3265 = vxor.u32 %v3261, 2147483648
      %v3266 = vmul.f32 %v3265, 1.442695
      %v3267 = vpow.pop %v3266
      %v3268 = vadd.f32 %v3267, 1.0
      %v3269 = vrcp.pop %v3268
      %v3270 = vmul.f32 %v3268, %v3269
      %v3271 = vsub.f32 1.0, %v3270
      %v3272 = vmul.f32 %v3269, %v3271
      %v3273 = vadd.f32 %v3269, %v3272
      %vm3274 = vweird.f32 %v3268
      %vm3275 = vweird.f32 %v3269
      %vm3276 = vmor %vm3274, %vm3275
      %v3277 = vsel %vm3276, %v3269, %v3273
      %v3278 = vand.u32 2147483647, %v3268
      %vm3279 = vcmp.eq.f32.partialorder %v3278, 8.507059e+37
      %v3280 = vand.u32 %v3268, 2147483648
      %v3281 = vor.u32 1.1754944e-38, %v3280
      %v3282 = vsel %vm3279, %v3281, %v3277
      %v3283 = vmul.f32 1.0, %v3282
      %v3284 = vxor.u32 %v3262, 2147483648
      %v3285 = vmul.f32 %v3284, 1.442695
      %v3286 = vpow.pop %v3285
      %v3287 = vadd.f32 %v3286, 1.0
      %v3288 = vrcp.pop %v3287
      %v3289 = vmul.f32 %v3287, %v3288
      %v3290 = vsub.f32 1.0, %v3289
      %v3291 = vmul.f32 %v3288, %v3290
      %v3292 = vadd.f32 %v3288, %v3291
      %vm3293 = vweird.f32 %v3287
      %vm3294 = vweird.f32 %v3288
      %vm3295 = vmor %vm3293, %vm3294
      %v3296 = vsel %vm3295, %v3288, %v3292
      %v3297 = vand.u32 2147483647, %v3287
      %vm3298 = vcmp.eq.f32.partialorder %v3297, 8.507059e+37
      %v3299 = vand.u32 %v3287, 2147483648
      %v3300 = vor.u32 1.1754944e-38, %v3299
      %v3301 = vsel %vm3298, %v3300, %v3296
      %v3302 = vmul.f32 1.0, %v3301
      %v3303 = vtanh.pop %v3263
      %v3304 = vxor.u32 %v3264, 2147483648
      %v3305 = vmul.f32 %v3304, 1.442695
      %v3306 = vpow.pop %v3305
      %v3307 = vadd.f32 %v3306, 1.0
      %v3308 = vrcp.pop %v3307
      %v3309 = vmul.f32 %v3307, %v3308
      %v3310 = vsub.f32 1.0, %v3309
      %v3311 = vmul.f32 %v3308, %v3310
      %v3312 = vadd.f32 %v3308, %v3311
      %vm3313 = vweird.f32 %v3307
      %vm3314 = vweird.f32 %v3308
      %vm3315 = vmor %vm3313, %vm3314
      %v3316 = vsel %vm3315, %v3308, %v3312
      %v3317 = vand.u32 2147483647, %v3307
      %vm3318 = vcmp.eq.f32.partialorder %v3317, 8.507059e+37
      %v3319 = vand.u32 %v3307, 2147483648
      %v3320 = vor.u32 1.1754944e-38, %v3319
      %v3321 = vsel %vm3318, %v3320, %v3316
      %v3322 = vmul.f32 1.0, %v3321
      %v3323 = vmul.f32 %v3302, %v3146
      %v3324 = vmul.f32 %v3283, %v3303
      %v3325 = vadd.f32 %v3323, %v3324
      %v3326 = vtanh.pop %v3325
      %v3327 = vmul.f32 %v3322, %v3326
      %s3328 = scalar_lea.vmem %s230, 120
      %3329 = vst [vmem:[%s3328] sm:$0xff] %v3327
      %3330 = vst [vmem:[#allocation2] sm:$0xff] %v3327
      %3331 = vst [vmem:[#allocation3] sm:$0xff] %v3325
      %s3332 = smul.u32 16, %s20
      %p3333 = scmp.lt.s32.totalorder %s3332, 31
      %s3334 = scalar_select %p3333, %s3332, 31
      %p3335 = scmp.lt.s32.totalorder %s19, 0
      %s3336 = scalar_select %p3335, %s19, 0
      %s3337 = sadd.s32 %s3336, %s3334
      %s3338 = smul.addr %s3337, 8
      %s3339 = scalar_lea.vmem %s4, %s3338
      // Predicated region
      $region41: #{lstm_encoder_forward.1} parent=35 // pred_check
        %p3340 = pneg %p138
      $region42: #{lstm_encoder_forward.1} parent=35 // pred_check_branch
        %3342 = sbr.rel (%p3340) target = $region44
      $region43: #{lstm_encoder_forward.1} parent=35 // pred_region
        %s3343 = smul.u32 16, %s20
      $region44: #{lstm_encoder_forward.1} parent=35 // pred_fallthru
        _
    $region36: #{lstm_encoder_forward.1} parent=5 // pred_fallthru
      _
    %p3344 = scmp.le.s32.totalorder 2, %s10
    // Predicated region
    $region45: #{lstm_encoder_forward.1} parent=5 // pred_check
      %p3345 = pneg %p3344
    $region46: #{lstm_encoder_forward.1} parent=5 // pred_check_branch
      %3347 = sbr.rel (%p3345) target = $region48
    $region47: #{lstm_encoder_forward.1} parent=5 // pred_region
      %s3348 = ssub.s32 %s10, 2
      // Predicated region
      $region49: #{lstm_encoder_forward.1} parent=47 // pred_check
        %p3349 = pneg %p144
      $region50: #{lstm_encoder_forward.1} parent=47 // pred_check_branch
        %3351 = sbr.rel (%p3349) target = $region52
      $region51: #{lstm_encoder_forward.1} parent=47 // pred_region
        %s3352 = smul.u32 16, %s22
        %p3353 = scmp.lt.s32.totalorder %s3352, 31
        %s3354 = scalar_select %p3353, %s3352, 31
        %p3355 = scmp.lt.s32.totalorder %s21, 0
        %s3356 = scalar_select %p3355, %s21, 0
        %s3357 = sadd.s32 %s3356, %s3354
        %s3358 = smul.addr %s3357, 8
        %s3359 = scalar_lea.vmem %s4, %s3358
      $region52: #{lstm_encoder_forward.1} parent=47 // pred_fallthru
        _
    $region48: #{lstm_encoder_forward.1} parent=5 // pred_fallthru
      _
  $region6: #{lstm_encoder_forward.1} parent=0 // loop_footer
    %s14 = sadd.s32 1, %s10
  $region7: #{lstm_encoder_forward.1} parent=0 // loop_footer_branch
    %9 = sbr.rel target = $region3
  $region8: #{lstm_encoder_forward.1} parent=0 // loop_exit
    _

// kernel: lstm_encoder_forward.1
$region0: #{lstm_encoder_forward.1}
  #allocation0 [shape = 'u32[]', space=smem, size = 0x4, offset = 0x4, fixed_abs, tag = 'smem constant byte address 0x4 - core index']
  #allocation1 [shape = 'u32[72,128]{1,0:T(1,128)}', space=vmem, size = 0x9000, scoped, tag = 'internal scratch']
  #allocation2 [shape = 'f32[8,128]{1,0:T(8,128)}', space=vmem, size = 0x1000, scoped, tag = 'scratch operand']
  #allocation3 [shape = 'f32[8,128]{1,0:T(8,128)}', space=vmem, size = 0x1000, scoped, tag = 'scratch operand']
  %s0 = inlined_call_operand.vmem [shape: bf16[32,8,16], index: 0, kind: input, shape index: {}]
  %s1 = inlined_call_operand.vmem [shape: bf16[16,512], index: 1, kind: input, shape index: {}]
  %s2 = inlined_call_operand.vmem [shape: bf16[128,512], index: 2, kind: input, shape index: {}]
  %s3 = inlined_call_operand.vmem [shape: f32[1,512], index: 3, kind: input, shape index: {}]
  %s4 = inlined_call_operand.vmem [shape: f32[32,8,128], index: 4, kind: output, shape index: {}]
  %s5 = sld [smem:[#allocation0]]
  $region53: #{lstm_encoder_forward.1} parent=0
    _
  %s7 = ssub.s32 1, %s5
  %s8 = scalar_select 0, %s7, %s5
  loop: start=0, step=1, limit=4
  $region2: #{lstm_encoder_forward.1} parent=0 // loop_pre_header
    _
  $region3: #{lstm_encoder_forward.1} parent=0 // loop_header
    %s10 = sphi 0, %s14
    %p11 = scmp.ge.s32.totalorder %s10, 4
    %s17 = sphi 0, %s29
    %s18 = sphi 0, %s25
    %s19 = sphi 0, %s17
    %s20 = sphi 0, %s18
    %s21 = sphi 0, %s19
    %s22 = sphi 0, %s20
    %s34 = sphi 0, %s36
    %s37 = sphi 0, %s34
    %s38 = sphi 0, %s37
    %s54 = sphi 0, %s38
    %s58 = sphi 0, %s58
    %s60 = sphi 0, %s58
    %s61 = sphi 0, %s60
    %s75 = sphi 0, %s61
    %s79 = sphi 0, %s79
    %s81 = sphi 0, %s79
    %s82 = sphi 0, %s81
    %s96 = sphi 0, %s82
    %s100 = sphi 0, %s100
    %s102 = sphi 0, %s100
    %s103 = sphi 0, %s102
    %s117 = sphi 0, %s103
    %s125 = sphi 0, %s127
    %s128 = sphi 0, %s125
    %s129 = sphi 0, %s128
    %s145 = sphi 0, %s129
  $region4: #{lstm_encoder_forward.1} parent=0 // loop_header_branch
    %13 = sbr.rel (%p11) target = $region8
  $region5: #{lstm_encoder_forward.1} parent=0 // loop_body
    %s15 = ssub.s32 %s10, 1
    %s16 = ssub.s32 %s10, 2
    %s23 = sadd.s32 1, %s18
    %p24 = scmp.ge.s32.totalorder %s23, 2
    %s25 = scalar_select %p24, 0, %s23
    %s26 = sadd.s32 1, %s17
    %s27 = scalar_select %p24, %s26, %s17
    %p28 = scmp.ge.s32.totalorder %s27, 1
    %s29 = scalar_select %p28, 0, %s27
    %s30 = ssub.s32 %s18, %s25
    %s31 = ssub.s32 %s17, %s29
    %s32 = sor.u32 %s30, %s31
    %p33 = scmp.eq.s32.totalorder %s32, 0
    %s35 = sadd.s32 %s34, 1
    %s36 = scalar_select %p33, %s34, %s35
    %p39 = pneg %p33
    %p40 = scmp.eq.s32.totalorder %s10, 1
    %p41 = por %p39, %p40
    %p42 = scmp.ne.s32.totalorder %s34, %s37
    %p43 = scmp.eq.s32.totalorder %s10, 0
    %p44 = por %p42, %p43
    %p45 = scmp.ne.s32.totalorder %s34, %s37
    %p46 = scmp.eq.s32.totalorder %s15, 1
    %p47 = por %p45, %p46
    %p48 = scmp.ne.s32.totalorder %s37, %s38
    %p49 = scmp.eq.s32.totalorder %s15, 0
    %p50 = por %p48, %p49
    %p51 = scmp.ne.s32.totalorder %s37, %s38
    %p52 = scmp.eq.s32.totalorder %s16, 1
    %p53 = por %p51, %p52
    %p55 = scmp.ne.s32.totalorder %s38, %s54
    %p56 = scmp.eq.s32.totalorder %s16, 0
    %p57 = por %p55, %p56
    %s59 = sadd.s32 %s58, 1
    %p62 = scmp.eq.s32.totalorder %s10, 1
    %p63 = scmp.ne.s32.totalorder %s58, %s60
    %p64 = scmp.eq.s32.totalorder %s10, 0
    %p65 = por %p63, %p64
    %p66 = scmp.ne.s32.totalorder %s58, %s60
    %p67 = scmp.eq.s32.totalorder %s15, 1
    %p68 = por %p66, %p67
    %p69 = scmp.ne.s32.totalorder %s60, %s61
    %p70 = scmp.eq.s32.totalorder %s15, 0
    %p71 = por %p69, %p70
    %p72 = scmp.ne.s32.totalorder %s60, %s61
    %p73 = scmp.eq.s32.totalorder %s16, 1
    %p74 = por %p72, %p73
    %p76 = scmp.ne.s32.totalorder %s61, %s75
    %p77 = scmp.eq.s32.totalorder %s16, 0
    %p78 = por %p76, %p77
    %s80 = sadd.s32 %s79, 1
    %p83 = scmp.eq.s32.totalorder %s10, 1
    %p84 = scmp.ne.s32.totalorder %s79, %s81
    %p85 = scmp.eq.s32.totalorder %s10, 0
    %p86 = por %p84, %p85
    %p87 = scmp.ne.s32.totalorder %s79, %s81
    %p88 = scmp.eq.s32.totalorder %s15, 1
    %p89 = por %p87, %p88
    %p90 = scmp.ne.s32.totalorder %s81, %s82
    %p91 = scmp.eq.s32.totalorder %s15, 0
    %p92 = por %p90, %p91
    %p93 = scmp.ne.s32.totalorder %s81, %s82
    %p94 = scmp.eq.s32.totalorder %s16, 1
    %p95 = por %p93, %p94
    %p97 = scmp.ne.s32.totalorder %s82, %s96
    %p98 = scmp.eq.s32.totalorder %s16, 0
    %p99 = por %p97, %p98
    %s101 = sadd.s32 %s100, 1
    %p104 = scmp.eq.s32.totalorder %s10, 1
    %p105 = scmp.ne.s32.totalorder %s100, %s102
    %p106 = scmp.eq.s32.totalorder %s10, 0
    %p107 = por %p105, %p106
    %p108 = scmp.ne.s32.totalorder %s100, %s102
    %p109 = scmp.eq.s32.totalorder %s15, 1
    %p110 = por %p108, %p109
    %p111 = scmp.ne.s32.totalorder %s102, %s103
    %p112 = scmp.eq.s32.totalorder %s15, 0
    %p113 = por %p111, %p112
    %p114 = scmp.ne.s32.totalorder %s102, %s103
    %p115 = scmp.eq.s32.totalorder %s16, 1
    %p116 = por %p114, %p115
    %p118 = scmp.ne.s32.totalorder %s103, %s117
    %p119 = scmp.eq.s32.totalorder %s16, 0
    %p120 = por %p118, %p119
    %s121 = ssub.s32 %s18, %s25
    %s122 = ssub.s32 %s17, %s29
    %s123 = sor.u32 %s121, %s122
    %p124 = scmp.eq.s32.totalorder %s123, 0
    %s126 = sadd.s32 %s125, 1
    %s127 = scalar_select %p124, %s125, %s126
    %p130 = pneg %p124
    %p131 = scmp.eq.s32.totalorder %s10, 1
    %p132 = por %p130, %p131
    %p133 = scmp.ne.s32.totalorder %s125, %s128
    %p134 = scmp.eq.s32.totalorder %s10, 0
    %p135 = por %p133, %p134
    %p136 = scmp.ne.s32.totalorder %s125, %s128
    %p137 = scmp.eq.s32.totalorder %s15, 1
    %p138 = por %p136, %p137
    %p139 = scmp.ne.s32.totalorder %s128, %s129
    %p140 = scmp.eq.s32.totalorder %s15, 0
    %p141 = por %p139, %p140
    %p142 = scmp.ne.s32.totalorder %s128, %s129
    %p143 = scmp.eq.s32.totalorder %s16, 1
    %p144 = por %p142, %p143
    %p146 = scmp.ne.s32.totalorder %s129, %s145
    %p147 = scmp.eq.s32.totalorder %s16, 0
    %p148 = por %p146, %p147
    %p149 = scmp.le.s32.totalorder 1, %s10
    %p150 = scmp.lt.s32.totalorder %s10, 3
    %p151 = pnand %p149, %p150
    %p152 = pneg %p151
    // Predicated region
    $region9: #{lstm_encoder_forward.1} parent=5 // pred_check
      _
    $region10: #{lstm_encoder_forward.1} parent=5 // pred_check_branch
      %154 = sbr.rel (%p151) target = $region12
    $region11: #{lstm_encoder_forward.1} parent=5 // pred_region
      %s155 = ssub.s32 %s10, 1
      // Predicated region
      $region13: #{lstm_encoder_forward.1} parent=11 // pred_check
        %p156 = pneg %p71
      $region14: #{lstm_encoder_forward.1} parent=11 // pred_check_branch
        %158 = sbr.rel (%p156) target = $region16
      $region15: #{lstm_encoder_forward.1} parent=11 // pred_region
        _
      $region16: #{lstm_encoder_forward.1} parent=11 // pred_fallthru
        _
      // Predicated region
      $region17: #{lstm_encoder_forward.1} parent=11 // pred_check
        %p159 = pneg %p92
      $region18: #{lstm_encoder_forward.1} parent=11 // pred_check_branch
        %161 = sbr.rel (%p159) target = $region20
      $region19: #{lstm_encoder_forward.1} parent=11 // pred_region
        _
      $region20: #{lstm_encoder_forward.1} parent=11 // pred_fallthru
        _
      // Predicated region
      $region21: #{lstm_encoder_forward.1} parent=11 // pred_check
        %p162 = pneg %p113
      $region22: #{lstm_encoder_forward.1} parent=11 // pred_check_branch
        %164 = sbr.rel (%p162) target = $region24
      $region23: #{lstm_encoder_forward.1} parent=11 // pred_region
        _
      $region24: #{lstm_encoder_forward.1} parent=11 // pred_fallthru
        _
    $region12: #{lstm_encoder_forward.1} parent=5 // pred_fallthru
      _
    %p165 = scmp.lt.s32.totalorder %s10, 2
    // Predicated region
    $region25: #{lstm_encoder_forward.1} parent=5 // pred_check
      %p166 = pneg %p165
    $region26: #{lstm_encoder_forward.1} parent=5 // pred_check_branch
      %168 = sbr.rel (%p166) target = $region28
    $region27: #{lstm_encoder_forward.1} parent=5 // pred_region
      // Predicated region
      $region29: #{lstm_encoder_forward.1} parent=27 // pred_check
        %p169 = pneg %p44
      $region30: #{lstm_encoder_forward.1} parent=27 // pred_check_branch
        %171 = sbr.rel (%p169) target = $region32
      $region31: #{lstm_encoder_forward.1} parent=27 // pred_region
        %s172 = smul.u32 16, %s18
        %p173 = scmp.lt.s32.totalorder %s172, 31
        %s174 = scalar_select %p173, %s172, 31
        %p175 = scmp.lt.s32.totalorder %s17, 0
        %s176 = scalar_select %p175, %s17, 0
        %s177 = sadd.s32 %s176, %s174
        %s178 = smul.addr %s177, 4
        %s179 = scalar_lea.vmem %s0, %s178
        %s180 = smul.u32 16, %s18
      $region32: #{lstm_encoder_forward.1} parent=27 // pred_fallthru
        _
    $region28: #{lstm_encoder_forward.1} parent=5 // pred_fallthru
      _
    %p181 = scmp.le.s32.totalorder 1, %s10
    %p182 = scmp.lt.s32.totalorder %s10, 3
    %p183 = pnand %p181, %p182
    %p184 = pneg %p183
    // Predicated region
    $region33: #{lstm_encoder_forward.1} parent=5 // pred_check
      _
    $region34: #{lstm_encoder_forward.1} parent=5 // pred_check_branch
      %186 = sbr.rel (%p183) target = $region36
    $region35: #{lstm_encoder_forward.1} parent=5 // pred_region
      %s187 = ssub.s32 %s10, 1
      %s188 = smul.u32 16, %s20
      %p189 = scmp.lt.s32.totalorder %s188, 31
      %s190 = scalar_select %p189, %s188, 31
      %p191 = scmp.lt.s32.totalorder %s19, 0
      %s192 = scalar_select %p191, %s19, 0
      %s193 = sadd.s32 %s192, %s190
      %s194 = smul.addr %s193, 4
      %s195 = scalar_lea.vmem %s0, %s194
      %p196 = pneg %p50
      %p197 = pneg %p47
      %p198 = pneg %p71
      %p199 = pneg %p68
      %p200 = pneg %p92
      %p201 = pneg %p89
      %p202 = pneg %p113
      %p203 = pneg %p110
      %p204 = pneg %p141
      %p205 = pneg %p138
      %s206 = smul.u32 16, %s20
      %p207 = scmp.lt.s32.totalorder %s206, 31
      %s208 = scalar_select %p207, %s206, 31
      %p209 = scmp.lt.s32.totalorder %s19, 0
      %s210 = scalar_select %p209, %s19, 0
      %s211 = sadd.s32 %s210, %s208
      %s212 = smul.addr %s211, 8
      %s213 = scalar_lea.vmem %s4, %s212
      %s214 = smul.u32 16, %s20
      %p215 = scmp.lt.s32.totalorder %s214, 31
      %s216 = scalar_select %p215, %s214, 31
      %p217 = scmp.lt.s32.totalorder %s19, 0
      %s218 = scalar_select %p217, %s19, 0
      %s219 = sadd.s32 %s218, %s216
      %s220 = smul.addr %s219, 4
      %s221 = scalar_lea.vmem %s0, %s220
      %s222 = smul.u32 16, %s20
      %s223 = smul.u32 16, %s20
      %p224 = scmp.lt.s32.totalorder %s223, 31
      %s225 = scalar_select %p224, %s223, 31
      %p226 = scmp.lt.s32.totalorder %s19, 0
      %s227 = scalar_select %p226, %s19, 0
      %s228 = sadd.s32 %s227, %s225
      %s229 = smul.addr %s228, 8
      %s230 = scalar_lea.vmem %s4, %s229
      %s231 = smul.u32 16, %s20
      %p233 = scmp.eq.s32.totalorder %s20, 0
      // Predicated region
      $region37: #{lstm_encoder_forward.1} parent=35 // pred_check
        %p234 = pneg %p233
      $region38: #{lstm_encoder_forward.1} parent=35 // pred_check_branch
        %236 = sbr.rel (%p234) target = $region40
      $region39: #{lstm_encoder_forward.1} parent=35 // pred_region
        %237 = vst [vmem:[#allocation2] sm:$0xff] 0.0
        %238 = vst [vmem:[#allocation3] sm:$0xff] 0.0
      $region40: #{lstm_encoder_forward.1} parent=35 // pred_fallthru
        _
      %v239 = vld [vmem:[%s1] sm:$0xff]
      %v240 = vld [vmem:[%s1 + $0x8] sm:$0xff]
      %v241 = vld [vmem:[%s1 + $0x10] sm:$0xff]
      %v242 = vld [vmem:[%s1 + $0x18] sm:$0xff]
      %v243 = vld [vmem:[%s2] sm:$0xff]
      %v244 = vld [vmem:[%s2 + $0x8] sm:$0xff]
      %v245 = vld [vmem:[%s2 + $0x10] sm:$0xff]
      %v246 = vld [vmem:[%s2 + $0x18] sm:$0xff]
      %v247 = vld [vmem:[%s2 + $0x20] sm:$0xff]
      %v248 = vld [vmem:[%s2 + $0x28] sm:$0xff]
      %v249 = vld [vmem:[%s2 + $0x30] sm:$0xff]
      %v250 = vld [vmem:[%s2 + $0x38] sm:$0xff]
      %v251 = vld [vmem:[%s2 + $0x40] sm:$0xff]
      %v252 = vld [vmem:[%s2 + $0x48] sm:$0xff]
      %v253 = vld [vmem:[%s2 + $0x50] sm:$0xff]
      %v254 = vld [vmem:[%s2 + $0x58] sm:$0xff]
      %v255 = vld [vmem:[%s2 + $0x60] sm:$0xff]
      %v256 = vld [vmem:[%s2 + $0x68] sm:$0xff]
      %v257 = vld [vmem:[%s2 + $0x70] sm:$0xff]
      %v258 = vld [vmem:[%s2 + $0x78] sm:$0xff]
      %v259 = vld [vmem:[%s2 + $0x80] sm:$0xff]
      %v260 = vld [vmem:[%s2 + $0x88] sm:$0xff]
      %v261 = vld [vmem:[%s2 + $0x90] sm:$0xff]
      %v262 = vld [vmem:[%s2 + $0x98] sm:$0xff]
      %v263 = vld [vmem:[%s2 + $0xa0] sm:$0xff]
      %v264 = vld [vmem:[%s2 + $0xa8] sm:$0xff]
      %v265 = vld [vmem:[%s2 + $0xb0] sm:$0xff]
      %v266 = vld [vmem:[%s2 + $0xb8] sm:$0xff]
      %v267 = vld [vmem:[%s2 + $0xc0] sm:$0xff]
      %v268 = vld [vmem:[%s2 + $0xc8] sm:$0xff]
      %v269 = vld [vmem:[%s2 + $0xd0] sm:$0xff]
      %v270 = vld [vmem:[%s2 + $0xd8] sm:$0xff]
      %v271 = vld [vmem:[%s2 + $0xe0] sm:$0xff]
      %v272 = vld [vmem:[%s2 + $0xe8] sm:$0xff]
      %v273 = vld [vmem:[%s2 + $0xf0] sm:$0xff]
      %v274 = vld [vmem:[%s2 + $0xf8] sm:$0xff]
      %v275 = vld [vmem:[%s3] sm:$0xf]
      %v277 = vperm.slane %v275, 0
      %v278 = vperm.slane %v275, 1
      %v279 = vperm.slane %v275, 2
      %v280 = vperm.slane %v275, 3
      %v285 = vld [vmem:[#allocation2] sm:$0xff]
      %v286 = vld [vmem:[#allocation3] sm:$0xff]
      %v287 = vld [vmem:[%s221] sm:$0xf]
      %v288 = vpack.c.bf16 %v285, %v285
      %v321 = vunpack.c.l.b16 %v243
      %v322 = vunpack.c.h.b16 %v243
      %v323 = vunpack.c.l.b16 %v244
      %v324 = vunpack.c.h.b16 %v244
      %v325 = vunpack.c.l.b16 %v245
      %v326 = vunpack.c.h.b16 %v245
      %v327 = vunpack.c.l.b16 %v246
      %v328 = vunpack.c.h.b16 %v246
      %v329 = vunpack.c.l.b16 %v247
      %v330 = vunpack.c.h.b16 %v247
      %v331 = vunpack.c.l.b16 %v248
      %v332 = vunpack.c.h.b16 %v248
      %v333 = vunpack.c.l.b16 %v249
      %v334 = vunpack.c.h.b16 %v249
      %v335 = vunpack.c.l.b16 %v250
      %v336 = vunpack.c.h.b16 %v250
      %v337 = vunpack.c.l.b16 %v251
      %v338 = vunpack.c.h.b16 %v251
      %v339 = vunpack.c.l.b16 %v252
      %v340 = vunpack.c.h.b16 %v252
      %v341 = vunpack.c.l.b16 %v253
      %v342 = vunpack.c.h.b16 %v253
      %v343 = vunpack.c.l.b16 %v254
      %v344 = vunpack.c.h.b16 %v254
      %v345 = vunpack.c.l.b16 %v255
      %v346 = vunpack.c.h.b16 %v255
      %v347 = vunpack.c.l.b16 %v256
      %v348 = vunpack.c.h.b16 %v256
      %v349 = vunpack.c.l.b16 %v257
      %v350 = vunpack.c.h.b16 %v257
      %v351 = vunpack.c.l.b16 %v258
      %v352 = vunpack.c.h.b16 %v258
      %v353 = vunpack.c.l.b16 %v259
      %v354 = vunpack.c.h.b16 %v259
      %v355 = vunpack.c.l.b16 %v260
      %v356 = vunpack.c.h.b16 %v260
      %v357 = vunpack.c.l.b16 %v261
      %v358 = vunpack.c.h.b16 %v261
      %v359 = vunpack.c.l.b16 %v262
      %v360 = vunpack.c.h.b16 %v262
      %v361 = vunpack.c.l.b16 %v263
      %v362 = vunpack.c.h.b16 %v263
      %v363 = vunpack.c.l.b16 %v264
      %v364 = vunpack.c.h.b16 %v264
      %v365 = vunpack.c.l.b16 %v265
      %v366 = vunpack.c.h.b16 %v265
      %v367 = vunpack.c.l.b16 %v266
      %v368 = vunpack.c.h.b16 %v266
      %v369 = vunpack.c.l.b16 %v267
      %v370 = vunpack.c.h.b16 %v267
      %v371 = vunpack.c.l.b16 %v268
      %v372 = vunpack.c.h.b16 %v268
      %v373 = vunpack.c.l.b16 %v269
      %v374 = vunpack.c.h.b16 %v269
      %v375 = vunpack.c.l.b16 %v270
      %v376 = vunpack.c.h.b16 %v270
      %v377 = vunpack.c.l.b16 %v271
      %v378 = vunpack.c.h.b16 %v271
      %v379 = vunpack.c.l.b16 %v272
      %v380 = vunpack.c.h.b16 %v272
      %v381 = vunpack.c.l.b16 %v273
      %v382 = vunpack.c.h.b16 %v273
      %v383 = vunpack.c.l.b16 %v274
      %v384 = vunpack.c.h.b16 %v274
      %v385 = vpack.c.b16 %v325, %v321
      %v386 = vpack.c.b16 %v326, %v322
      %v387 = vpack.c.b16 %v327, %v323
      %v388 = vpack.c.b16 %v328, %v324
      %v389 = vpack.c.b16 %v333, %v329
      %v390 = vpack.c.b16 %v334, %v330
      %v391 = vpack.c.b16 %v335, %v331
      %v392 = vpack.c.b16 %v336, %v332
      %v393 = vpack.c.b16 %v341, %v337
      %v394 = vpack.c.b16 %v342, %v338
      %v395 = vpack.c.b16 %v343, %v339
      %v396 = vpack.c.b16 %v344, %v340
      %v397 = vpack.c.b16 %v349, %v345
      %v398 = vpack.c.b16 %v350, %v346
      %v399 = vpack.c.b16 %v351, %v347
      %v400 = vpack.c.b16 %v352, %v348
      %v401 = vpack.c.b16 %v357, %v353
      %v402 = vpack.c.b16 %v358, %v354
      %v403 = vpack.c.b16 %v359, %v355
      %v404 = vpack.c.b16 %v360, %v356
      %v405 = vpack.c.b16 %v365, %v361
      %v406 = vpack.c.b16 %v366, %v362
      %v407 = vpack.c.b16 %v367, %v363
      %v408 = vpack.c.b16 %v368, %v364
      %v409 = vpack.c.b16 %v373, %v369
      %v410 = vpack.c.b16 %v374, %v370
      %v411 = vpack.c.b16 %v375, %v371
      %v412 = vpack.c.b16 %v376, %v372
      %v413 = vpack.c.b16 %v381, %v377
      %v414 = vpack.c.b16 %v382, %v378
      %v415 = vpack.c.b16 %v383, %v379
      %v416 = vpack.c.b16 %v384, %v380
      %449 = vmatpush.bf16.msra.mxu0 %v413
      %450 = vmatpush.bf16.msra.mxu0 %v409
      %451 = vmatpush.bf16.msra.mxu0 %v405
      %452 = vmatpush.bf16.msra.mxu0 %v401
      %453 = vmatpush.bf16.msra.mxu0 %v397
      %454 = vmatpush.bf16.msra.mxu0 %v393
      %455 = vmatpush.bf16.msra.mxu0 %v389
      %456 = vmatpush.bf16.msra.mxu0 %v385
      %457 = vmatmul.bf16.gmra.mxu0 %v288
      %v458 = vpop.f32.mrf.mxu0
      %v459 = vadd.f32 0.0, %v458
      %v460 = vpop.f32.mrf.mxu0
      %461 = vdwg.mxu0
      %462 = vmatpush.bf16.msra.mxu0 %v414
      %463 = vmatpush.bf16.msra.mxu0 %v410
      %464 = vmatpush.bf16.msra.mxu0 %v406
      %465 = vmatpush.bf16.msra.mxu0 %v402
      %466 = vmatpush.bf16.msra.mxu0 %v398
      %467 = vmatpush.bf16.msra.mxu0 %v394
      %468 = vmatpush.bf16.msra.mxu0 %v390
      %469 = vmatpush.bf16.msra.mxu0 %v386
      %470 = vmatmul.bf16.gmra.mxu0 %v288
      %v471 = vpop.f32.mrf.mxu0
      %v472 = vadd.f32 0.0, %v471
      %v473 = vpop.f32.mrf.mxu0
      %474 = vdwg.mxu0
      %475 = vmatpush.bf16.msra.mxu0 %v415
      %476 = vmatpush.bf16.msra.mxu0 %v411
      %477 = vmatpush.bf16.msra.mxu0 %v407
      %478 = vmatpush.bf16.msra.mxu0 %v403
      %479 = vmatpush.bf16.msra.mxu0 %v399
      %480 = vmatpush.bf16.msra.mxu0 %v395
      %481 = vmatpush.bf16.msra.mxu0 %v391
      %482 = vmatpush.bf16.msra.mxu0 %v387
      %483 = vmatmul.bf16.gmra.mxu0 %v288
      %v484 = vpop.f32.mrf.mxu0
      %v485 = vadd.f32 0.0, %v484
      %v486 = vpop.f32.mrf.mxu0
      %487 = vdwg.mxu0
      %488 = vmatpush.bf16.msra.mxu0 %v416
      %489 = vmatpush.bf16.msra.mxu0 %v412
      %490 = vmatpush.bf16.msra.mxu0 %v408
      %491 = vmatpush.bf16.msra.mxu0 %v404
      %492 = vmatpush.bf16.msra.mxu0 %v400
      %493 = vmatpush.bf16.msra.mxu0 %v396
      %494 = vmatpush.bf16.msra.mxu0 %v392
      %495 = vmatpush.bf16.msra.mxu0 %v388
      %496 = vmatmul.bf16.gmra.mxu0 %v288
      %v497 = vpop.f32.mrf.mxu0
      %v498 = vadd.f32 0.0, %v497
      %v499 = vpop.f32.mrf.mxu0
      %500 = vdwg.mxu0
      %v505 = vunpack.c.l.b16 %v239
      %v506 = vunpack.c.h.b16 %v239
      %v507 = vunpack.c.l.b16 %v240
      %v508 = vunpack.c.h.b16 %v240
      %v509 = vunpack.c.l.b16 %v241
      %v510 = vunpack.c.h.b16 %v241
      %v511 = vunpack.c.l.b16 %v242
      %v512 = vunpack.c.h.b16 %v242
      %v513 = vpack.c.b16 %v509, %v505
      %v514 = vpack.c.b16 %v510, %v506
      %v515 = vpack.c.b16 %v511, %v507
      %v516 = vpack.c.b16 %v512, %v508
      %vm521 = vcmask 130048
      %v523 = vsel %vm521, %v287, 0
      %525 = vmatpush.bf16.msra.mxu0 0
      %526 = vmatpush.bf16.msra.mxu0 0
      %527 = vmatpush.bf16.msra.mxu0 0
      %528 = vmatpush.bf16.msra.mxu0 0
      %529 = vmatpush.bf16.msra.mxu0 0
      %530 = vmatpush.bf16.msra.mxu0 0
      %531 = vmatpush.bf16.msra.mxu0 0
      %532 = vmatpush.bf16.msra.mxu0 %v513
      %533 = vmatmul.bf16.gmra.mxu0 %v523
      %v534 = vpop.f32.mrf.mxu0
      %v535 = vadd.f32 %v459, %v534
      %v536 = vpop.f32.mrf.mxu0
      %537 = vdwg.mxu0
      %538 = vmatpush.bf16.msra.mxu0 0
      %539 = vmatpush.bf16.msra.mxu0 0
      %540 = vmatpush.bf16.msra.mxu0 0
      %541 = vmatpush.bf16.msra.mxu0 0
      %542 = vmatpush.bf16.msra.mxu0 0
      %543 = vmatpush.bf16.msra.mxu0 0
      %544 = vmatpush.bf16.msra.mxu0 0
      %545 = vmatpush.bf16.msra.mxu0 %v514
      %546 = vmatmul.bf16.gmra.mxu0 %v523
      %v547 = vpop.f32.mrf.mxu0
      %v548 = vadd.f32 %v472, %v547
      %v549 = vpop.f32.mrf.mxu0
      %550 = vdwg.mxu0
      %551 = vmatpush.bf16.msra.mxu0 0
      %552 = vmatpush.bf16.msra.mxu0 0
      %553 = vmatpush.bf16.msra.mxu0 0
      %554 = vmatpush.bf16.msra.mxu0 0
      %555 = vmatpush.bf16.msra.mxu0 0
      %556 = vmatpush.bf16.msra.mxu0 0
      %557 = vmatpush.bf16.msra.mxu0 0
      %558 = vmatpush.bf16.msra.mxu0 %v515
      %559 = vmatmul.bf16.gmra.mxu0 %v523
      %v560 = vpop.f32.mrf.mxu0
      %v561 = vadd.f32 %v485, %v560
      %v562 = vpop.f32.mrf.mxu0
      %563 = vdwg.mxu0
      %564 = vmatpush.bf16.msra.mxu0 0
      %565 = vmatpush.bf16.msra.mxu0 0
      %566 = vmatpush.bf16.msra.mxu0 0
      %567 = vmatpush.bf16.msra.mxu0 0
      %568 = vmatpush.bf16.msra.mxu0 0
      %569 = vmatpush.bf16.msra.mxu0 0
      %570 = vmatpush.bf16.msra.mxu0 0
      %571 = vmatpush.bf16.msra.mxu0 %v516
      %572 = vmatmul.bf16.gmra.mxu0 %v523
      %v573 = vpop.f32.mrf.mxu0
      %v574 = vadd.f32 %v498, %v573
      %v575 = vpop.f32.mrf.mxu0
      %576 = vdwg.mxu0
      %v577 = vadd.f32 %v535, %v277
      %v578 = vadd.f32 %v548, %v278
      %v579 = vadd.f32 %v561, %v279
      %v580 = vadd.f32 %v574, %v280
      %v581 = vxor.u32 %v577, 2147483648
      %v582 = vmul.f32 %v581, 1.442695
      %v583 = vpow.pop %v582
      %v584 = vadd.f32 %v583, 1.0
      %v585 = vrcp.pop %v584
      %v586 = vmul.f32 %v584, %v585
      %v587 = vsub.f32 1.0, %v586
      %v588 = vmul.f32 %v585, %v587
      %v589 = vadd.f32 %v585, %v588
      %vm590 = vweird.f32 %v584
      %vm591 = vweird.f32 %v585
      %vm592 = vmor %vm590, %vm591
      %v593 = vsel %vm592, %v585, %v589
      %v594 = vand.u32 2147483647, %v584
      %vm595 = vcmp.eq.f32.partialorder %v594, 8.507059e+37
      %v596 = vand.u32 %v584, 2147483648
      %v597 = vor.u32 1.1754944e-38, %v596
      %v598 = vsel %vm595, %v597, %v593
      %v599 = vmul.f32 1.0, %v598
      %v600 = vxor.u32 %v578, 2147483648
      %v601 = vmul.f32 %v600, 1.442695
      %v602 = vpow.pop %v601
      %v603 = vadd.f32 %v602, 1.0
      %v604 = vrcp.pop %v603
      %v605 = vmul.f32 %v603, %v604
      %v606 = vsub.f32 1.0, %v605
      %v607 = vmul.f32 %v604, %v606
      %v608 = vadd.f32 %v604, %v607
      %vm609 = vweird.f32 %v603
      %vm610 = vweird.f32 %v604
      %vm611 = vmor %vm609, %vm610
      %v612 = vsel %vm611, %v604, %v608
      %v613 = vand.u32 2147483647, %v603
      %vm614 = vcmp.eq.f32.partialorder %v613, 8.507059e+37
      %v615 = vand.u32 %v603, 2147483648
      %v616 = vor.u32 1.1754944e-38, %v615
      %v617 = vsel %vm614, %v616, %v612
      %v618 = vmul.f32 1.0, %v617
      %v619 = vtanh.pop %v579
      %v620 = vxor.u32 %v580, 2147483648
      %v621 = vmul.f32 %v620, 1.442695
      %v622 = vpow.pop %v621
      %v623 = vadd.f32 %v622, 1.0
      %v624 = vrcp.pop %v623
      %v625 = vmul.f32 %v623, %v624
      %v626 = vsub.f32 1.0, %v625
      %v627 = vmul.f32 %v624, %v626
      %v628 = vadd.f32 %v624, %v627
      %vm629 = vweird.f32 %v623
      %vm630 = vweird.f32 %v624
      %vm631 = vmor %vm629, %vm630
      %v632 = vsel %vm631, %v624, %v628
      %v633 = vand.u32 2147483647, %v623
      %vm634 = vcmp.eq.f32.partialorder %v633, 8.507059e+37
      %v635 = vand.u32 %v623, 2147483648
      %v636 = vor.u32 1.1754944e-38, %v635
      %v637 = vsel %vm634, %v636, %v632
      %v638 = vmul.f32 1.0, %v637
      %v639 = vmul.f32 %v618, %v286
      %v640 = vmul.f32 %v599, %v619
      %v641 = vadd.f32 %v639, %v640
      %v642 = vtanh.pop %v641
      %v643 = vmul.f32 %v638, %v642
      %644 = vst [vmem:[%s230] sm:$0xff] %v643
      %s645 = scalar_lea.vmem %s221, 4
      %v646 = vld [vmem:[%s645] sm:$0xf]
      %v647 = vpack.c.bf16 %v643, %v643
      %648 = vmatpush.bf16.msra.mxu0 %v413
      %649 = vmatpush.bf16.msra.mxu0 %v409
      %650 = vmatpush.bf16.msra.mxu0 %v405
      %651 = vmatpush.bf16.msra.mxu0 %v401
      %652 = vmatpush.bf16.msra.mxu0 %v397
      %653 = vmatpush.bf16.msra.mxu0 %v393
      %654 = vmatpush.bf16.msra.mxu0 %v389
      %655 = vmatpush.bf16.msra.mxu0 %v385
      %656 = vmatmul.bf16.gmra.mxu0 %v647
      %v657 = vpop.f32.mrf.mxu0
      %v658 = vadd.f32 0.0, %v657
      %v659 = vpop.f32.mrf.mxu0
      %660 = vdwg.mxu0
      %661 = vmatpush.bf16.msra.mxu0 %v414
      %662 = vmatpush.bf16.msra.mxu0 %v410
      %663 = vmatpush.bf16.msra.mxu0 %v406
      %664 = vmatpush.bf16.msra.mxu0 %v402
      %665 = vmatpush.bf16.msra.mxu0 %v398
      %666 = vmatpush.bf16.msra.mxu0 %v394
      %667 = vmatpush.bf16.msra.mxu0 %v390
      %668 = vmatpush.bf16.msra.mxu0 %v386
      %669 = vmatmul.bf16.gmra.mxu0 %v647
      %v670 = vpop.f32.mrf.mxu0
      %v671 = vadd.f32 0.0, %v670
      %v672 = vpop.f32.mrf.mxu0
      %673 = vdwg.mxu0
      %674 = vmatpush.bf16.msra.mxu0 %v415
      %675 = vmatpush.bf16.msra.mxu0 %v411
      %676 = vmatpush.bf16.msra.mxu0 %v407
      %677 = vmatpush.bf16.msra.mxu0 %v403
      %678 = vmatpush.bf16.msra.mxu0 %v399
      %679 = vmatpush.bf16.msra.mxu0 %v395
      %680 = vmatpush.bf16.msra.mxu0 %v391
      %681 = vmatpush.bf16.msra.mxu0 %v387
      %682 = vmatmul.bf16.gmra.mxu0 %v647
      %v683 = vpop.f32.mrf.mxu0
      %v684 = vadd.f32 0.0, %v683
      %v685 = vpop.f32.mrf.mxu0
      %686 = vdwg.mxu0
      %687 = vmatpush.bf16.msra.mxu0 %v416
      %688 = vmatpush.bf16.msra.mxu0 %v412
      %689 = vmatpush.bf16.msra.mxu0 %v408
      %690 = vmatpush.bf16.msra.mxu0 %v404
      %691 = vmatpush.bf16.msra.mxu0 %v400
      %692 = vmatpush.bf16.msra.mxu0 %v396
      %693 = vmatpush.bf16.msra.mxu0 %v392
      %694 = vmatpush.bf16.msra.mxu0 %v388
      %695 = vmatmul.bf16.gmra.mxu0 %v647
      %v696 = vpop.f32.mrf.mxu0
      %v697 = vadd.f32 0.0, %v696
      %v698 = vpop.f32.mrf.mxu0
      %699 = vdwg.mxu0
      %v701 = vsel %vm521, %v646, 0
      %703 = vmatpush.bf16.msra.mxu0 0
      %704 = vmatpush.bf16.msra.mxu0 0
      %705 = vmatpush.bf16.msra.mxu0 0
      %706 = vmatpush.bf16.msra.mxu0 0
      %707 = vmatpush.bf16.msra.mxu0 0
      %708 = vmatpush.bf16.msra.mxu0 0
      %709 = vmatpush.bf16.msra.mxu0 0
      %710 = vmatpush.bf16.msra.mxu0 %v513
      %711 = vmatmul.bf16.gmra.mxu0 %v701
      %v712 = vpop.f32.mrf.mxu0
      %v713 = vadd.f32 %v658, %v712
      %v714 = vpop.f32.mrf.mxu0
      %715 = vdwg.mxu0
      %716 = vmatpush.bf16.msra.mxu0 0
      %717 = vmatpush.bf16.msra.mxu0 0
      %718 = vmatpush.bf16.msra.mxu0 0
      %719 = vmatpush.bf16.msra.mxu0 0
      %720 = vmatpush.bf16.msra.mxu0 0
      %721 = vmatpush.bf16.msra.mxu0 0
      %722 = vmatpush.bf16.msra.mxu0 0
      %723 = vmatpush.bf16.msra.mxu0 %v514
      %724 = vmatmul.bf16.gmra.mxu0 %v701
      %v725 = vpop.f32.mrf.mxu0
      %v726 = vadd.f32 %v671, %v725
      %v727 = vpop.f32.mrf.mxu0
      %728 = vdwg.mxu0
      %729 = vmatpush.bf16.msra.mxu0 0
      %730 = vmatpush.bf16.msra.mxu0 0
      %731 = vmatpush.bf16.msra.mxu0 0
      %732 = vmatpush.bf16.msra.mxu0 0
      %733 = vmatpush.bf16.msra.mxu0 0
      %734 = vmatpush.bf16.msra.mxu0 0
      %735 = vmatpush.bf16.msra.mxu0 0
      %736 = vmatpush.bf16.msra.mxu0 %v515
      %737 = vmatmul.bf16.gmra.mxu0 %v701
      %v738 = vpop.f32.mrf.mxu0
      %v739 = vadd.f32 %v684, %v738
      %v740 = vpop.f32.mrf.mxu0
      %741 = vdwg.mxu0
      %742 = vmatpush.bf16.msra.mxu0 0
      %743 = vmatpush.bf16.msra.mxu0 0
      %744 = vmatpush.bf16.msra.mxu0 0
      %745 = vmatpush.bf16.msra.mxu0 0
      %746 = vmatpush.bf16.msra.mxu0 0
      %747 = vmatpush.bf16.msra.mxu0 0
      %748 = vmatpush.bf16.msra.mxu0 0
      %749 = vmatpush.bf16.msra.mxu0 %v516
      %750 = vmatmul.bf16.gmra.mxu0 %v701
      %v751 = vpop.f32.mrf.mxu0
      %v752 = vadd.f32 %v697, %v751
      %v753 = vpop.f32.mrf.mxu0
      %754 = vdwg.mxu0
      %v755 = vadd.f32 %v713, %v277
      %v756 = vadd.f32 %v726, %v278
      %v757 = vadd.f32 %v739, %v279
      %v758 = vadd.f32 %v752, %v280
      %v759 = vxor.u32 %v755, 2147483648
      %v760 = vmul.f32 %v759, 1.442695
      %v761 = vpow.pop %v760
      %v762 = vadd.f32 %v761, 1.0
      %v763 = vrcp.pop %v762
      %v764 = vmul.f32 %v762, %v763
      %v765 = vsub.f32 1.0, %v764
      %v766 = vmul.f32 %v763, %v765
      %v767 = vadd.f32 %v763, %v766
      %vm768 = vweird.f32 %v762
      %vm769 = vweird.f32 %v763
      %vm770 = vmor %vm768, %vm769
      %v771 = vsel %vm770, %v763, %v767
      %v772 = vand.u32 2147483647, %v762
      %vm773 = vcmp.eq.f32.partialorder %v772, 8.507059e+37
      %v774 = vand.u32 %v762, 2147483648
      %v775 = vor.u32 1.1754944e-38, %v774
      %v776 = vsel %vm773, %v775, %v771
      %v777 = vmul.f32 1.0, %v776
      %v778 = vxor.u32 %v756, 2147483648
      %v779 = vmul.f32 %v778, 1.442695
      %v780 = vpow.pop %v779
      %v781 = vadd.f32 %v780, 1.0
      %v782 = vrcp.pop %v781
      %v783 = vmul.f32 %v781, %v782
      %v784 = vsub.f32 1.0, %v783
      %v785 = vmul.f32 %v782, %v784
      %v786 = vadd.f32 %v782, %v785
      %vm787 = vweird.f32 %v781
      %vm788 = vweird.f32 %v782
      %vm789 = vmor %vm787, %vm788
      %v790 = vsel %vm789, %v782, %v786
      %v791 = vand.u32 2147483647, %v781
      %vm792 = vcmp.eq.f32.partialorder %v791, 8.507059e+37
      %v793 = vand.u32 %v781, 2147483648
      %v794 = vor.u32 1.1754944e-38, %v793
      %v795 = vsel %vm792, %v794, %v790
      %v796 = vmul.f32 1.0, %v795
      %v797 = vtanh.pop %v757
      %v798 = vxor.u32 %v758, 2147483648
      %v799 = vmul.f32 %v798, 1.442695
      %v800 = vpow.pop %v799
      %v801 = vadd.f32 %v800, 1.0
      %v802 = vrcp.pop %v801
      %v803 = vmul.f32 %v801, %v802
      %v804 = vsub.f32 1.0, %v803
      %v805 = vmul.f32 %v802, %v804
      %v806 = vadd.f32 %v802, %v805
      %vm807 = vweird.f32 %v801
      %vm808 = vweird.f32 %v802
      %vm809 = vmor %vm807, %vm808
      %v810 = vsel %vm809, %v802, %v806
      %v811 = vand.u32 2147483647, %v801
      %vm812 = vcmp.eq.f32.partialorder %v811, 8.507059e+37
      %v813 = vand.u32 %v801, 2147483648
      %v814 = vor.u32 1.1754944e-38, %v813
      %v815 = vsel %vm812, %v814, %v810
      %v816 = vmul.f32 1.0, %v815
      %v817 = vmul.f32 %v796, %v641
      %v818 = vmul.f32 %v777, %v797
      %v819 = vadd.f32 %v817, %v818
      %v820 = vtanh.pop %v819
      %v821 = vmul.f32 %v816, %v820
      %s822 = scalar_lea.vmem %s230, 8
      %823 = vst [vmem:[%s822] sm:$0xff] %v821
      %s824 = scalar_lea.vmem %s221, 8
      %v825 = vld [vmem:[%s824] sm:$0xf]
      %v826 = vpack.c.bf16 %v821, %v821
      %827 = vmatpush.bf16.msra.mxu0 %v413
      %828 = vmatpush.bf16.msra.mxu0 %v409
      %829 = vmatpush.bf16.msra.mxu0 %v405
      %830 = vmatpush.bf16.msra.mxu0 %v401
      %831 = vmatpush.bf16.msra.mxu0 %v397
      %832 = vmatpush.bf16.msra.mxu0 %v393
      %833 = vmatpush.bf16.msra.mxu0 %v389
      %834 = vmatpush.bf16.msra.mxu0 %v385
      %835 = vmatmul.bf16.gmra.mxu0 %v826
      %v836 = vpop.f32.mrf.mxu0
      %v837 = vadd.f32 0.0, %v836
      %v838 = vpop.f32.mrf.mxu0
      %839 = vdwg.mxu0
      %840 = vmatpush.bf16.msra.mxu0 %v414
      %841 = vmatpush.bf16.msra.mxu0 %v410
      %842 = vmatpush.bf16.msra.mxu0 %v406
      %843 = vmatpush.bf16.msra.mxu0 %v402
      %844 = vmatpush.bf16.msra.mxu0 %v398
      %845 = vmatpush.bf16.msra.mxu0 %v394
      %846 = vmatpush.bf16.msra.mxu0 %v390
      %847 = vmatpush.bf16.msra.mxu0 %v386
      %848 = vmatmul.bf16.gmra.mxu0 %v826
      %v849 = vpop.f32.mrf.mxu0
      %v850 = vadd.f32 0.0, %v849
      %v851 = vpop.f32.mrf.mxu0
      %852 = vdwg.mxu0
      %853 = vmatpush.bf16.msra.mxu0 %v415
      %854 = vmatpush.bf16.msra.mxu0 %v411
      %855 = vmatpush.bf16.msra.mxu0 %v407
      %856 = vmatpush.bf16.msra.mxu0 %v403
      %857 = vmatpush.bf16.msra.mxu0 %v399
      %858 = vmatpush.bf16.msra.mxu0 %v395
      %859 = vmatpush.bf16.msra.mxu0 %v391
      %860 = vmatpush.bf16.msra.mxu0 %v387
      %861 = vmatmul.bf16.gmra.mxu0 %v826
      %v862 = vpop.f32.mrf.mxu0
      %v863 = vadd.f32 0.0, %v862
      %v864 = vpop.f32.mrf.mxu0
      %865 = vdwg.mxu0
      %866 = vmatpush.bf16.msra.mxu0 %v416
      %867 = vmatpush.bf16.msra.mxu0 %v412
      %868 = vmatpush.bf16.msra.mxu0 %v408
      %869 = vmatpush.bf16.msra.mxu0 %v404
      %870 = vmatpush.bf16.msra.mxu0 %v400
      %871 = vmatpush.bf16.msra.mxu0 %v396
      %872 = vmatpush.bf16.msra.mxu0 %v392
      %873 = vmatpush.bf16.msra.mxu0 %v388
      %874 = vmatmul.bf16.gmra.mxu0 %v826
      %v875 = vpop.f32.mrf.mxu0
      %v876 = vadd.f32 0.0, %v875
      %v877 = vpop.f32.mrf.mxu0
      %878 = vdwg.mxu0
      %v880 = vsel %vm521, %v825, 0
      %882 = vmatpush.bf16.msra.mxu0 0
      %883 = vmatpush.bf16.msra.mxu0 0
      %884 = vmatpush.bf16.msra.mxu0 0
      %885 = vmatpush.bf16.msra.mxu0 0
      %886 = vmatpush.bf16.msra.mxu0 0
      %887 = vmatpush.bf16.msra.mxu0 0
      %888 = vmatpush.bf16.msra.mxu0 0
      %889 = vmatpush.bf16.msra.mxu0 %v513
      %890 = vmatmul.bf16.gmra.mxu0 %v880
      %v891 = vpop.f32.mrf.mxu0
      %v892 = vadd.f32 %v837, %v891
      %v893 = vpop.f32.mrf.mxu0
      %894 = vdwg.mxu0
      %895 = vmatpush.bf16.msra.mxu0 0
      %896 = vmatpush.bf16.msra.mxu0 0
      %897 = vmatpush.bf16.msra.mxu0 0
      %898 = vmatpush.bf16.msra.mxu0 0
      %899 = vmatpush.bf16.msra.mxu0 0
      %900 = vmatpush.bf16.msra.mxu0 0
      %901 = vmatpush.bf16.msra.mxu0 0
      %902 = vmatpush.bf16.msra.mxu0 %v514
      %903 = vmatmul.bf16.gmra.mxu0 %v880
      %v904 = vpop.f32.mrf.mxu0
      %v905 = vadd.f32 %v850, %v904
      %v906 = vpop.f32.mrf.mxu0
      %907 = vdwg.mxu0
      %908 = vmatpush.bf16.msra.mxu0 0
      %909 = vmatpush.bf16.msra.mxu0 0
      %910 = vmatpush.bf16.msra.mxu0 0
      %911 = vmatpush.bf16.msra.mxu0 0
      %912 = vmatpush.bf16.msra.mxu0 0
      %913 = vmatpush.bf16.msra.mxu0 0
      %914 = vmatpush.bf16.msra.mxu0 0
      %915 = vmatpush.bf16.msra.mxu0 %v515
      %916 = vmatmul.bf16.gmra.mxu0 %v880
      %v917 = vpop.f32.mrf.mxu0
      %v918 = vadd.f32 %v863, %v917
      %v919 = vpop.f32.mrf.mxu0
      %920 = vdwg.mxu0
      %921 = vmatpush.bf16.msra.mxu0 0
      %922 = vmatpush.bf16.msra.mxu0 0
      %923 = vmatpush.bf16.msra.mxu0 0
      %924 = vmatpush.bf16.msra.mxu0 0
      %925 = vmatpush.bf16.msra.mxu0 0
      %926 = vmatpush.bf16.msra.mxu0 0
      %927 = vmatpush.bf16.msra.mxu0 0
      %928 = vmatpush.bf16.msra.mxu0 %v516
      %929 = vmatmul.bf16.gmra.mxu0 %v880
      %v930 = vpop.f32.mrf.mxu0
      %v931 = vadd.f32 %v876, %v930
      %v932 = vpop.f32.mrf.mxu0
      %933 = vdwg.mxu0
      %v934 = vadd.f32 %v892, %v277
      %v935 = vadd.f32 %v905, %v278
      %v936 = vadd.f32 %v918, %v279
      %v937 = vadd.f32 %v931, %v280
      %v938 = vxor.u32 %v934, 2147483648
      %v939 = vmul.f32 %v938, 1.442695
      %v940 = vpow.pop %v939
      %v941 = vadd.f32 %v940, 1.0
      %v942 = vrcp.pop %v941
      %v943 = vmul.f32 %v941, %v942
      %v944 = vsub.f32 1.0, %v943
      %v945 = vmul.f32 %v942, %v944
      %v946 = vadd.f32 %v942, %v945
      %vm947 = vweird.f32 %v941
      %vm948 = vweird.f32 %v942
      %vm949 = vmor %vm947, %vm948
      %v950 = vsel %vm949, %v942, %v946
      %v951 = vand.u32 2147483647, %v941
      %vm952 = vcmp.eq.f32.partialorder %v951, 8.507059e+37
      %v953 = vand.u32 %v941, 2147483648
      %v954 = vor.u32 1.1754944e-38, %v953
      %v955 = vsel %vm952, %v954, %v950
      %v956 = vmul.f32 1.0, %v955
      %v957 = vxor.u32 %v935, 2147483648
      %v958 = vmul.f32 %v957, 1.442695
      %v959 = vpow.pop %v958
      %v960 = vadd.f32 %v959, 1.0
      %v961 = vrcp.pop %v960
      %v962 = vmul.f32 %v960, %v961
      %v963 = vsub.f32 1.0, %v962
      %v964 = vmul.f32 %v961, %v963
      %v965 = vadd.f32 %v961, %v964
      %vm966 = vweird.f32 %v960
      %vm967 = vweird.f32 %v961
      %vm968 = vmor %vm966, %vm967
      %v969 = vsel %vm968, %v961, %v965
      %v970 = vand.u32 2147483647, %v960
      %vm971 = vcmp.eq.f32.partialorder %v970, 8.507059e+37
      %v972 = vand.u32 %v960, 2147483648
      %v973 = vor.u32 1.1754944e-38, %v972
      %v974 = vsel %vm971, %v973, %v969
      %v975 = vmul.f32 1.0, %v974
      %v976 = vtanh.pop %v936
      %v977 = vxor.u32 %v937, 2147483648
      %v978 = vmul.f32 %v977, 1.442695
      %v979 = vpow.pop %v978
      %v980 = vadd.f32 %v979, 1.0
      %v981 = vrcp.pop %v980
      %v982 = vmul.f32 %v980, %v981
      %v983 = vsub.f32 1.0, %v982
      %v984 = vmul.f32 %v981, %v983
      %v985 = vadd.f32 %v981, %v984
      %vm986 = vweird.f32 %v980
      %vm987 = vweird.f32 %v981
      %vm988 = vmor %vm986, %vm987
      %v989 = vsel %vm988, %v981, %v985
      %v990 = vand.u32 2147483647, %v980
      %vm991 = vcmp.eq.f32.partialorder %v990, 8.507059e+37
      %v992 = vand.u32 %v980, 2147483648
      %v993 = vor.u32 1.1754944e-38, %v992
      %v994 = vsel %vm991, %v993, %v989
      %v995 = vmul.f32 1.0, %v994
      %v996 = vmul.f32 %v975, %v819
      %v997 = vmul.f32 %v956, %v976
      %v998 = vadd.f32 %v996, %v997
      %v999 = vtanh.pop %v998
      %v1000 = vmul.f32 %v995, %v999
      %s1001 = scalar_lea.vmem %s230, 16
      %1002 = vst [vmem:[%s1001] sm:$0xff] %v1000
      %s1003 = scalar_lea.vmem %s221, 12
      %v1004 = vld [vmem:[%s1003] sm:$0xf]
      %v1005 = vpack.c.bf16 %v1000, %v1000
      %1006 = vmatpush.bf16.msra.mxu0 %v413
      %1007 = vmatpush.bf16.msra.mxu0 %v409
      %1008 = vmatpush.bf16.msra.mxu0 %v405
      %1009 = vmatpush.bf16.msra.mxu0 %v401
      %1010 = vmatpush.bf16.msra.mxu0 %v397
      %1011 = vmatpush.bf16.msra.mxu0 %v393
      %1012 = vmatpush.bf16.msra.mxu0 %v389
      %1013 = vmatpush.bf16.msra.mxu0 %v385
      %1014 = vmatmul.bf16.gmra.mxu0 %v1005
      %v1015 = vpop.f32.mrf.mxu0
      %v1016 = vadd.f32 0.0, %v1015
      %v1017 = vpop.f32.mrf.mxu0
      %1018 = vdwg.mxu0
      %1019 = vmatpush.bf16.msra.mxu0 %v414
      %1020 = vmatpush.bf16.msra.mxu0 %v410
      %1021 = vmatpush.bf16.msra.mxu0 %v406
      %1022 = vmatpush.bf16.msra.mxu0 %v402
      %1023 = vmatpush.bf16.msra.mxu0 %v398
      %1024 = vmatpush.bf16.msra.mxu0 %v394
      %1025 = vmatpush.bf16.msra.mxu0 %v390
      %1026 = vmatpush.bf16.msra.mxu0 %v386
      %1027 = vmatmul.bf16.gmra.mxu0 %v1005
      %v1028 = vpop.f32.mrf.mxu0
      %v1029 = vadd.f32 0.0, %v1028
      %v1030 = vpop.f32.mrf.mxu0
      %1031 = vdwg.mxu0
      %1032 = vmatpush.bf16.msra.mxu0 %v415
      %1033 = vmatpush.bf16.msra.mxu0 %v411
      %1034 = vmatpush.bf16.msra.mxu0 %v407
      %1035 = vmatpush.bf16.msra.mxu0 %v403
      %1036 = vmatpush.bf16.msra.mxu0 %v399
      %1037 = vmatpush.bf16.msra.mxu0 %v395
      %1038 = vmatpush.bf16.msra.mxu0 %v391
      %1039 = vmatpush.bf16.msra.mxu0 %v387
      %1040 = vmatmul.bf16.gmra.mxu0 %v1005
      %v1041 = vpop.f32.mrf.mxu0
      %v1042 = vadd.f32 0.0, %v1041
      %v1043 = vpop.f32.mrf.mxu0
      %1044 = vdwg.mxu0
      %1045 = vmatpush.bf16.msra.mxu0 %v416
      %1046 = vmatpush.bf16.msra.mxu0 %v412
      %1047 = vmatpush.bf16.msra.mxu0 %v408
      %1048 = vmatpush.bf16.msra.mxu0 %v404
      %1049 = vmatpush.bf16.msra.mxu0 %v400
      %1050 = vmatpush.bf16.msra.mxu0 %v396
      %1051 = vmatpush.bf16.msra.mxu0 %v392
      %1052 = vmatpush.bf16.msra.mxu0 %v388
      %1053 = vmatmul.bf16.gmra.mxu0 %v1005
      %v1054 = vpop.f32.mrf.mxu0
      %v1055 = vadd.f32 0.0, %v1054
      %v1056 = vpop.f32.mrf.mxu0
      %1057 = vdwg.mxu0
      %v1059 = vsel %vm521, %v1004, 0
      %1061 = vmatpush.bf16.msra.mxu0 0
      %1062 = vmatpush.bf16.msra.mxu0 0
      %1063 = vmatpush.bf16.msra.mxu0 0
      %1064 = vmatpush.bf16.msra.mxu0 0
      %1065 = vmatpush.bf16.msra.mxu0 0
      %1066 = vmatpush.bf16.msra.mxu0 0
      %1067 = vmatpush.bf16.msra.mxu0 0
      %1068 = vmatpush.bf16.msra.mxu0 %v513
      %1069 = vmatmul.bf16.gmra.mxu0 %v1059
      %v1070 = vpop.f32.mrf.mxu0
      %v1071 = vadd.f32 %v1016, %v1070
      %v1072 = vpop.f32.mrf.mxu0
      %1073 = vdwg.mxu0
      %1074 = vmatpush.bf16.msra.mxu0 0
      %1075 = vmatpush.bf16.msra.mxu0 0
      %1076 = vmatpush.bf16.msra.mxu0 0
      %1077 = vmatpush.bf16.msra.mxu0 0
      %1078 = vmatpush.bf16.msra.mxu0 0
      %1079 = vmatpush.bf16.msra.mxu0 0
      %1080 = vmatpush.bf16.msra.mxu0 0
      %1081 = vmatpush.bf16.msra.mxu0 %v514
      %1082 = vmatmul.bf16.gmra.mxu0 %v1059
      %v1083 = vpop.f32.mrf.mxu0
      %v1084 = vadd.f32 %v1029, %v1083
      %v1085 = vpop.f32.mrf.mxu0
      %1086 = vdwg.mxu0
      %1087 = vmatpush.bf16.msra.mxu0 0
      %1088 = vmatpush.bf16.msra.mxu0 0
      %1089 = vmatpush.bf16.msra.mxu0 0
      %1090 = vmatpush.bf16.msra.mxu0 0
      %1091 = vmatpush.bf16.msra.mxu0 0
      %1092 = vmatpush.bf16.msra.mxu0 0
      %1093 = vmatpush.bf16.msra.mxu0 0
      %1094 = vmatpush.bf16.msra.mxu0 %v515
      %1095 = vmatmul.bf16.gmra.mxu0 %v1059
      %v1096 = vpop.f32.mrf.mxu0
      %v1097 = vadd.f32 %v1042, %v1096
      %v1098 = vpop.f32.mrf.mxu0
      %1099 = vdwg.mxu0
      %1100 = vmatpush.bf16.msra.mxu0 0
      %1101 = vmatpush.bf16.msra.mxu0 0
      %1102 = vmatpush.bf16.msra.mxu0 0
      %1103 = vmatpush.bf16.msra.mxu0 0
      %1104 = vmatpush.bf16.msra.mxu0 0
      %1105 = vmatpush.bf16.msra.mxu0 0
      %1106 = vmatpush.bf16.msra.mxu0 0
      %1107 = vmatpush.bf16.msra.mxu0 %v516
      %1108 = vmatmul.bf16.gmra.mxu0 %v1059
      %v1109 = vpop.f32.mrf.mxu0
      %v1110 = vadd.f32 %v1055, %v1109
      %v1111 = vpop.f32.mrf.mxu0
      %1112 = vdwg.mxu0
      %v1113 = vadd.f32 %v1071, %v277
      %v1114 = vadd.f32 %v1084, %v278
      %v1115 = vadd.f32 %v1097, %v279
      %v1116 = vadd.f32 %v1110, %v280
      %v1117 = vxor.u32 %v1113, 2147483648
      %v1118 = vmul.f32 %v1117, 1.442695
      %v1119 = vpow.pop %v1118
      %v1120 = vadd.f32 %v1119, 1.0
      %v1121 = vrcp.pop %v1120
      %v1122 = vmul.f32 %v1120, %v1121
      %v1123 = vsub.f32 1.0, %v1122
      %v1124 = vmul.f32 %v1121, %v1123
      %v1125 = vadd.f32 %v1121, %v1124
      %vm1126 = vweird.f32 %v1120
      %vm1127 = vweird.f32 %v1121
      %vm1128 = vmor %vm1126, %vm1127
      %v1129 = vsel %vm1128, %v1121, %v1125
      %v1130 = vand.u32 2147483647, %v1120
      %vm1131 = vcmp.eq.f32.partialorder %v1130, 8.507059e+37
      %v1132 = vand.u32 %v1120, 2147483648
      %v1133 = vor.u32 1.1754944e-38, %v1132
      %v1134 = vsel %vm1131, %v1133, %v1129
      %v1135 = vmul.f32 1.0, %v1134
      %v1136 = vxor.u32 %v1114, 2147483648
      %v1137 = vmul.f32 %v1136, 1.442695
      %v1138 = vpow.pop %v1137
      %v1139 = vadd.f32 %v1138, 1.0
      %v1140 = vrcp.pop %v1139
      %v1141 = vmul.f32 %v1139, %v1140
      %v1142 = vsub.f32 1.0, %v1141
      %v1143 = vmul.f32 %v1140, %v1142
      %v1144 = vadd.f32 %v1140, %v1143
      %vm1145 = vweird.f32 %v1139
      %vm1146 = vweird.f32 %v1140
      %vm1147 = vmor %vm1145, %vm1146
      %v1148 = vsel %vm1147, %v1140, %v1144
      %v1149 = vand.u32 2147483647, %v1139
      %vm1150 = vcmp.eq.f32.partialorder %v1149, 8.507059e+37
      %v1151 = vand.u32 %v1139, 2147483648
      %v1152 = vor.u32 1.1754944e-38, %v1151
      %v1153 = vsel %vm1150, %v1152, %v1148
      %v1154 = vmul.f32 1.0, %v1153
      %v1155 = vtanh.pop %v1115
      %v1156 = vxor.u32 %v1116, 2147483648
      %v1157 = vmul.f32 %v1156, 1.442695
      %v1158 = vpow.pop %v1157
      %v1159 = vadd.f32 %v1158, 1.0
      %v1160 = vrcp.pop %v1159
      %v1161 = vmul.f32 %v1159, %v1160
      %v1162 = vsub.f32 1.0, %v1161
      %v1163 = vmul.f32 %v1160, %v1162
      %v1164 = vadd.f32 %v1160, %v1163
      %vm1165 = vweird.f32 %v1159
      %vm1166 = vweird.f32 %v1160
      %vm1167 = vmor %vm1165, %vm1166
      %v1168 = vsel %vm1167, %v1160, %v1164
      %v1169 = vand.u32 2147483647, %v1159
      %vm1170 = vcmp.eq.f32.partialorder %v1169, 8.507059e+37
      %v1171 = vand.u32 %v1159, 2147483648
      %v1172 = vor.u32 1.1754944e-38, %v1171
      %v1173 = vsel %vm1170, %v1172, %v1168
      %v1174 = vmul.f32 1.0, %v1173
      %v1175 = vmul.f32 %v1154, %v998
      %v1176 = vmul.f32 %v1135, %v1155
      %v1177 = vadd.f32 %v1175, %v1176
      %v1178 = vtanh.pop %v1177
      %v1179 = vmul.f32 %v1174, %v1178
      %s1180 = scalar_lea.vmem %s230, 24
      %1181 = vst [vmem:[%s1180] sm:$0xff] %v1179
      %s1182 = scalar_lea.vmem %s221, 16
      %v1183 = vld [vmem:[%s1182] sm:$0xf]
      %v1184 = vpack.c.bf16 %v1179, %v1179
      %1185 = vmatpush.bf16.msra.mxu0 %v413
      %1186 = vmatpush.bf16.msra.mxu0 %v409
      %1187 = vmatpush.bf16.msra.mxu0 %v405
      %1188 = vmatpush.bf16.msra.mxu0 %v401
      %1189 = vmatpush.bf16.msra.mxu0 %v397
      %1190 = vmatpush.bf16.msra.mxu0 %v393
      %1191 = vmatpush.bf16.msra.mxu0 %v389
      %1192 = vmatpush.bf16.msra.mxu0 %v385
      %1193 = vmatmul.bf16.gmra.mxu0 %v1184
      %v1194 = vpop.f32.mrf.mxu0
      %v1195 = vadd.f32 0.0, %v1194
      %v1196 = vpop.f32.mrf.mxu0
      %1197 = vdwg.mxu0
      %1198 = vmatpush.bf16.msra.mxu0 %v414
      %1199 = vmatpush.bf16.msra.mxu0 %v410
      %1200 = vmatpush.bf16.msra.mxu0 %v406
      %1201 = vmatpush.bf16.msra.mxu0 %v402
      %1202 = vmatpush.bf16.msra.mxu0 %v398
      %1203 = vmatpush.bf16.msra.mxu0 %v394
      %1204 = vmatpush.bf16.msra.mxu0 %v390
      %1205 = vmatpush.bf16.msra.mxu0 %v386
      %1206 = vmatmul.bf16.gmra.mxu0 %v1184
      %v1207 = vpop.f32.mrf.mxu0
      %v1208 = vadd.f32 0.0, %v1207
      %v1209 = vpop.f32.mrf.mxu0
      %1210 = vdwg.mxu0
      %1211 = vmatpush.bf16.msra.mxu0 %v415
      %1212 = vmatpush.bf16.msra.mxu0 %v411
      %1213 = vmatpush.bf16.msra.mxu0 %v407
      %1214 = vmatpush.bf16.msra.mxu0 %v403
      %1215 = vmatpush.bf16.msra.mxu0 %v399
      %1216 = vmatpush.bf16.msra.mxu0 %v395
      %1217 = vmatpush.bf16.msra.mxu0 %v391
      %1218 = vmatpush.bf16.msra.mxu0 %v387
      %1219 = vmatmul.bf16.gmra.mxu0 %v1184
      %v1220 = vpop.f32.mrf.mxu0
      %v1221 = vadd.f32 0.0, %v1220
      %v1222 = vpop.f32.mrf.mxu0
      %1223 = vdwg.mxu0
      %1224 = vmatpush.bf16.msra.mxu0 %v416
      %1225 = vmatpush.bf16.msra.mxu0 %v412
      %1226 = vmatpush.bf16.msra.mxu0 %v408
      %1227 = vmatpush.bf16.msra.mxu0 %v404
      %1228 = vmatpush.bf16.msra.mxu0 %v400
      %1229 = vmatpush.bf16.msra.mxu0 %v396
      %1230 = vmatpush.bf16.msra.mxu0 %v392
      %1231 = vmatpush.bf16.msra.mxu0 %v388
      %1232 = vmatmul.bf16.gmra.mxu0 %v1184
      %v1233 = vpop.f32.mrf.mxu0
      %v1234 = vadd.f32 0.0, %v1233
      %v1235 = vpop.f32.mrf.mxu0
      %1236 = vdwg.mxu0
      %v1238 = vsel %vm521, %v1183, 0
      %1240 = vmatpush.bf16.msra.mxu0 0
      %1241 = vmatpush.bf16.msra.mxu0 0
      %1242 = vmatpush.bf16.msra.mxu0 0
      %1243 = vmatpush.bf16.msra.mxu0 0
      %1244 = vmatpush.bf16.msra.mxu0 0
      %1245 = vmatpush.bf16.msra.mxu0 0
      %1246 = vmatpush.bf16.msra.mxu0 0
      %1247 = vmatpush.bf16.msra.mxu0 %v513
      %1248 = vmatmul.bf16.gmra.mxu0 %v1238
      %v1249 = vpop.f32.mrf.mxu0
      %v1250 = vadd.f32 %v1195, %v1249
      %v1251 = vpop.f32.mrf.mxu0
      %1252 = vdwg.mxu0
      %1253 = vmatpush.bf16.msra.mxu0 0
      %1254 = vmatpush.bf16.msra.mxu0 0
      %1255 = vmatpush.bf16.msra.mxu0 0
      %1256 = vmatpush.bf16.msra.mxu0 0
      %1257 = vmatpush.bf16.msra.mxu0 0
      %1258 = vmatpush.bf16.msra.mxu0 0
      %1259 = vmatpush.bf16.msra.mxu0 0
      %1260 = vmatpush.bf16.msra.mxu0 %v514
      %1261 = vmatmul.bf16.gmra.mxu0 %v1238
      %v1262 = vpop.f32.mrf.mxu0
      %v1263 = vadd.f32 %v1208, %v1262
      %v1264 = vpop.f32.mrf.mxu0
      %1265 = vdwg.mxu0
      %1266 = vmatpush.bf16.msra.mxu0 0
      %1267 = vmatpush.bf16.msra.mxu0 0
      %1268 = vmatpush.bf16.msra.mxu0 0
      %1269 = vmatpush.bf16.msra.mxu0 0
      %1270 = vmatpush.bf16.msra.mxu0 0
      %1271 = vmatpush.bf16.msra.mxu0 0
      %1272 = vmatpush.bf16.msra.mxu0 0
      %1273 = vmatpush.bf16.msra.mxu0 %v515
      %1274 = vmatmul.bf16.gmra.mxu0 %v1238
      %v1275 = vpop.f32.mrf.mxu0
      %v1276 = vadd.f32 %v1221, %v1275
      %v1277 = vpop.f32.mrf.mxu0
      %1278 = vdwg.mxu0
      %1279 = vmatpush.bf16.msra.mxu0 0
      %1280 = vmatpush.bf16.msra.mxu0 0
      %1281 = vmatpush.bf16.msra.mxu0 0
      %1282 = vmatpush.bf16.msra.mxu0 0
      %1283 = vmatpush.bf16.msra.mxu0 0
      %1284 = vmatpush.bf16.msra.mxu0 0
      %1285 = vmatpush.bf16.msra.mxu0 0
      %1286 = vmatpush.bf16.msra.mxu0 %v516
      %1287 = vmatmul.bf16.gmra.mxu0 %v1238
      %v1288 = vpop.f32.mrf.mxu0
      %v1289 = vadd.f32 %v1234, %v1288
      %v1290 = vpop.f32.mrf.mxu0
      %1291 = vdwg.mxu0
      %v1292 = vadd.f32 %v1250, %v277
      %v1293 = vadd.f32 %v1263, %v278
      %v1294 = vadd.f32 %v1276, %v279
      %v1295 = vadd.f32 %v1289, %v280
      %v1296 = vxor.u32 %v1292, 2147483648
      %v1297 = vmul.f32 %v1296, 1.442695
      %v1298 = vpow.pop %v1297
      %v1299 = vadd.f32 %v1298, 1.0
      %v1300 = vrcp.pop %v1299
      %v1301 = vmul.f32 %v1299, %v1300
      %v1302 = vsub.f32 1.0, %v1301
      %v1303 = vmul.f32 %v1300, %v1302
      %v1304 = vadd.f32 %v1300, %v1303
      %vm1305 = vweird.f32 %v1299
      %vm1306 = vweird.f32 %v1300
      %vm1307 = vmor %vm1305, %vm1306
      %v1308 = vsel %vm1307, %v1300, %v1304
      %v1309 = vand.u32 2147483647, %v1299
      %vm1310 = vcmp.eq.f32.partialorder %v1309, 8.507059e+37
      %v1311 = vand.u32 %v1299, 2147483648
      %v1312 = vor.u32 1.1754944e-38, %v1311
      %v1313 = vsel %vm1310, %v1312, %v1308
      %v1314 = vmul.f32 1.0, %v1313
      %v1315 = vxor.u32 %v1293, 2147483648
      %v1316 = vmul.f32 %v1315, 1.442695
      %v1317 = vpow.pop %v1316
      %v1318 = vadd.f32 %v1317, 1.0
      %v1319 = vrcp.pop %v1318
      %v1320 = vmul.f32 %v1318, %v1319
      %v1321 = vsub.f32 1.0, %v1320
      %v1322 = vmul.f32 %v1319, %v1321
      %v1323 = vadd.f32 %v1319, %v1322
      %vm1324 = vweird.f32 %v1318
      %vm1325 = vweird.f32 %v1319
      %vm1326 = vmor %vm1324, %vm1325
      %v1327 = vsel %vm1326, %v1319, %v1323
      %v1328 = vand.u32 2147483647, %v1318
      %vm1329 = vcmp.eq.f32.partialorder %v1328, 8.507059e+37
      %v1330 = vand.u32 %v1318, 2147483648
      %v1331 = vor.u32 1.1754944e-38, %v1330
      %v1332 = vsel %vm1329, %v1331, %v1327
      %v1333 = vmul.f32 1.0, %v1332
      %v1334 = vtanh.pop %v1294
      %v1335 = vxor.u32 %v1295, 2147483648
      %v1336 = vmul.f32 %v1335, 1.442695
      %v1337 = vpow.pop %v1336
      %v1338 = vadd.f32 %v1337, 1.0
      %v1339 = vrcp.pop %v1338
      %v1340 = vmul.f32 %v1338, %v1339
      %v1341 = vsub.f32 1.0, %v1340
      %v1342 = vmul.f32 %v1339, %v1341
      %v1343 = vadd.f32 %v1339, %v1342
      %vm1344 = vweird.f32 %v1338
      %vm1345 = vweird.f32 %v1339
      %vm1346 = vmor %vm1344, %vm1345
      %v1347 = vsel %vm1346, %v1339, %v1343
      %v1348 = vand.u32 2147483647, %v1338
      %vm1349 = vcmp.eq.f32.partialorder %v1348, 8.507059e+37
      %v1350 = vand.u32 %v1338, 2147483648
      %v1351 = vor.u32 1.1754944e-38, %v1350
      %v1352 = vsel %vm1349, %v1351, %v1347
      %v1353 = vmul.f32 1.0, %v1352
      %v1354 = vmul.f32 %v1333, %v1177
      %v1355 = vmul.f32 %v1314, %v1334
      %v1356 = vadd.f32 %v1354, %v1355
      %v1357 = vtanh.pop %v1356
      %v1358 = vmul.f32 %v1353, %v1357
      %s1359 = scalar_lea.vmem %s230, 32
      %1360 = vst [vmem:[%s1359] sm:$0xff] %v1358
      %s1361 = scalar_lea.vmem %s221, 20
      %v1362 = vld [vmem:[%s1361] sm:$0xf]
      %v1363 = vpack.c.bf16 %v1358, %v1358
      %1364 = vmatpush.bf16.msra.mxu0 %v413
      %1365 = vmatpush.bf16.msra.mxu0 %v409
      %1366 = vmatpush.bf16.msra.mxu0 %v405
      %1367 = vmatpush.bf16.msra.mxu0 %v401
      %1368 = vmatpush.bf16.msra.mxu0 %v397
      %1369 = vmatpush.bf16.msra.mxu0 %v393
      %1370 = vmatpush.bf16.msra.mxu0 %v389
      %1371 = vmatpush.bf16.msra.mxu0 %v385
      %1372 = vmatmul.bf16.gmra.mxu0 %v1363
      %v1373 = vpop.f32.mrf.mxu0
      %v1374 = vadd.f32 0.0, %v1373
      %v1375 = vpop.f32.mrf.mxu0
      %1376 = vdwg.mxu0
      %1377 = vmatpush.bf16.msra.mxu0 %v414
      %1378 = vmatpush.bf16.msra.mxu0 %v410
      %1379 = vmatpush.bf16.msra.mxu0 %v406
      %1380 = vmatpush.bf16.msra.mxu0 %v402
      %1381 = vmatpush.bf16.msra.mxu0 %v398
      %1382 = vmatpush.bf16.msra.mxu0 %v394
      %1383 = vmatpush.bf16.msra.mxu0 %v390
      %1384 = vmatpush.bf16.msra.mxu0 %v386
      %1385 = vmatmul.bf16.gmra.mxu0 %v1363
      %v1386 = vpop.f32.mrf.mxu0
      %v1387 = vadd.f32 0.0, %v1386
      %v1388 = vpop.f32.mrf.mxu0
      %1389 = vdwg.mxu0
      %1390 = vmatpush.bf16.msra.mxu0 %v415
      %1391 = vmatpush.bf16.msra.mxu0 %v411
      %1392 = vmatpush.bf16.msra.mxu0 %v407
      %1393 = vmatpush.bf16.msra.mxu0 %v403
      %1394 = vmatpush.bf16.msra.mxu0 %v399
      %1395 = vmatpush.bf16.msra.mxu0 %v395
      %1396 = vmatpush.bf16.msra.mxu0 %v391
      %1397 = vmatpush.bf16.msra.mxu0 %v387
      %1398 = vmatmul.bf16.gmra.mxu0 %v1363
      %v1399 = vpop.f32.mrf.mxu0
      %v1400 = vadd.f32 0.0, %v1399
      %v1401 = vpop.f32.mrf.mxu0
      %1402 = vdwg.mxu0
      %1403 = vmatpush.bf16.msra.mxu0 %v416
      %1404 = vmatpush.bf16.msra.mxu0 %v412
      %1405 = vmatpush.bf16.msra.mxu0 %v408
      %1406 = vmatpush.bf16.msra.mxu0 %v404
      %1407 = vmatpush.bf16.msra.mxu0 %v400
      %1408 = vmatpush.bf16.msra.mxu0 %v396
      %1409 = vmatpush.bf16.msra.mxu0 %v392
      %1410 = vmatpush.bf16.msra.mxu0 %v388
      %1411 = vmatmul.bf16.gmra.mxu0 %v1363
      %v1412 = vpop.f32.mrf.mxu0
      %v1413 = vadd.f32 0.0, %v1412
      %v1414 = vpop.f32.mrf.mxu0
      %1415 = vdwg.mxu0
      %v1417 = vsel %vm521, %v1362, 0
      %1419 = vmatpush.bf16.msra.mxu0 0
      %1420 = vmatpush.bf16.msra.mxu0 0
      %1421 = vmatpush.bf16.msra.mxu0 0
      %1422 = vmatpush.bf16.msra.mxu0 0
      %1423 = vmatpush.bf16.msra.mxu0 0
      %1424 = vmatpush.bf16.msra.mxu0 0
      %1425 = vmatpush.bf16.msra.mxu0 0
      %1426 = vmatpush.bf16.msra.mxu0 %v513
      %1427 = vmatmul.bf16.gmra.mxu0 %v1417
      %v1428 = vpop.f32.mrf.mxu0
      %v1429 = vadd.f32 %v1374, %v1428
      %v1430 = vpop.f32.mrf.mxu0
      %1431 = vdwg.mxu0
      %1432 = vmatpush.bf16.msra.mxu0 0
      %1433 = vmatpush.bf16.msra.mxu0 0
      %1434 = vmatpush.bf16.msra.mxu0 0
      %1435 = vmatpush.bf16.msra.mxu0 0
      %1436 = vmatpush.bf16.msra.mxu0 0
      %1437 = vmatpush.bf16.msra.mxu0 0
      %1438 = vmatpush.bf16.msra.mxu0 0
      %1439 = vmatpush.bf16.msra.mxu0 %v514
      %1440 = vmatmul.bf16.gmra.mxu0 %v1417
      %v1441 = vpop.f32.mrf.mxu0
      %v1442 = vadd.f32 %v1387, %v1441
      %v1443 = vpop.f32.mrf.mxu0
      %1444 = vdwg.mxu0
      %1445 = vmatpush.bf16.msra.mxu0 0
      %1446 = vmatpush.bf16.msra.mxu0 0
      %1447 = vmatpush.bf16.msra.mxu0 0
      %1448 = vmatpush.bf16.msra.mxu0 0
      %1449 = vmatpush.bf16.msra.mxu0 0
      %1450 = vmatpush.bf16.msra.mxu0 0
      %1451 = vmatpush.bf16.msra.mxu0 0
      %1452 = vmatpush.bf16.msra.mxu0 %v515
      %1453 = vmatmul.bf16.gmra.mxu0 %v1417
      %v1454 = vpop.f32.mrf.mxu0
      %v1455 = vadd.f32 %v1400, %v1454
      %v1456 = vpop.f32.mrf.mxu0
      %1457 = vdwg.mxu0
      %1458 = vmatpush.bf16.msra.mxu0 0
      %1459 = vmatpush.bf16.msra.mxu0 0
      %1460 = vmatpush.bf16.msra.mxu0 0
      %1461 = vmatpush.bf16.msra.mxu0 0
      %1462 = vmatpush.bf16.msra.mxu0 0
      %1463 = vmatpush.bf16.msra.mxu0 0
      %1464 = vmatpush.bf16.msra.mxu0 0
      %1465 = vmatpush.bf16.msra.mxu0 %v516
      %1466 = vmatmul.bf16.gmra.mxu0 %v1417
      %v1467 = vpop.f32.mrf.mxu0
      %v1468 = vadd.f32 %v1413, %v1467
      %v1469 = vpop.f32.mrf.mxu0
      %1470 = vdwg.mxu0
      %v1471 = vadd.f32 %v1429, %v277
      %v1472 = vadd.f32 %v1442, %v278
      %v1473 = vadd.f32 %v1455, %v279
      %v1474 = vadd.f32 %v1468, %v280
      %v1475 = vxor.u32 %v1471, 2147483648
      %v1476 = vmul.f32 %v1475, 1.442695
      %v1477 = vpow.pop %v1476
      %v1478 = vadd.f32 %v1477, 1.0
      %v1479 = vrcp.pop %v1478
      %v1480 = vmul.f32 %v1478, %v1479
      %v1481 = vsub.f32 1.0, %v1480
      %v1482 = vmul.f32 %v1479, %v1481
      %v1483 = vadd.f32 %v1479, %v1482
      %vm1484 = vweird.f32 %v1478
      %vm1485 = vweird.f32 %v1479
      %vm1486 = vmor %vm1484, %vm1485
      %v1487 = vsel %vm1486, %v1479, %v1483
      %v1488 = vand.u32 2147483647, %v1478
      %vm1489 = vcmp.eq.f32.partialorder %v1488, 8.507059e+37
      %v1490 = vand.u32 %v1478, 2147483648
      %v1491 = vor.u32 1.1754944e-38, %v1490
      %v1492 = vsel %vm1489, %v1491, %v1487
      %v1493 = vmul.f32 1.0, %v1492
      %v1494 = vxor.u32 %v1472, 2147483648
      %v1495 = vmul.f32 %v1494, 1.442695
      %v1496 = vpow.pop %v1495
      %v1497 = vadd.f32 %v1496, 1.0
      %v1498 = vrcp.pop %v1497
      %v1499 = vmul.f32 %v1497, %v1498
      %v1500 = vsub.f32 1.0, %v1499
      %v1501 = vmul.f32 %v1498, %v1500
      %v1502 = vadd.f32 %v1498, %v1501
      %vm1503 = vweird.f32 %v1497
      %vm1504 = vweird.f32 %v1498
      %vm1505 = vmor %vm1503, %vm1504
      %v1506 = vsel %vm1505, %v1498, %v1502
      %v1507 = vand.u32 2147483647, %v1497
      %vm1508 = vcmp.eq.f32.partialorder %v1507, 8.507059e+37
      %v1509 = vand.u32 %v1497, 2147483648
      %v1510 = vor.u32 1.1754944e-38, %v1509
      %v1511 = vsel %vm1508, %v1510, %v1506
      %v1512 = vmul.f32 1.0, %v1511
      %v1513 = vtanh.pop %v1473
      %v1514 = vxor.u32 %v1474, 2147483648
      %v1515 = vmul.f32 %v1514, 1.442695
      %v1516 = vpow.pop %v1515
      %v1517 = vadd.f32 %v1516, 1.0
      %v1518 = vrcp.pop %v1517
      %v1519 = vmul.f32 %v1517, %v1518
      %v1520 = vsub.f32 1.0, %v1519
      %v1521 = vmul.f32 %v1518, %v1520
      %v1522 = vadd.f32 %v1518, %v1521
      %vm1523 = vweird.f32 %v1517
      %vm1524 = vweird.f32 %v1518
      %vm1525 = vmor %vm1523, %vm1524
      %v1526 = vsel %vm1525, %v1518, %v1522
      %v1527 = vand.u32 2147483647, %v1517
      %vm1528 = vcmp.eq.f32.partialorder %v1527, 8.507059e+37
      %v1529 = vand.u32 %v1517, 2147483648
      %v1530 = vor.u32 1.1754944e-38, %v1529
      %v1531 = vsel %vm1528, %v1530, %v1526
      %v1532 = vmul.f32 1.0, %v1531
      %v1533 = vmul.f32 %v1512, %v1356
      %v1534 = vmul.f32 %v1493, %v1513
      %v1535 = vadd.f32 %v1533, %v1534
      %v1536 = vtanh.pop %v1535
      %v1537 = vmul.f32 %v1532, %v1536
      %s1538 = scalar_lea.vmem %s230, 40
      %1539 = vst [vmem:[%s1538] sm:$0xff] %v1537
      %s1540 = scalar_lea.vmem %s221, 24
      %v1541 = vld [vmem:[%s1540] sm:$0xf]
      %v1542 = vpack.c.bf16 %v1537, %v1537
      %1543 = vmatpush.bf16.msra.mxu0 %v413
      %1544 = vmatpush.bf16.msra.mxu0 %v409
      %1545 = vmatpush.bf16.msra.mxu0 %v405
      %1546 = vmatpush.bf16.msra.mxu0 %v401
      %1547 = vmatpush.bf16.msra.mxu0 %v397
      %1548 = vmatpush.bf16.msra.mxu0 %v393
      %1549 = vmatpush.bf16.msra.mxu0 %v389
      %1550 = vmatpush.bf16.msra.mxu0 %v385
      %1551 = vmatmul.bf16.gmra.mxu0 %v1542
      %v1552 = vpop.f32.mrf.mxu0
      %v1553 = vadd.f32 0.0, %v1552
      %v1554 = vpop.f32.mrf.mxu0
      %1555 = vdwg.mxu0
      %1556 = vmatpush.bf16.msra.mxu0 %v414
      %1557 = vmatpush.bf16.msra.mxu0 %v410
      %1558 = vmatpush.bf16.msra.mxu0 %v406
      %1559 = vmatpush.bf16.msra.mxu0 %v402
      %1560 = vmatpush.bf16.msra.mxu0 %v398
      %1561 = vmatpush.bf16.msra.mxu0 %v394
      %1562 = vmatpush.bf16.msra.mxu0 %v390
      %1563 = vmatpush.bf16.msra.mxu0 %v386
      %1564 = vmatmul.bf16.gmra.mxu0 %v1542
      %v1565 = vpop.f32.mrf.mxu0
      %v1566 = vadd.f32 0.0, %v1565
      %v1567 = vpop.f32.mrf.mxu0
      %1568 = vdwg.mxu0
      %1569 = vmatpush.bf16.msra.mxu0 %v415
      %1570 = vmatpush.bf16.msra.mxu0 %v411
      %1571 = vmatpush.bf16.msra.mxu0 %v407
      %1572 = vmatpush.bf16.msra.mxu0 %v403
      %1573 = vmatpush.bf16.msra.mxu0 %v399
      %1574 = vmatpush.bf16.msra.mxu0 %v395
      %1575 = vmatpush.bf16.msra.mxu0 %v391
      %1576 = vmatpush.bf16.msra.mxu0 %v387
      %1577 = vmatmul.bf16.gmra.mxu0 %v1542
      %v1578 = vpop.f32.mrf.mxu0
      %v1579 = vadd.f32 0.0, %v1578
      %v1580 = vpop.f32.mrf.mxu0
      %1581 = vdwg.mxu0
      %1582 = vmatpush.bf16.msra.mxu0 %v416
      %1583 = vmatpush.bf16.msra.mxu0 %v412
      %1584 = vmatpush.bf16.msra.mxu0 %v408
      %1585 = vmatpush.bf16.msra.mxu0 %v404
      %1586 = vmatpush.bf16.msra.mxu0 %v400
      %1587 = vmatpush.bf16.msra.mxu0 %v396
      %1588 = vmatpush.bf16.msra.mxu0 %v392
      %1589 = vmatpush.bf16.msra.mxu0 %v388
      %1590 = vmatmul.bf16.gmra.mxu0 %v1542
      %v1591 = vpop.f32.mrf.mxu0
      %v1592 = vadd.f32 0.0, %v1591
      %v1593 = vpop.f32.mrf.mxu0
      %1594 = vdwg.mxu0
      %v1596 = vsel %vm521, %v1541, 0
      %1598 = vmatpush.bf16.msra.mxu0 0
      %1599 = vmatpush.bf16.msra.mxu0 0
      %1600 = vmatpush.bf16.msra.mxu0 0
      %1601 = vmatpush.bf16.msra.mxu0 0
      %1602 = vmatpush.bf16.msra.mxu0 0
      %1603 = vmatpush.bf16.msra.mxu0 0
      %1604 = vmatpush.bf16.msra.mxu0 0
      %1605 = vmatpush.bf16.msra.mxu0 %v513
      %1606 = vmatmul.bf16.gmra.mxu0 %v1596
      %v1607 = vpop.f32.mrf.mxu0
      %v1608 = vadd.f32 %v1553, %v1607
      %v1609 = vpop.f32.mrf.mxu0
      %1610 = vdwg.mxu0
      %1611 = vmatpush.bf16.msra.mxu0 0
      %1612 = vmatpush.bf16.msra.mxu0 0
      %1613 = vmatpush.bf16.msra.mxu0 0
      %1614 = vmatpush.bf16.msra.mxu0 0
      %1615 = vmatpush.bf16.msra.mxu0 0
      %1616 = vmatpush.bf16.msra.mxu0 0
      %1617 = vmatpush.bf16.msra.mxu0 0
      %1618 = vmatpush.bf16.msra.mxu0 %v514
      %1619 = vmatmul.bf16.gmra.mxu0 %v1596
      %v1620 = vpop.f32.mrf.mxu0
      %v1621 = vadd.f32 %v1566, %v1620
      %v1622 = vpop.f32.mrf.mxu0
      %1623 = vdwg.mxu0
      %1624 = vmatpush.bf16.msra.mxu0 0
      %1625 = vmatpush.bf16.msra.mxu0 0
      %1626 = vmatpush.bf16.msra.mxu0 0
      %1627 = vmatpush.bf16.msra.mxu0 0
      %1628 = vmatpush.bf16.msra.mxu0 0
      %1629 = vmatpush.bf16.msra.mxu0 0
      %1630 = vmatpush.bf16.msra.mxu0 0
      %1631 = vmatpush.bf16.msra.mxu0 %v515
      %1632 = vmatmul.bf16.gmra.mxu0 %v1596
      %v1633 = vpop.f32.mrf.mxu0
      %v1634 = vadd.f32 %v1579, %v1633
      %v1635 = vpop.f32.mrf.mxu0
      %1636 = vdwg.mxu0
      %1637 = vmatpush.bf16.msra.mxu0 0
      %1638 = vmatpush.bf16.msra.mxu0 0
      %1639 = vmatpush.bf16.msra.mxu0 0
      %1640 = vmatpush.bf16.msra.mxu0 0
      %1641 = vmatpush.bf16.msra.mxu0 0
      %1642 = vmatpush.bf16.msra.mxu0 0
      %1643 = vmatpush.bf16.msra.mxu0 0
      %1644 = vmatpush.bf16.msra.mxu0 %v516
      %1645 = vmatmul.bf16.gmra.mxu0 %v1596
      %v1646 = vpop.f32.mrf.mxu0
      %v1647 = vadd.f32 %v1592, %v1646
      %v1648 = vpop.f32.mrf.mxu0
      %1649 = vdwg.mxu0
      %v1650 = vadd.f32 %v1608, %v277
      %v1651 = vadd.f32 %v1621, %v278
      %v1652 = vadd.f32 %v1634, %v279
      %v1653 = vadd.f32 %v1647, %v280
      %v1654 = vxor.u32 %v1650, 2147483648
      %v1655 = vmul.f32 %v1654, 1.442695
      %v1656 = vpow.pop %v1655
      %v1657 = vadd.f32 %v1656, 1.0
      %v1658 = vrcp.pop %v1657
      %v1659 = vmul.f32 %v1657, %v1658
      %v1660 = vsub.f32 1.0, %v1659
      %v1661 = vmul.f32 %v1658, %v1660
      %v1662 = vadd.f32 %v1658, %v1661
      %vm1663 = vweird.f32 %v1657
      %vm1664 = vweird.f32 %v1658
      %vm1665 = vmor %vm1663, %vm1664
      %v1666 = vsel %vm1665, %v1658, %v1662
      %v1667 = vand.u32 2147483647, %v1657
      %vm1668 = vcmp.eq.f32.partialorder %v1667, 8.507059e+37
      %v1669 = vand.u32 %v1657, 2147483648
      %v1670 = vor.u32 1.1754944e-38, %v1669
      %v1671 = vsel %vm1668, %v1670, %v1666
      %v1672 = vmul.f32 1.0, %v1671
      %v1673 = vxor.u32 %v1651, 2147483648
      %v1674 = vmul.f32 %v1673, 1.442695
      %v1675 = vpow.pop %v1674
      %v1676 = vadd.f32 %v1675, 1.0
      %v1677 = vrcp.pop %v1676
      %v1678 = vmul.f32 %v1676, %v1677
      %v1679 = vsub.f32 1.0, %v1678
      %v1680 = vmul.f32 %v1677, %v1679
      %v1681 = vadd.f32 %v1677, %v1680
      %vm1682 = vweird.f32 %v1676
      %vm1683 = vweird.f32 %v1677
      %vm1684 = vmor %vm1682, %vm1683
      %v1685 = vsel %vm1684, %v1677, %v1681
      %v1686 = vand.u32 2147483647, %v1676
      %vm1687 = vcmp.eq.f32.partialorder %v1686, 8.507059e+37
      %v1688 = vand.u32 %v1676, 2147483648
      %v1689 = vor.u32 1.1754944e-38, %v1688
      %v1690 = vsel %vm1687, %v1689, %v1685
      %v1691 = vmul.f32 1.0, %v1690
      %v1692 = vtanh.pop %v1652
      %v1693 = vxor.u32 %v1653, 2147483648
      %v1694 = vmul.f32 %v1693, 1.442695
      %v1695 = vpow.pop %v1694
      %v1696 = vadd.f32 %v1695, 1.0
      %v1697 = vrcp.pop %v1696
      %v1698 = vmul.f32 %v1696, %v1697
      %v1699 = vsub.f32 1.0, %v1698
      %v1700 = vmul.f32 %v1697, %v1699
      %v1701 = vadd.f32 %v1697, %v1700
      %vm1702 = vweird.f32 %v1696
      %vm1703 = vweird.f32 %v1697
      %vm1704 = vmor %vm1702, %vm1703
      %v1705 = vsel %vm1704, %v1697, %v1701
      %v1706 = vand.u32 2147483647, %v1696
      %vm1707 = vcmp.eq.f32.partialorder %v1706, 8.507059e+37
      %v1708 = vand.u32 %v1696, 2147483648
      %v1709 = vor.u32 1.1754944e-38, %v1708
      %v1710 = vsel %vm1707, %v1709, %v1705
      %v1711 = vmul.f32 1.0, %v1710
      %v1712 = vmul.f32 %v1691, %v1535
      %v1713 = vmul.f32 %v1672, %v1692
      %v1714 = vadd.f32 %v1712, %v1713
      %v1715 = vtanh.pop %v1714
      %v1716 = vmul.f32 %v1711, %v1715
      %s1717 = scalar_lea.vmem %s230, 48
      %1718 = vst [vmem:[%s1717] sm:$0xff] %v1716
      %s1719 = scalar_lea.vmem %s221, 28
      %v1720 = vld [vmem:[%s1719] sm:$0xf]
      %v1721 = vpack.c.bf16 %v1716, %v1716
      %1722 = vmatpush.bf16.msra.mxu0 %v413
      %1723 = vmatpush.bf16.msra.mxu0 %v409
      %1724 = vmatpush.bf16.msra.mxu0 %v405
      %1725 = vmatpush.bf16.msra.mxu0 %v401
      %1726 = vmatpush.bf16.msra.mxu0 %v397
      %1727 = vmatpush.bf16.msra.mxu0 %v393
      %1728 = vmatpush.bf16.msra.mxu0 %v389
      %1729 = vmatpush.bf16.msra.mxu0 %v385
      %1730 = vmatmul.bf16.gmra.mxu0 %v1721
      %v1731 = vpop.f32.mrf.mxu0
      %v1732 = vadd.f32 0.0, %v1731
      %v1733 = vpop.f32.mrf.mxu0
      %1734 = vdwg.mxu0
      %1735 = vmatpush.bf16.msra.mxu0 %v414
      %1736 = vmatpush.bf16.msra.mxu0 %v410
      %1737 = vmatpush.bf16.msra.mxu0 %v406
      %1738 = vmatpush.bf16.msra.mxu0 %v402
      %1739 = vmatpush.bf16.msra.mxu0 %v398
      %1740 = vmatpush.bf16.msra.mxu0 %v394
      %1741 = vmatpush.bf16.msra.mxu0 %v390
      %1742 = vmatpush.bf16.msra.mxu0 %v386
      %1743 = vmatmul.bf16.gmra.mxu0 %v1721
      %v1744 = vpop.f32.mrf.mxu0
      %v1745 = vadd.f32 0.0, %v1744
      %v1746 = vpop.f32.mrf.mxu0
      %1747 = vdwg.mxu0
      %1748 = vmatpush.bf16.msra.mxu0 %v415
      %1749 = vmatpush.bf16.msra.mxu0 %v411
      %1750 = vmatpush.bf16.msra.mxu0 %v407
      %1751 = vmatpush.bf16.msra.mxu0 %v403
      %1752 = vmatpush.bf16.msra.mxu0 %v399
      %1753 = vmatpush.bf16.msra.mxu0 %v395
      %1754 = vmatpush.bf16.msra.mxu0 %v391
      %1755 = vmatpush.bf16.msra.mxu0 %v387
      %1756 = vmatmul.bf16.gmra.mxu0 %v1721
      %v1757 = vpop.f32.mrf.mxu0
      %v1758 = vadd.f32 0.0, %v1757
      %v1759 = vpop.f32.mrf.mxu0
      %1760 = vdwg.mxu0
      %1761 = vmatpush.bf16.msra.mxu0 %v416
      %1762 = vmatpush.bf16.msra.mxu0 %v412
      %1763 = vmatpush.bf16.msra.mxu0 %v408
      %1764 = vmatpush.bf16.msra.mxu0 %v404
      %1765 = vmatpush.bf16.msra.mxu0 %v400
      %1766 = vmatpush.bf16.msra.mxu0 %v396
      %1767 = vmatpush.bf16.msra.mxu0 %v392
      %1768 = vmatpush.bf16.msra.mxu0 %v388
      %1769 = vmatmul.bf16.gmra.mxu0 %v1721
      %v1770 = vpop.f32.mrf.mxu0
      %v1771 = vadd.f32 0.0, %v1770
      %v1772 = vpop.f32.mrf.mxu0
      %1773 = vdwg.mxu0
      %v1775 = vsel %vm521, %v1720, 0
      %1777 = vmatpush.bf16.msra.mxu0 0
      %1778 = vmatpush.bf16.msra.mxu0 0
      %1779 = vmatpush.bf16.msra.mxu0 0
      %1780 = vmatpush.bf16.msra.mxu0 0
      %1781 = vmatpush.bf16.msra.mxu0 0
      %1782 = vmatpush.bf16.msra.mxu0 0
      %1783 = vmatpush.bf16.msra.mxu0 0
      %1784 = vmatpush.bf16.msra.mxu0 %v513
      %1785 = vmatmul.bf16.gmra.mxu0 %v1775
      %v1786 = vpop.f32.mrf.mxu0
      %v1787 = vadd.f32 %v1732, %v1786
      %v1788 = vpop.f32.mrf.mxu0
      %1789 = vdwg.mxu0
      %1790 = vmatpush.bf16.msra.mxu0 0
      %1791 = vmatpush.bf16.msra.mxu0 0
      %1792 = vmatpush.bf16.msra.mxu0 0
      %1793 = vmatpush.bf16.msra.mxu0 0
      %1794 = vmatpush.bf16.msra.mxu0 0
      %1795 = vmatpush.bf16.msra.mxu0 0
      %1796 = vmatpush.bf16.msra.mxu0 0
      %1797 = vmatpush.bf16.msra.mxu0 %v514
      %1798 = vmatmul.bf16.gmra.mxu0 %v1775
      %v1799 = vpop.f32.mrf.mxu0
      %v1800 = vadd.f32 %v1745, %v1799
      %v1801 = vpop.f32.mrf.mxu0
      %1802 = vdwg.mxu0
      %1803 = vmatpush.bf16.msra.mxu0 0
      %1804 = vmatpush.bf16.msra.mxu0 0
      %1805 = vmatpush.bf16.msra.mxu0 0
      %1806 = vmatpush.bf16.msra.mxu0 0
      %1807 = vmatpush.bf16.msra.mxu0 0
      %1808 = vmatpush.bf16.msra.mxu0 0
      %1809 = vmatpush.bf16.msra.mxu0 0
      %1810 = vmatpush.bf16.msra.mxu0 %v515
      %1811 = vmatmul.bf16.gmra.mxu0 %v1775
      %v1812 = vpop.f32.mrf.mxu0
      %v1813 = vadd.f32 %v1758, %v1812
      %v1814 = vpop.f32.mrf.mxu0
      %1815 = vdwg.mxu0
      %1816 = vmatpush.bf16.msra.mxu0 0
      %1817 = vmatpush.bf16.msra.mxu0 0
      %1818 = vmatpush.bf16.msra.mxu0 0
      %1819 = vmatpush.bf16.msra.mxu0 0
      %1820 = vmatpush.bf16.msra.mxu0 0
      %1821 = vmatpush.bf16.msra.mxu0 0
      %1822 = vmatpush.bf16.msra.mxu0 0
      %1823 = vmatpush.bf16.msra.mxu0 %v516
      %1824 = vmatmul.bf16.gmra.mxu0 %v1775
      %v1825 = vpop.f32.mrf.mxu0
      %v1826 = vadd.f32 %v1771, %v1825
      %v1827 = vpop.f32.mrf.mxu0
      %1828 = vdwg.mxu0
      %v1829 = vadd.f32 %v1787, %v277
      %v1830 = vadd.f32 %v1800, %v278
      %v1831 = vadd.f32 %v1813, %v279
      %v1832 = vadd.f32 %v1826, %v280
      %v1833 = vxor.u32 %v1829, 2147483648
      %v1834 = vmul.f32 %v1833, 1.442695
      %v1835 = vpow.pop %v1834
      %v1836 = vadd.f32 %v1835, 1.0
      %v1837 = vrcp.pop %v1836
      %v1838 = vmul.f32 %v1836, %v1837
      %v1839 = vsub.f32 1.0, %v1838
      %v1840 = vmul.f32 %v1837, %v1839
      %v1841 = vadd.f32 %v1837, %v1840
      %vm1842 = vweird.f32 %v1836
      %vm1843 = vweird.f32 %v1837
      %vm1844 = vmor %vm1842, %vm1843
      %v1845 = vsel %vm1844, %v1837, %v1841
      %v1846 = vand.u32 2147483647, %v1836
      %vm1847 = vcmp.eq.f32.partialorder %v1846, 8.507059e+37
      %v1848 = vand.u32 %v1836, 2147483648
      %v1849 = vor.u32 1.1754944e-38, %v1848
      %v1850 = vsel %vm1847, %v1849, %v1845
      %v1851 = vmul.f32 1.0, %v1850
      %v1852 = vxor.u32 %v1830, 2147483648
      %v1853 = vmul.f32 %v1852, 1.442695
      %v1854 = vpow.pop %v1853
      %v1855 = vadd.f32 %v1854, 1.0
      %v1856 = vrcp.pop %v1855
      %v1857 = vmul.f32 %v1855, %v1856
      %v1858 = vsub.f32 1.0, %v1857
      %v1859 = vmul.f32 %v1856, %v1858
      %v1860 = vadd.f32 %v1856, %v1859
      %vm1861 = vweird.f32 %v1855
      %vm1862 = vweird.f32 %v1856
      %vm1863 = vmor %vm1861, %vm1862
      %v1864 = vsel %vm1863, %v1856, %v1860
      %v1865 = vand.u32 2147483647, %v1855
      %vm1866 = vcmp.eq.f32.partialorder %v1865, 8.507059e+37
      %v1867 = vand.u32 %v1855, 2147483648
      %v1868 = vor.u32 1.1754944e-38, %v1867
      %v1869 = vsel %vm1866, %v1868, %v1864
      %v1870 = vmul.f32 1.0, %v1869
      %v1871 = vtanh.pop %v1831
      %v1872 = vxor.u32 %v1832, 2147483648
      %v1873 = vmul.f32 %v1872, 1.442695
      %v1874 = vpow.pop %v1873
      %v1875 = vadd.f32 %v1874, 1.0
      %v1876 = vrcp.pop %v1875
      %v1877 = vmul.f32 %v1875, %v1876
      %v1878 = vsub.f32 1.0, %v1877
      %v1879 = vmul.f32 %v1876, %v1878
      %v1880 = vadd.f32 %v1876, %v1879
      %vm1881 = vweird.f32 %v1875
      %vm1882 = vweird.f32 %v1876
      %vm1883 = vmor %vm1881, %vm1882
      %v1884 = vsel %vm1883, %v1876, %v1880
      %v1885 = vand.u32 2147483647, %v1875
      %vm1886 = vcmp.eq.f32.partialorder %v1885, 8.507059e+37
      %v1887 = vand.u32 %v1875, 2147483648
      %v1888 = vor.u32 1.1754944e-38, %v1887
      %v1889 = vsel %vm1886, %v1888, %v1884
      %v1890 = vmul.f32 1.0, %v1889
      %v1891 = vmul.f32 %v1870, %v1714
      %v1892 = vmul.f32 %v1851, %v1871
      %v1893 = vadd.f32 %v1891, %v1892
      %v1894 = vtanh.pop %v1893
      %v1895 = vmul.f32 %v1890, %v1894
      %s1896 = scalar_lea.vmem %s230, 56
      %1897 = vst [vmem:[%s1896] sm:$0xff] %v1895
      %s1898 = scalar_lea.vmem %s221, 32
      %v1899 = vld [vmem:[%s1898] sm:$0xf]
      %v1900 = vpack.c.bf16 %v1895, %v1895
      %1901 = vmatpush.bf16.msra.mxu0 %v413
      %1902 = vmatpush.bf16.msra.mxu0 %v409
      %1903 = vmatpush.bf16.msra.mxu0 %v405
      %1904 = vmatpush.bf16.msra.mxu0 %v401
      %1905 = vmatpush.bf16.msra.mxu0 %v397
      %1906 = vmatpush.bf16.msra.mxu0 %v393
      %1907 = vmatpush.bf16.msra.mxu0 %v389
      %1908 = vmatpush.bf16.msra.mxu0 %v385
      %1909 = vmatmul.bf16.gmra.mxu0 %v1900
      %v1910 = vpop.f32.mrf.mxu0
      %v1911 = vadd.f32 0.0, %v1910
      %v1912 = vpop.f32.mrf.mxu0
      %1913 = vdwg.mxu0
      %1914 = vmatpush.bf16.msra.mxu0 %v414
      %1915 = vmatpush.bf16.msra.mxu0 %v410
      %1916 = vmatpush.bf16.msra.mxu0 %v406
      %1917 = vmatpush.bf16.msra.mxu0 %v402
      %1918 = vmatpush.bf16.msra.mxu0 %v398
      %1919 = vmatpush.bf16.msra.mxu0 %v394
      %1920 = vmatpush.bf16.msra.mxu0 %v390
      %1921 = vmatpush.bf16.msra.mxu0 %v386
      %1922 = vmatmul.bf16.gmra.mxu0 %v1900
      %v1923 = vpop.f32.mrf.mxu0
      %v1924 = vadd.f32 0.0, %v1923
      %v1925 = vpop.f32.mrf.mxu0
      %1926 = vdwg.mxu0
      %1927 = vmatpush.bf16.msra.mxu0 %v415
      %1928 = vmatpush.bf16.msra.mxu0 %v411
      %1929 = vmatpush.bf16.msra.mxu0 %v407
      %1930 = vmatpush.bf16.msra.mxu0 %v403
      %1931 = vmatpush.bf16.msra.mxu0 %v399
      %1932 = vmatpush.bf16.msra.mxu0 %v395
      %1933 = vmatpush.bf16.msra.mxu0 %v391
      %1934 = vmatpush.bf16.msra.mxu0 %v387
      %1935 = vmatmul.bf16.gmra.mxu0 %v1900
      %v1936 = vpop.f32.mrf.mxu0
      %v1937 = vadd.f32 0.0, %v1936
      %v1938 = vpop.f32.mrf.mxu0
      %1939 = vdwg.mxu0
      %1940 = vmatpush.bf16.msra.mxu0 %v416
      %1941 = vmatpush.bf16.msra.mxu0 %v412
      %1942 = vmatpush.bf16.msra.mxu0 %v408
      %1943 = vmatpush.bf16.msra.mxu0 %v404
      %1944 = vmatpush.bf16.msra.mxu0 %v400
      %1945 = vmatpush.bf16.msra.mxu0 %v396
      %1946 = vmatpush.bf16.msra.mxu0 %v392
      %1947 = vmatpush.bf16.msra.mxu0 %v388
      %1948 = vmatmul.bf16.gmra.mxu0 %v1900
      %v1949 = vpop.f32.mrf.mxu0
      %v1950 = vadd.f32 0.0, %v1949
      %v1951 = vpop.f32.mrf.mxu0
      %1952 = vdwg.mxu0
      %v1954 = vsel %vm521, %v1899, 0
      %1956 = vmatpush.bf16.msra.mxu0 0
      %1957 = vmatpush.bf16.msra.mxu0 0
      %1958 = vmatpush.bf16.msra.mxu0 0
      %1959 = vmatpush.bf16.msra.mxu0 0
      %1960 = vmatpush.bf16.msra.mxu0 0
      %1961 = vmatpush.bf16.msra.mxu0 0
      %1962 = vmatpush.bf16.msra.mxu0 0
      %1963 = vmatpush.bf16.msra.mxu0 %v513
      %1964 = vmatmul.bf16.gmra.mxu0 %v1954
      %v1965 = vpop.f32.mrf.mxu0
      %v1966 = vadd.f32 %v1911, %v1965
      %v1967 = vpop.f32.mrf.mxu0
      %1968 = vdwg.mxu0
      %1969 = vmatpush.bf16.msra.mxu0 0
      %1970 = vmatpush.bf16.msra.mxu0 0
      %1971 = vmatpush.bf16.msra.mxu0 0
      %1972 = vmatpush.bf16.msra.mxu0 0
      %1973 = vmatpush.bf16.msra.mxu0 0
      %1974 = vmatpush.bf16.msra.mxu0 0
      %1975 = vmatpush.bf16.msra.mxu0 0
      %1976 = vmatpush.bf16.msra.mxu0 %v514
      %1977 = vmatmul.bf16.gmra.mxu0 %v1954
      %v1978 = vpop.f32.mrf.mxu0
      %v1979 = vadd.f32 %v1924, %v1978
      %v1980 = vpop.f32.mrf.mxu0
      %1981 = vdwg.mxu0
      %1982 = vmatpush.bf16.msra.mxu0 0
      %1983 = vmatpush.bf16.msra.mxu0 0
      %1984 = vmatpush.bf16.msra.mxu0 0
      %1985 = vmatpush.bf16.msra.mxu0 0
      %1986 = vmatpush.bf16.msra.mxu0 0
      %1987 = vmatpush.bf16.msra.mxu0 0
      %1988 = vmatpush.bf16.msra.mxu0 0
      %1989 = vmatpush.bf16.msra.mxu0 %v515
      %1990 = vmatmul.bf16.gmra.mxu0 %v1954
      %v1991 = vpop.f32.mrf.mxu0
      %v1992 = vadd.f32 %v1937, %v1991
      %v1993 = vpop.f32.mrf.mxu0
      %1994 = vdwg.mxu0
      %1995 = vmatpush.bf16.msra.mxu0 0
      %1996 = vmatpush.bf16.msra.mxu0 0
      %1997 = vmatpush.bf16.msra.mxu0 0
      %1998 = vmatpush.bf16.msra.mxu0 0
      %1999 = vmatpush.bf16.msra.mxu0 0
      %2000 = vmatpush.bf16.msra.mxu0 0
      %2001 = vmatpush.bf16.msra.mxu0 0
      %2002 = vmatpush.bf16.msra.mxu0 %v516
      %2003 = vmatmul.bf16.gmra.mxu0 %v1954
      %v2004 = vpop.f32.mrf.mxu0
      %v2005 = vadd.f32 %v1950, %v2004
      %v2006 = vpop.f32.mrf.mxu0
      %2007 = vdwg.mxu0
      %v2008 = vadd.f32 %v1966, %v277
      %v2009 = vadd.f32 %v1979, %v278
      %v2010 = vadd.f32 %v1992, %v279
      %v2011 = vadd.f32 %v2005, %v280
      %v2012 = vxor.u32 %v2008, 2147483648
      %v2013 = vmul.f32 %v2012, 1.442695
      %v2014 = vpow.pop %v2013
      %v2015 = vadd.f32 %v2014, 1.0
      %v2016 = vrcp.pop %v2015
      %v2017 = vmul.f32 %v2015, %v2016
      %v2018 = vsub.f32 1.0, %v2017
      %v2019 = vmul.f32 %v2016, %v2018
      %v2020 = vadd.f32 %v2016, %v2019
      %vm2021 = vweird.f32 %v2015
      %vm2022 = vweird.f32 %v2016
      %vm2023 = vmor %vm2021, %vm2022
      %v2024 = vsel %vm2023, %v2016, %v2020
      %v2025 = vand.u32 2147483647, %v2015
      %vm2026 = vcmp.eq.f32.partialorder %v2025, 8.507059e+37
      %v2027 = vand.u32 %v2015, 2147483648
      %v2028 = vor.u32 1.1754944e-38, %v2027
      %v2029 = vsel %vm2026, %v2028, %v2024
      %v2030 = vmul.f32 1.0, %v2029
      %v2031 = vxor.u32 %v2009, 2147483648
      %v2032 = vmul.f32 %v2031, 1.442695
      %v2033 = vpow.pop %v2032
      %v2034 = vadd.f32 %v2033, 1.0
      %v2035 = vrcp.pop %v2034
      %v2036 = vmul.f32 %v2034, %v2035
      %v2037 = vsub.f32 1.0, %v2036
      %v2038 = vmul.f32 %v2035, %v2037
      %v2039 = vadd.f32 %v2035, %v2038
      %vm2040 = vweird.f32 %v2034
      %vm2041 = vweird.f32 %v2035
      %vm2042 = vmor %vm2040, %vm2041
      %v2043 = vsel %vm2042, %v2035, %v2039
      %v2044 = vand.u32 2147483647, %v2034
      %vm2045 = vcmp.eq.f32.partialorder %v2044, 8.507059e+37
      %v2046 = vand.u32 %v2034, 2147483648
      %v2047 = vor.u32 1.1754944e-38, %v2046
      %v2048 = vsel %vm2045, %v2047, %v2043
      %v2049 = vmul.f32 1.0, %v2048
      %v2050 = vtanh.pop %v2010
      %v2051 = vxor.u32 %v2011, 2147483648
      %v2052 = vmul.f32 %v2051, 1.442695
      %v2053 = vpow.pop %v2052
      %v2054 = vadd.f32 %v2053, 1.0
      %v2055 = vrcp.pop %v2054
      %v2056 = vmul.f32 %v2054, %v2055
      %v2057 = vsub.f32 1.0, %v2056
      %v2058 = vmul.f32 %v2055, %v2057
      %v2059 = vadd.f32 %v2055, %v2058
      %vm2060 = vweird.f32 %v2054
      %vm2061 = vweird.f32 %v2055
      %vm2062 = vmor %vm2060, %vm2061
      %v2063 = vsel %vm2062, %v2055, %v2059
      %v2064 = vand.u32 2147483647, %v2054
      %vm2065 = vcmp.eq.f32.partialorder %v2064, 8.507059e+37
      %v2066 = vand.u32 %v2054, 2147483648
      %v2067 = vor.u32 1.1754944e-38, %v2066
      %v2068 = vsel %vm2065, %v2067, %v2063
      %v2069 = vmul.f32 1.0, %v2068
      %v2070 = vmul.f32 %v2049, %v1893
      %v2071 = vmul.f32 %v2030, %v2050
      %v2072 = vadd.f32 %v2070, %v2071
      %v2073 = vtanh.pop %v2072
      %v2074 = vmul.f32 %v2069, %v2073
      %s2075 = scalar_lea.vmem %s230, 64
      %2076 = vst [vmem:[%s2075] sm:$0xff] %v2074
      %s2077 = scalar_lea.vmem %s221, 36
      %v2078 = vld [vmem:[%s2077] sm:$0xf]
      %v2079 = vpack.c.bf16 %v2074, %v2074
      %2080 = vmatpush.bf16.msra.mxu0 %v413
      %2081 = vmatpush.bf16.msra.mxu0 %v409
      %2082 = vmatpush.bf16.msra.mxu0 %v405
      %2083 = vmatpush.bf16.msra.mxu0 %v401
      %2084 = vmatpush.bf16.msra.mxu0 %v397
      %2085 = vmatpush.bf16.msra.mxu0 %v393
      %2086 = vmatpush.bf16.msra.mxu0 %v389
      %2087 = vmatpush.bf16.msra.mxu0 %v385
      %2088 = vmatmul.bf16.gmra.mxu0 %v2079
      %v2089 = vpop.f32.mrf.mxu0
      %v2090 = vadd.f32 0.0, %v2089
      %v2091 = vpop.f32.mrf.mxu0
      %2092 = vdwg.mxu0
      %2093 = vmatpush.bf16.msra.mxu0 %v414
      %2094 = vmatpush.bf16.msra.mxu0 %v410
      %2095 = vmatpush.bf16.msra.mxu0 %v406
      %2096 = vmatpush.bf16.msra.mxu0 %v402
      %2097 = vmatpush.bf16.msra.mxu0 %v398
      %2098 = vmatpush.bf16.msra.mxu0 %v394
      %2099 = vmatpush.bf16.msra.mxu0 %v390
      %2100 = vmatpush.bf16.msra.mxu0 %v386
      %2101 = vmatmul.bf16.gmra.mxu0 %v2079
      %v2102 = vpop.f32.mrf.mxu0
      %v2103 = vadd.f32 0.0, %v2102
      %v2104 = vpop.f32.mrf.mxu0
      %2105 = vdwg.mxu0
      %2106 = vmatpush.bf16.msra.mxu0 %v415
      %2107 = vmatpush.bf16.msra.mxu0 %v411
      %2108 = vmatpush.bf16.msra.mxu0 %v407
      %2109 = vmatpush.bf16.msra.mxu0 %v403
      %2110 = vmatpush.bf16.msra.mxu0 %v399
      %2111 = vmatpush.bf16.msra.mxu0 %v395
      %2112 = vmatpush.bf16.msra.mxu0 %v391
      %2113 = vmatpush.bf16.msra.mxu0 %v387
      %2114 = vmatmul.bf16.gmra.mxu0 %v2079
      %v2115 = vpop.f32.mrf.mxu0
      %v2116 = vadd.f32 0.0, %v2115
      %v2117 = vpop.f32.mrf.mxu0
      %2118 = vdwg.mxu0
      %2119 = vmatpush.bf16.msra.mxu0 %v416
      %2120 = vmatpush.bf16.msra.mxu0 %v412
      %2121 = vmatpush.bf16.msra.mxu0 %v408
      %2122 = vmatpush.bf16.msra.mxu0 %v404
      %2123 = vmatpush.bf16.msra.mxu0 %v400
      %2124 = vmatpush.bf16.msra.mxu0 %v396
      %2125 = vmatpush.bf16.msra.mxu0 %v392
      %2126 = vmatpush.bf16.msra.mxu0 %v388
      %2127 = vmatmul.bf16.gmra.mxu0 %v2079
      %v2128 = vpop.f32.mrf.mxu0
      %v2129 = vadd.f32 0.0, %v2128
      %v2130 = vpop.f32.mrf.mxu0
      %2131 = vdwg.mxu0
      %v2133 = vsel %vm521, %v2078, 0
      %2135 = vmatpush.bf16.msra.mxu0 0
      %2136 = vmatpush.bf16.msra.mxu0 0
      %2137 = vmatpush.bf16.msra.mxu0 0
      %2138 = vmatpush.bf16.msra.mxu0 0
      %2139 = vmatpush.bf16.msra.mxu0 0
      %2140 = vmatpush.bf16.msra.mxu0 0
      %2141 = vmatpush.bf16.msra.mxu0 0
      %2142 = vmatpush.bf16.msra.mxu0 %v513
      %2143 = vmatmul.bf16.gmra.mxu0 %v2133
      %v2144 = vpop.f32.mrf.mxu0
      %v2145 = vadd.f32 %v2090, %v2144
      %v2146 = vpop.f32.mrf.mxu0
      %2147 = vdwg.mxu0
      %2148 = vmatpush.bf16.msra.mxu0 0
      %2149 = vmatpush.bf16.msra.mxu0 0
      %2150 = vmatpush.bf16.msra.mxu0 0
      %2151 = vmatpush.bf16.msra.mxu0 0
      %2152 = vmatpush.bf16.msra.mxu0 0
      %2153 = vmatpush.bf16.msra.mxu0 0
      %2154 = vmatpush.bf16.msra.mxu0 0
      %2155 = vmatpush.bf16.msra.mxu0 %v514
      %2156 = vmatmul.bf16.gmra.mxu0 %v2133
      %v2157 = vpop.f32.mrf.mxu0
      %v2158 = vadd.f32 %v2103, %v2157
      %v2159 = vpop.f32.mrf.mxu0
      %2160 = vdwg.mxu0
      %2161 = vmatpush.bf16.msra.mxu0 0
      %2162 = vmatpush.bf16.msra.mxu0 0
      %2163 = vmatpush.bf16.msra.mxu0 0
      %2164 = vmatpush.bf16.msra.mxu0 0
      %2165 = vmatpush.bf16.msra.mxu0 0
      %2166 = vmatpush.bf16.msra.mxu0 0
      %2167 = vmatpush.bf16.msra.mxu0 0
      %2168 = vmatpush.bf16.msra.mxu0 %v515
      %2169 = vmatmul.bf16.gmra.mxu0 %v2133
      %v2170 = vpop.f32.mrf.mxu0
      %v2171 = vadd.f32 %v2116, %v2170
      %v2172 = vpop.f32.mrf.mxu0
      %2173 = vdwg.mxu0
      %2174 = vmatpush.bf16.msra.mxu0 0
      %2175 = vmatpush.bf16.msra.mxu0 0
      %2176 = vmatpush.bf16.msra.mxu0 0
      %2177 = vmatpush.bf16.msra.mxu0 0
      %2178 = vmatpush.bf16.msra.mxu0 0
      %2179 = vmatpush.bf16.msra.mxu0 0
      %2180 = vmatpush.bf16.msra.mxu0 0
      %2181 = vmatpush.bf16.msra.mxu0 %v516
      %2182 = vmatmul.bf16.gmra.mxu0 %v2133
      %v2183 = vpop.f32.mrf.mxu0
      %v2184 = vadd.f32 %v2129, %v2183
      %v2185 = vpop.f32.mrf.mxu0
      %2186 = vdwg.mxu0
      %v2187 = vadd.f32 %v2145, %v277
      %v2188 = vadd.f32 %v2158, %v278
      %v2189 = vadd.f32 %v2171, %v279
      %v2190 = vadd.f32 %v2184, %v280
      %v2191 = vxor.u32 %v2187, 2147483648
      %v2192 = vmul.f32 %v2191, 1.442695
      %v2193 = vpow.pop %v2192
      %v2194 = vadd.f32 %v2193, 1.0
      %v2195 = vrcp.pop %v2194
      %v2196 = vmul.f32 %v2194, %v2195
      %v2197 = vsub.f32 1.0, %v2196
      %v2198 = vmul.f32 %v2195, %v2197
      %v2199 = vadd.f32 %v2195, %v2198
      %vm2200 = vweird.f32 %v2194
      %vm2201 = vweird.f32 %v2195
      %vm2202 = vmor %vm2200, %vm2201
      %v2203 = vsel %vm2202, %v2195, %v2199
      %v2204 = vand.u32 2147483647, %v2194
      %vm2205 = vcmp.eq.f32.partialorder %v2204, 8.507059e+37
      %v2206 = vand.u32 %v2194, 2147483648
      %v2207 = vor.u32 1.1754944e-38, %v2206
      %v2208 = vsel %vm2205, %v2207, %v2203
      %v2209 = vmul.f32 1.0, %v2208
      %v2210 = vxor.u32 %v2188, 2147483648
      %v2211 = vmul.f32 %v2210, 1.442695
      %v2212 = vpow.pop %v2211
      %v2213 = vadd.f32 %v2212, 1.0
      %v2214 = vrcp.pop %v2213
      %v2215 = vmul.f32 %v2213, %v2214
      %v2216 = vsub.f32 1.0, %v2215
      %v2217 = vmul.f32 %v2214, %v2216
      %v2218 = vadd.f32 %v2214, %v2217
      %vm2219 = vweird.f32 %v2213
      %vm2220 = vweird.f32 %v2214
      %vm2221 = vmor %vm2219, %vm2220
      %v2222 = vsel %vm2221, %v2214, %v2218
      %v2223 = vand.u32 2147483647, %v2213
      %vm2224 = vcmp.eq.f32.partialorder %v2223, 8.507059e+37
      %v2225 = vand.u32 %v2213, 2147483648
      %v2226 = vor.u32 1.1754944e-38, %v2225
      %v2227 = vsel %vm2224, %v2226, %v2222
      %v2228 = vmul.f32 1.0, %v2227
      %v2229 = vtanh.pop %v2189
      %v2230 = vxor.u32 %v2190, 2147483648
      %v2231 = vmul.f32 %v2230, 1.442695
      %v2232 = vpow.pop %v2231
      %v2233 = vadd.f32 %v2232, 1.0
      %v2234 = vrcp.pop %v2233
      %v2235 = vmul.f32 %v2233, %v2234
      %v2236 = vsub.f32 1.0, %v2235
      %v2237 = vmul.f32 %v2234, %v2236
      %v2238 = vadd.f32 %v2234, %v2237
      %vm2239 = vweird.f32 %v2233
      %vm2240 = vweird.f32 %v2234
      %vm2241 = vmor %vm2239, %vm2240
      %v2242 = vsel %vm2241, %v2234, %v2238
      %v2243 = vand.u32 2147483647, %v2233
      %vm2244 = vcmp.eq.f32.partialorder %v2243, 8.507059e+37
      %v2245 = vand.u32 %v2233, 2147483648
      %v2246 = vor.u32 1.1754944e-38, %v2245
      %v2247 = vsel %vm2244, %v2246, %v2242
      %v2248 = vmul.f32 1.0, %v2247
      %v2249 = vmul.f32 %v2228, %v2072
      %v2250 = vmul.f32 %v2209, %v2229
      %v2251 = vadd.f32 %v2249, %v2250
      %v2252 = vtanh.pop %v2251
      %v2253 = vmul.f32 %v2248, %v2252
      %s2254 = scalar_lea.vmem %s230, 72
      %2255 = vst [vmem:[%s2254] sm:$0xff] %v2253
      %s2256 = scalar_lea.vmem %s221, 40
      %v2257 = vld [vmem:[%s2256] sm:$0xf]
      %v2258 = vpack.c.bf16 %v2253, %v2253
      %2259 = vmatpush.bf16.msra.mxu0 %v413
      %2260 = vmatpush.bf16.msra.mxu0 %v409
      %2261 = vmatpush.bf16.msra.mxu0 %v405
      %2262 = vmatpush.bf16.msra.mxu0 %v401
      %2263 = vmatpush.bf16.msra.mxu0 %v397
      %2264 = vmatpush.bf16.msra.mxu0 %v393
      %2265 = vmatpush.bf16.msra.mxu0 %v389
      %2266 = vmatpush.bf16.msra.mxu0 %v385
      %2267 = vmatmul.bf16.gmra.mxu0 %v2258
      %v2268 = vpop.f32.mrf.mxu0
      %v2269 = vadd.f32 0.0, %v2268
      %v2270 = vpop.f32.mrf.mxu0
      %2271 = vdwg.mxu0
      %2272 = vmatpush.bf16.msra.mxu0 %v414
      %2273 = vmatpush.bf16.msra.mxu0 %v410
      %2274 = vmatpush.bf16.msra.mxu0 %v406
      %2275 = vmatpush.bf16.msra.mxu0 %v402
      %2276 = vmatpush.bf16.msra.mxu0 %v398
      %2277 = vmatpush.bf16.msra.mxu0 %v394
      %2278 = vmatpush.bf16.msra.mxu0 %v390
      %2279 = vmatpush.bf16.msra.mxu0 %v386
      %2280 = vmatmul.bf16.gmra.mxu0 %v2258
      %v2281 = vpop.f32.mrf.mxu0
      %v2282 = vadd.f32 0.0, %v2281
      %v2283 = vpop.f32.mrf.mxu0
      %2284 = vdwg.mxu0
      %2285 = vmatpush.bf16.msra.mxu0 %v415
      %2286 = vmatpush.bf16.msra.mxu0 %v411
      %2287 = vmatpush.bf16.msra.mxu0 %v407
      %2288 = vmatpush.bf16.msra.mxu0 %v403
      %2289 = vmatpush.bf16.msra.mxu0 %v399
      %2290 = vmatpush.bf16.msra.mxu0 %v395
      %2291 = vmatpush.bf16.msra.mxu0 %v391
      %2292 = vmatpush.bf16.msra.mxu0 %v387
      %2293 = vmatmul.bf16.gmra.mxu0 %v2258
      %v2294 = vpop.f32.mrf.mxu0
      %v2295 = vadd.f32 0.0, %v2294
      %v2296 = vpop.f32.mrf.mxu0
      %2297 = vdwg.mxu0
      %2298 = vmatpush.bf16.msra.mxu0 %v416
      %2299 = vmatpush.bf16.msra.mxu0 %v412
      %2300 = vmatpush.bf16.msra.mxu0 %v408
      %2301 = vmatpush.bf16.msra.mxu0 %v404
      %2302 = vmatpush.bf16.msra.mxu0 %v400
      %2303 = vmatpush.bf16.msra.mxu0 %v396
      %2304 = vmatpush.bf16.msra.mxu0 %v392
      %2305 = vmatpush.bf16.msra.mxu0 %v388
      %2306 = vmatmul.bf16.gmra.mxu0 %v2258
      %v2307 = vpop.f32.mrf.mxu0
      %v2308 = vadd.f32 0.0, %v2307
      %v2309 = vpop.f32.mrf.mxu0
      %2310 = vdwg.mxu0
      %v2312 = vsel %vm521, %v2257, 0
      %2314 = vmatpush.bf16.msra.mxu0 0
      %2315 = vmatpush.bf16.msra.mxu0 0
      %2316 = vmatpush.bf16.msra.mxu0 0
      %2317 = vmatpush.bf16.msra.mxu0 0
      %2318 = vmatpush.bf16.msra.mxu0 0
      %2319 = vmatpush.bf16.msra.mxu0 0
      %2320 = vmatpush.bf16.msra.mxu0 0
      %2321 = vmatpush.bf16.msra.mxu0 %v513
      %2322 = vmatmul.bf16.gmra.mxu0 %v2312
      %v2323 = vpop.f32.mrf.mxu0
      %v2324 = vadd.f32 %v2269, %v2323
      %v2325 = vpop.f32.mrf.mxu0
      %2326 = vdwg.mxu0
      %2327 = vmatpush.bf16.msra.mxu0 0
      %2328 = vmatpush.bf16.msra.mxu0 0
      %2329 = vmatpush.bf16.msra.mxu0 0
      %2330 = vmatpush.bf16.msra.mxu0 0
      %2331 = vmatpush.bf16.msra.mxu0 0
      %2332 = vmatpush.bf16.msra.mxu0 0
      %2333 = vmatpush.bf16.msra.mxu0 0
      %2334 = vmatpush.bf16.msra.mxu0 %v514
      %2335 = vmatmul.bf16.gmra.mxu0 %v2312
      %v2336 = vpop.f32.mrf.mxu0
      %v2337 = vadd.f32 %v2282, %v2336
      %v2338 = vpop.f32.mrf.mxu0
      %2339 = vdwg.mxu0
      %2340 = vmatpush.bf16.msra.mxu0 0
      %2341 = vmatpush.bf16.msra.mxu0 0
      %2342 = vmatpush.bf16.msra.mxu0 0
      %2343 = vmatpush.bf16.msra.mxu0 0
      %2344 = vmatpush.bf16.msra.mxu0 0
      %2345 = vmatpush.bf16.msra.mxu0 0
      %2346 = vmatpush.bf16.msra.mxu0 0
      %2347 = vmatpush.bf16.msra.mxu0 %v515
      %2348 = vmatmul.bf16.gmra.mxu0 %v2312
      %v2349 = vpop.f32.mrf.mxu0
      %v2350 = vadd.f32 %v2295, %v2349
      %v2351 = vpop.f32.mrf.mxu0
      %2352 = vdwg.mxu0
      %2353 = vmatpush.bf16.msra.mxu0 0
      %2354 = vmatpush.bf16.msra.mxu0 0
      %2355 = vmatpush.bf16.msra.mxu0 0
      %2356 = vmatpush.bf16.msra.mxu0 0
      %2357 = vmatpush.bf16.msra.mxu0 0
      %2358 = vmatpush.bf16.msra.mxu0 0
      %2359 = vmatpush.bf16.msra.mxu0 0
      %2360 = vmatpush.bf16.msra.mxu0 %v516
      %2361 = vmatmul.bf16.gmra.mxu0 %v2312
      %v2362 = vpop.f32.mrf.mxu0
      %v2363 = vadd.f32 %v2308, %v2362
      %v2364 = vpop.f32.mrf.mxu0
      %2365 = vdwg.mxu0
      %v2366 = vadd.f32 %v2324, %v277
      %v2367 = vadd.f32 %v2337, %v278
      %v2368 = vadd.f32 %v2350, %v279
      %v2369 = vadd.f32 %v2363, %v280
      %v2370 = vxor.u32 %v2366, 2147483648
      %v2371 = vmul.f32 %v2370, 1.442695
      %v2372 = vpow.pop %v2371
      %v2373 = vadd.f32 %v2372, 1.0
      %v2374 = vrcp.pop %v2373
      %v2375 = vmul.f32 %v2373, %v2374
      %v2376 = vsub.f32 1.0, %v2375
      %v2377 = vmul.f32 %v2374, %v2376
      %v2378 = vadd.f32 %v2374, %v2377
      %vm2379 = vweird.f32 %v2373
      %vm2380 = vweird.f32 %v2374
      %vm2381 = vmor %vm2379, %vm2380
      %v2382 = vsel %vm2381, %v2374, %v2378
      %v2383 = vand.u32 2147483647, %v2373
      %vm2384 = vcmp.eq.f32.partialorder %v2383, 8.507059e+37
      %v2385 = vand.u32 %v2373, 2147483648
      %v2386 = vor.u32 1.1754944e-38, %v2385
      %v2387 = vsel %vm2384, %v2386, %v2382
      %v2388 = vmul.f32 1.0, %v2387
      %v2389 = vxor.u32 %v2367, 2147483648
      %v2390 = vmul.f32 %v2389, 1.442695
      %v2391 = vpow.pop %v2390
      %v2392 = vadd.f32 %v2391, 1.0
      %v2393 = vrcp.pop %v2392
      %v2394 = vmul.f32 %v2392, %v2393
      %v2395 = vsub.f32 1.0, %v2394
      %v2396 = vmul.f32 %v2393, %v2395
      %v2397 = vadd.f32 %v2393, %v2396
      %vm2398 = vweird.f32 %v2392
      %vm2399 = vweird.f32 %v2393
      %vm2400 = vmor %vm2398, %vm2399
      %v2401 = vsel %vm2400, %v2393, %v2397
      %v2402 = vand.u32 2147483647, %v2392
      %vm2403 = vcmp.eq.f32.partialorder %v2402, 8.507059e+37
      %v2404 = vand.u32 %v2392, 2147483648
      %v2405 = vor.u32 1.1754944e-38, %v2404
      %v2406 = vsel %vm2403, %v2405, %v2401
      %v2407 = vmul.f32 1.0, %v2406
      %v2408 = vtanh.pop %v2368
      %v2409 = vxor.u32 %v2369, 2147483648
      %v2410 = vmul.f32 %v2409, 1.442695
      %v2411 = vpow.pop %v2410
      %v2412 = vadd.f32 %v2411, 1.0
      %v2413 = vrcp.pop %v2412
      %v2414 = vmul.f32 %v2412, %v2413
      %v2415 = vsub.f32 1.0, %v2414
      %v2416 = vmul.f32 %v2413, %v2415
      %v2417 = vadd.f32 %v2413, %v2416
      %vm2418 = vweird.f32 %v2412
      %vm2419 = vweird.f32 %v2413
      %vm2420 = vmor %vm2418, %vm2419
      %v2421 = vsel %vm2420, %v2413, %v2417
      %v2422 = vand.u32 2147483647, %v2412
      %vm2423 = vcmp.eq.f32.partialorder %v2422, 8.507059e+37
      %v2424 = vand.u32 %v2412, 2147483648
      %v2425 = vor.u32 1.1754944e-38, %v2424
      %v2426 = vsel %vm2423, %v2425, %v2421
      %v2427 = vmul.f32 1.0, %v2426
      %v2428 = vmul.f32 %v2407, %v2251
      %v2429 = vmul.f32 %v2388, %v2408
      %v2430 = vadd.f32 %v2428, %v2429
      %v2431 = vtanh.pop %v2430
      %v2432 = vmul.f32 %v2427, %v2431
      %s2433 = scalar_lea.vmem %s230, 80
      %2434 = vst [vmem:[%s2433] sm:$0xff] %v2432
      %s2435 = scalar_lea.vmem %s221, 44
      %v2436 = vld [vmem:[%s2435] sm:$0xf]
      %v2437 = vpack.c.bf16 %v2432, %v2432
      %2438 = vmatpush.bf16.msra.mxu0 %v413
      %2439 = vmatpush.bf16.msra.mxu0 %v409
      %2440 = vmatpush.bf16.msra.mxu0 %v405
      %2441 = vmatpush.bf16.msra.mxu0 %v401
      %2442 = vmatpush.bf16.msra.mxu0 %v397
      %2443 = vmatpush.bf16.msra.mxu0 %v393
      %2444 = vmatpush.bf16.msra.mxu0 %v389
      %2445 = vmatpush.bf16.msra.mxu0 %v385
      %2446 = vmatmul.bf16.gmra.mxu0 %v2437
      %v2447 = vpop.f32.mrf.mxu0
      %v2448 = vadd.f32 0.0, %v2447
      %v2449 = vpop.f32.mrf.mxu0
      %2450 = vdwg.mxu0
      %2451 = vmatpush.bf16.msra.mxu0 %v414
      %2452 = vmatpush.bf16.msra.mxu0 %v410
      %2453 = vmatpush.bf16.msra.mxu0 %v406
      %2454 = vmatpush.bf16.msra.mxu0 %v402
      %2455 = vmatpush.bf16.msra.mxu0 %v398
      %2456 = vmatpush.bf16.msra.mxu0 %v394
      %2457 = vmatpush.bf16.msra.mxu0 %v390
      %2458 = vmatpush.bf16.msra.mxu0 %v386
      %2459 = vmatmul.bf16.gmra.mxu0 %v2437
      %v2460 = vpop.f32.mrf.mxu0
      %v2461 = vadd.f32 0.0, %v2460
      %v2462 = vpop.f32.mrf.mxu0
      %2463 = vdwg.mxu0
      %2464 = vmatpush.bf16.msra.mxu0 %v415
      %2465 = vmatpush.bf16.msra.mxu0 %v411
      %2466 = vmatpush.bf16.msra.mxu0 %v407
      %2467 = vmatpush.bf16.msra.mxu0 %v403
      %2468 = vmatpush.bf16.msra.mxu0 %v399
      %2469 = vmatpush.bf16.msra.mxu0 %v395
      %2470 = vmatpush.bf16.msra.mxu0 %v391
      %2471 = vmatpush.bf16.msra.mxu0 %v387
      %2472 = vmatmul.bf16.gmra.mxu0 %v2437
      %v2473 = vpop.f32.mrf.mxu0
      %v2474 = vadd.f32 0.0, %v2473
      %v2475 = vpop.f32.mrf.mxu0
      %2476 = vdwg.mxu0
      %2477 = vmatpush.bf16.msra.mxu0 %v416
      %2478 = vmatpush.bf16.msra.mxu0 %v412
      %2479 = vmatpush.bf16.msra.mxu0 %v408
      %2480 = vmatpush.bf16.msra.mxu0 %v404
      %2481 = vmatpush.bf16.msra.mxu0 %v400
      %2482 = vmatpush.bf16.msra.mxu0 %v396
      %2483 = vmatpush.bf16.msra.mxu0 %v392
      %2484 = vmatpush.bf16.msra.mxu0 %v388
      %2485 = vmatmul.bf16.gmra.mxu0 %v2437
      %v2486 = vpop.f32.mrf.mxu0
      %v2487 = vadd.f32 0.0, %v2486
      %v2488 = vpop.f32.mrf.mxu0
      %2489 = vdwg.mxu0
      %v2491 = vsel %vm521, %v2436, 0
      %2493 = vmatpush.bf16.msra.mxu0 0
      %2494 = vmatpush.bf16.msra.mxu0 0
      %2495 = vmatpush.bf16.msra.mxu0 0
      %2496 = vmatpush.bf16.msra.mxu0 0
      %2497 = vmatpush.bf16.msra.mxu0 0
      %2498 = vmatpush.bf16.msra.mxu0 0
      %2499 = vmatpush.bf16.msra.mxu0 0
      %2500 = vmatpush.bf16.msra.mxu0 %v513
      %2501 = vmatmul.bf16.gmra.mxu0 %v2491
      %v2502 = vpop.f32.mrf.mxu0
      %v2503 = vadd.f32 %v2448, %v2502
      %v2504 = vpop.f32.mrf.mxu0
      %2505 = vdwg.mxu0
      %2506 = vmatpush.bf16.msra.mxu0 0
      %2507 = vmatpush.bf16.msra.mxu0 0
      %2508 = vmatpush.bf16.msra.mxu0 0
      %2509 = vmatpush.bf16.msra.mxu0 0
      %2510 = vmatpush.bf16.msra.mxu0 0
      %2511 = vmatpush.bf16.msra.mxu0 0
      %2512 = vmatpush.bf16.msra.mxu0 0
      %2513 = vmatpush.bf16.msra.mxu0 %v514
      %2514 = vmatmul.bf16.gmra.mxu0 %v2491
      %v2515 = vpop.f32.mrf.mxu0
      %v2516 = vadd.f32 %v2461, %v2515
      %v2517 = vpop.f32.mrf.mxu0
      %2518 = vdwg.mxu0
      %2519 = vmatpush.bf16.msra.mxu0 0
      %2520 = vmatpush.bf16.msra.mxu0 0
      %2521 = vmatpush.bf16.msra.mxu0 0
      %2522 = vmatpush.bf16.msra.mxu0 0
      %2523 = vmatpush.bf16.msra.mxu0 0
      %2524 = vmatpush.bf16.msra.mxu0 0
      %2525 = vmatpush.bf16.msra.mxu0 0
      %2526 = vmatpush.bf16.msra.mxu0 %v515
      %2527 = vmatmul.bf16.gmra.mxu0 %v2491
      %v2528 = vpop.f32.mrf.mxu0
      %v2529 = vadd.f32 %v2474, %v2528
      %v2530 = vpop.f32.mrf.mxu0
      %2531 = vdwg.mxu0
      %2532 = vmatpush.bf16.msra.mxu0 0
      %2533 = vmatpush.bf16.msra.mxu0 0
      %2534 = vmatpush.bf16.msra.mxu0 0
      %2535 = vmatpush.bf16.msra.mxu0 0
      %2536 = vmatpush.bf16.msra.mxu0 0
      %2537 = vmatpush.bf16.msra.mxu0 0
      %2538 = vmatpush.bf16.msra.mxu0 0
      %2539 = vmatpush.bf16.msra.mxu0 %v516
      %2540 = vmatmul.bf16.gmra.mxu0 %v2491
      %v2541 = vpop.f32.mrf.mxu0
      %v2542 = vadd.f32 %v2487, %v2541
      %v2543 = vpop.f32.mrf.mxu0
      %2544 = vdwg.mxu0
      %v2545 = vadd.f32 %v2503, %v277
      %v2546 = vadd.f32 %v2516, %v278
      %v2547 = vadd.f32 %v2529, %v279
      %v2548 = vadd.f32 %v2542, %v280
      %v2549 = vxor.u32 %v2545, 2147483648
      %v2550 = vmul.f32 %v2549, 1.442695
      %v2551 = vpow.pop %v2550
      %v2552 = vadd.f32 %v2551, 1.0
      %v2553 = vrcp.pop %v2552
      %v2554 = vmul.f32 %v2552, %v2553
      %v2555 = vsub.f32 1.0, %v2554
      %v2556 = vmul.f32 %v2553, %v2555
      %v2557 = vadd.f32 %v2553, %v2556
      %vm2558 = vweird.f32 %v2552
      %vm2559 = vweird.f32 %v2553
      %vm2560 = vmor %vm2558, %vm2559
      %v2561 = vsel %vm2560, %v2553, %v2557
      %v2562 = vand.u32 2147483647, %v2552
      %vm2563 = vcmp.eq.f32.partialorder %v2562, 8.507059e+37
      %v2564 = vand.u32 %v2552, 2147483648
      %v2565 = vor.u32 1.1754944e-38, %v2564
      %v2566 = vsel %vm2563, %v2565, %v2561
      %v2567 = vmul.f32 1.0, %v2566
      %v2568 = vxor.u32 %v2546, 2147483648
      %v2569 = vmul.f32 %v2568, 1.442695
      %v2570 = vpow.pop %v2569
      %v2571 = vadd.f32 %v2570, 1.0
      %v2572 = vrcp.pop %v2571
      %v2573 = vmul.f32 %v2571, %v2572
      %v2574 = vsub.f32 1.0, %v2573
      %v2575 = vmul.f32 %v2572, %v2574
      %v2576 = vadd.f32 %v2572, %v2575
      %vm2577 = vweird.f32 %v2571
      %vm2578 = vweird.f32 %v2572
      %vm2579 = vmor %vm2577, %vm2578
      %v2580 = vsel %vm2579, %v2572, %v2576
      %v2581 = vand.u32 2147483647, %v2571
      %vm2582 = vcmp.eq.f32.partialorder %v2581, 8.507059e+37
      %v2583 = vand.u32 %v2571, 2147483648
      %v2584 = vor.u32 1.1754944e-38, %v2583
      %v2585 = vsel %vm2582, %v2584, %v2580
      %v2586 = vmul.f32 1.0, %v2585
      %v2587 = vtanh.pop %v2547
      %v2588 = vxor.u32 %v2548, 2147483648
      %v2589 = vmul.f32 %v2588, 1.442695
      %v2590 = vpow.pop %v2589
      %v2591 = vadd.f32 %v2590, 1.0
      %v2592 = vrcp.pop %v2591
      %v2593 = vmul.f32 %v2591, %v2592
      %v2594 = vsub.f32 1.0, %v2593
      %v2595 = vmul.f32 %v2592, %v2594
      %v2596 = vadd.f32 %v2592, %v2595
      %vm2597 = vweird.f32 %v2591
      %vm2598 = vweird.f32 %v2592
      %vm2599 = vmor %vm2597, %vm2598
      %v2600 = vsel %vm2599, %v2592, %v2596
      %v2601 = vand.u32 2147483647, %v2591
      %vm2602 = vcmp.eq.f32.partialorder %v2601, 8.507059e+37
      %v2603 = vand.u32 %v2591, 2147483648
      %v2604 = vor.u32 1.1754944e-38, %v2603
      %v2605 = vsel %vm2602, %v2604, %v2600
      %v2606 = vmul.f32 1.0, %v2605
      %v2607 = vmul.f32 %v2586, %v2430
      %v2608 = vmul.f32 %v2567, %v2587
      %v2609 = vadd.f32 %v2607, %v2608
      %v2610 = vtanh.pop %v2609
      %v2611 = vmul.f32 %v2606, %v2610
      %s2612 = scalar_lea.vmem %s230, 88
      %2613 = vst [vmem:[%s2612] sm:$0xff] %v2611
      %s2614 = scalar_lea.vmem %s221, 48
      %v2615 = vld [vmem:[%s2614] sm:$0xf]
      %v2616 = vpack.c.bf16 %v2611, %v2611
      %2617 = vmatpush.bf16.msra.mxu0 %v413
      %2618 = vmatpush.bf16.msra.mxu0 %v409
      %2619 = vmatpush.bf16.msra.mxu0 %v405
      %2620 = vmatpush.bf16.msra.mxu0 %v401
      %2621 = vmatpush.bf16.msra.mxu0 %v397
      %2622 = vmatpush.bf16.msra.mxu0 %v393
      %2623 = vmatpush.bf16.msra.mxu0 %v389
      %2624 = vmatpush.bf16.msra.mxu0 %v385
      %2625 = vmatmul.bf16.gmra.mxu0 %v2616
      %v2626 = vpop.f32.mrf.mxu0
      %v2627 = vadd.f32 0.0, %v2626
      %v2628 = vpop.f32.mrf.mxu0
      %2629 = vdwg.mxu0
      %2630 = vmatpush.bf16.msra.mxu0 %v414
      %2631 = vmatpush.bf16.msra.mxu0 %v410
      %2632 = vmatpush.bf16.msra.mxu0 %v406
      %2633 = vmatpush.bf16.msra.mxu0 %v402
      %2634 = vmatpush.bf16.msra.mxu0 %v398
      %2635 = vmatpush.bf16.msra.mxu0 %v394
      %2636 = vmatpush.bf16.msra.mxu0 %v390
      %2637 = vmatpush.bf16.msra.mxu0 %v386
      %2638 = vmatmul.bf16.gmra.mxu0 %v2616
      %v2639 = vpop.f32.mrf.mxu0
      %v2640 = vadd.f32 0.0, %v2639
      %v2641 = vpop.f32.mrf.mxu0
      %2642 = vdwg.mxu0
      %2643 = vmatpush.bf16.msra.mxu0 %v415
      %2644 = vmatpush.bf16.msra.mxu0 %v411
      %2645 = vmatpush.bf16.msra.mxu0 %v407
      %2646 = vmatpush.bf16.msra.mxu0 %v403
      %2647 = vmatpush.bf16.msra.mxu0 %v399
      %2648 = vmatpush.bf16.msra.mxu0 %v395
      %2649 = vmatpush.bf16.msra.mxu0 %v391
      %2650 = vmatpush.bf16.msra.mxu0 %v387
      %2651 = vmatmul.bf16.gmra.mxu0 %v2616
      %v2652 = vpop.f32.mrf.mxu0
      %v2653 = vadd.f32 0.0, %v2652
      %v2654 = vpop.f32.mrf.mxu0
      %2655 = vdwg.mxu0
      %2656 = vmatpush.bf16.msra.mxu0 %v416
      %2657 = vmatpush.bf16.msra.mxu0 %v412
      %2658 = vmatpush.bf16.msra.mxu0 %v408
      %2659 = vmatpush.bf16.msra.mxu0 %v404
      %2660 = vmatpush.bf16.msra.mxu0 %v400
      %2661 = vmatpush.bf16.msra.mxu0 %v396
      %2662 = vmatpush.bf16.msra.mxu0 %v392
      %2663 = vmatpush.bf16.msra.mxu0 %v388
      %2664 = vmatmul.bf16.gmra.mxu0 %v2616
      %v2665 = vpop.f32.mrf.mxu0
      %v2666 = vadd.f32 0.0, %v2665
      %v2667 = vpop.f32.mrf.mxu0
      %2668 = vdwg.mxu0
      %v2670 = vsel %vm521, %v2615, 0
      %2672 = vmatpush.bf16.msra.mxu0 0
      %2673 = vmatpush.bf16.msra.mxu0 0
      %2674 = vmatpush.bf16.msra.mxu0 0
      %2675 = vmatpush.bf16.msra.mxu0 0
      %2676 = vmatpush.bf16.msra.mxu0 0
      %2677 = vmatpush.bf16.msra.mxu0 0
      %2678 = vmatpush.bf16.msra.mxu0 0
      %2679 = vmatpush.bf16.msra.mxu0 %v513
      %2680 = vmatmul.bf16.gmra.mxu0 %v2670
      %v2681 = vpop.f32.mrf.mxu0
      %v2682 = vadd.f32 %v2627, %v2681
      %v2683 = vpop.f32.mrf.mxu0
      %2684 = vdwg.mxu0
      %2685 = vmatpush.bf16.msra.mxu0 0
      %2686 = vmatpush.bf16.msra.mxu0 0
      %2687 = vmatpush.bf16.msra.mxu0 0
      %2688 = vmatpush.bf16.msra.mxu0 0
      %2689 = vmatpush.bf16.msra.mxu0 0
      %2690 = vmatpush.bf16.msra.mxu0 0
      %2691 = vmatpush.bf16.msra.mxu0 0
      %2692 = vmatpush.bf16.msra.mxu0 %v514
      %2693 = vmatmul.bf16.gmra.mxu0 %v2670
      %v2694 = vpop.f32.mrf.mxu0
      %v2695 = vadd.f32 %v2640, %v2694
      %v2696 = vpop.f32.mrf.mxu0
      %2697 = vdwg.mxu0
      %2698 = vmatpush.bf16.msra.mxu0 0
      %2699 = vmatpush.bf16.msra.mxu0 0
      %2700 = vmatpush.bf16.msra.mxu0 0
      %2701 = vmatpush.bf16.msra.mxu0 0
      %2702 = vmatpush.bf16.msra.mxu0 0
      %2703 = vmatpush.bf16.msra.mxu0 0
      %2704 = vmatpush.bf16.msra.mxu0 0
      %2705 = vmatpush.bf16.msra.mxu0 %v515
      %2706 = vmatmul.bf16.gmra.mxu0 %v2670
      %v2707 = vpop.f32.mrf.mxu0
      %v2708 = vadd.f32 %v2653, %v2707
      %v2709 = vpop.f32.mrf.mxu0
      %2710 = vdwg.mxu0
      %2711 = vmatpush.bf16.msra.mxu0 0
      %2712 = vmatpush.bf16.msra.mxu0 0
      %2713 = vmatpush.bf16.msra.mxu0 0
      %2714 = vmatpush.bf16.msra.mxu0 0
      %2715 = vmatpush.bf16.msra.mxu0 0
      %2716 = vmatpush.bf16.msra.mxu0 0
      %2717 = vmatpush.bf16.msra.mxu0 0
      %2718 = vmatpush.bf16.msra.mxu0 %v516
      %2719 = vmatmul.bf16.gmra.mxu0 %v2670
      %v2720 = vpop.f32.mrf.mxu0
      %v2721 = vadd.f32 %v2666, %v2720
      %v2722 = vpop.f32.mrf.mxu0
      %2723 = vdwg.mxu0
      %v2724 = vadd.f32 %v2682, %v277
      %v2725 = vadd.f32 %v2695, %v278
      %v2726 = vadd.f32 %v2708, %v279
      %v2727 = vadd.f32 %v2721, %v280
      %v2728 = vxor.u32 %v2724, 2147483648
      %v2729 = vmul.f32 %v2728, 1.442695
      %v2730 = vpow.pop %v2729
      %v2731 = vadd.f32 %v2730, 1.0
      %v2732 = vrcp.pop %v2731
      %v2733 = vmul.f32 %v2731, %v2732
      %v2734 = vsub.f32 1.0, %v2733
      %v2735 = vmul.f32 %v2732, %v2734
      %v2736 = vadd.f32 %v2732, %v2735
      %vm2737 = vweird.f32 %v2731
      %vm2738 = vweird.f32 %v2732
      %vm2739 = vmor %vm2737, %vm2738
      %v2740 = vsel %vm2739, %v2732, %v2736
      %v2741 = vand.u32 2147483647, %v2731
      %vm2742 = vcmp.eq.f32.partialorder %v2741, 8.507059e+37
      %v2743 = vand.u32 %v2731, 2147483648
      %v2744 = vor.u32 1.1754944e-38, %v2743
      %v2745 = vsel %vm2742, %v2744, %v2740
      %v2746 = vmul.f32 1.0, %v2745
      %v2747 = vxor.u32 %v2725, 2147483648
      %v2748 = vmul.f32 %v2747, 1.442695
      %v2749 = vpow.pop %v2748
      %v2750 = vadd.f32 %v2749, 1.0
      %v2751 = vrcp.pop %v2750
      %v2752 = vmul.f32 %v2750, %v2751
      %v2753 = vsub.f32 1.0, %v2752
      %v2754 = vmul.f32 %v2751, %v2753
      %v2755 = vadd.f32 %v2751, %v2754
      %vm2756 = vweird.f32 %v2750
      %vm2757 = vweird.f32 %v2751
      %vm2758 = vmor %vm2756, %vm2757
      %v2759 = vsel %vm2758, %v2751, %v2755
      %v2760 = vand.u32 2147483647, %v2750
      %vm2761 = vcmp.eq.f32.partialorder %v2760, 8.507059e+37
      %v2762 = vand.u32 %v2750, 2147483648
      %v2763 = vor.u32 1.1754944e-38, %v2762
      %v2764 = vsel %vm2761, %v2763, %v2759
      %v2765 = vmul.f32 1.0, %v2764
      %v2766 = vtanh.pop %v2726
      %v2767 = vxor.u32 %v2727, 2147483648
      %v2768 = vmul.f32 %v2767, 1.442695
      %v2769 = vpow.pop %v2768
      %v2770 = vadd.f32 %v2769, 1.0
      %v2771 = vrcp.pop %v2770
      %v2772 = vmul.f32 %v2770, %v2771
      %v2773 = vsub.f32 1.0, %v2772
      %v2774 = vmul.f32 %v2771, %v2773
      %v2775 = vadd.f32 %v2771, %v2774
      %vm2776 = vweird.f32 %v2770
      %vm2777 = vweird.f32 %v2771
      %vm2778 = vmor %vm2776, %vm2777
      %v2779 = vsel %vm2778, %v2771, %v2775
      %v2780 = vand.u32 2147483647, %v2770
      %vm2781 = vcmp.eq.f32.partialorder %v2780, 8.507059e+37
      %v2782 = vand.u32 %v2770, 2147483648
      %v2783 = vor.u32 1.1754944e-38, %v2782
      %v2784 = vsel %vm2781, %v2783, %v2779
      %v2785 = vmul.f32 1.0, %v2784
      %v2786 = vmul.f32 %v2765, %v2609
      %v2787 = vmul.f32 %v2746, %v2766
      %v2788 = vadd.f32 %v2786, %v2787
      %v2789 = vtanh.pop %v2788
      %v2790 = vmul.f32 %v2785, %v2789
      %s2791 = scalar_lea.vmem %s230, 96
      %2792 = vst [vmem:[%s2791] sm:$0xff] %v2790
      %s2793 = scalar_lea.vmem %s221, 52
      %v2794 = vld [vmem:[%s2793] sm:$0xf]
      %v2795 = vpack.c.bf16 %v2790, %v2790
      %2796 = vmatpush.bf16.msra.mxu0 %v413
      %2797 = vmatpush.bf16.msra.mxu0 %v409
      %2798 = vmatpush.bf16.msra.mxu0 %v405
      %2799 = vmatpush.bf16.msra.mxu0 %v401
      %2800 = vmatpush.bf16.msra.mxu0 %v397
      %2801 = vmatpush.bf16.msra.mxu0 %v393
      %2802 = vmatpush.bf16.msra.mxu0 %v389
      %2803 = vmatpush.bf16.msra.mxu0 %v385
      %2804 = vmatmul.bf16.gmra.mxu0 %v2795
      %v2805 = vpop.f32.mrf.mxu0
      %v2806 = vadd.f32 0.0, %v2805
      %v2807 = vpop.f32.mrf.mxu0
      %2808 = vdwg.mxu0
      %2809 = vmatpush.bf16.msra.mxu0 %v414
      %2810 = vmatpush.bf16.msra.mxu0 %v410
      %2811 = vmatpush.bf16.msra.mxu0 %v406
      %2812 = vmatpush.bf16.msra.mxu0 %v402
      %2813 = vmatpush.bf16.msra.mxu0 %v398
      %2814 = vmatpush.bf16.msra.mxu0 %v394
      %2815 = vmatpush.bf16.msra.mxu0 %v390
      %2816 = vmatpush.bf16.msra.mxu0 %v386
      %2817 = vmatmul.bf16.gmra.mxu0 %v2795
      %v2818 = vpop.f32.mrf.mxu0
      %v2819 = vadd.f32 0.0, %v2818
      %v2820 = vpop.f32.mrf.mxu0
      %2821 = vdwg.mxu0
      %2822 = vmatpush.bf16.msra.mxu0 %v415
      %2823 = vmatpush.bf16.msra.mxu0 %v411
      %2824 = vmatpush.bf16.msra.mxu0 %v407
      %2825 = vmatpush.bf16.msra.mxu0 %v403
      %2826 = vmatpush.bf16.msra.mxu0 %v399
      %2827 = vmatpush.bf16.msra.mxu0 %v395
      %2828 = vmatpush.bf16.msra.mxu0 %v391
      %2829 = vmatpush.bf16.msra.mxu0 %v387
      %2830 = vmatmul.bf16.gmra.mxu0 %v2795
      %v2831 = vpop.f32.mrf.mxu0
      %v2832 = vadd.f32 0.0, %v2831
      %v2833 = vpop.f32.mrf.mxu0
      %2834 = vdwg.mxu0
      %2835 = vmatpush.bf16.msra.mxu0 %v416
      %2836 = vmatpush.bf16.msra.mxu0 %v412
      %2837 = vmatpush.bf16.msra.mxu0 %v408
      %2838 = vmatpush.bf16.msra.mxu0 %v404
      %2839 = vmatpush.bf16.msra.mxu0 %v400
      %2840 = vmatpush.bf16.msra.mxu0 %v396
      %2841 = vmatpush.bf16.msra.mxu0 %v392
      %2842 = vmatpush.bf16.msra.mxu0 %v388
      %2843 = vmatmul.bf16.gmra.mxu0 %v2795
      %v2844 = vpop.f32.mrf.mxu0
      %v2845 = vadd.f32 0.0, %v2844
      %v2846 = vpop.f32.mrf.mxu0
      %2847 = vdwg.mxu0
      %v2849 = vsel %vm521, %v2794, 0
      %2851 = vmatpush.bf16.msra.mxu0 0
      %2852 = vmatpush.bf16.msra.mxu0 0
      %2853 = vmatpush.bf16.msra.mxu0 0
      %2854 = vmatpush.bf16.msra.mxu0 0
      %2855 = vmatpush.bf16.msra.mxu0 0
      %2856 = vmatpush.bf16.msra.mxu0 0
      %2857 = vmatpush.bf16.msra.mxu0 0
      %2858 = vmatpush.bf16.msra.mxu0 %v513
      %2859 = vmatmul.bf16.gmra.mxu0 %v2849
      %v2860 = vpop.f32.mrf.mxu0
      %v2861 = vadd.f32 %v2806, %v2860
      %v2862 = vpop.f32.mrf.mxu0
      %2863 = vdwg.mxu0
      %2864 = vmatpush.bf16.msra.mxu0 0
      %2865 = vmatpush.bf16.msra.mxu0 0
      %2866 = vmatpush.bf16.msra.mxu0 0
      %2867 = vmatpush.bf16.msra.mxu0 0
      %2868 = vmatpush.bf16.msra.mxu0 0
      %2869 = vmatpush.bf16.msra.mxu0 0
      %2870 = vmatpush.bf16.msra.mxu0 0
      %2871 = vmatpush.bf16.msra.mxu0 %v514
      %2872 = vmatmul.bf16.gmra.mxu0 %v2849
      %v2873 = vpop.f32.mrf.mxu0
      %v2874 = vadd.f32 %v2819, %v2873
      %v2875 = vpop.f32.mrf.mxu0
      %2876 = vdwg.mxu0
      %2877 = vmatpush.bf16.msra.mxu0 0
      %2878 = vmatpush.bf16.msra.mxu0 0
      %2879 = vmatpush.bf16.msra.mxu0 0
      %2880 = vmatpush.bf16.msra.mxu0 0
      %2881 = vmatpush.bf16.msra.mxu0 0
      %2882 = vmatpush.bf16.msra.mxu0 0
      %2883 = vmatpush.bf16.msra.mxu0 0
      %2884 = vmatpush.bf16.msra.mxu0 %v515
      %2885 = vmatmul.bf16.gmra.mxu0 %v2849
      %v2886 = vpop.f32.mrf.mxu0
      %v2887 = vadd.f32 %v2832, %v2886
      %v2888 = vpop.f32.mrf.mxu0
      %2889 = vdwg.mxu0
      %2890 = vmatpush.bf16.msra.mxu0 0
      %2891 = vmatpush.bf16.msra.mxu0 0
      %2892 = vmatpush.bf16.msra.mxu0 0
      %2893 = vmatpush.bf16.msra.mxu0 0
      %2894 = vmatpush.bf16.msra.mxu0 0
      %2895 = vmatpush.bf16.msra.mxu0 0
      %2896 = vmatpush.bf16.msra.mxu0 0
      %2897 = vmatpush.bf16.msra.mxu0 %v516
      %2898 = vmatmul.bf16.gmra.mxu0 %v2849
      %v2899 = vpop.f32.mrf.mxu0
      %v2900 = vadd.f32 %v2845, %v2899
      %v2901 = vpop.f32.mrf.mxu0
      %2902 = vdwg.mxu0
      %v2903 = vadd.f32 %v2861, %v277
      %v2904 = vadd.f32 %v2874, %v278
      %v2905 = vadd.f32 %v2887, %v279
      %v2906 = vadd.f32 %v2900, %v280
      %v2907 = vxor.u32 %v2903, 2147483648
      %v2908 = vmul.f32 %v2907, 1.442695
      %v2909 = vpow.pop %v2908
      %v2910 = vadd.f32 %v2909, 1.0
      %v2911 = vrcp.pop %v2910
      %v2912 = vmul.f32 %v2910, %v2911
      %v2913 = vsub.f32 1.0, %v2912
      %v2914 = vmul.f32 %v2911, %v2913
      %v2915 = vadd.f32 %v2911, %v2914
      %vm2916 = vweird.f32 %v2910
      %vm2917 = vweird.f32 %v2911
      %vm2918 = vmor %vm2916, %vm2917
      %v2919 = vsel %vm2918, %v2911, %v2915
      %v2920 = vand.u32 2147483647, %v2910
      %vm2921 = vcmp.eq.f32.partialorder %v2920, 8.507059e+37
      %v2922 = vand.u32 %v2910, 2147483648
      %v2923 = vor.u32 1.1754944e-38, %v2922
      %v2924 = vsel %vm2921, %v2923, %v2919
      %v2925 = vmul.f32 1.0, %v2924
      %v2926 = vxor.u32 %v2904, 2147483648
      %v2927 = vmul.f32 %v2926, 1.442695
      %v2928 = vpow.pop %v2927
      %v2929 = vadd.f32 %v2928, 1.0
      %v2930 = vrcp.pop %v2929
      %v2931 = vmul.f32 %v2929, %v2930
      %v2932 = vsub.f32 1.0, %v2931
      %v2933 = vmul.f32 %v2930, %v2932
      %v2934 = vadd.f32 %v2930, %v2933
      %vm2935 = vweird.f32 %v2929
      %vm2936 = vweird.f32 %v2930
      %vm2937 = vmor %vm2935, %vm2936
      %v2938 = vsel %vm2937, %v2930, %v2934
      %v2939 = vand.u32 2147483647, %v2929
      %vm2940 = vcmp.eq.f32.partialorder %v2939, 8.507059e+37
      %v2941 = vand.u32 %v2929, 2147483648
      %v2942 = vor.u32 1.1754944e-38, %v2941
      %v2943 = vsel %vm2940, %v2942, %v2938
      %v2944 = vmul.f32 1.0, %v2943
      %v2945 = vtanh.pop %v2905
      %v2946 = vxor.u32 %v2906, 2147483648
      %v2947 = vmul.f32 %v2946, 1.442695
      %v2948 = vpow.pop %v2947
      %v2949 = vadd.f32 %v2948, 1.0
      %v2950 = vrcp.pop %v2949
      %v2951 = vmul.f32 %v2949, %v2950
      %v2952 = vsub.f32 1.0, %v2951
      %v2953 = vmul.f32 %v2950, %v2952
      %v2954 = vadd.f32 %v2950, %v2953
      %vm2955 = vweird.f32 %v2949
      %vm2956 = vweird.f32 %v2950
      %vm2957 = vmor %vm2955, %vm2956
      %v2958 = vsel %vm2957, %v2950, %v2954
      %v2959 = vand.u32 2147483647, %v2949
      %vm2960 = vcmp.eq.f32.partialorder %v2959, 8.507059e+37
      %v2961 = vand.u32 %v2949, 2147483648
      %v2962 = vor.u32 1.1754944e-38, %v2961
      %v2963 = vsel %vm2960, %v2962, %v2958
      %v2964 = vmul.f32 1.0, %v2963
      %v2965 = vmul.f32 %v2944, %v2788
      %v2966 = vmul.f32 %v2925, %v2945
      %v2967 = vadd.f32 %v2965, %v2966
      %v2968 = vtanh.pop %v2967
      %v2969 = vmul.f32 %v2964, %v2968
      %s2970 = scalar_lea.vmem %s230, 104
      %2971 = vst [vmem:[%s2970] sm:$0xff] %v2969
      %s2972 = scalar_lea.vmem %s221, 56
      %v2973 = vld [vmem:[%s2972] sm:$0xf]
      %v2974 = vpack.c.bf16 %v2969, %v2969
      %2975 = vmatpush.bf16.msra.mxu0 %v413
      %2976 = vmatpush.bf16.msra.mxu0 %v409
      %2977 = vmatpush.bf16.msra.mxu0 %v405
      %2978 = vmatpush.bf16.msra.mxu0 %v401
      %2979 = vmatpush.bf16.msra.mxu0 %v397
      %2980 = vmatpush.bf16.msra.mxu0 %v393
      %2981 = vmatpush.bf16.msra.mxu0 %v389
      %2982 = vmatpush.bf16.msra.mxu0 %v385
      %2983 = vmatmul.bf16.gmra.mxu0 %v2974
      %v2984 = vpop.f32.mrf.mxu0
      %v2985 = vadd.f32 0.0, %v2984
      %v2986 = vpop.f32.mrf.mxu0
      %2987 = vdwg.mxu0
      %2988 = vmatpush.bf16.msra.mxu0 %v414
      %2989 = vmatpush.bf16.msra.mxu0 %v410
      %2990 = vmatpush.bf16.msra.mxu0 %v406
      %2991 = vmatpush.bf16.msra.mxu0 %v402
      %2992 = vmatpush.bf16.msra.mxu0 %v398
      %2993 = vmatpush.bf16.msra.mxu0 %v394
      %2994 = vmatpush.bf16.msra.mxu0 %v390
      %2995 = vmatpush.bf16.msra.mxu0 %v386
      %2996 = vmatmul.bf16.gmra.mxu0 %v2974
      %v2997 = vpop.f32.mrf.mxu0
      %v2998 = vadd.f32 0.0, %v2997
      %v2999 = vpop.f32.mrf.mxu0
      %3000 = vdwg.mxu0
      %3001 = vmatpush.bf16.msra.mxu0 %v415
      %3002 = vmatpush.bf16.msra.mxu0 %v411
      %3003 = vmatpush.bf16.msra.mxu0 %v407
      %3004 = vmatpush.bf16.msra.mxu0 %v403
      %3005 = vmatpush.bf16.msra.mxu0 %v399
      %3006 = vmatpush.bf16.msra.mxu0 %v395
      %3007 = vmatpush.bf16.msra.mxu0 %v391
      %3008 = vmatpush.bf16.msra.mxu0 %v387
      %3009 = vmatmul.bf16.gmra.mxu0 %v2974
      %v3010 = vpop.f32.mrf.mxu0
      %v3011 = vadd.f32 0.0, %v3010
      %v3012 = vpop.f32.mrf.mxu0
      %3013 = vdwg.mxu0
      %3014 = vmatpush.bf16.msra.mxu0 %v416
      %3015 = vmatpush.bf16.msra.mxu0 %v412
      %3016 = vmatpush.bf16.msra.mxu0 %v408
      %3017 = vmatpush.bf16.msra.mxu0 %v404
      %3018 = vmatpush.bf16.msra.mxu0 %v400
      %3019 = vmatpush.bf16.msra.mxu0 %v396
      %3020 = vmatpush.bf16.msra.mxu0 %v392
      %3021 = vmatpush.bf16.msra.mxu0 %v388
      %3022 = vmatmul.bf16.gmra.mxu0 %v2974
      %v3023 = vpop.f32.mrf.mxu0
      %v3024 = vadd.f32 0.0, %v3023
      %v3025 = vpop.f32.mrf.mxu0
      %3026 = vdwg.mxu0
      %v3028 = vsel %vm521, %v2973, 0
      %3030 = vmatpush.bf16.msra.mxu0 0
      %3031 = vmatpush.bf16.msra.mxu0 0
      %3032 = vmatpush.bf16.msra.mxu0 0
      %3033 = vmatpush.bf16.msra.mxu0 0
      %3034 = vmatpush.bf16.msra.mxu0 0
      %3035 = vmatpush.bf16.msra.mxu0 0
      %3036 = vmatpush.bf16.msra.mxu0 0
      %3037 = vmatpush.bf16.msra.mxu0 %v513
      %3038 = vmatmul.bf16.gmra.mxu0 %v3028
      %v3039 = vpop.f32.mrf.mxu0
      %v3040 = vadd.f32 %v2985, %v3039
      %v3041 = vpop.f32.mrf.mxu0
      %3042 = vdwg.mxu0
      %3043 = vmatpush.bf16.msra.mxu0 0
      %3044 = vmatpush.bf16.msra.mxu0 0
      %3045 = vmatpush.bf16.msra.mxu0 0
      %3046 = vmatpush.bf16.msra.mxu0 0
      %3047 = vmatpush.bf16.msra.mxu0 0
      %3048 = vmatpush.bf16.msra.mxu0 0
      %3049 = vmatpush.bf16.msra.mxu0 0
      %3050 = vmatpush.bf16.msra.mxu0 %v514
      %3051 = vmatmul.bf16.gmra.mxu0 %v3028
      %v3052 = vpop.f32.mrf.mxu0
      %v3053 = vadd.f32 %v2998, %v3052
      %v3054 = vpop.f32.mrf.mxu0
      %3055 = vdwg.mxu0
      %3056 = vmatpush.bf16.msra.mxu0 0
      %3057 = vmatpush.bf16.msra.mxu0 0
      %3058 = vmatpush.bf16.msra.mxu0 0
      %3059 = vmatpush.bf16.msra.mxu0 0
      %3060 = vmatpush.bf16.msra.mxu0 0
      %3061 = vmatpush.bf16.msra.mxu0 0
      %3062 = vmatpush.bf16.msra.mxu0 0
      %3063 = vmatpush.bf16.msra.mxu0 %v515
      %3064 = vmatmul.bf16.gmra.mxu0 %v3028
      %v3065 = vpop.f32.mrf.mxu0
      %v3066 = vadd.f32 %v3011, %v3065
      %v3067 = vpop.f32.mrf.mxu0
      %3068 = vdwg.mxu0
      %3069 = vmatpush.bf16.msra.mxu0 0
      %3070 = vmatpush.bf16.msra.mxu0 0
      %3071 = vmatpush.bf16.msra.mxu0 0
      %3072 = vmatpush.bf16.msra.mxu0 0
      %3073 = vmatpush.bf16.msra.mxu0 0
      %3074 = vmatpush.bf16.msra.mxu0 0
      %3075 = vmatpush.bf16.msra.mxu0 0
      %3076 = vmatpush.bf16.msra.mxu0 %v516
      %3077 = vmatmul.bf16.gmra.mxu0 %v3028
      %v3078 = vpop.f32.mrf.mxu0
      %v3079 = vadd.f32 %v3024, %v3078
      %v3080 = vpop.f32.mrf.mxu0
      %3081 = vdwg.mxu0
      %v3082 = vadd.f32 %v3040, %v277
      %v3083 = vadd.f32 %v3053, %v278
      %v3084 = vadd.f32 %v3066, %v279
      %v3085 = vadd.f32 %v3079, %v280
      %v3086 = vxor.u32 %v3082, 2147483648
      %v3087 = vmul.f32 %v3086, 1.442695
      %v3088 = vpow.pop %v3087
      %v3089 = vadd.f32 %v3088, 1.0
      %v3090 = vrcp.pop %v3089
      %v3091 = vmul.f32 %v3089, %v3090
      %v3092 = vsub.f32 1.0, %v3091
      %v3093 = vmul.f32 %v3090, %v3092
      %v3094 = vadd.f32 %v3090, %v3093
      %vm3095 = vweird.f32 %v3089
      %vm3096 = vweird.f32 %v3090
      %vm3097 = vmor %vm3095, %vm3096
      %v3098 = vsel %vm3097, %v3090, %v3094
      %v3099 = vand.u32 2147483647, %v3089
      %vm3100 = vcmp.eq.f32.partialorder %v3099, 8.507059e+37
      %v3101 = vand.u32 %v3089, 2147483648
      %v3102 = vor.u32 1.1754944e-38, %v3101
      %v3103 = vsel %vm3100, %v3102, %v3098
      %v3104 = vmul.f32 1.0, %v3103
      %v3105 = vxor.u32 %v3083, 2147483648
      %v3106 = vmul.f32 %v3105, 1.442695
      %v3107 = vpow.pop %v3106
      %v3108 = vadd.f32 %v3107, 1.0
      %v3109 = vrcp.pop %v3108
      %v3110 = vmul.f32 %v3108, %v3109
      %v3111 = vsub.f32 1.0, %v3110
      %v3112 = vmul.f32 %v3109, %v3111
      %v3113 = vadd.f32 %v3109, %v3112
      %vm3114 = vweird.f32 %v3108
      %vm3115 = vweird.f32 %v3109
      %vm3116 = vmor %vm3114, %vm3115
      %v3117 = vsel %vm3116, %v3109, %v3113
      %v3118 = vand.u32 2147483647, %v3108
      %vm3119 = vcmp.eq.f32.partialorder %v3118, 8.507059e+37
      %v3120 = vand.u32 %v3108, 2147483648
      %v3121 = vor.u32 1.1754944e-38, %v3120
      %v3122 = vsel %vm3119, %v3121, %v3117
      %v3123 = vmul.f32 1.0, %v3122
      %v3124 = vtanh.pop %v3084
      %v3125 = vxor.u32 %v3085, 2147483648
      %v3126 = vmul.f32 %v3125, 1.442695
      %v3127 = vpow.pop %v3126
      %v3128 = vadd.f32 %v3127, 1.0
      %v3129 = vrcp.pop %v3128
      %v3130 = vmul.f32 %v3128, %v3129
      %v3131 = vsub.f32 1.0, %v3130
      %v3132 = vmul.f32 %v3129, %v3131
      %v3133 = vadd.f32 %v3129, %v3132
      %vm3134 = vweird.f32 %v3128
      %vm3135 = vweird.f32 %v3129
      %vm3136 = vmor %vm3134, %vm3135
      %v3137 = vsel %vm3136, %v3129, %v3133
      %v3138 = vand.u32 2147483647, %v3128
      %vm3139 = vcmp.eq.f32.partialorder %v3138, 8.507059e+37
      %v3140 = vand.u32 %v3128, 2147483648
      %v3141 = vor.u32 1.1754944e-38, %v3140
      %v3142 = vsel %vm3139, %v3141, %v3137
      %v3143 = vmul.f32 1.0, %v3142
      %v3144 = vmul.f32 %v3123, %v2967
      %v3145 = vmul.f32 %v3104, %v3124
      %v3146 = vadd.f32 %v3144, %v3145
      %v3147 = vtanh.pop %v3146
      %v3148 = vmul.f32 %v3143, %v3147
      %s3149 = scalar_lea.vmem %s230, 112
      %3150 = vst [vmem:[%s3149] sm:$0xff] %v3148
      %s3151 = scalar_lea.vmem %s221, 60
      %v3152 = vld [vmem:[%s3151] sm:$0xf]
      %v3153 = vpack.c.bf16 %v3148, %v3148
      %3154 = vmatpush.bf16.msra.mxu0 %v413
      %3155 = vmatpush.bf16.msra.mxu0 %v409
      %3156 = vmatpush.bf16.msra.mxu0 %v405
      %3157 = vmatpush.bf16.msra.mxu0 %v401
      %3158 = vmatpush.bf16.msra.mxu0 %v397
      %3159 = vmatpush.bf16.msra.mxu0 %v393
      %3160 = vmatpush.bf16.msra.mxu0 %v389
      %3161 = vmatpush.bf16.msra.mxu0 %v385
      %3162 = vmatmul.bf16.gmra.mxu0 %v3153
      %v3163 = vpop.f32.mrf.mxu0
      %v3164 = vadd.f32 0.0, %v3163
      %v3165 = vpop.f32.mrf.mxu0
      %3166 = vdwg.mxu0
      %3167 = vmatpush.bf16.msra.mxu0 %v414
      %3168 = vmatpush.bf16.msra.mxu0 %v410
      %3169 = vmatpush.bf16.msra.mxu0 %v406
      %3170 = vmatpush.bf16.msra.mxu0 %v402
      %3171 = vmatpush.bf16.msra.mxu0 %v398
      %3172 = vmatpush.bf16.msra.mxu0 %v394
      %3173 = vmatpush.bf16.msra.mxu0 %v390
      %3174 = vmatpush.bf16.msra.mxu0 %v386
      %3175 = vmatmul.bf16.gmra.mxu0 %v3153
      %v3176 = vpop.f32.mrf.mxu0
      %v3177 = vadd.f32 0.0, %v3176
      %v3178 = vpop.f32.mrf.mxu0
      %3179 = vdwg.mxu0
      %3180 = vmatpush.bf16.msra.mxu0 %v415
      %3181 = vmatpush.bf16.msra.mxu0 %v411
      %3182 = vmatpush.bf16.msra.mxu0 %v407
      %3183 = vmatpush.bf16.msra.mxu0 %v403
      %3184 = vmatpush.bf16.msra.mxu0 %v399
      %3185 = vmatpush.bf16.msra.mxu0 %v395
      %3186 = vmatpush.bf16.msra.mxu0 %v391
      %3187 = vmatpush.bf16.msra.mxu0 %v387
      %3188 = vmatmul.bf16.gmra.mxu0 %v3153
      %v3189 = vpop.f32.mrf.mxu0
      %v3190 = vadd.f32 0.0, %v3189
      %v3191 = vpop.f32.mrf.mxu0
      %3192 = vdwg.mxu0
      %3193 = vmatpush.bf16.msra.mxu0 %v416
      %3194 = vmatpush.bf16.msra.mxu0 %v412
      %3195 = vmatpush.bf16.msra.mxu0 %v408
      %3196 = vmatpush.bf16.msra.mxu0 %v404
      %3197 = vmatpush.bf16.msra.mxu0 %v400
      %3198 = vmatpush.bf16.msra.mxu0 %v396
      %3199 = vmatpush.bf16.msra.mxu0 %v392
      %3200 = vmatpush.bf16.msra.mxu0 %v388
      %3201 = vmatmul.bf16.gmra.mxu0 %v3153
      %v3202 = vpop.f32.mrf.mxu0
      %v3203 = vadd.f32 0.0, %v3202
      %v3204 = vpop.f32.mrf.mxu0
      %3205 = vdwg.mxu0
      %v3207 = vsel %vm521, %v3152, 0
      %3209 = vmatpush.bf16.msra.mxu0 0
      %3210 = vmatpush.bf16.msra.mxu0 0
      %3211 = vmatpush.bf16.msra.mxu0 0
      %3212 = vmatpush.bf16.msra.mxu0 0
      %3213 = vmatpush.bf16.msra.mxu0 0
      %3214 = vmatpush.bf16.msra.mxu0 0
      %3215 = vmatpush.bf16.msra.mxu0 0
      %3216 = vmatpush.bf16.msra.mxu0 %v513
      %3217 = vmatmul.bf16.gmra.mxu0 %v3207
      %v3218 = vpop.f32.mrf.mxu0
      %v3219 = vadd.f32 %v3164, %v3218
      %v3220 = vpop.f32.mrf.mxu0
      %3221 = vdwg.mxu0
      %3222 = vmatpush.bf16.msra.mxu0 0
      %3223 = vmatpush.bf16.msra.mxu0 0
      %3224 = vmatpush.bf16.msra.mxu0 0
      %3225 = vmatpush.bf16.msra.mxu0 0
      %3226 = vmatpush.bf16.msra.mxu0 0
      %3227 = vmatpush.bf16.msra.mxu0 0
      %3228 = vmatpush.bf16.msra.mxu0 0
      %3229 = vmatpush.bf16.msra.mxu0 %v514
      %3230 = vmatmul.bf16.gmra.mxu0 %v3207
      %v3231 = vpop.f32.mrf.mxu0
      %v3232 = vadd.f32 %v3177, %v3231
      %v3233 = vpop.f32.mrf.mxu0
      %3234 = vdwg.mxu0
      %3235 = vmatpush.bf16.msra.mxu0 0
      %3236 = vmatpush.bf16.msra.mxu0 0
      %3237 = vmatpush.bf16.msra.mxu0 0
      %3238 = vmatpush.bf16.msra.mxu0 0
      %3239 = vmatpush.bf16.msra.mxu0 0
      %3240 = vmatpush.bf16.msra.mxu0 0
      %3241 = vmatpush.bf16.msra.mxu0 0
      %3242 = vmatpush.bf16.msra.mxu0 %v515
      %3243 = vmatmul.bf16.gmra.mxu0 %v3207
      %v3244 = vpop.f32.mrf.mxu0
      %v3245 = vadd.f32 %v3190, %v3244
      %v3246 = vpop.f32.mrf.mxu0
      %3247 = vdwg.mxu0
      %3248 = vmatpush.bf16.msra.mxu0 0
      %3249 = vmatpush.bf16.msra.mxu0 0
      %3250 = vmatpush.bf16.msra.mxu0 0
      %3251 = vmatpush.bf16.msra.mxu0 0
      %3252 = vmatpush.bf16.msra.mxu0 0
      %3253 = vmatpush.bf16.msra.mxu0 0
      %3254 = vmatpush.bf16.msra.mxu0 0
      %3255 = vmatpush.bf16.msra.mxu0 %v516
      %3256 = vmatmul.bf16.gmra.mxu0 %v3207
      %v3257 = vpop.f32.mrf.mxu0
      %v3258 = vadd.f32 %v3203, %v3257
      %v3259 = vpop.f32.mrf.mxu0
      %3260 = vdwg.mxu0
      %v3261 = vadd.f32 %v3219, %v277
      %v3262 = vadd.f32 %v3232, %v278
      %v3263 = vadd.f32 %v3245, %v279
      %v3264 = vadd.f32 %v3258, %v280
      %v3265 = vxor.u32 %v3261, 2147483648
      %v3266 = vmul.f32 %v3265, 1.442695
      %v3267 = vpow.pop %v3266
      %v3268 = vadd.f32 %v3267, 1.0
      %v3269 = vrcp.pop %v3268
      %v3270 = vmul.f32 %v3268, %v3269
      %v3271 = vsub.f32 1.0, %v3270
      %v3272 = vmul.f32 %v3269, %v3271
      %v3273 = vadd.f32 %v3269, %v3272
      %vm3274 = vweird.f32 %v3268
      %vm3275 = vweird.f32 %v3269
      %vm3276 = vmor %vm3274, %vm3275
      %v3277 = vsel %vm3276, %v3269, %v3273
      %v3278 = vand.u32 2147483647, %v3268
      %vm3279 = vcmp.eq.f32.partialorder %v3278, 8.507059e+37
      %v3280 = vand.u32 %v3268, 2147483648
      %v3281 = vor.u32 1.1754944e-38, %v3280
      %v3282 = vsel %vm3279, %v3281, %v3277
      %v3283 = vmul.f32 1.0, %v3282
      %v3284 = vxor.u32 %v3262, 2147483648
      %v3285 = vmul.f32 %v3284, 1.442695
      %v3286 = vpow.pop %v3285
      %v3287 = vadd.f32 %v3286, 1.0
      %v3288 = vrcp.pop %v3287
      %v3289 = vmul.f32 %v3287, %v3288
      %v3290 = vsub.f32 1.0, %v3289
      %v3291 = vmul.f32 %v3288, %v3290
      %v3292 = vadd.f32 %v3288, %v3291
      %vm3293 = vweird.f32 %v3287
      %vm3294 = vweird.f32 %v3288
      %vm3295 = vmor %vm3293, %vm3294
      %v3296 = vsel %vm3295, %v3288, %v3292
      %v3297 = vand.u32 2147483647, %v3287
      %vm3298 = vcmp.eq.f32.partialorder %v3297, 8.507059e+37
      %v3299 = vand.u32 %v3287, 2147483648
      %v3300 = vor.u32 1.1754944e-38, %v3299
      %v3301 = vsel %vm3298, %v3300, %v3296
      %v3302 = vmul.f32 1.0, %v3301
      %v3303 = vtanh.pop %v3263
      %v3304 = vxor.u32 %v3264, 2147483648
      %v3305 = vmul.f32 %v3304, 1.442695
      %v3306 = vpow.pop %v3305
      %v3307 = vadd.f32 %v3306, 1.0
      %v3308 = vrcp.pop %v3307
      %v3309 = vmul.f32 %v3307, %v3308
      %v3310 = vsub.f32 1.0, %v3309
      %v3311 = vmul.f32 %v3308, %v3310
      %v3312 = vadd.f32 %v3308, %v3311
      %vm3313 = vweird.f32 %v3307
      %vm3314 = vweird.f32 %v3308
      %vm3315 = vmor %vm3313, %vm3314
      %v3316 = vsel %vm3315, %v3308, %v3312
      %v3317 = vand.u32 2147483647, %v3307
      %vm3318 = vcmp.eq.f32.partialorder %v3317, 8.507059e+37
      %v3319 = vand.u32 %v3307, 2147483648
      %v3320 = vor.u32 1.1754944e-38, %v3319
      %v3321 = vsel %vm3318, %v3320, %v3316
      %v3322 = vmul.f32 1.0, %v3321
      %v3323 = vmul.f32 %v3302, %v3146
      %v3324 = vmul.f32 %v3283, %v3303
      %v3325 = vadd.f32 %v3323, %v3324
      %v3326 = vtanh.pop %v3325
      %v3327 = vmul.f32 %v3322, %v3326
      %s3328 = scalar_lea.vmem %s230, 120
      %3329 = vst [vmem:[%s3328] sm:$0xff] %v3327
      %3330 = vst [vmem:[#allocation2] sm:$0xff] %v3327
      %3331 = vst [vmem:[#allocation3] sm:$0xff] %v3325
      %s3332 = smul.u32 16, %s20
      %p3333 = scmp.lt.s32.totalorder %s3332, 31
      %s3334 = scalar_select %p3333, %s3332, 31
      %p3335 = scmp.lt.s32.totalorder %s19, 0
      %s3336 = scalar_select %p3335, %s19, 0
      %s3337 = sadd.s32 %s3336, %s3334
      %s3338 = smul.addr %s3337, 8
      %s3339 = scalar_lea.vmem %s4, %s3338
      // Predicated region
      $region41: #{lstm_encoder_forward.1} parent=35 // pred_check
        %p3340 = pneg %p138
      $region42: #{lstm_encoder_forward.1} parent=35 // pred_check_branch
        %3342 = sbr.rel (%p3340) target = $region44
      $region43: #{lstm_encoder_forward.1} parent=35 // pred_region
        %s3343 = smul.u32 16, %s20
      $region44: #{lstm_encoder_forward.1} parent=35 // pred_fallthru
        _
    $region36: #{lstm_encoder_forward.1} parent=5 // pred_fallthru
      _
    %p3344 = scmp.le.s32.totalorder 2, %s10
    // Predicated region
    $region45: #{lstm_encoder_forward.1} parent=5 // pred_check
      %p3345 = pneg %p3344
    $region46: #{lstm_encoder_forward.1} parent=5 // pred_check_branch
      %3347 = sbr.rel (%p3345) target = $region48
    $region47: #{lstm_encoder_forward.1} parent=5 // pred_region
      %s3348 = ssub.s32 %s10, 2
      // Predicated region
      $region49: #{lstm_encoder_forward.1} parent=47 // pred_check
        %p3349 = pneg %p144
      $region50: #{lstm_encoder_forward.1} parent=47 // pred_check_branch
        %3351 = sbr.rel (%p3349) target = $region52
      $region51: #{lstm_encoder_forward.1} parent=47 // pred_region
        %s3352 = smul.u32 16, %s22
        %p3353 = scmp.lt.s32.totalorder %s3352, 31
        %s3354 = scalar_select %p3353, %s3352, 31
        %p3355 = scmp.lt.s32.totalorder %s21, 0
        %s3356 = scalar_select %p3355, %s21, 0
        %s3357 = sadd.s32 %s3356, %s3354
        %s3358 = smul.addr %s3357, 8
        %s3359 = scalar_lea.vmem %s4, %s3358
      $region52: #{lstm_encoder_forward.1} parent=47 // pred_fallthru
        _
    $region48: #{lstm_encoder_forward.1} parent=5 // pred_fallthru
      _
  $region6: #{lstm_encoder_forward.1} parent=0 // loop_footer
    %s14 = sadd.s32 1, %s10
  $region7: #{lstm_encoder_forward.1} parent=0 // loop_footer_branch
    %9 = sbr.rel target = $region3
  $region8: #{lstm_encoder_forward.1} parent=0 // loop_exit
    _

</llo_original>
